<compile_context>
chip_gen: v5e
topology: v5e:2x2
jax: 0.10.0
libtpu: 0.0.40
codegen_flags: <defaults>
</compile_context>

<pallas_src>
import functools

import jax
import jax.numpy as jnp
from jax import lax
from jax.experimental import pallas as pl
from jax.experimental.pallas import tpu as pltpu


# ----------------------------- Pallas kernels ------------------------------

_VMEM = pl.BlockSpec(memory_space=pltpu.MemorySpace.VMEM)


def _leaky(x, slope=0.2):
    return jnp.where(x > 0, x, slope * x)


def _bn_train(y, gamma, beta, m_valid, eps):
    """Train-mode BatchNorm over axis 0 (biased variance, PyTorch semantics).

    Rows >= m_valid are exact zeros, so summing over ALL rows and dividing by
    the true row count `m_valid` yields exact batch statistics.
    """
    inv_m = jnp.float32(1.0 / m_valid)
    s1 = jnp.sum(y, axis=0, keepdims=True)
    s2 = jnp.sum(y * y, axis=0, keepdims=True)
    mean = s1 * inv_m
    var = jnp.maximum(s2 * inv_m - mean * mean, 0.0)     # biased variance
    xn = (y - mean) * lax.rsqrt(var + eps)
    return gamma * xn + beta


def _gemm_bias_leaky_kernel(x_ref, w_ref, b_ref, o_ref):
    """o = LeakyReLU(x @ w + b).  x:(M,K) bf16, w:(K,N) bf16, b:(1,N) f32."""
    y = jnp.dot(x_ref[...], w_ref[...], preferred_element_type=jnp.float32)
    o_ref[...] = _leaky(y + b_ref[...]).astype(o_ref.dtype)


def _gemm_bn_leaky_kernel(x_ref, w_ref, g_ref, bt_ref, o_ref, *, m_valid, eps):
    """o = LeakyReLU(BN_train(x @ w)).  Conv bias omitted: it cancels in BN."""
    y = jnp.dot(x_ref[...], w_ref[...], preferred_element_type=jnp.float32)
    z = _bn_train(y, g_ref[...], bt_ref[...], m_valid, eps)
    o_ref[...] = _leaky(z).astype(o_ref.dtype)


def _head_kernel(x_ref, w1_ref, g1_ref, bt1_ref, w2_ref, b2_ref, o_ref, *,
                 m_valid, eps):
    """Fused head: Linear -> BatchNorm1d -> LeakyReLU -> Linear -> Tanh."""
    y1 = jnp.dot(x_ref[...], w1_ref[...], preferred_element_type=jnp.float32)
    z1 = _leaky(_bn_train(y1, g1_ref[...], bt1_ref[...], m_valid, eps))
    y2 = jnp.dot(z1.astype(jnp.bfloat16), w2_ref[...],
                 preferred_element_type=jnp.float32)
    o_ref[...] = jnp.tanh(y2 + b2_ref[...]).astype(o_ref.dtype)


def gemm_bias_leaky(x, w, b):
    M = x.shape[0]
    Np = w.shape[1]
    return pl.pallas_call(
        _gemm_bias_leaky_kernel,
        out_shape=jax.ShapeDtypeStruct((M, Np), jnp.float32),
        in_specs=[_VMEM] * 3,
        out_specs=_VMEM,
    )(x, w, b)


def gemm_bn_leaky(x, w, gamma, beta, m_valid, eps=1e-5):
    M = x.shape[0]
    Np = w.shape[1]
    kernel = functools.partial(_gemm_bn_leaky_kernel, m_valid=m_valid, eps=eps)
    return pl.pallas_call(
        kernel,
        out_shape=jax.ShapeDtypeStruct((M, Np), jnp.float32),
        in_specs=[_VMEM] * 4,
        out_specs=_VMEM,
    )(x, w, gamma, beta)


def linear_head(x, w1, g1, bt1, w2, b2, m_valid, eps=1e-5):
    M = x.shape[0]
    Op = w2.shape[1]
    kernel = functools.partial(_head_kernel, m_valid=m_valid, eps=eps)
    return pl.pallas_call(
        kernel,
        out_shape=jax.ShapeDtypeStruct((M, Op), jnp.float32),
        in_specs=[_VMEM] * 6,
        out_specs=_VMEM,
    )(x, w1, g1, bt1, w2, b2)


# ------------------------------ glue (JAX, jitted) --------------------------

def _round_up(n, m):
    return (n + m - 1) // m * m


def im2col_nhwc(x, k, s, p):
    """x:(N,H,W,C) -> patches:(N*Ho*Wo, k*k*C), flattened in (kh, kw, c) order."""
    # TODO(synk): patch extraction stays in plain XLA (overlapping windows are
    # not expressible with a BlockSpec index_map); it fuses under jit.
    N, H, W, C = x.shape
    xp = jnp.pad(x, ((0, 0), (p, p), (p, p), (0, 0)))
    Ho = (H + 2 * p - k) // s + 1
    Wo = (W + 2 * p - k) // s + 1
    taps = []
    for i in range(k):
        for j in range(k):
            taps.append(xp[:, i:i + s * Ho:s, j:j + s * Wo:s, :])   # (N,Ho,Wo,C)
    patches = jnp.stack(taps, axis=3)                   # (N, Ho, Wo, k*k, C)
    patches = patches.reshape(N * Ho * Wo, k * k * C)
    return patches, Ho, Wo


# Architecture constants (match CNN_Encoder.__init__ with input_size=(1,28,28))
INPUT_SIZE = (1, 28, 28)
CONV_CFG = [  # (Cin, Cout, kernel, stride, pad, has_bn)
    (1,    16,  4, 1, 1, False),
    (16,   32,  4, 2, 1, True),
    (32,   64,  4, 2, 1, True),
    (64,  128,  4, 2, 1, True),
    (128, 256,  3, 2, 1, True),
]
FINAL_CHW = (256, 2, 2)          # conv stack output for a 28x28 input
FLAT_FTS = 256 * 2 * 2           # 1024, same as get_flat_fts()


def init_params(key, output_size):
    """Weights stored pre-permuted / pre-transposed / lane-padded / bf16-cast."""
    params = {"conv": [], "linear": {}}
    for (cin, cout, k, s, p, has_bn) in CONV_CFG:
        key, kw, kb = jax.random.split(key, 3)
        w = jax.random.normal(kw, (cout, cin, k, k), jnp.float32) * 0.05
        b = jax.random.normal(kb, (cout,), jnp.float32) * 0.05
        K = cin * k * k
        Kp = _round_up(K, 128)        # lane-pad the tiny K of layer 0 (16 -> 128)
        Cp = _round_up(cout, 128)     # lane-dense output channels
        # (Cout,Cin,kh,kw) -> (kh,kw,Cin,Cout): matches NHWC im2col tap order
        wmat = w.transpose(2, 3, 1, 0).reshape(K, cout)
        wmat = jnp.pad(wmat, ((0, Kp - K), (0, Cp - cout))).astype(jnp.bfloat16)
        layer = {"wmat": wmat}
        if has_bn:
            key, kg, kbt = jax.random.split(key, 3)
            gamma = 1.0 + 0.1 * jax.random.normal(kg, (cout,), jnp.float32)
            beta = 0.1 * jax.random.normal(kbt, (cout,), jnp.float32)
            # conv bias `b` is dropped: it cancels exactly in train-mode BN
            layer["gamma"] = jnp.pad(gamma, (0, Cp - cout),
                                     constant_values=1.0).reshape(1, Cp)
            layer["beta"] = jnp.pad(beta, (0, Cp - cout)).reshape(1, Cp)
        else:
            layer["bias"] = jnp.pad(b, (0, Cp - cout)).reshape(1, Cp)
        params["conv"].append(layer)

    key, k1w, k1b, kg1, kb1, k2w, k2b = jax.random.split(key, 7)
    w1 = jax.random.normal(k1w, (FLAT_FTS, FLAT_FTS), jnp.float32) * 0.02
    _b1 = jax.random.normal(k1b, (FLAT_FTS,), jnp.float32) * 0.02  # cancels in BN1d
    g1 = 1.0 + 0.1 * jax.random.normal(kg1, (FLAT_FTS,), jnp.float32)
    bt1 = 0.1 * jax.random.normal(kb1, (FLAT_FTS,), jnp.float32)
    w2 = jax.random.normal(k2w, (output_size, FLAT_FTS), jnp.float32) * 0.02
    b2 = jax.random.normal(k2b, (output_size,), jnp.float32) * 0.02

    # Permute w1's input axis from NCHW flatten (c,h,w) to NHWC flatten (h,w,c)
    # so activations never need a transpose before the head.
    Cf, Hf, Wf = FINAL_CHW
    w1_perm = w1.reshape(FLAT_FTS, Cf, Hf, Wf).transpose(0, 2, 3, 1)
    w1_perm = w1_perm.reshape(FLAT_FTS, FLAT_FTS)
    Op = _round_up(output_size, 128)
    params["linear"] = {
        "w1t": w1_perm.T.astype(jnp.bfloat16),                                  # (1024,1024)
        "g1": g1.reshape(1, FLAT_FTS),
        "bt1": bt1.reshape(1, FLAT_FTS),
        "w2t": jnp.pad(w2.T, ((0, 0), (0, Op - output_size))).astype(jnp.bfloat16),  # (1024,Op)
        "b2": jnp.pad(b2, (0, Op - output_size)).reshape(1, Op),
    }
    return params


def cnn_encoder_forward(x, params, *, output_size):
    """x: reshapeable to (-1, 1, 28, 28); returns (N, output_size)."""
    nc, H, W = INPUT_SIZE
    h = x.reshape(-1, nc, H, W).astype(jnp.float32)
    N = h.shape[0]
    h = h.transpose(0, 2, 3, 1)                              # NHWC once, stays NHWC

    for li, (cin, cout, k, s, p, has_bn) in enumerate(CONV_CFG):
        layer = params["conv"][li]
        patches, Ho, Wo = im2col_nhwc(h, k, s, p)            # (M, K)
        M, K = patches.shape
        Kp = layer["wmat"].shape[0]
        Mp = _round_up(M, 16)
        if Mp > M or Kp > K:
            patches = jnp.pad(patches, ((0, Mp - M), (0, Kp - K)))
        patches = patches.astype(jnp.bfloat16)
        if has_bn:
            y = gemm_bn_leaky(patches, layer["wmat"],
                              layer["gamma"], layer["beta"], m_valid=M)
        else:
            y = gemm_bias_leaky(patches, layer["wmat"], layer["bias"])
        h = y[:M, :cout].reshape(N, Ho, Wo, cout)            # drop zero pads, stay NHWC

    flat = h.reshape(N, FLAT_FTS)                            # NHWC flatten (w1 pre-permuted)
    Mp = _round_up(N, 16)
    flat = jnp.pad(flat, ((0, Mp - N), (0, 0))).astype(jnp.bfloat16)

    lin = params["linear"]
    out = linear_head(flat, lin["w1t"], lin["g1"], lin["bt1"],
                      lin["w2t"], lin["b2"], m_valid=N)
    return out[:N, :output_size]


# --------------------------------- main -------------------------------------

if __name__ == "__main__":
    output_size = 32
    batch = 2

    key = jax.random.PRNGKey(0)
    key, kx = jax.random.split(key)
    x = jax.random.normal(kx, (batch, *INPUT_SIZE), jnp.float32)

    params = init_params(key, output_size)

    fwd = jax.jit(cnn_encoder_forward, static_argnames=("output_size",))
    out = fwd(x, params, output_size=output_size)
    out = jax.block_until_ready(out)

    assert out.shape == (batch, output_size)
    assert bool(jnp.all(jnp.isfinite(out)))
    assert bool(jnp.all(jnp.abs(out) <= 1.0))  # tanh output range
    print("KERNEL_OK")
</pallas_src>

<mosaic_0001>
module attributes {stable_mosaic.version = 11 : i64} {
  func.func @_gemm_bias_leaky_kernel(%arg0: memref<1472x128xbf16, #tpu.memory_space<vmem>>, %arg1: memref<128x128xbf16, #tpu.memory_space<vmem>>, %arg2: memref<1x128xf32, #tpu.memory_space<vmem>>, %arg3: memref<1472x128xf32, #tpu.memory_space<vmem>>) attributes {dimension_semantics = [], scalar_prefetch = 0 : i64, scratch_operands = 0 : i64, tpu.core_type = #tpu.core_type<tc>} {
    %c0 = arith.constant 0 : index
    %c0_0 = arith.constant 0 : index
    %0 = vector.load %arg0[%c0, %c0_0] : memref<1472x128xbf16, #tpu.memory_space<vmem>>, vector<1472x128xbf16>
    %c0_1 = arith.constant 0 : index
    %c0_2 = arith.constant 0 : index
    %1 = vector.load %arg1[%c0_1, %c0_2] : memref<128x128xbf16, #tpu.memory_space<vmem>>, vector<128x128xbf16>
    %cst = arith.constant dense<0.000000e+00> : vector<1472x128xf32>
    %2 = tpu.matmul %0, %1, %cst {dimension_numbers = #tpu.dot_dimension_numbers<[1], [0], [0], [1], [0, 0, 1, 1], [], []>} : vector<1472x128xbf16>, vector<128x128xbf16>, vector<1472x128xf32> -> vector<1472x128xf32>
    %c0_3 = arith.constant 0 : index
    %c0_4 = arith.constant 0 : index
    %3 = vector.load %arg2[%c0_3, %c0_4] : memref<1x128xf32, #tpu.memory_space<vmem>>, vector<1x128xf32>
    %4 = vector.broadcast %3 : vector<1x128xf32> to vector<1472x128xf32>
    %5 = arith.addf %2, %4 : vector<1472x128xf32>
    %cst_5 = arith.constant 0.000000e+00 : f32
    %6 = vector.broadcast %cst_5 : f32 to vector<1472x128xf32>
    %7 = arith.cmpf ogt, %5, %6 : vector<1472x128xf32>
    %cst_6 = arith.constant 2.000000e-01 : f32
    %8 = vector.broadcast %cst_6 : f32 to vector<1472x128xf32>
    %9 = arith.mulf %8, %5 : vector<1472x128xf32>
    %10 = arith.select %7, %5, %9 : vector<1472x128xi1>, vector<1472x128xf32>
    %c0_7 = arith.constant 0 : index
    %c0_8 = arith.constant 0 : index
    %11 = vector.load %arg3[%c0_7, %c0_8] : memref<1472x128xf32, #tpu.memory_space<vmem>>, vector<1472x128xf32>
    tpu.vector_store %arg3[%c0_7, %c0_8], %10 {strides = array<i32>} : memref<1472x128xf32, #tpu.memory_space<vmem>>, vector<1472x128xf32>,
    return
  }
}

module attributes {stable_mosaic.version = 11 : i64} {
  func.func @_gemm_bn_leaky_kernel(%arg0: memref<352x256xbf16, #tpu.memory_space<vmem>>, %arg1: memref<256x128xbf16, #tpu.memory_space<vmem>>, %arg2: memref<1x128xf32, #tpu.memory_space<vmem>>, %arg3: memref<1x128xf32, #tpu.memory_space<vmem>>, %arg4: memref<352x128xf32, #tpu.memory_space<vmem>>) attributes {dimension_semantics = [], scalar_prefetch = 0 : i64, scratch_operands = 0 : i64, tpu.core_type = #tpu.core_type<tc>} {
    %c0 = arith.constant 0 : index
    %c0_0 = arith.constant 0 : index
    %0 = vector.load %arg0[%c0, %c0_0] : memref<352x256xbf16, #tpu.memory_space<vmem>>, vector<352x256xbf16>
    %c0_1 = arith.constant 0 : index
    %c0_2 = arith.constant 0 : index
    %1 = vector.load %arg1[%c0_1, %c0_2] : memref<256x128xbf16, #tpu.memory_space<vmem>>, vector<256x128xbf16>
    %cst = arith.constant dense<0.000000e+00> : vector<352x128xf32>
    %2 = tpu.matmul %0, %1, %cst {dimension_numbers = #tpu.dot_dimension_numbers<[1], [0], [0], [1], [0, 0, 1, 1], [], []>} : vector<352x256xbf16>, vector<256x128xbf16>, vector<352x128xf32> -> vector<352x128xf32>
    %c0_3 = arith.constant 0 : index
    %c0_4 = arith.constant 0 : index
    %3 = vector.load %arg2[%c0_3, %c0_4] : memref<1x128xf32, #tpu.memory_space<vmem>>, vector<1x128xf32>
    %c0_5 = arith.constant 0 : index
    %c0_6 = arith.constant 0 : index
    %4 = vector.load %arg3[%c0_5, %c0_6] : memref<1x128xf32, #tpu.memory_space<vmem>>, vector<1x128xf32>
    %cst_7 = arith.constant dense<0.000000e+00> : vector<128xf32>
    %5 = vector.multi_reduction <add>, %2, %cst_7 [0] : vector<352x128xf32> to vector<128xf32>
    %6 = vector.shape_cast %5 : vector<128xf32> to vector<1x128xf32>
    %7 = arith.mulf %2, %2 : vector<352x128xf32>
    %cst_8 = arith.constant dense<0.000000e+00> : vector<128xf32>
    %8 = vector.multi_reduction <add>, %7, %cst_8 [0] : vector<352x128xf32> to vector<128xf32>
    %9 = vector.shape_cast %8 : vector<128xf32> to vector<1x128xf32>
    %cst_9 = arith.constant 2.958580e-03 : f32
    %10 = vector.broadcast %cst_9 : f32 to vector<1x128xf32>
    %11 = arith.mulf %6, %10 : vector<1x128xf32>
    %cst_10 = arith.constant 2.958580e-03 : f32
    %12 = vector.broadcast %cst_10 : f32 to vector<1x128xf32>
    %13 = arith.mulf %9, %12 : vector<1x128xf32>
    %14 = arith.mulf %11, %11 : vector<1x128xf32>
    %15 = arith.subf %13, %14 : vector<1x128xf32>
    %cst_11 = arith.constant 0.000000e+00 : f32
    %16 = vector.broadcast %cst_11 : f32 to vector<1x128xf32>
    %17 = arith.maximumf %15, %16 : vector<1x128xf32>
    %18 = vector.broadcast %11 : vector<1x128xf32> to vector<352x128xf32>
    %19 = arith.subf %2, %18 : vector<352x128xf32>
    %cst_12 = arith.constant 9.99999974E-6 : f32
    %20 = vector.broadcast %cst_12 : f32 to vector<1x128xf32>
    %21 = arith.addf %17, %20 : vector<1x128xf32>
    %22 = math.rsqrt %21 : vector<1x128xf32>
    %23 = vector.broadcast %22 : vector<1x128xf32> to vector<352x128xf32>
    %24 = arith.mulf %19, %23 : vector<352x128xf32>
    %25 = vector.broadcast %3 : vector<1x128xf32> to vector<352x128xf32>
    %26 = arith.mulf %25, %24 : vector<352x128xf32>
    %27 = vector.broadcast %4 : vector<1x128xf32> to vector<352x128xf32>
    %28 = arith.addf %26, %27 : vector<352x128xf32>
    %cst_13 = arith.constant 0.000000e+00 : f32
    %29 = vector.broadcast %cst_13 : f32 to vector<352x128xf32>
    %30 = arith.cmpf ogt, %28, %29 : vector<352x128xf32>
    %cst_14 = arith.constant 2.000000e-01 : f32
    %31 = vector.broadcast %cst_14 : f32 to vector<352x128xf32>
    %32 = arith.mulf %31, %28 : vector<352x128xf32>
    %33 = arith.select %30, %28, %32 : vector<352x128xi1>, vector<352x128xf32>
    %c0_15 = arith.constant 0 : index
    %c0_16 = arith.constant 0 : index
    %34 = vector.load %arg4[%c0_15, %c0_16] : memref<352x128xf32, #tpu.memory_space<vmem>>, vector<352x128xf32>
    tpu.vector_store %arg4[%c0_15, %c0_16], %33 {strides = array<i32>} : memref<352x128xf32, #tpu.memory_space<vmem>>, vector<352x128xf32>,
    return
  }
}

module attributes {stable_mosaic.version = 11 : i64} {
  func.func @_gemm_bn_leaky_kernel(%arg0: memref<80x512xbf16, #tpu.memory_space<vmem>>, %arg1: memref<512x128xbf16, #tpu.memory_space<vmem>>, %arg2: memref<1x128xf32, #tpu.memory_space<vmem>>, %arg3: memref<1x128xf32, #tpu.memory_space<vmem>>, %arg4: memref<80x128xf32, #tpu.memory_space<vmem>>) attributes {dimension_semantics = [], scalar_prefetch = 0 : i64, scratch_operands = 0 : i64, tpu.core_type = #tpu.core_type<tc>} {
    %c0 = arith.constant 0 : index
    %c0_0 = arith.constant 0 : index
    %0 = vector.load %arg0[%c0, %c0_0] : memref<80x512xbf16, #tpu.memory_space<vmem>>, vector<80x512xbf16>
    %c0_1 = arith.constant 0 : index
    %c0_2 = arith.constant 0 : index
    %1 = vector.load %arg1[%c0_1, %c0_2] : memref<512x128xbf16, #tpu.memory_space<vmem>>, vector<512x128xbf16>
    %cst = arith.constant dense<0.000000e+00> : vector<80x128xf32>
    %2 = tpu.matmul %0, %1, %cst {dimension_numbers = #tpu.dot_dimension_numbers<[1], [0], [0], [1], [0, 0, 1, 1], [], []>} : vector<80x512xbf16>, vector<512x128xbf16>, vector<80x128xf32> -> vector<80x128xf32>
    %c0_3 = arith.constant 0 : index
    %c0_4 = arith.constant 0 : index
    %3 = vector.load %arg2[%c0_3, %c0_4] : memref<1x128xf32, #tpu.memory_space<vmem>>, vector<1x128xf32>
    %c0_5 = arith.constant 0 : index
    %c0_6 = arith.constant 0 : index
    %4 = vector.load %arg3[%c0_5, %c0_6] : memref<1x128xf32, #tpu.memory_space<vmem>>, vector<1x128xf32>
    %cst_7 = arith.constant dense<0.000000e+00> : vector<128xf32>
    %5 = vector.multi_reduction <add>, %2, %cst_7 [0] : vector<80x128xf32> to vector<128xf32>
    %6 = vector.shape_cast %5 : vector<128xf32> to vector<1x128xf32>
    %7 = arith.mulf %2, %2 : vector<80x128xf32>
    %cst_8 = arith.constant dense<0.000000e+00> : vector<128xf32>
    %8 = vector.multi_reduction <add>, %7, %cst_8 [0] : vector<80x128xf32> to vector<128xf32>
    %9 = vector.shape_cast %8 : vector<128xf32> to vector<1x128xf32>
    %cst_9 = arith.constant 0.013888889 : f32
    %10 = vector.broadcast %cst_9 : f32 to vector<1x128xf32>
    %11 = arith.mulf %6, %10 : vector<1x128xf32>
    %cst_10 = arith.constant 0.013888889 : f32
    %12 = vector.broadcast %cst_10 : f32 to vector<1x128xf32>
    %13 = arith.mulf %9, %12 : vector<1x128xf32>
    %14 = arith.mulf %11, %11 : vector<1x128xf32>
    %15 = arith.subf %13, %14 : vector<1x128xf32>
    %cst_11 = arith.constant 0.000000e+00 : f32
    %16 = vector.broadcast %cst_11 : f32 to vector<1x128xf32>
    %17 = arith.maximumf %15, %16 : vector<1x128xf32>
    %18 = vector.broadcast %11 : vector<1x128xf32> to vector<80x128xf32>
    %19 = arith.subf %2, %18 : vector<80x128xf32>
    %cst_12 = arith.constant 9.99999974E-6 : f32
    %20 = vector.broadcast %cst_12 : f32 to vector<1x128xf32>
    %21 = arith.addf %17, %20 : vector<1x128xf32>
    %22 = math.rsqrt %21 : vector<1x128xf32>
    %23 = vector.broadcast %22 : vector<1x128xf32> to vector<80x128xf32>
    %24 = arith.mulf %19, %23 : vector<80x128xf32>
    %25 = vector.broadcast %3 : vector<1x128xf32> to vector<80x128xf32>
    %26 = arith.mulf %25, %24 : vector<80x128xf32>
    %27 = vector.broadcast %4 : vector<1x128xf32> to vector<80x128xf32>
    %28 = arith.addf %26, %27 : vector<80x128xf32>
    %cst_13 = arith.constant 0.000000e+00 : f32
    %29 = vector.broadcast %cst_13 : f32 to vector<80x128xf32>
    %30 = arith.cmpf ogt, %28, %29 : vector<80x128xf32>
    %cst_14 = arith.constant 2.000000e-01 : f32
    %31 = vector.broadcast %cst_14 : f32 to vector<80x128xf32>
    %32 = arith.mulf %31, %28 : vector<80x128xf32>
    %33 = arith.select %30, %28, %32 : vector<80x128xi1>, vector<80x128xf32>
    %c0_15 = arith.constant 0 : index
    %c0_16 = arith.constant 0 : index
    %34 = vector.load %arg4[%c0_15, %c0_16] : memref<80x128xf32, #tpu.memory_space<vmem>>, vector<80x128xf32>
    tpu.vector_store %arg4[%c0_15, %c0_16], %33 {strides = array<i32>} : memref<80x128xf32, #tpu.memory_space<vmem>>, vector<80x128xf32>,
    return
  }
}

module attributes {stable_mosaic.version = 11 : i64} {
  func.func @_gemm_bn_leaky_kernel(%arg0: memref<32x1024xbf16, #tpu.memory_space<vmem>>, %arg1: memref<1024x128xbf16, #tpu.memory_space<vmem>>, %arg2: memref<1x128xf32, #tpu.memory_space<vmem>>, %arg3: memref<1x128xf32, #tpu.memory_space<vmem>>, %arg4: memref<32x128xf32, #tpu.memory_space<vmem>>) attributes {dimension_semantics = [], scalar_prefetch = 0 : i64, scratch_operands = 0 : i64, tpu.core_type = #tpu.core_type<tc>} {
    %c0 = arith.constant 0 : index
    %c0_0 = arith.constant 0 : index
    %0 = vector.load %arg0[%c0, %c0_0] : memref<32x1024xbf16, #tpu.memory_space<vmem>>, vector<32x1024xbf16>
    %c0_1 = arith.constant 0 : index
    %c0_2 = arith.constant 0 : index
    %1 = vector.load %arg1[%c0_1, %c0_2] : memref<1024x128xbf16, #tpu.memory_space<vmem>>, vector<1024x128xbf16>
    %cst = arith.constant dense<0.000000e+00> : vector<32x128xf32>
    %2 = tpu.matmul %0, %1, %cst {dimension_numbers = #tpu.dot_dimension_numbers<[1], [0], [0], [1], [0, 0, 1, 1], [], []>} : vector<32x1024xbf16>, vector<1024x128xbf16>, vector<32x128xf32> -> vector<32x128xf32>
    %c0_3 = arith.constant 0 : index
    %c0_4 = arith.constant 0 : index
    %3 = vector.load %arg2[%c0_3, %c0_4] : memref<1x128xf32, #tpu.memory_space<vmem>>, vector<1x128xf32>
    %c0_5 = arith.constant 0 : index
    %c0_6 = arith.constant 0 : index
    %4 = vector.load %arg3[%c0_5, %c0_6] : memref<1x128xf32, #tpu.memory_space<vmem>>, vector<1x128xf32>
    %cst_7 = arith.constant dense<0.000000e+00> : vector<128xf32>
    %5 = vector.multi_reduction <add>, %2, %cst_7 [0] : vector<32x128xf32> to vector<128xf32>
    %6 = vector.shape_cast %5 : vector<128xf32> to vector<1x128xf32>
    %7 = arith.mulf %2, %2 : vector<32x128xf32>
    %cst_8 = arith.constant dense<0.000000e+00> : vector<128xf32>
    %8 = vector.multi_reduction <add>, %7, %cst_8 [0] : vector<32x128xf32> to vector<128xf32>
    %9 = vector.shape_cast %8 : vector<128xf32> to vector<1x128xf32>
    %cst_9 = arith.constant 0.055555556 : f32
    %10 = vector.broadcast %cst_9 : f32 to vector<1x128xf32>
    %11 = arith.mulf %6, %10 : vector<1x128xf32>
    %cst_10 = arith.constant 0.055555556 : f32
    %12 = vector.broadcast %cst_10 : f32 to vector<1x128xf32>
    %13 = arith.mulf %9, %12 : vector<1x128xf32>
    %14 = arith.mulf %11, %11 : vector<1x128xf32>
    %15 = arith.subf %13, %14 : vector<1x128xf32>
    %cst_11 = arith.constant 0.000000e+00 : f32
    %16 = vector.broadcast %cst_11 : f32 to vector<1x128xf32>
    %17 = arith.maximumf %15, %16 : vector<1x128xf32>
    %18 = vector.broadcast %11 : vector<1x128xf32> to vector<32x128xf32>
    %19 = arith.subf %2, %18 : vector<32x128xf32>
    %cst_12 = arith.constant 9.99999974E-6 : f32
    %20 = vector.broadcast %cst_12 : f32 to vector<1x128xf32>
    %21 = arith.addf %17, %20 : vector<1x128xf32>
    %22 = math.rsqrt %21 : vector<1x128xf32>
    %23 = vector.broadcast %22 : vector<1x128xf32> to vector<32x128xf32>
    %24 = arith.mulf %19, %23 : vector<32x128xf32>
    %25 = vector.broadcast %3 : vector<1x128xf32> to vector<32x128xf32>
    %26 = arith.mulf %25, %24 : vector<32x128xf32>
    %27 = vector.broadcast %4 : vector<1x128xf32> to vector<32x128xf32>
    %28 = arith.addf %26, %27 : vector<32x128xf32>
    %cst_13 = arith.constant 0.000000e+00 : f32
    %29 = vector.broadcast %cst_13 : f32 to vector<32x128xf32>
    %30 = arith.cmpf ogt, %28, %29 : vector<32x128xf32>
    %cst_14 = arith.constant 2.000000e-01 : f32
    %31 = vector.broadcast %cst_14 : f32 to vector<32x128xf32>
    %32 = arith.mulf %31, %28 : vector<32x128xf32>
    %33 = arith.select %30, %28, %32 : vector<32x128xi1>, vector<32x128xf32>
    %c0_15 = arith.constant 0 : index
    %c0_16 = arith.constant 0 : index
    %34 = vector.load %arg4[%c0_15, %c0_16] : memref<32x128xf32, #tpu.memory_space<vmem>>, vector<32x128xf32>
    tpu.vector_store %arg4[%c0_15, %c0_16], %33 {strides = array<i32>} : memref<32x128xf32, #tpu.memory_space<vmem>>, vector<32x128xf32>,
    return
  }
}

module attributes {stable_mosaic.version = 11 : i64} {
  func.func @_gemm_bn_leaky_kernel(%arg0: memref<16x1152xbf16, #tpu.memory_space<vmem>>, %arg1: memref<1152x256xbf16, #tpu.memory_space<vmem>>, %arg2: memref<1x256xf32, #tpu.memory_space<vmem>>, %arg3: memref<1x256xf32, #tpu.memory_space<vmem>>, %arg4: memref<16x256xf32, #tpu.memory_space<vmem>>) attributes {dimension_semantics = [], scalar_prefetch = 0 : i64, scratch_operands = 0 : i64, tpu.core_type = #tpu.core_type<tc>} {
    %c0 = arith.constant 0 : index
    %c0_0 = arith.constant 0 : index
    %0 = vector.load %arg0[%c0, %c0_0] : memref<16x1152xbf16, #tpu.memory_space<vmem>>, vector<16x1152xbf16>
    %c0_1 = arith.constant 0 : index
    %c0_2 = arith.constant 0 : index
    %1 = vector.load %arg1[%c0_1, %c0_2] : memref<1152x256xbf16, #tpu.memory_space<vmem>>, vector<1152x256xbf16>
    %cst = arith.constant dense<0.000000e+00> : vector<16x256xf32>
    %2 = tpu.matmul %0, %1, %cst {dimension_numbers = #tpu.dot_dimension_numbers<[1], [0], [0], [1], [0, 0, 1, 1], [], []>} : vector<16x1152xbf16>, vector<1152x256xbf16>, vector<16x256xf32> -> vector<16x256xf32>
    %c0_3 = arith.constant 0 : index
    %c0_4 = arith.constant 0 : index
    %3 = vector.load %arg2[%c0_3, %c0_4] : memref<1x256xf32, #tpu.memory_space<vmem>>, vector<1x256xf32>
    %c0_5 = arith.constant 0 : index
    %c0_6 = arith.constant 0 : index
    %4 = vector.load %arg3[%c0_5, %c0_6] : memref<1x256xf32, #tpu.memory_space<vmem>>, vector<1x256xf32>
    %cst_7 = arith.constant dense<0.000000e+00> : vector<256xf32>
    %5 = vector.multi_reduction <add>, %2, %cst_7 [0] : vector<16x256xf32> to vector<256xf32>
    %6 = vector.shape_cast %5 : vector<256xf32> to vector<1x256xf32>
    %7 = arith.mulf %2, %2 : vector<16x256xf32>
    %cst_8 = arith.constant dense<0.000000e+00> : vector<256xf32>
    %8 = vector.multi_reduction <add>, %7, %cst_8 [0] : vector<16x256xf32> to vector<256xf32>
    %9 = vector.shape_cast %8 : vector<256xf32> to vector<1x256xf32>
    %cst_9 = arith.constant 1.250000e-01 : f32
    %10 = vector.broadcast %cst_9 : f32 to vector<1x256xf32>
    %11 = arith.mulf %6, %10 : vector<1x256xf32>
    %cst_10 = arith.constant 1.250000e-01 : f32
    %12 = vector.broadcast %cst_10 : f32 to vector<1x256xf32>
    %13 = arith.mulf %9, %12 : vector<1x256xf32>
    %14 = arith.mulf %11, %11 : vector<1x256xf32>
    %15 = arith.subf %13, %14 : vector<1x256xf32>
    %cst_11 = arith.constant 0.000000e+00 : f32
    %16 = vector.broadcast %cst_11 : f32 to vector<1x256xf32>
    %17 = arith.maximumf %15, %16 : vector<1x256xf32>
    %18 = vector.broadcast %11 : vector<1x256xf32> to vector<16x256xf32>
    %19 = arith.subf %2, %18 : vector<16x256xf32>
    %cst_12 = arith.constant 9.99999974E-6 : f32
    %20 = vector.broadcast %cst_12 : f32 to vector<1x256xf32>
    %21 = arith.addf %17, %20 : vector<1x256xf32>
    %22 = math.rsqrt %21 : vector<1x256xf32>
    %23 = vector.broadcast %22 : vector<1x256xf32> to vector<16x256xf32>
    %24 = arith.mulf %19, %23 : vector<16x256xf32>
    %25 = vector.broadcast %3 : vector<1x256xf32> to vector<16x256xf32>
    %26 = arith.mulf %25, %24 : vector<16x256xf32>
    %27 = vector.broadcast %4 : vector<1x256xf32> to vector<16x256xf32>
    %28 = arith.addf %26, %27 : vector<16x256xf32>
    %cst_13 = arith.constant 0.000000e+00 : f32
    %29 = vector.broadcast %cst_13 : f32 to vector<16x256xf32>
    %30 = arith.cmpf ogt, %28, %29 : vector<16x256xf32>
    %cst_14 = arith.constant 2.000000e-01 : f32
    %31 = vector.broadcast %cst_14 : f32 to vector<16x256xf32>
    %32 = arith.mulf %31, %28 : vector<16x256xf32>
    %33 = arith.select %30, %28, %32 : vector<16x256xi1>, vector<16x256xf32>
    %c0_15 = arith.constant 0 : index
    %c0_16 = arith.constant 0 : index
    %34 = vector.load %arg4[%c0_15, %c0_16] : memref<16x256xf32, #tpu.memory_space<vmem>>, vector<16x256xf32>
    tpu.vector_store %arg4[%c0_15, %c0_16], %33 {strides = array<i32>} : memref<16x256xf32, #tpu.memory_space<vmem>>, vector<16x256xf32>,
    return
  }
}

module attributes {stable_mosaic.version = 11 : i64} {
  func.func @_head_kernel(%arg0: memref<16x1024xbf16, #tpu.memory_space<vmem>>, %arg1: memref<1024x1024xbf16, #tpu.memory_space<vmem>>, %arg2: memref<1x1024xf32, #tpu.memory_space<vmem>>, %arg3: memref<1x1024xf32, #tpu.memory_space<vmem>>, %arg4: memref<1024x128xbf16, #tpu.memory_space<vmem>>, %arg5: memref<1x128xf32, #tpu.memory_space<vmem>>, %arg6: memref<16x128xf32, #tpu.memory_space<vmem>>) attributes {dimension_semantics = [], scalar_prefetch = 0 : i64, scratch_operands = 0 : i64, tpu.core_type = #tpu.core_type<tc>} {
    %c0 = arith.constant 0 : index
    %c0_0 = arith.constant 0 : index
    %0 = vector.load %arg0[%c0, %c0_0] : memref<16x1024xbf16, #tpu.memory_space<vmem>>, vector<16x1024xbf16>
    %c0_1 = arith.constant 0 : index
    %c0_2 = arith.constant 0 : index
    %1 = vector.load %arg1[%c0_1, %c0_2] : memref<1024x1024xbf16, #tpu.memory_space<vmem>>, vector<1024x1024xbf16>
    %cst = arith.constant dense<0.000000e+00> : vector<16x1024xf32>
    %2 = tpu.matmul %0, %1, %cst {dimension_numbers = #tpu.dot_dimension_numbers<[1], [0], [0], [1], [0, 0, 1, 1], [], []>} : vector<16x1024xbf16>, vector<1024x1024xbf16>, vector<16x1024xf32> -> vector<16x1024xf32>
    %c0_3 = arith.constant 0 : index
    %c0_4 = arith.constant 0 : index
    %3 = vector.load %arg2[%c0_3, %c0_4] : memref<1x1024xf32, #tpu.memory_space<vmem>>, vector<1x1024xf32>
    %c0_5 = arith.constant 0 : index
    %c0_6 = arith.constant 0 : index
    %4 = vector.load %arg3[%c0_5, %c0_6] : memref<1x1024xf32, #tpu.memory_space<vmem>>, vector<1x1024xf32>
    %cst_7 = arith.constant dense<0.000000e+00> : vector<1024xf32>
    %5 = vector.multi_reduction <add>, %2, %cst_7 [0] : vector<16x1024xf32> to vector<1024xf32>
    %6 = vector.shape_cast %5 : vector<1024xf32> to vector<1x1024xf32>
    %7 = arith.mulf %2, %2 : vector<16x1024xf32>
    %cst_8 = arith.constant dense<0.000000e+00> : vector<1024xf32>
    %8 = vector.multi_reduction <add>, %7, %cst_8 [0] : vector<16x1024xf32> to vector<1024xf32>
    %9 = vector.shape_cast %8 : vector<1024xf32> to vector<1x1024xf32>
    %cst_9 = arith.constant 5.000000e-01 : f32
    %10 = vector.broadcast %cst_9 : f32 to vector<1x1024xf32>
    %11 = arith.mulf %6, %10 : vector<1x1024xf32>
    %cst_10 = arith.constant 5.000000e-01 : f32
    %12 = vector.broadcast %cst_10 : f32 to vector<1x1024xf32>
    %13 = arith.mulf %9, %12 : vector<1x1024xf32>
    %14 = arith.mulf %11, %11 : vector<1x1024xf32>
    %15 = arith.subf %13, %14 : vector<1x1024xf32>
    %cst_11 = arith.constant 0.000000e+00 : f32
    %16 = vector.broadcast %cst_11 : f32 to vector<1x1024xf32>
    %17 = arith.maximumf %15, %16 : vector<1x1024xf32>
    %18 = vector.broadcast %11 : vector<1x1024xf32> to vector<16x1024xf32>
    %19 = arith.subf %2, %18 : vector<16x1024xf32>
    %cst_12 = arith.constant 9.99999974E-6 : f32
    %20 = vector.broadcast %cst_12 : f32 to vector<1x1024xf32>
    %21 = arith.addf %17, %20 : vector<1x1024xf32>
    %22 = math.rsqrt %21 : vector<1x1024xf32>
    %23 = vector.broadcast %22 : vector<1x1024xf32> to vector<16x1024xf32>
    %24 = arith.mulf %19, %23 : vector<16x1024xf32>
    %25 = vector.broadcast %3 : vector<1x1024xf32> to vector<16x1024xf32>
    %26 = arith.mulf %25, %24 : vector<16x1024xf32>
    %27 = vector.broadcast %4 : vector<1x1024xf32> to vector<16x1024xf32>
    %28 = arith.addf %26, %27 : vector<16x1024xf32>
    %cst_13 = arith.constant 0.000000e+00 : f32
    %29 = vector.broadcast %cst_13 : f32 to vector<16x1024xf32>
    %30 = arith.cmpf ogt, %28, %29 : vector<16x1024xf32>
    %cst_14 = arith.constant 2.000000e-01 : f32
    %31 = vector.broadcast %cst_14 : f32 to vector<16x1024xf32>
    %32 = arith.mulf %31, %28 : vector<16x1024xf32>
    %33 = arith.select %30, %28, %32 : vector<16x1024xi1>, vector<16x1024xf32>
    %34 = arith.truncf %33 : vector<16x1024xf32> to vector<16x1024xbf16>
    %c0_15 = arith.constant 0 : index
    %c0_16 = arith.constant 0 : index
    %35 = vector.load %arg4[%c0_15, %c0_16] : memref<1024x128xbf16, #tpu.memory_space<vmem>>, vector<1024x128xbf16>
    %cst_17 = arith.constant dense<0.000000e+00> : vector<16x128xf32>
    %36 = tpu.matmul %34, %35, %cst_17 {dimension_numbers = #tpu.dot_dimension_numbers<[1], [0], [0], [1], [0, 0, 1, 1], [], []>} : vector<16x1024xbf16>, vector<1024x128xbf16>, vector<16x128xf32> -> vector<16x128xf32>
    %c0_18 = arith.constant 0 : index
    %c0_19 = arith.constant 0 : index
    %37 = vector.load %arg5[%c0_18, %c0_19] : memref<1x128xf32, #tpu.memory_space<vmem>>, vector<1x128xf32>
    %38 = vector.broadcast %37 : vector<1x128xf32> to vector<16x128xf32>
    %39 = arith.addf %36, %38 : vector<16x128xf32>
    %40 = math.tanh %39 : vector<16x128xf32>
    %c0_20 = arith.constant 0 : index
    %c0_21 = arith.constant 0 : index
    %41 = vector.load %arg6[%c0_20, %c0_21] : memref<16x128xf32, #tpu.memory_space<vmem>>, vector<16x128xf32>
    tpu.vector_store %arg6[%c0_20, %c0_21], %40 {strides = array<i32>} : memref<16x128xf32, #tpu.memory_space<vmem>>, vector<16x128xf32>,
    return
  }
}

</mosaic_0001>

<llo_original>
// kernel: cnn_encoder_forward.6
$region0: #{cnn_encoder_forward.6}
  #allocation0 [shape = 'u32[]', space=smem, size = 0x4, offset = 0x4, fixed_abs, tag = 'smem constant byte address 0x4 - core index']
  #allocation1 [shape = 'u32[72,128]{1,0:T(1,128)}', space=vmem, size = 0x9000, scoped, tag = 'internal scratch']
  %s0 = inlined_call_operand.vmem [shape: bf16[1472,128], index: 0, kind: input, shape index: {}]
  %s1 = inlined_call_operand.vmem [shape: bf16[128,128], index: 1, kind: input, shape index: {}]
  %s2 = inlined_call_operand.vmem [shape: f32[1,128], index: 2, kind: input, shape index: {}]
  %s3 = inlined_call_operand.vmem [shape: f32[1472,128], index: 3, kind: output, shape index: {}]
  %s4 = sld [smem:[#allocation0]]
  $region22: #{cnn_encoder_forward.6} parent=0
    _
  %s6 = ssub.s32 1, %s4
  %s7 = scalar_select 0, %s6, %s4
  // Predicated region
  $region2: #{cnn_encoder_forward.6} parent=0 // pred_check
    _
  $region3: #{cnn_encoder_forward.6} parent=0 // pred_check_branch
    %9 = sbr.rel (0) target = $region5
  $region4: #{cnn_encoder_forward.6} parent=0 // pred_region
    _
  $region5: #{cnn_encoder_forward.6} parent=0 // pred_fallthru
    _
  // Predicated region
  $region6: #{cnn_encoder_forward.6} parent=0 // pred_check
    _
  $region7: #{cnn_encoder_forward.6} parent=0 // pred_check_branch
    %11 = sbr.rel (0) target = $region9
  $region8: #{cnn_encoder_forward.6} parent=0 // pred_region
    _
  $region9: #{cnn_encoder_forward.6} parent=0 // pred_fallthru
    _
  // Predicated region
  $region10: #{cnn_encoder_forward.6} parent=0 // pred_check
    _
  $region11: #{cnn_encoder_forward.6} parent=0 // pred_check_branch
    %13 = sbr.rel (0) target = $region13
  $region12: #{cnn_encoder_forward.6} parent=0 // pred_region
    _
  $region13: #{cnn_encoder_forward.6} parent=0 // pred_fallthru
    _
  %v14 = vld [vmem:[%s0] sm:$0xf]
  %v15 = vld [vmem:[%s0 + $0x4] sm:$0xf]
  %v16 = vld [vmem:[%s0 + $0x8] sm:$0xf]
  %v17 = vld [vmem:[%s0 + $0xc] sm:$0xf]
  %v18 = vld [vmem:[%s0 + $0x10] sm:$0xf]
  %v19 = vld [vmem:[%s0 + $0x14] sm:$0xf]
  %v20 = vld [vmem:[%s0 + $0x18] sm:$0xf]
  %v21 = vld [vmem:[%s0 + $0x1c] sm:$0xf]
  %v22 = vld [vmem:[%s0 + $0x20] sm:$0xf]
  %v23 = vld [vmem:[%s0 + $0x24] sm:$0xf]
  %v24 = vld [vmem:[%s0 + $0x28] sm:$0xf]
  %v25 = vld [vmem:[%s0 + $0x2c] sm:$0xf]
  %v26 = vld [vmem:[%s0 + $0x30] sm:$0xf]
  %v27 = vld [vmem:[%s0 + $0x34] sm:$0xf]
  %v28 = vld [vmem:[%s0 + $0x38] sm:$0xf]
  %v29 = vld [vmem:[%s0 + $0x3c] sm:$0xf]
  %v30 = vld [vmem:[%s0 + $0x40] sm:$0xf]
  %v31 = vld [vmem:[%s0 + $0x44] sm:$0xf]
  %v32 = vld [vmem:[%s0 + $0x48] sm:$0xf]
  %v33 = vld [vmem:[%s0 + $0x4c] sm:$0xf]
  %v34 = vld [vmem:[%s0 + $0x50] sm:$0xf]
  %v35 = vld [vmem:[%s0 + $0x54] sm:$0xf]
  %v36 = vld [vmem:[%s0 + $0x58] sm:$0xf]
  %v37 = vld [vmem:[%s0 + $0x5c] sm:$0xf]
  %v38 = vld [vmem:[%s0 + $0x60] sm:$0xf]
  %v39 = vld [vmem:[%s0 + $0x64] sm:$0xf]
  %v40 = vld [vmem:[%s0 + $0x68] sm:$0xf]
  %v41 = vld [vmem:[%s0 + $0x6c] sm:$0xf]
  %v42 = vld [vmem:[%s0 + $0x70] sm:$0xf]
  %v43 = vld [vmem:[%s0 + $0x74] sm:$0xf]
  %v44 = vld [vmem:[%s0 + $0x78] sm:$0xf]
  %v45 = vld [vmem:[%s0 + $0x7c] sm:$0xf]
  %v46 = vld [vmem:[%s0 + $0x80] sm:$0xf]
  %v47 = vld [vmem:[%s0 + $0x84] sm:$0xf]
  %v48 = vld [vmem:[%s0 + $0x88] sm:$0xf]
  %v49 = vld [vmem:[%s0 + $0x8c] sm:$0xf]
  %v50 = vld [vmem:[%s0 + $0x90] sm:$0xf]
  %v51 = vld [vmem:[%s0 + $0x94] sm:$0xf]
  %v52 = vld [vmem:[%s0 + $0x98] sm:$0xf]
  %v53 = vld [vmem:[%s0 + $0x9c] sm:$0xf]
  %v54 = vld [vmem:[%s0 + $0xa0] sm:$0xf]
  %v55 = vld [vmem:[%s0 + $0xa4] sm:$0xf]
  %v56 = vld [vmem:[%s0 + $0xa8] sm:$0xf]
  %v57 = vld [vmem:[%s0 + $0xac] sm:$0xf]
  %v58 = vld [vmem:[%s0 + $0xb0] sm:$0xf]
  %v59 = vld [vmem:[%s0 + $0xb4] sm:$0xf]
  %v60 = vld [vmem:[%s0 + $0xb8] sm:$0xf]
  %v61 = vld [vmem:[%s0 + $0xbc] sm:$0xf]
  %v62 = vld [vmem:[%s0 + $0xc0] sm:$0xf]
  %v63 = vld [vmem:[%s0 + $0xc4] sm:$0xf]
  %v64 = vld [vmem:[%s0 + $0xc8] sm:$0xf]
  %v65 = vld [vmem:[%s0 + $0xcc] sm:$0xf]
  %v66 = vld [vmem:[%s0 + $0xd0] sm:$0xf]
  %v67 = vld [vmem:[%s0 + $0xd4] sm:$0xf]
  %v68 = vld [vmem:[%s0 + $0xd8] sm:$0xf]
  %v69 = vld [vmem:[%s0 + $0xdc] sm:$0xf]
  %v70 = vld [vmem:[%s0 + $0xe0] sm:$0xf]
  %v71 = vld [vmem:[%s0 + $0xe4] sm:$0xf]
  %v72 = vld [vmem:[%s0 + $0xe8] sm:$0xf]
  %v73 = vld [vmem:[%s0 + $0xec] sm:$0xf]
  %v74 = vld [vmem:[%s0 + $0xf0] sm:$0xf]
  %v75 = vld [vmem:[%s0 + $0xf4] sm:$0xf]
  %v76 = vld [vmem:[%s0 + $0xf8] sm:$0xf]
  %v77 = vld [vmem:[%s0 + $0xfc] sm:$0xf]
  %v78 = vld [vmem:[%s0 + $0x100] sm:$0xf]
  %v79 = vld [vmem:[%s0 + $0x104] sm:$0xf]
  %v80 = vld [vmem:[%s0 + $0x108] sm:$0xf]
  %v81 = vld [vmem:[%s0 + $0x10c] sm:$0xf]
  %v82 = vld [vmem:[%s0 + $0x110] sm:$0xf]
  %v83 = vld [vmem:[%s0 + $0x114] sm:$0xf]
  %v84 = vld [vmem:[%s0 + $0x118] sm:$0xf]
  %v85 = vld [vmem:[%s0 + $0x11c] sm:$0xf]
  %v86 = vld [vmem:[%s0 + $0x120] sm:$0xf]
  %v87 = vld [vmem:[%s0 + $0x124] sm:$0xf]
  %v88 = vld [vmem:[%s0 + $0x128] sm:$0xf]
  %v89 = vld [vmem:[%s0 + $0x12c] sm:$0xf]
  %v90 = vld [vmem:[%s0 + $0x130] sm:$0xf]
  %v91 = vld [vmem:[%s0 + $0x134] sm:$0xf]
  %v92 = vld [vmem:[%s0 + $0x138] sm:$0xf]
  %v93 = vld [vmem:[%s0 + $0x13c] sm:$0xf]
  %v94 = vld [vmem:[%s0 + $0x140] sm:$0xf]
  %v95 = vld [vmem:[%s0 + $0x144] sm:$0xf]
  %v96 = vld [vmem:[%s0 + $0x148] sm:$0xf]
  %v97 = vld [vmem:[%s0 + $0x14c] sm:$0xf]
  %v98 = vld [vmem:[%s0 + $0x150] sm:$0xf]
  %v99 = vld [vmem:[%s0 + $0x154] sm:$0xf]
  %v100 = vld [vmem:[%s0 + $0x158] sm:$0xf]
  %v101 = vld [vmem:[%s0 + $0x15c] sm:$0xf]
  %v102 = vld [vmem:[%s0 + $0x160] sm:$0xf]
  %v103 = vld [vmem:[%s0 + $0x164] sm:$0xf]
  %v104 = vld [vmem:[%s0 + $0x168] sm:$0xf]
  %v105 = vld [vmem:[%s0 + $0x16c] sm:$0xf]
  %v106 = vld [vmem:[%s0 + $0x170] sm:$0xf]
  %v107 = vld [vmem:[%s0 + $0x174] sm:$0xf]
  %v108 = vld [vmem:[%s0 + $0x178] sm:$0xf]
  %v109 = vld [vmem:[%s0 + $0x17c] sm:$0xf]
  %v110 = vld [vmem:[%s0 + $0x180] sm:$0xf]
  %v111 = vld [vmem:[%s0 + $0x184] sm:$0xf]
  %v112 = vld [vmem:[%s0 + $0x188] sm:$0xf]
  %v113 = vld [vmem:[%s0 + $0x18c] sm:$0xf]
  %v114 = vld [vmem:[%s0 + $0x190] sm:$0xf]
  %v115 = vld [vmem:[%s0 + $0x194] sm:$0xf]
  %v116 = vld [vmem:[%s0 + $0x198] sm:$0xf]
  %v117 = vld [vmem:[%s0 + $0x19c] sm:$0xf]
  %v118 = vld [vmem:[%s0 + $0x1a0] sm:$0xf]
  %v119 = vld [vmem:[%s0 + $0x1a4] sm:$0xf]
  %v120 = vld [vmem:[%s0 + $0x1a8] sm:$0xf]
  %v121 = vld [vmem:[%s0 + $0x1ac] sm:$0xf]
  %v122 = vld [vmem:[%s0 + $0x1b0] sm:$0xf]
  %v123 = vld [vmem:[%s0 + $0x1b4] sm:$0xf]
  %v124 = vld [vmem:[%s0 + $0x1b8] sm:$0xf]
  %v125 = vld [vmem:[%s0 + $0x1bc] sm:$0xf]
  %v126 = vld [vmem:[%s0 + $0x1c0] sm:$0xf]
  %v127 = vld [vmem:[%s0 + $0x1c4] sm:$0xf]
  %v128 = vld [vmem:[%s0 + $0x1c8] sm:$0xf]
  %v129 = vld [vmem:[%s0 + $0x1cc] sm:$0xf]
  %v130 = vld [vmem:[%s0 + $0x1d0] sm:$0xf]
  %v131 = vld [vmem:[%s0 + $0x1d4] sm:$0xf]
  %v132 = vld [vmem:[%s0 + $0x1d8] sm:$0xf]
  %v133 = vld [vmem:[%s0 + $0x1dc] sm:$0xf]
  %v134 = vld [vmem:[%s0 + $0x1e0] sm:$0xf]
  %v135 = vld [vmem:[%s0 + $0x1e4] sm:$0xf]
  %v136 = vld [vmem:[%s0 + $0x1e8] sm:$0xf]
  %v137 = vld [vmem:[%s0 + $0x1ec] sm:$0xf]
  %v138 = vld [vmem:[%s0 + $0x1f0] sm:$0xf]
  %v139 = vld [vmem:[%s0 + $0x1f4] sm:$0xf]
  %v140 = vld [vmem:[%s0 + $0x1f8] sm:$0xf]
  %v141 = vld [vmem:[%s0 + $0x1fc] sm:$0xf]
  %v142 = vld [vmem:[%s0 + $0x200] sm:$0xf]
  %v143 = vld [vmem:[%s0 + $0x204] sm:$0xf]
  %v144 = vld [vmem:[%s0 + $0x208] sm:$0xf]
  %v145 = vld [vmem:[%s0 + $0x20c] sm:$0xf]
  %v146 = vld [vmem:[%s0 + $0x210] sm:$0xf]
  %v147 = vld [vmem:[%s0 + $0x214] sm:$0xf]
  %v148 = vld [vmem:[%s0 + $0x218] sm:$0xf]
  %v149 = vld [vmem:[%s0 + $0x21c] sm:$0xf]
  %v150 = vld [vmem:[%s0 + $0x220] sm:$0xf]
  %v151 = vld [vmem:[%s0 + $0x224] sm:$0xf]
  %v152 = vld [vmem:[%s0 + $0x228] sm:$0xf]
  %v153 = vld [vmem:[%s0 + $0x22c] sm:$0xf]
  %v154 = vld [vmem:[%s0 + $0x230] sm:$0xf]
  %v155 = vld [vmem:[%s0 + $0x234] sm:$0xf]
  %v156 = vld [vmem:[%s0 + $0x238] sm:$0xf]
  %v157 = vld [vmem:[%s0 + $0x23c] sm:$0xf]
  %v158 = vld [vmem:[%s0 + $0x240] sm:$0xf]
  %v159 = vld [vmem:[%s0 + $0x244] sm:$0xf]
  %v160 = vld [vmem:[%s0 + $0x248] sm:$0xf]
  %v161 = vld [vmem:[%s0 + $0x24c] sm:$0xf]
  %v162 = vld [vmem:[%s0 + $0x250] sm:$0xf]
  %v163 = vld [vmem:[%s0 + $0x254] sm:$0xf]
  %v164 = vld [vmem:[%s0 + $0x258] sm:$0xf]
  %v165 = vld [vmem:[%s0 + $0x25c] sm:$0xf]
  %v166 = vld [vmem:[%s0 + $0x260] sm:$0xf]
  %v167 = vld [vmem:[%s0 + $0x264] sm:$0xf]
  %v168 = vld [vmem:[%s0 + $0x268] sm:$0xf]
  %v169 = vld [vmem:[%s0 + $0x26c] sm:$0xf]
  %v170 = vld [vmem:[%s0 + $0x270] sm:$0xf]
  %v171 = vld [vmem:[%s0 + $0x274] sm:$0xf]
  %v172 = vld [vmem:[%s0 + $0x278] sm:$0xf]
  %v173 = vld [vmem:[%s0 + $0x27c] sm:$0xf]
  %v174 = vld [vmem:[%s0 + $0x280] sm:$0xf]
  %v175 = vld [vmem:[%s0 + $0x284] sm:$0xf]
  %v176 = vld [vmem:[%s0 + $0x288] sm:$0xf]
  %v177 = vld [vmem:[%s0 + $0x28c] sm:$0xf]
  %v178 = vld [vmem:[%s0 + $0x290] sm:$0xf]
  %v179 = vld [vmem:[%s0 + $0x294] sm:$0xf]
  %v180 = vld [vmem:[%s0 + $0x298] sm:$0xf]
  %v181 = vld [vmem:[%s0 + $0x29c] sm:$0xf]
  %v182 = vld [vmem:[%s0 + $0x2a0] sm:$0xf]
  %v183 = vld [vmem:[%s0 + $0x2a4] sm:$0xf]
  %v184 = vld [vmem:[%s0 + $0x2a8] sm:$0xf]
  %v185 = vld [vmem:[%s0 + $0x2ac] sm:$0xf]
  %v186 = vld [vmem:[%s0 + $0x2b0] sm:$0xf]
  %v187 = vld [vmem:[%s0 + $0x2b4] sm:$0xf]
  %v188 = vld [vmem:[%s0 + $0x2b8] sm:$0xf]
  %v189 = vld [vmem:[%s0 + $0x2bc] sm:$0xf]
  %v190 = vld [vmem:[%s0 + $0x2c0] sm:$0xf]
  %v191 = vld [vmem:[%s0 + $0x2c4] sm:$0xf]
  %v192 = vld [vmem:[%s0 + $0x2c8] sm:$0xf]
  %v193 = vld [vmem:[%s0 + $0x2cc] sm:$0xf]
  %v194 = vld [vmem:[%s0 + $0x2d0] sm:$0xf]
  %v195 = vld [vmem:[%s0 + $0x2d4] sm:$0xf]
  %v196 = vld [vmem:[%s0 + $0x2d8] sm:$0xf]
  %v197 = vld [vmem:[%s0 + $0x2dc] sm:$0xf]
  %v198 = vld [vmem:[%s1] sm:$0xf]
  %v199 = vld [vmem:[%s1 + $0x4] sm:$0xf]
  %v200 = vld [vmem:[%s1 + $0x8] sm:$0xf]
  %v201 = vld [vmem:[%s1 + $0xc] sm:$0xf]
  %v202 = vld [vmem:[%s1 + $0x10] sm:$0xf]
  %v203 = vld [vmem:[%s1 + $0x14] sm:$0xf]
  %v204 = vld [vmem:[%s1 + $0x18] sm:$0xf]
  %v205 = vld [vmem:[%s1 + $0x1c] sm:$0xf]
  %v206 = vld [vmem:[%s1 + $0x20] sm:$0xf]
  %v207 = vld [vmem:[%s1 + $0x24] sm:$0xf]
  %v208 = vld [vmem:[%s1 + $0x28] sm:$0xf]
  %v209 = vld [vmem:[%s1 + $0x2c] sm:$0xf]
  %v210 = vld [vmem:[%s1 + $0x30] sm:$0xf]
  %v211 = vld [vmem:[%s1 + $0x34] sm:$0xf]
  %v212 = vld [vmem:[%s1 + $0x38] sm:$0xf]
  %v213 = vld [vmem:[%s1 + $0x3c] sm:$0xf]
  %v214 = vld [vmem:[%s2] sm:$0x1]
  %v216 = vperm.slane %v214, 0
  %v402 = vunpack.c.l.b16 %v14
  %v403 = vunpack.c.l.b16 %v15
  %v404 = vunpack.c.l.b16 %v16
  %v405 = vunpack.c.l.b16 %v17
  %v406 = vunpack.c.l.b16 %v18
  %v407 = vunpack.c.l.b16 %v19
  %v408 = vunpack.c.l.b16 %v20
  %v409 = vunpack.c.l.b16 %v21
  %v410 = vunpack.c.l.b16 %v22
  %v411 = vunpack.c.l.b16 %v23
  %v412 = vunpack.c.l.b16 %v24
  %v413 = vunpack.c.l.b16 %v25
  %v414 = vunpack.c.l.b16 %v26
  %v415 = vunpack.c.l.b16 %v27
  %v416 = vunpack.c.l.b16 %v28
  %v417 = vunpack.c.l.b16 %v29
  %v418 = vunpack.c.l.b16 %v30
  %v419 = vunpack.c.l.b16 %v31
  %v420 = vunpack.c.l.b16 %v32
  %v421 = vunpack.c.l.b16 %v33
  %v422 = vunpack.c.l.b16 %v34
  %v423 = vunpack.c.l.b16 %v35
  %v424 = vunpack.c.l.b16 %v36
  %v425 = vunpack.c.l.b16 %v37
  %v426 = vunpack.c.l.b16 %v38
  %v427 = vunpack.c.l.b16 %v39
  %v428 = vunpack.c.l.b16 %v40
  %v429 = vunpack.c.l.b16 %v41
  %v430 = vunpack.c.l.b16 %v42
  %v431 = vunpack.c.l.b16 %v43
  %v432 = vunpack.c.l.b16 %v44
  %v433 = vunpack.c.l.b16 %v45
  %v434 = vunpack.c.l.b16 %v46
  %v435 = vunpack.c.l.b16 %v47
  %v436 = vunpack.c.l.b16 %v48
  %v437 = vunpack.c.l.b16 %v49
  %v438 = vunpack.c.l.b16 %v50
  %v439 = vunpack.c.l.b16 %v51
  %v440 = vunpack.c.l.b16 %v52
  %v441 = vunpack.c.l.b16 %v53
  %v442 = vunpack.c.l.b16 %v54
  %v443 = vunpack.c.l.b16 %v55
  %v444 = vunpack.c.l.b16 %v56
  %v445 = vunpack.c.l.b16 %v57
  %v446 = vunpack.c.l.b16 %v58
  %v447 = vunpack.c.l.b16 %v59
  %v448 = vunpack.c.l.b16 %v60
  %v449 = vunpack.c.l.b16 %v61
  %v450 = vunpack.c.l.b16 %v62
  %v451 = vunpack.c.l.b16 %v63
  %v452 = vunpack.c.l.b16 %v64
  %v453 = vunpack.c.l.b16 %v65
  %v454 = vunpack.c.l.b16 %v66
  %v455 = vunpack.c.l.b16 %v67
  %v456 = vunpack.c.l.b16 %v68
  %v457 = vunpack.c.l.b16 %v69
  %v458 = vunpack.c.l.b16 %v70
  %v459 = vunpack.c.l.b16 %v71
  %v460 = vunpack.c.l.b16 %v72
  %v461 = vunpack.c.l.b16 %v73
  %v462 = vunpack.c.l.b16 %v74
  %v463 = vunpack.c.l.b16 %v75
  %v464 = vunpack.c.l.b16 %v76
  %v465 = vunpack.c.l.b16 %v77
  %v466 = vunpack.c.l.b16 %v78
  %v467 = vunpack.c.l.b16 %v79
  %v468 = vunpack.c.l.b16 %v80
  %v469 = vunpack.c.l.b16 %v81
  %v470 = vunpack.c.l.b16 %v82
  %v471 = vunpack.c.l.b16 %v83
  %v472 = vunpack.c.l.b16 %v84
  %v473 = vunpack.c.l.b16 %v85
  %v474 = vunpack.c.l.b16 %v86
  %v475 = vunpack.c.l.b16 %v87
  %v476 = vunpack.c.l.b16 %v88
  %v477 = vunpack.c.l.b16 %v89
  %v478 = vunpack.c.l.b16 %v90
  %v479 = vunpack.c.l.b16 %v91
  %v480 = vunpack.c.l.b16 %v92
  %v481 = vunpack.c.l.b16 %v93
  %v482 = vunpack.c.l.b16 %v94
  %v483 = vunpack.c.l.b16 %v95
  %v484 = vunpack.c.l.b16 %v96
  %v485 = vunpack.c.l.b16 %v97
  %v486 = vunpack.c.l.b16 %v98
  %v487 = vunpack.c.l.b16 %v99
  %v488 = vunpack.c.l.b16 %v100
  %v489 = vunpack.c.l.b16 %v101
  %v490 = vunpack.c.l.b16 %v102
  %v491 = vunpack.c.l.b16 %v103
  %v492 = vunpack.c.l.b16 %v104
  %v493 = vunpack.c.l.b16 %v105
  %v494 = vunpack.c.l.b16 %v106
  %v495 = vunpack.c.l.b16 %v107
  %v496 = vunpack.c.l.b16 %v108
  %v497 = vunpack.c.l.b16 %v109
  %v498 = vunpack.c.l.b16 %v110
  %v499 = vunpack.c.l.b16 %v111
  %v500 = vunpack.c.l.b16 %v112
  %v501 = vunpack.c.l.b16 %v113
  %v502 = vunpack.c.l.b16 %v114
  %v503 = vunpack.c.l.b16 %v115
  %v504 = vunpack.c.l.b16 %v116
  %v505 = vunpack.c.l.b16 %v117
  %v506 = vunpack.c.l.b16 %v118
  %v507 = vunpack.c.l.b16 %v119
  %v508 = vunpack.c.l.b16 %v120
  %v509 = vunpack.c.l.b16 %v121
  %v510 = vunpack.c.l.b16 %v122
  %v511 = vunpack.c.l.b16 %v123
  %v512 = vunpack.c.l.b16 %v124
  %v513 = vunpack.c.l.b16 %v125
  %v514 = vunpack.c.l.b16 %v126
  %v515 = vunpack.c.l.b16 %v127
  %v516 = vunpack.c.l.b16 %v128
  %v517 = vunpack.c.l.b16 %v129
  %v518 = vunpack.c.l.b16 %v130
  %v519 = vunpack.c.l.b16 %v131
  %v520 = vunpack.c.l.b16 %v132
  %v521 = vunpack.c.l.b16 %v133
  %v522 = vunpack.c.l.b16 %v134
  %v523 = vunpack.c.l.b16 %v135
  %v524 = vunpack.c.l.b16 %v136
  %v525 = vunpack.c.l.b16 %v137
  %v526 = vunpack.c.l.b16 %v138
  %v527 = vunpack.c.l.b16 %v139
  %v528 = vunpack.c.l.b16 %v140
  %v529 = vunpack.c.l.b16 %v141
  %v530 = vunpack.c.l.b16 %v142
  %v531 = vunpack.c.l.b16 %v143
  %v532 = vunpack.c.l.b16 %v144
  %v533 = vunpack.c.l.b16 %v145
  %v534 = vunpack.c.l.b16 %v146
  %v535 = vunpack.c.l.b16 %v147
  %v536 = vunpack.c.l.b16 %v148
  %v537 = vunpack.c.l.b16 %v149
  %v538 = vunpack.c.l.b16 %v150
  %v539 = vunpack.c.l.b16 %v151
  %v540 = vunpack.c.l.b16 %v152
  %v541 = vunpack.c.l.b16 %v153
  %v542 = vunpack.c.l.b16 %v154
  %v543 = vunpack.c.l.b16 %v155
  %v544 = vunpack.c.l.b16 %v156
  %v545 = vunpack.c.l.b16 %v157
  %v546 = vunpack.c.l.b16 %v158
  %v547 = vunpack.c.l.b16 %v159
  %v548 = vunpack.c.l.b16 %v160
  %v549 = vunpack.c.l.b16 %v161
  %v550 = vunpack.c.l.b16 %v162
  %v551 = vunpack.c.l.b16 %v163
  %v552 = vunpack.c.l.b16 %v164
  %v553 = vunpack.c.l.b16 %v165
  %v554 = vunpack.c.l.b16 %v166
  %v555 = vunpack.c.l.b16 %v167
  %v556 = vunpack.c.l.b16 %v168
  %v557 = vunpack.c.l.b16 %v169
  %v558 = vunpack.c.l.b16 %v170
  %v559 = vunpack.c.l.b16 %v171
  %v560 = vunpack.c.l.b16 %v172
  %v561 = vunpack.c.l.b16 %v173
  %v562 = vunpack.c.l.b16 %v174
  %v563 = vunpack.c.l.b16 %v175
  %v564 = vunpack.c.l.b16 %v176
  %v565 = vunpack.c.l.b16 %v177
  %v566 = vunpack.c.l.b16 %v178
  %v567 = vunpack.c.l.b16 %v179
  %v568 = vunpack.c.l.b16 %v180
  %v569 = vunpack.c.l.b16 %v181
  %v570 = vunpack.c.l.b16 %v182
  %v571 = vunpack.c.l.b16 %v183
  %v572 = vunpack.c.l.b16 %v184
  %v573 = vunpack.c.l.b16 %v185
  %v574 = vunpack.c.l.b16 %v186
  %v575 = vunpack.c.l.b16 %v187
  %v576 = vunpack.c.l.b16 %v188
  %v577 = vunpack.c.l.b16 %v189
  %v578 = vunpack.c.l.b16 %v190
  %v579 = vunpack.c.l.b16 %v191
  %v580 = vunpack.c.l.b16 %v192
  %v581 = vunpack.c.l.b16 %v193
  %v582 = vunpack.c.l.b16 %v194
  %v583 = vunpack.c.l.b16 %v195
  %v584 = vunpack.c.l.b16 %v196
  %v585 = vunpack.c.l.b16 %v197
  %v586 = vpack.c.b16 %v403, %v402
  %v587 = vpack.c.b16 %v405, %v404
  %v588 = vpack.c.b16 %v407, %v406
  %v589 = vpack.c.b16 %v409, %v408
  %v590 = vpack.c.b16 %v411, %v410
  %v591 = vpack.c.b16 %v413, %v412
  %v592 = vpack.c.b16 %v415, %v414
  %v593 = vpack.c.b16 %v417, %v416
  %v594 = vpack.c.b16 %v419, %v418
  %v595 = vpack.c.b16 %v421, %v420
  %v596 = vpack.c.b16 %v423, %v422
  %v597 = vpack.c.b16 %v425, %v424
  %v598 = vpack.c.b16 %v427, %v426
  %v599 = vpack.c.b16 %v429, %v428
  %v600 = vpack.c.b16 %v431, %v430
  %v601 = vpack.c.b16 %v433, %v432
  %v602 = vpack.c.b16 %v435, %v434
  %v603 = vpack.c.b16 %v437, %v436
  %v604 = vpack.c.b16 %v439, %v438
  %v605 = vpack.c.b16 %v441, %v440
  %v606 = vpack.c.b16 %v443, %v442
  %v607 = vpack.c.b16 %v445, %v444
  %v608 = vpack.c.b16 %v447, %v446
  %v609 = vpack.c.b16 %v449, %v448
  %v610 = vpack.c.b16 %v451, %v450
  %v611 = vpack.c.b16 %v453, %v452
  %v612 = vpack.c.b16 %v455, %v454
  %v613 = vpack.c.b16 %v457, %v456
  %v614 = vpack.c.b16 %v459, %v458
  %v615 = vpack.c.b16 %v461, %v460
  %v616 = vpack.c.b16 %v463, %v462
  %v617 = vpack.c.b16 %v465, %v464
  %v618 = vpack.c.b16 %v467, %v466
  %v619 = vpack.c.b16 %v469, %v468
  %v620 = vpack.c.b16 %v471, %v470
  %v621 = vpack.c.b16 %v473, %v472
  %v622 = vpack.c.b16 %v475, %v474
  %v623 = vpack.c.b16 %v477, %v476
  %v624 = vpack.c.b16 %v479, %v478
  %v625 = vpack.c.b16 %v481, %v480
  %v626 = vpack.c.b16 %v483, %v482
  %v627 = vpack.c.b16 %v485, %v484
  %v628 = vpack.c.b16 %v487, %v486
  %v629 = vpack.c.b16 %v489, %v488
  %v630 = vpack.c.b16 %v491, %v490
  %v631 = vpack.c.b16 %v493, %v492
  %v632 = vpack.c.b16 %v495, %v494
  %v633 = vpack.c.b16 %v497, %v496
  %v634 = vpack.c.b16 %v499, %v498
  %v635 = vpack.c.b16 %v501, %v500
  %v636 = vpack.c.b16 %v503, %v502
  %v637 = vpack.c.b16 %v505, %v504
  %v638 = vpack.c.b16 %v507, %v506
  %v639 = vpack.c.b16 %v509, %v508
  %v640 = vpack.c.b16 %v511, %v510
  %v641 = vpack.c.b16 %v513, %v512
  %v642 = vpack.c.b16 %v515, %v514
  %v643 = vpack.c.b16 %v517, %v516
  %v644 = vpack.c.b16 %v519, %v518
  %v645 = vpack.c.b16 %v521, %v520
  %v646 = vpack.c.b16 %v523, %v522
  %v647 = vpack.c.b16 %v525, %v524
  %v648 = vpack.c.b16 %v527, %v526
  %v649 = vpack.c.b16 %v529, %v528
  %v650 = vpack.c.b16 %v531, %v530
  %v651 = vpack.c.b16 %v533, %v532
  %v652 = vpack.c.b16 %v535, %v534
  %v653 = vpack.c.b16 %v537, %v536
  %v654 = vpack.c.b16 %v539, %v538
  %v655 = vpack.c.b16 %v541, %v540
  %v656 = vpack.c.b16 %v543, %v542
  %v657 = vpack.c.b16 %v545, %v544
  %v658 = vpack.c.b16 %v547, %v546
  %v659 = vpack.c.b16 %v549, %v548
  %v660 = vpack.c.b16 %v551, %v550
  %v661 = vpack.c.b16 %v553, %v552
  %v662 = vpack.c.b16 %v555, %v554
  %v663 = vpack.c.b16 %v557, %v556
  %v664 = vpack.c.b16 %v559, %v558
  %v665 = vpack.c.b16 %v561, %v560
  %v666 = vpack.c.b16 %v563, %v562
  %v667 = vpack.c.b16 %v565, %v564
  %v668 = vpack.c.b16 %v567, %v566
  %v669 = vpack.c.b16 %v569, %v568
  %v670 = vpack.c.b16 %v571, %v570
  %v671 = vpack.c.b16 %v573, %v572
  %v672 = vpack.c.b16 %v575, %v574
  %v673 = vpack.c.b16 %v577, %v576
  %v674 = vpack.c.b16 %v579, %v578
  %v675 = vpack.c.b16 %v581, %v580
  %v676 = vpack.c.b16 %v583, %v582
  %v677 = vpack.c.b16 %v585, %v584
  %v786 = vunpack.c.l.b16 %v198
  %v787 = vunpack.c.l.b16 %v199
  %v788 = vunpack.c.l.b16 %v200
  %v789 = vunpack.c.l.b16 %v201
  %v790 = vunpack.c.l.b16 %v202
  %v791 = vunpack.c.l.b16 %v203
  %v792 = vunpack.c.l.b16 %v204
  %v793 = vunpack.c.l.b16 %v205
  %v794 = vunpack.c.l.b16 %v206
  %v795 = vunpack.c.l.b16 %v207
  %v796 = vunpack.c.l.b16 %v208
  %v797 = vunpack.c.l.b16 %v209
  %v798 = vunpack.c.l.b16 %v210
  %v799 = vunpack.c.l.b16 %v211
  %v800 = vunpack.c.l.b16 %v212
  %v801 = vunpack.c.l.b16 %v213
  %v802 = vpack.c.b16 %v787, %v786
  %v803 = vpack.c.b16 %v789, %v788
  %v804 = vpack.c.b16 %v791, %v790
  %v805 = vpack.c.b16 %v793, %v792
  %v806 = vpack.c.b16 %v795, %v794
  %v807 = vpack.c.b16 %v797, %v796
  %v808 = vpack.c.b16 %v799, %v798
  %v809 = vpack.c.b16 %v801, %v800
  %818 = vmatpush.bf16.msra.mxu0 %v809
  %819 = vmatpush.bf16.msra.mxu0 %v808
  %820 = vmatpush.bf16.msra.mxu0 %v807
  %821 = vmatpush.bf16.msra.mxu0 %v806
  %822 = vmatpush.bf16.msra.mxu0 %v805
  %823 = vmatpush.bf16.msra.mxu0 %v804
  %824 = vmatpush.bf16.msra.mxu0 %v803
  %825 = vmatpush.bf16.msra.mxu0 %v802
  %826 = vmatmul.bf16.gmra.mxu0 %v586
  %v827 = vpop.f32.mrf.mxu0
  %v828 = vadd.f32 %v216, %v827
  %v829 = vpop.f32.mrf.mxu0
  %v830 = vadd.f32 %v216, %v829
  %831 = vmatmul.bf16.gmra.mxu0 %v587
  %v832 = vpop.f32.mrf.mxu0
  %v833 = vadd.f32 %v216, %v832
  %v834 = vpop.f32.mrf.mxu0
  %v835 = vadd.f32 %v216, %v834
  %836 = vmatmul.bf16.gmra.mxu0 %v588
  %v837 = vpop.f32.mrf.mxu0
  %v838 = vadd.f32 %v216, %v837
  %v839 = vpop.f32.mrf.mxu0
  %v840 = vadd.f32 %v216, %v839
  %841 = vmatmul.bf16.gmra.mxu0 %v589
  %v842 = vpop.f32.mrf.mxu0
  %v843 = vadd.f32 %v216, %v842
  %v844 = vpop.f32.mrf.mxu0
  %v845 = vadd.f32 %v216, %v844
  %846 = vmatmul.bf16.gmra.mxu0 %v590
  %v847 = vpop.f32.mrf.mxu0
  %v848 = vadd.f32 %v216, %v847
  %v849 = vpop.f32.mrf.mxu0
  %v850 = vadd.f32 %v216, %v849
  %851 = vmatmul.bf16.gmra.mxu0 %v591
  %v852 = vpop.f32.mrf.mxu0
  %v853 = vadd.f32 %v216, %v852
  %v854 = vpop.f32.mrf.mxu0
  %v855 = vadd.f32 %v216, %v854
  %856 = vmatmul.bf16.gmra.mxu0 %v592
  %v857 = vpop.f32.mrf.mxu0
  %v858 = vadd.f32 %v216, %v857
  %v859 = vpop.f32.mrf.mxu0
  %v860 = vadd.f32 %v216, %v859
  %861 = vmatmul.bf16.gmra.mxu0 %v593
  %v862 = vpop.f32.mrf.mxu0
  %v863 = vadd.f32 %v216, %v862
  %v864 = vpop.f32.mrf.mxu0
  %v865 = vadd.f32 %v216, %v864
  %866 = vmatmul.bf16.gmra.mxu0 %v594
  %v867 = vpop.f32.mrf.mxu0
  %v868 = vadd.f32 %v216, %v867
  %v869 = vpop.f32.mrf.mxu0
  %v870 = vadd.f32 %v216, %v869
  %871 = vmatmul.bf16.gmra.mxu0 %v595
  %v872 = vpop.f32.mrf.mxu0
  %v873 = vadd.f32 %v216, %v872
  %v874 = vpop.f32.mrf.mxu0
  %v875 = vadd.f32 %v216, %v874
  %876 = vmatmul.bf16.gmra.mxu0 %v596
  %v877 = vpop.f32.mrf.mxu0
  %v878 = vadd.f32 %v216, %v877
  %v879 = vpop.f32.mrf.mxu0
  %v880 = vadd.f32 %v216, %v879
  %881 = vmatmul.bf16.gmra.mxu0 %v597
  %v882 = vpop.f32.mrf.mxu0
  %v883 = vadd.f32 %v216, %v882
  %v884 = vpop.f32.mrf.mxu0
  %v885 = vadd.f32 %v216, %v884
  %886 = vmatmul.bf16.gmra.mxu0 %v598
  %v887 = vpop.f32.mrf.mxu0
  %v888 = vadd.f32 %v216, %v887
  %v889 = vpop.f32.mrf.mxu0
  %v890 = vadd.f32 %v216, %v889
  %891 = vmatmul.bf16.gmra.mxu0 %v599
  %v892 = vpop.f32.mrf.mxu0
  %v893 = vadd.f32 %v216, %v892
  %v894 = vpop.f32.mrf.mxu0
  %v895 = vadd.f32 %v216, %v894
  %896 = vmatmul.bf16.gmra.mxu0 %v600
  %v897 = vpop.f32.mrf.mxu0
  %v898 = vadd.f32 %v216, %v897
  %v899 = vpop.f32.mrf.mxu0
  %v900 = vadd.f32 %v216, %v899
  %901 = vmatmul.bf16.gmra.mxu0 %v601
  %v902 = vpop.f32.mrf.mxu0
  %v903 = vadd.f32 %v216, %v902
  %v904 = vpop.f32.mrf.mxu0
  %v905 = vadd.f32 %v216, %v904
  %906 = vmatmul.bf16.gmra.mxu0 %v602
  %v907 = vpop.f32.mrf.mxu0
  %v908 = vadd.f32 %v216, %v907
  %v909 = vpop.f32.mrf.mxu0
  %v910 = vadd.f32 %v216, %v909
  %911 = vmatmul.bf16.gmra.mxu0 %v603
  %v912 = vpop.f32.mrf.mxu0
  %v913 = vadd.f32 %v216, %v912
  %v914 = vpop.f32.mrf.mxu0
  %v915 = vadd.f32 %v216, %v914
  %916 = vmatmul.bf16.gmra.mxu0 %v604
  %v917 = vpop.f32.mrf.mxu0
  %v918 = vadd.f32 %v216, %v917
  %v919 = vpop.f32.mrf.mxu0
  %v920 = vadd.f32 %v216, %v919
  %921 = vmatmul.bf16.gmra.mxu0 %v605
  %v922 = vpop.f32.mrf.mxu0
  %v923 = vadd.f32 %v216, %v922
  %v924 = vpop.f32.mrf.mxu0
  %v925 = vadd.f32 %v216, %v924
  %926 = vmatmul.bf16.gmra.mxu0 %v606
  %v927 = vpop.f32.mrf.mxu0
  %v928 = vadd.f32 %v216, %v927
  %v929 = vpop.f32.mrf.mxu0
  %v930 = vadd.f32 %v216, %v929
  %931 = vmatmul.bf16.gmra.mxu0 %v607
  %v932 = vpop.f32.mrf.mxu0
  %v933 = vadd.f32 %v216, %v932
  %v934 = vpop.f32.mrf.mxu0
  %v935 = vadd.f32 %v216, %v934
  %936 = vmatmul.bf16.gmra.mxu0 %v608
  %v937 = vpop.f32.mrf.mxu0
  %v938 = vadd.f32 %v216, %v937
  %v939 = vpop.f32.mrf.mxu0
  %v940 = vadd.f32 %v216, %v939
  %941 = vmatmul.bf16.gmra.mxu0 %v609
  %v942 = vpop.f32.mrf.mxu0
  %v943 = vadd.f32 %v216, %v942
  %v944 = vpop.f32.mrf.mxu0
  %v945 = vadd.f32 %v216, %v944
  %946 = vmatmul.bf16.gmra.mxu0 %v610
  %v947 = vpop.f32.mrf.mxu0
  %v948 = vadd.f32 %v216, %v947
  %v949 = vpop.f32.mrf.mxu0
  %v950 = vadd.f32 %v216, %v949
  %951 = vmatmul.bf16.gmra.mxu0 %v611
  %v952 = vpop.f32.mrf.mxu0
  %v953 = vadd.f32 %v216, %v952
  %v954 = vpop.f32.mrf.mxu0
  %v955 = vadd.f32 %v216, %v954
  %956 = vmatmul.bf16.gmra.mxu0 %v612
  %v957 = vpop.f32.mrf.mxu0
  %v958 = vadd.f32 %v216, %v957
  %v959 = vpop.f32.mrf.mxu0
  %v960 = vadd.f32 %v216, %v959
  %961 = vmatmul.bf16.gmra.mxu0 %v613
  %v962 = vpop.f32.mrf.mxu0
  %v963 = vadd.f32 %v216, %v962
  %v964 = vpop.f32.mrf.mxu0
  %v965 = vadd.f32 %v216, %v964
  %966 = vmatmul.bf16.gmra.mxu0 %v614
  %v967 = vpop.f32.mrf.mxu0
  %v968 = vadd.f32 %v216, %v967
  %v969 = vpop.f32.mrf.mxu0
  %v970 = vadd.f32 %v216, %v969
  %971 = vmatmul.bf16.gmra.mxu0 %v615
  %v972 = vpop.f32.mrf.mxu0
  %v973 = vadd.f32 %v216, %v972
  %v974 = vpop.f32.mrf.mxu0
  %v975 = vadd.f32 %v216, %v974
  %976 = vmatmul.bf16.gmra.mxu0 %v616
  %v977 = vpop.f32.mrf.mxu0
  %v978 = vadd.f32 %v216, %v977
  %v979 = vpop.f32.mrf.mxu0
  %v980 = vadd.f32 %v216, %v979
  %981 = vmatmul.bf16.gmra.mxu0 %v617
  %v982 = vpop.f32.mrf.mxu0
  %v983 = vadd.f32 %v216, %v982
  %v984 = vpop.f32.mrf.mxu0
  %v985 = vadd.f32 %v216, %v984
  %986 = vmatmul.bf16.gmra.mxu0 %v618
  %v987 = vpop.f32.mrf.mxu0
  %v988 = vadd.f32 %v216, %v987
  %v989 = vpop.f32.mrf.mxu0
  %v990 = vadd.f32 %v216, %v989
  %991 = vmatmul.bf16.gmra.mxu0 %v619
  %v992 = vpop.f32.mrf.mxu0
  %v993 = vadd.f32 %v216, %v992
  %v994 = vpop.f32.mrf.mxu0
  %v995 = vadd.f32 %v216, %v994
  %996 = vmatmul.bf16.gmra.mxu0 %v620
  %v997 = vpop.f32.mrf.mxu0
  %v998 = vadd.f32 %v216, %v997
  %v999 = vpop.f32.mrf.mxu0
  %v1000 = vadd.f32 %v216, %v999
  %1001 = vmatmul.bf16.gmra.mxu0 %v621
  %v1002 = vpop.f32.mrf.mxu0
  %v1003 = vadd.f32 %v216, %v1002
  %v1004 = vpop.f32.mrf.mxu0
  %v1005 = vadd.f32 %v216, %v1004
  %1006 = vmatmul.bf16.gmra.mxu0 %v622
  %v1007 = vpop.f32.mrf.mxu0
  %v1008 = vadd.f32 %v216, %v1007
  %v1009 = vpop.f32.mrf.mxu0
  %v1010 = vadd.f32 %v216, %v1009
  %1011 = vmatmul.bf16.gmra.mxu0 %v623
  %v1012 = vpop.f32.mrf.mxu0
  %v1013 = vadd.f32 %v216, %v1012
  %v1014 = vpop.f32.mrf.mxu0
  %v1015 = vadd.f32 %v216, %v1014
  %1016 = vmatmul.bf16.gmra.mxu0 %v624
  %v1017 = vpop.f32.mrf.mxu0
  %v1018 = vadd.f32 %v216, %v1017
  %v1019 = vpop.f32.mrf.mxu0
  %v1020 = vadd.f32 %v216, %v1019
  %1021 = vmatmul.bf16.gmra.mxu0 %v625
  %v1022 = vpop.f32.mrf.mxu0
  %v1023 = vadd.f32 %v216, %v1022
  %v1024 = vpop.f32.mrf.mxu0
  %v1025 = vadd.f32 %v216, %v1024
  %1026 = vmatmul.bf16.gmra.mxu0 %v626
  %v1027 = vpop.f32.mrf.mxu0
  %v1028 = vadd.f32 %v216, %v1027
  %v1029 = vpop.f32.mrf.mxu0
  %v1030 = vadd.f32 %v216, %v1029
  %1031 = vmatmul.bf16.gmra.mxu0 %v627
  %v1032 = vpop.f32.mrf.mxu0
  %v1033 = vadd.f32 %v216, %v1032
  %v1034 = vpop.f32.mrf.mxu0
  %v1035 = vadd.f32 %v216, %v1034
  %1036 = vmatmul.bf16.gmra.mxu0 %v628
  %v1037 = vpop.f32.mrf.mxu0
  %v1038 = vadd.f32 %v216, %v1037
  %v1039 = vpop.f32.mrf.mxu0
  %v1040 = vadd.f32 %v216, %v1039
  %1041 = vmatmul.bf16.gmra.mxu0 %v629
  %v1042 = vpop.f32.mrf.mxu0
  %v1043 = vadd.f32 %v216, %v1042
  %v1044 = vpop.f32.mrf.mxu0
  %v1045 = vadd.f32 %v216, %v1044
  %1046 = vmatmul.bf16.gmra.mxu0 %v630
  %v1047 = vpop.f32.mrf.mxu0
  %v1048 = vadd.f32 %v216, %v1047
  %v1049 = vpop.f32.mrf.mxu0
  %v1050 = vadd.f32 %v216, %v1049
  %1051 = vmatmul.bf16.gmra.mxu0 %v631
  %v1052 = vpop.f32.mrf.mxu0
  %v1053 = vadd.f32 %v216, %v1052
  %v1054 = vpop.f32.mrf.mxu0
  %v1055 = vadd.f32 %v216, %v1054
  %1056 = vmatmul.bf16.gmra.mxu0 %v632
  %v1057 = vpop.f32.mrf.mxu0
  %v1058 = vadd.f32 %v216, %v1057
  %v1059 = vpop.f32.mrf.mxu0
  %v1060 = vadd.f32 %v216, %v1059
  %1061 = vmatmul.bf16.gmra.mxu0 %v633
  %v1062 = vpop.f32.mrf.mxu0
  %v1063 = vadd.f32 %v216, %v1062
  %v1064 = vpop.f32.mrf.mxu0
  %v1065 = vadd.f32 %v216, %v1064
  %1066 = vmatmul.bf16.gmra.mxu0 %v634
  %v1067 = vpop.f32.mrf.mxu0
  %v1068 = vadd.f32 %v216, %v1067
  %v1069 = vpop.f32.mrf.mxu0
  %v1070 = vadd.f32 %v216, %v1069
  %1071 = vmatmul.bf16.gmra.mxu0 %v635
  %v1072 = vpop.f32.mrf.mxu0
  %v1073 = vadd.f32 %v216, %v1072
  %v1074 = vpop.f32.mrf.mxu0
  %v1075 = vadd.f32 %v216, %v1074
  %1076 = vmatmul.bf16.gmra.mxu0 %v636
  %v1077 = vpop.f32.mrf.mxu0
  %v1078 = vadd.f32 %v216, %v1077
  %v1079 = vpop.f32.mrf.mxu0
  %v1080 = vadd.f32 %v216, %v1079
  %1081 = vmatmul.bf16.gmra.mxu0 %v637
  %v1082 = vpop.f32.mrf.mxu0
  %v1083 = vadd.f32 %v216, %v1082
  %v1084 = vpop.f32.mrf.mxu0
  %v1085 = vadd.f32 %v216, %v1084
  %1086 = vmatmul.bf16.gmra.mxu0 %v638
  %v1087 = vpop.f32.mrf.mxu0
  %v1088 = vadd.f32 %v216, %v1087
  %v1089 = vpop.f32.mrf.mxu0
  %v1090 = vadd.f32 %v216, %v1089
  %1091 = vmatmul.bf16.gmra.mxu0 %v639
  %v1092 = vpop.f32.mrf.mxu0
  %v1093 = vadd.f32 %v216, %v1092
  %v1094 = vpop.f32.mrf.mxu0
  %v1095 = vadd.f32 %v216, %v1094
  %1096 = vmatmul.bf16.gmra.mxu0 %v640
  %v1097 = vpop.f32.mrf.mxu0
  %v1098 = vadd.f32 %v216, %v1097
  %v1099 = vpop.f32.mrf.mxu0
  %v1100 = vadd.f32 %v216, %v1099
  %1101 = vmatmul.bf16.gmra.mxu0 %v641
  %v1102 = vpop.f32.mrf.mxu0
  %v1103 = vadd.f32 %v216, %v1102
  %v1104 = vpop.f32.mrf.mxu0
  %v1105 = vadd.f32 %v216, %v1104
  %1106 = vmatmul.bf16.gmra.mxu0 %v642
  %v1107 = vpop.f32.mrf.mxu0
  %v1108 = vadd.f32 %v216, %v1107
  %v1109 = vpop.f32.mrf.mxu0
  %v1110 = vadd.f32 %v216, %v1109
  %1111 = vmatmul.bf16.gmra.mxu0 %v643
  %v1112 = vpop.f32.mrf.mxu0
  %v1113 = vadd.f32 %v216, %v1112
  %v1114 = vpop.f32.mrf.mxu0
  %v1115 = vadd.f32 %v216, %v1114
  %1116 = vmatmul.bf16.gmra.mxu0 %v644
  %v1117 = vpop.f32.mrf.mxu0
  %v1118 = vadd.f32 %v216, %v1117
  %v1119 = vpop.f32.mrf.mxu0
  %v1120 = vadd.f32 %v216, %v1119
  %1121 = vmatmul.bf16.gmra.mxu0 %v645
  %v1122 = vpop.f32.mrf.mxu0
  %v1123 = vadd.f32 %v216, %v1122
  %v1124 = vpop.f32.mrf.mxu0
  %v1125 = vadd.f32 %v216, %v1124
  %1126 = vmatmul.bf16.gmra.mxu0 %v646
  %v1127 = vpop.f32.mrf.mxu0
  %v1128 = vadd.f32 %v216, %v1127
  %v1129 = vpop.f32.mrf.mxu0
  %v1130 = vadd.f32 %v216, %v1129
  %1131 = vmatmul.bf16.gmra.mxu0 %v647
  %v1132 = vpop.f32.mrf.mxu0
  %v1133 = vadd.f32 %v216, %v1132
  %v1134 = vpop.f32.mrf.mxu0
  %v1135 = vadd.f32 %v216, %v1134
  %1136 = vmatmul.bf16.gmra.mxu0 %v648
  %v1137 = vpop.f32.mrf.mxu0
  %v1138 = vadd.f32 %v216, %v1137
  %v1139 = vpop.f32.mrf.mxu0
  %v1140 = vadd.f32 %v216, %v1139
  %1141 = vmatmul.bf16.gmra.mxu0 %v649
  %v1142 = vpop.f32.mrf.mxu0
  %v1143 = vadd.f32 %v216, %v1142
  %v1144 = vpop.f32.mrf.mxu0
  %v1145 = vadd.f32 %v216, %v1144
  %1146 = vmatmul.bf16.gmra.mxu0 %v650
  %v1147 = vpop.f32.mrf.mxu0
  %v1148 = vadd.f32 %v216, %v1147
  %v1149 = vpop.f32.mrf.mxu0
  %v1150 = vadd.f32 %v216, %v1149
  %1151 = vmatmul.bf16.gmra.mxu0 %v651
  %v1152 = vpop.f32.mrf.mxu0
  %v1153 = vadd.f32 %v216, %v1152
  %v1154 = vpop.f32.mrf.mxu0
  %v1155 = vadd.f32 %v216, %v1154
  %1156 = vmatmul.bf16.gmra.mxu0 %v652
  %v1157 = vpop.f32.mrf.mxu0
  %v1158 = vadd.f32 %v216, %v1157
  %v1159 = vpop.f32.mrf.mxu0
  %v1160 = vadd.f32 %v216, %v1159
  %1161 = vmatmul.bf16.gmra.mxu0 %v653
  %v1162 = vpop.f32.mrf.mxu0
  %v1163 = vadd.f32 %v216, %v1162
  %v1164 = vpop.f32.mrf.mxu0
  %v1165 = vadd.f32 %v216, %v1164
  %1166 = vmatmul.bf16.gmra.mxu0 %v654
  %v1167 = vpop.f32.mrf.mxu0
  %v1168 = vadd.f32 %v216, %v1167
  %v1169 = vpop.f32.mrf.mxu0
  %v1170 = vadd.f32 %v216, %v1169
  %1171 = vmatmul.bf16.gmra.mxu0 %v655
  %v1172 = vpop.f32.mrf.mxu0
  %v1173 = vadd.f32 %v216, %v1172
  %v1174 = vpop.f32.mrf.mxu0
  %v1175 = vadd.f32 %v216, %v1174
  %1176 = vmatmul.bf16.gmra.mxu0 %v656
  %v1177 = vpop.f32.mrf.mxu0
  %v1178 = vadd.f32 %v216, %v1177
  %v1179 = vpop.f32.mrf.mxu0
  %v1180 = vadd.f32 %v216, %v1179
  %1181 = vmatmul.bf16.gmra.mxu0 %v657
  %v1182 = vpop.f32.mrf.mxu0
  %v1183 = vadd.f32 %v216, %v1182
  %v1184 = vpop.f32.mrf.mxu0
  %v1185 = vadd.f32 %v216, %v1184
  %1186 = vmatmul.bf16.gmra.mxu0 %v658
  %v1187 = vpop.f32.mrf.mxu0
  %v1188 = vadd.f32 %v216, %v1187
  %v1189 = vpop.f32.mrf.mxu0
  %v1190 = vadd.f32 %v216, %v1189
  %1191 = vmatmul.bf16.gmra.mxu0 %v659
  %v1192 = vpop.f32.mrf.mxu0
  %v1193 = vadd.f32 %v216, %v1192
  %v1194 = vpop.f32.mrf.mxu0
  %v1195 = vadd.f32 %v216, %v1194
  %1196 = vmatmul.bf16.gmra.mxu0 %v660
  %v1197 = vpop.f32.mrf.mxu0
  %v1198 = vadd.f32 %v216, %v1197
  %v1199 = vpop.f32.mrf.mxu0
  %v1200 = vadd.f32 %v216, %v1199
  %1201 = vmatmul.bf16.gmra.mxu0 %v661
  %v1202 = vpop.f32.mrf.mxu0
  %v1203 = vadd.f32 %v216, %v1202
  %v1204 = vpop.f32.mrf.mxu0
  %v1205 = vadd.f32 %v216, %v1204
  %1206 = vmatmul.bf16.gmra.mxu0 %v662
  %v1207 = vpop.f32.mrf.mxu0
  %v1208 = vadd.f32 %v216, %v1207
  %v1209 = vpop.f32.mrf.mxu0
  %v1210 = vadd.f32 %v216, %v1209
  %1211 = vmatmul.bf16.gmra.mxu0 %v663
  %v1212 = vpop.f32.mrf.mxu0
  %v1213 = vadd.f32 %v216, %v1212
  %v1214 = vpop.f32.mrf.mxu0
  %v1215 = vadd.f32 %v216, %v1214
  %1216 = vmatmul.bf16.gmra.mxu0 %v664
  %v1217 = vpop.f32.mrf.mxu0
  %v1218 = vadd.f32 %v216, %v1217
  %v1219 = vpop.f32.mrf.mxu0
  %v1220 = vadd.f32 %v216, %v1219
  %1221 = vmatmul.bf16.gmra.mxu0 %v665
  %v1222 = vpop.f32.mrf.mxu0
  %v1223 = vadd.f32 %v216, %v1222
  %v1224 = vpop.f32.mrf.mxu0
  %v1225 = vadd.f32 %v216, %v1224
  %1226 = vmatmul.bf16.gmra.mxu0 %v666
  %v1227 = vpop.f32.mrf.mxu0
  %v1228 = vadd.f32 %v216, %v1227
  %v1229 = vpop.f32.mrf.mxu0
  %v1230 = vadd.f32 %v216, %v1229
  %1231 = vmatmul.bf16.gmra.mxu0 %v667
  %v1232 = vpop.f32.mrf.mxu0
  %v1233 = vadd.f32 %v216, %v1232
  %v1234 = vpop.f32.mrf.mxu0
  %v1235 = vadd.f32 %v216, %v1234
  %1236 = vmatmul.bf16.gmra.mxu0 %v668
  %v1237 = vpop.f32.mrf.mxu0
  %v1238 = vadd.f32 %v216, %v1237
  %v1239 = vpop.f32.mrf.mxu0
  %v1240 = vadd.f32 %v216, %v1239
  %1241 = vmatmul.bf16.gmra.mxu0 %v669
  %v1242 = vpop.f32.mrf.mxu0
  %v1243 = vadd.f32 %v216, %v1242
  %v1244 = vpop.f32.mrf.mxu0
  %v1245 = vadd.f32 %v216, %v1244
  %1246 = vmatmul.bf16.gmra.mxu0 %v670
  %v1247 = vpop.f32.mrf.mxu0
  %v1248 = vadd.f32 %v216, %v1247
  %v1249 = vpop.f32.mrf.mxu0
  %v1250 = vadd.f32 %v216, %v1249
  %1251 = vmatmul.bf16.gmra.mxu0 %v671
  %v1252 = vpop.f32.mrf.mxu0
  %v1253 = vadd.f32 %v216, %v1252
  %v1254 = vpop.f32.mrf.mxu0
  %v1255 = vadd.f32 %v216, %v1254
  %1256 = vmatmul.bf16.gmra.mxu0 %v672
  %v1257 = vpop.f32.mrf.mxu0
  %v1258 = vadd.f32 %v216, %v1257
  %v1259 = vpop.f32.mrf.mxu0
  %v1260 = vadd.f32 %v216, %v1259
  %1261 = vmatmul.bf16.gmra.mxu0 %v673
  %v1262 = vpop.f32.mrf.mxu0
  %v1263 = vadd.f32 %v216, %v1262
  %v1264 = vpop.f32.mrf.mxu0
  %v1265 = vadd.f32 %v216, %v1264
  %1266 = vmatmul.bf16.gmra.mxu0 %v674
  %v1267 = vpop.f32.mrf.mxu0
  %v1268 = vadd.f32 %v216, %v1267
  %v1269 = vpop.f32.mrf.mxu0
  %v1270 = vadd.f32 %v216, %v1269
  %1271 = vmatmul.bf16.gmra.mxu0 %v675
  %v1272 = vpop.f32.mrf.mxu0
  %v1273 = vadd.f32 %v216, %v1272
  %v1274 = vpop.f32.mrf.mxu0
  %v1275 = vadd.f32 %v216, %v1274
  %1276 = vmatmul.bf16.gmra.mxu0 %v676
  %v1277 = vpop.f32.mrf.mxu0
  %v1278 = vadd.f32 %v216, %v1277
  %v1279 = vpop.f32.mrf.mxu0
  %v1280 = vadd.f32 %v216, %v1279
  %1281 = vmatmul.bf16.gmra.mxu0 %v677
  %v1282 = vpop.f32.mrf.mxu0
  %v1283 = vadd.f32 %v216, %v1282
  %v1284 = vpop.f32.mrf.mxu0
  %v1285 = vadd.f32 %v216, %v1284
  %1286 = vdwg.mxu0
  %vm1287 = vcmp.gt.f32.partialorder %v828, 0.0
  %vm1288 = vcmp.gt.f32.partialorder %v830, 0.0
  %vm1289 = vcmp.gt.f32.partialorder %v833, 0.0
  %vm1290 = vcmp.gt.f32.partialorder %v835, 0.0
  %vm1291 = vcmp.gt.f32.partialorder %v838, 0.0
  %vm1292 = vcmp.gt.f32.partialorder %v840, 0.0
  %vm1293 = vcmp.gt.f32.partialorder %v843, 0.0
  %vm1294 = vcmp.gt.f32.partialorder %v845, 0.0
  %vm1295 = vcmp.gt.f32.partialorder %v848, 0.0
  %vm1296 = vcmp.gt.f32.partialorder %v850, 0.0
  %vm1297 = vcmp.gt.f32.partialorder %v853, 0.0
  %vm1298 = vcmp.gt.f32.partialorder %v855, 0.0
  %vm1299 = vcmp.gt.f32.partialorder %v858, 0.0
  %vm1300 = vcmp.gt.f32.partialorder %v860, 0.0
  %vm1301 = vcmp.gt.f32.partialorder %v863, 0.0
  %vm1302 = vcmp.gt.f32.partialorder %v865, 0.0
  %vm1303 = vcmp.gt.f32.partialorder %v868, 0.0
  %vm1304 = vcmp.gt.f32.partialorder %v870, 0.0
  %vm1305 = vcmp.gt.f32.partialorder %v873, 0.0
  %vm1306 = vcmp.gt.f32.partialorder %v875, 0.0
  %vm1307 = vcmp.gt.f32.partialorder %v878, 0.0
  %vm1308 = vcmp.gt.f32.partialorder %v880, 0.0
  %vm1309 = vcmp.gt.f32.partialorder %v883, 0.0
  %vm1310 = vcmp.gt.f32.partialorder %v885, 0.0
  %vm1311 = vcmp.gt.f32.partialorder %v888, 0.0
  %vm1312 = vcmp.gt.f32.partialorder %v890, 0.0
  %vm1313 = vcmp.gt.f32.partialorder %v893, 0.0
  %vm1314 = vcmp.gt.f32.partialorder %v895, 0.0
  %vm1315 = vcmp.gt.f32.partialorder %v898, 0.0
  %vm1316 = vcmp.gt.f32.partialorder %v900, 0.0
  %vm1317 = vcmp.gt.f32.partialorder %v903, 0.0
  %vm1318 = vcmp.gt.f32.partialorder %v905, 0.0
  %vm1319 = vcmp.gt.f32.partialorder %v908, 0.0
  %vm1320 = vcmp.gt.f32.partialorder %v910, 0.0
  %vm1321 = vcmp.gt.f32.partialorder %v913, 0.0
  %vm1322 = vcmp.gt.f32.partialorder %v915, 0.0
  %vm1323 = vcmp.gt.f32.partialorder %v918, 0.0
  %vm1324 = vcmp.gt.f32.partialorder %v920, 0.0
  %vm1325 = vcmp.gt.f32.partialorder %v923, 0.0
  %vm1326 = vcmp.gt.f32.partialorder %v925, 0.0
  %vm1327 = vcmp.gt.f32.partialorder %v928, 0.0
  %vm1328 = vcmp.gt.f32.partialorder %v930, 0.0
  %vm1329 = vcmp.gt.f32.partialorder %v933, 0.0
  %vm1330 = vcmp.gt.f32.partialorder %v935, 0.0
  %vm1331 = vcmp.gt.f32.partialorder %v938, 0.0
  %vm1332 = vcmp.gt.f32.partialorder %v940, 0.0
  %vm1333 = vcmp.gt.f32.partialorder %v943, 0.0
  %vm1334 = vcmp.gt.f32.partialorder %v945, 0.0
  %vm1335 = vcmp.gt.f32.partialorder %v948, 0.0
  %vm1336 = vcmp.gt.f32.partialorder %v950, 0.0
  %vm1337 = vcmp.gt.f32.partialorder %v953, 0.0
  %vm1338 = vcmp.gt.f32.partialorder %v955, 0.0
  %vm1339 = vcmp.gt.f32.partialorder %v958, 0.0
  %vm1340 = vcmp.gt.f32.partialorder %v960, 0.0
  %vm1341 = vcmp.gt.f32.partialorder %v963, 0.0
  %vm1342 = vcmp.gt.f32.partialorder %v965, 0.0
  %vm1343 = vcmp.gt.f32.partialorder %v968, 0.0
  %vm1344 = vcmp.gt.f32.partialorder %v970, 0.0
  %vm1345 = vcmp.gt.f32.partialorder %v973, 0.0
  %vm1346 = vcmp.gt.f32.partialorder %v975, 0.0
  %vm1347 = vcmp.gt.f32.partialorder %v978, 0.0
  %vm1348 = vcmp.gt.f32.partialorder %v980, 0.0
  %vm1349 = vcmp.gt.f32.partialorder %v983, 0.0
  %vm1350 = vcmp.gt.f32.partialorder %v985, 0.0
  %vm1351 = vcmp.gt.f32.partialorder %v988, 0.0
  %vm1352 = vcmp.gt.f32.partialorder %v990, 0.0
  %vm1353 = vcmp.gt.f32.partialorder %v993, 0.0
  %vm1354 = vcmp.gt.f32.partialorder %v995, 0.0
  %vm1355 = vcmp.gt.f32.partialorder %v998, 0.0
  %vm1356 = vcmp.gt.f32.partialorder %v1000, 0.0
  %vm1357 = vcmp.gt.f32.partialorder %v1003, 0.0
  %vm1358 = vcmp.gt.f32.partialorder %v1005, 0.0
  %vm1359 = vcmp.gt.f32.partialorder %v1008, 0.0
  %vm1360 = vcmp.gt.f32.partialorder %v1010, 0.0
  %vm1361 = vcmp.gt.f32.partialorder %v1013, 0.0
  %vm1362 = vcmp.gt.f32.partialorder %v1015, 0.0
  %vm1363 = vcmp.gt.f32.partialorder %v1018, 0.0
  %vm1364 = vcmp.gt.f32.partialorder %v1020, 0.0
  %vm1365 = vcmp.gt.f32.partialorder %v1023, 0.0
  %vm1366 = vcmp.gt.f32.partialorder %v1025, 0.0
  %vm1367 = vcmp.gt.f32.partialorder %v1028, 0.0
  %vm1368 = vcmp.gt.f32.partialorder %v1030, 0.0
  %vm1369 = vcmp.gt.f32.partialorder %v1033, 0.0
  %vm1370 = vcmp.gt.f32.partialorder %v1035, 0.0
  %vm1371 = vcmp.gt.f32.partialorder %v1038, 0.0
  %vm1372 = vcmp.gt.f32.partialorder %v1040, 0.0
  %vm1373 = vcmp.gt.f32.partialorder %v1043, 0.0
  %vm1374 = vcmp.gt.f32.partialorder %v1045, 0.0
  %vm1375 = vcmp.gt.f32.partialorder %v1048, 0.0
  %vm1376 = vcmp.gt.f32.partialorder %v1050, 0.0
  %vm1377 = vcmp.gt.f32.partialorder %v1053, 0.0
  %vm1378 = vcmp.gt.f32.partialorder %v1055, 0.0
  %vm1379 = vcmp.gt.f32.partialorder %v1058, 0.0
  %vm1380 = vcmp.gt.f32.partialorder %v1060, 0.0
  %vm1381 = vcmp.gt.f32.partialorder %v1063, 0.0
  %vm1382 = vcmp.gt.f32.partialorder %v1065, 0.0
  %vm1383 = vcmp.gt.f32.partialorder %v1068, 0.0
  %vm1384 = vcmp.gt.f32.partialorder %v1070, 0.0
  %vm1385 = vcmp.gt.f32.partialorder %v1073, 0.0
  %vm1386 = vcmp.gt.f32.partialorder %v1075, 0.0
  %vm1387 = vcmp.gt.f32.partialorder %v1078, 0.0
  %vm1388 = vcmp.gt.f32.partialorder %v1080, 0.0
  %vm1389 = vcmp.gt.f32.partialorder %v1083, 0.0
  %vm1390 = vcmp.gt.f32.partialorder %v1085, 0.0
  %vm1391 = vcmp.gt.f32.partialorder %v1088, 0.0
  %vm1392 = vcmp.gt.f32.partialorder %v1090, 0.0
  %vm1393 = vcmp.gt.f32.partialorder %v1093, 0.0
  %vm1394 = vcmp.gt.f32.partialorder %v1095, 0.0
  %vm1395 = vcmp.gt.f32.partialorder %v1098, 0.0
  %vm1396 = vcmp.gt.f32.partialorder %v1100, 0.0
  %vm1397 = vcmp.gt.f32.partialorder %v1103, 0.0
  %vm1398 = vcmp.gt.f32.partialorder %v1105, 0.0
  %vm1399 = vcmp.gt.f32.partialorder %v1108, 0.0
  %vm1400 = vcmp.gt.f32.partialorder %v1110, 0.0
  %vm1401 = vcmp.gt.f32.partialorder %v1113, 0.0
  %vm1402 = vcmp.gt.f32.partialorder %v1115, 0.0
  %vm1403 = vcmp.gt.f32.partialorder %v1118, 0.0
  %vm1404 = vcmp.gt.f32.partialorder %v1120, 0.0
  %vm1405 = vcmp.gt.f32.partialorder %v1123, 0.0
  %vm1406 = vcmp.gt.f32.partialorder %v1125, 0.0
  %vm1407 = vcmp.gt.f32.partialorder %v1128, 0.0
  %vm1408 = vcmp.gt.f32.partialorder %v1130, 0.0
  %vm1409 = vcmp.gt.f32.partialorder %v1133, 0.0
  %vm1410 = vcmp.gt.f32.partialorder %v1135, 0.0
  %vm1411 = vcmp.gt.f32.partialorder %v1138, 0.0
  %vm1412 = vcmp.gt.f32.partialorder %v1140, 0.0
  %vm1413 = vcmp.gt.f32.partialorder %v1143, 0.0
  %vm1414 = vcmp.gt.f32.partialorder %v1145, 0.0
  %vm1415 = vcmp.gt.f32.partialorder %v1148, 0.0
  %vm1416 = vcmp.gt.f32.partialorder %v1150, 0.0
  %vm1417 = vcmp.gt.f32.partialorder %v1153, 0.0
  %vm1418 = vcmp.gt.f32.partialorder %v1155, 0.0
  %vm1419 = vcmp.gt.f32.partialorder %v1158, 0.0
  %vm1420 = vcmp.gt.f32.partialorder %v1160, 0.0
  %vm1421 = vcmp.gt.f32.partialorder %v1163, 0.0
  %vm1422 = vcmp.gt.f32.partialorder %v1165, 0.0
  %vm1423 = vcmp.gt.f32.partialorder %v1168, 0.0
  %vm1424 = vcmp.gt.f32.partialorder %v1170, 0.0
  %vm1425 = vcmp.gt.f32.partialorder %v1173, 0.0
  %vm1426 = vcmp.gt.f32.partialorder %v1175, 0.0
  %vm1427 = vcmp.gt.f32.partialorder %v1178, 0.0
  %vm1428 = vcmp.gt.f32.partialorder %v1180, 0.0
  %vm1429 = vcmp.gt.f32.partialorder %v1183, 0.0
  %vm1430 = vcmp.gt.f32.partialorder %v1185, 0.0
  %vm1431 = vcmp.gt.f32.partialorder %v1188, 0.0
  %vm1432 = vcmp.gt.f32.partialorder %v1190, 0.0
  %vm1433 = vcmp.gt.f32.partialorder %v1193, 0.0
  %vm1434 = vcmp.gt.f32.partialorder %v1195, 0.0
  %vm1435 = vcmp.gt.f32.partialorder %v1198, 0.0
  %vm1436 = vcmp.gt.f32.partialorder %v1200, 0.0
  %vm1437 = vcmp.gt.f32.partialorder %v1203, 0.0
  %vm1438 = vcmp.gt.f32.partialorder %v1205, 0.0
  %vm1439 = vcmp.gt.f32.partialorder %v1208, 0.0
  %vm1440 = vcmp.gt.f32.partialorder %v1210, 0.0
  %vm1441 = vcmp.gt.f32.partialorder %v1213, 0.0
  %vm1442 = vcmp.gt.f32.partialorder %v1215, 0.0
  %vm1443 = vcmp.gt.f32.partialorder %v1218, 0.0
  %vm1444 = vcmp.gt.f32.partialorder %v1220, 0.0
  %vm1445 = vcmp.gt.f32.partialorder %v1223, 0.0
  %vm1446 = vcmp.gt.f32.partialorder %v1225, 0.0
  %vm1447 = vcmp.gt.f32.partialorder %v1228, 0.0
  %vm1448 = vcmp.gt.f32.partialorder %v1230, 0.0
  %vm1449 = vcmp.gt.f32.partialorder %v1233, 0.0
  %vm1450 = vcmp.gt.f32.partialorder %v1235, 0.0
  %vm1451 = vcmp.gt.f32.partialorder %v1238, 0.0
  %vm1452 = vcmp.gt.f32.partialorder %v1240, 0.0
  %vm1453 = vcmp.gt.f32.partialorder %v1243, 0.0
  %vm1454 = vcmp.gt.f32.partialorder %v1245, 0.0
  %vm1455 = vcmp.gt.f32.partialorder %v1248, 0.0
  %vm1456 = vcmp.gt.f32.partialorder %v1250, 0.0
  %vm1457 = vcmp.gt.f32.partialorder %v1253, 0.0
  %vm1458 = vcmp.gt.f32.partialorder %v1255, 0.0
  %vm1459 = vcmp.gt.f32.partialorder %v1258, 0.0
  %vm1460 = vcmp.gt.f32.partialorder %v1260, 0.0
  %vm1461 = vcmp.gt.f32.partialorder %v1263, 0.0
  %vm1462 = vcmp.gt.f32.partialorder %v1265, 0.0
  %vm1463 = vcmp.gt.f32.partialorder %v1268, 0.0
  %vm1464 = vcmp.gt.f32.partialorder %v1270, 0.0
  %vm1465 = vcmp.gt.f32.partialorder %v1273, 0.0
  %vm1466 = vcmp.gt.f32.partialorder %v1275, 0.0
  %vm1467 = vcmp.gt.f32.partialorder %v1278, 0.0
  %vm1468 = vcmp.gt.f32.partialorder %v1280, 0.0
  %vm1469 = vcmp.gt.f32.partialorder %v1283, 0.0
  %vm1470 = vcmp.gt.f32.partialorder %v1285, 0.0
  %v1471 = vmul.f32 %v828, 0.2
  %v1472 = vmul.f32 %v830, 0.2
  %v1473 = vmul.f32 %v833, 0.2
  %v1474 = vmul.f32 %v835, 0.2
  %v1475 = vmul.f32 %v838, 0.2
  %v1476 = vmul.f32 %v840, 0.2
  %v1477 = vmul.f32 %v843, 0.2
  %v1478 = vmul.f32 %v845, 0.2
  %v1479 = vmul.f32 %v848, 0.2
  %v1480 = vmul.f32 %v850, 0.2
  %v1481 = vmul.f32 %v853, 0.2
  %v1482 = vmul.f32 %v855, 0.2
  %v1483 = vmul.f32 %v858, 0.2
  %v1484 = vmul.f32 %v860, 0.2
  %v1485 = vmul.f32 %v863, 0.2
  %v1486 = vmul.f32 %v865, 0.2
  %v1487 = vmul.f32 %v868, 0.2
  %v1488 = vmul.f32 %v870, 0.2
  %v1489 = vmul.f32 %v873, 0.2
  %v1490 = vmul.f32 %v875, 0.2
  %v1491 = vmul.f32 %v878, 0.2
  %v1492 = vmul.f32 %v880, 0.2
  %v1493 = vmul.f32 %v883, 0.2
  %v1494 = vmul.f32 %v885, 0.2
  %v1495 = vmul.f32 %v888, 0.2
  %v1496 = vmul.f32 %v890, 0.2
  %v1497 = vmul.f32 %v893, 0.2
  %v1498 = vmul.f32 %v895, 0.2
  %v1499 = vmul.f32 %v898, 0.2
  %v1500 = vmul.f32 %v900, 0.2
  %v1501 = vmul.f32 %v903, 0.2
  %v1502 = vmul.f32 %v905, 0.2
  %v1503 = vmul.f32 %v908, 0.2
  %v1504 = vmul.f32 %v910, 0.2
  %v1505 = vmul.f32 %v913, 0.2
  %v1506 = vmul.f32 %v915, 0.2
  %v1507 = vmul.f32 %v918, 0.2
  %v1508 = vmul.f32 %v920, 0.2
  %v1509 = vmul.f32 %v923, 0.2
  %v1510 = vmul.f32 %v925, 0.2
  %v1511 = vmul.f32 %v928, 0.2
  %v1512 = vmul.f32 %v930, 0.2
  %v1513 = vmul.f32 %v933, 0.2
  %v1514 = vmul.f32 %v935, 0.2
  %v1515 = vmul.f32 %v938, 0.2
  %v1516 = vmul.f32 %v940, 0.2
  %v1517 = vmul.f32 %v943, 0.2
  %v1518 = vmul.f32 %v945, 0.2
  %v1519 = vmul.f32 %v948, 0.2
  %v1520 = vmul.f32 %v950, 0.2
  %v1521 = vmul.f32 %v953, 0.2
  %v1522 = vmul.f32 %v955, 0.2
  %v1523 = vmul.f32 %v958, 0.2
  %v1524 = vmul.f32 %v960, 0.2
  %v1525 = vmul.f32 %v963, 0.2
  %v1526 = vmul.f32 %v965, 0.2
  %v1527 = vmul.f32 %v968, 0.2
  %v1528 = vmul.f32 %v970, 0.2
  %v1529 = vmul.f32 %v973, 0.2
  %v1530 = vmul.f32 %v975, 0.2
  %v1531 = vmul.f32 %v978, 0.2
  %v1532 = vmul.f32 %v980, 0.2
  %v1533 = vmul.f32 %v983, 0.2
  %v1534 = vmul.f32 %v985, 0.2
  %v1535 = vmul.f32 %v988, 0.2
  %v1536 = vmul.f32 %v990, 0.2
  %v1537 = vmul.f32 %v993, 0.2
  %v1538 = vmul.f32 %v995, 0.2
  %v1539 = vmul.f32 %v998, 0.2
  %v1540 = vmul.f32 %v1000, 0.2
  %v1541 = vmul.f32 %v1003, 0.2
  %v1542 = vmul.f32 %v1005, 0.2
  %v1543 = vmul.f32 %v1008, 0.2
  %v1544 = vmul.f32 %v1010, 0.2
  %v1545 = vmul.f32 %v1013, 0.2
  %v1546 = vmul.f32 %v1015, 0.2
  %v1547 = vmul.f32 %v1018, 0.2
  %v1548 = vmul.f32 %v1020, 0.2
  %v1549 = vmul.f32 %v1023, 0.2
  %v1550 = vmul.f32 %v1025, 0.2
  %v1551 = vmul.f32 %v1028, 0.2
  %v1552 = vmul.f32 %v1030, 0.2
  %v1553 = vmul.f32 %v1033, 0.2
  %v1554 = vmul.f32 %v1035, 0.2
  %v1555 = vmul.f32 %v1038, 0.2
  %v1556 = vmul.f32 %v1040, 0.2
  %v1557 = vmul.f32 %v1043, 0.2
  %v1558 = vmul.f32 %v1045, 0.2
  %v1559 = vmul.f32 %v1048, 0.2
  %v1560 = vmul.f32 %v1050, 0.2
  %v1561 = vmul.f32 %v1053, 0.2
  %v1562 = vmul.f32 %v1055, 0.2
  %v1563 = vmul.f32 %v1058, 0.2
  %v1564 = vmul.f32 %v1060, 0.2
  %v1565 = vmul.f32 %v1063, 0.2
  %v1566 = vmul.f32 %v1065, 0.2
  %v1567 = vmul.f32 %v1068, 0.2
  %v1568 = vmul.f32 %v1070, 0.2
  %v1569 = vmul.f32 %v1073, 0.2
  %v1570 = vmul.f32 %v1075, 0.2
  %v1571 = vmul.f32 %v1078, 0.2
  %v1572 = vmul.f32 %v1080, 0.2
  %v1573 = vmul.f32 %v1083, 0.2
  %v1574 = vmul.f32 %v1085, 0.2
  %v1575 = vmul.f32 %v1088, 0.2
  %v1576 = vmul.f32 %v1090, 0.2
  %v1577 = vmul.f32 %v1093, 0.2
  %v1578 = vmul.f32 %v1095, 0.2
  %v1579 = vmul.f32 %v1098, 0.2
  %v1580 = vmul.f32 %v1100, 0.2
  %v1581 = vmul.f32 %v1103, 0.2
  %v1582 = vmul.f32 %v1105, 0.2
  %v1583 = vmul.f32 %v1108, 0.2
  %v1584 = vmul.f32 %v1110, 0.2
  %v1585 = vmul.f32 %v1113, 0.2
  %v1586 = vmul.f32 %v1115, 0.2
  %v1587 = vmul.f32 %v1118, 0.2
  %v1588 = vmul.f32 %v1120, 0.2
  %v1589 = vmul.f32 %v1123, 0.2
  %v1590 = vmul.f32 %v1125, 0.2
  %v1591 = vmul.f32 %v1128, 0.2
  %v1592 = vmul.f32 %v1130, 0.2
  %v1593 = vmul.f32 %v1133, 0.2
  %v1594 = vmul.f32 %v1135, 0.2
  %v1595 = vmul.f32 %v1138, 0.2
  %v1596 = vmul.f32 %v1140, 0.2
  %v1597 = vmul.f32 %v1143, 0.2
  %v1598 = vmul.f32 %v1145, 0.2
  %v1599 = vmul.f32 %v1148, 0.2
  %v1600 = vmul.f32 %v1150, 0.2
  %v1601 = vmul.f32 %v1153, 0.2
  %v1602 = vmul.f32 %v1155, 0.2
  %v1603 = vmul.f32 %v1158, 0.2
  %v1604 = vmul.f32 %v1160, 0.2
  %v1605 = vmul.f32 %v1163, 0.2
  %v1606 = vmul.f32 %v1165, 0.2
  %v1607 = vmul.f32 %v1168, 0.2
  %v1608 = vmul.f32 %v1170, 0.2
  %v1609 = vmul.f32 %v1173, 0.2
  %v1610 = vmul.f32 %v1175, 0.2
  %v1611 = vmul.f32 %v1178, 0.2
  %v1612 = vmul.f32 %v1180, 0.2
  %v1613 = vmul.f32 %v1183, 0.2
  %v1614 = vmul.f32 %v1185, 0.2
  %v1615 = vmul.f32 %v1188, 0.2
  %v1616 = vmul.f32 %v1190, 0.2
  %v1617 = vmul.f32 %v1193, 0.2
  %v1618 = vmul.f32 %v1195, 0.2
  %v1619 = vmul.f32 %v1198, 0.2
  %v1620 = vmul.f32 %v1200, 0.2
  %v1621 = vmul.f32 %v1203, 0.2
  %v1622 = vmul.f32 %v1205, 0.2
  %v1623 = vmul.f32 %v1208, 0.2
  %v1624 = vmul.f32 %v1210, 0.2
  %v1625 = vmul.f32 %v1213, 0.2
  %v1626 = vmul.f32 %v1215, 0.2
  %v1627 = vmul.f32 %v1218, 0.2
  %v1628 = vmul.f32 %v1220, 0.2
  %v1629 = vmul.f32 %v1223, 0.2
  %v1630 = vmul.f32 %v1225, 0.2
  %v1631 = vmul.f32 %v1228, 0.2
  %v1632 = vmul.f32 %v1230, 0.2
  %v1633 = vmul.f32 %v1233, 0.2
  %v1634 = vmul.f32 %v1235, 0.2
  %v1635 = vmul.f32 %v1238, 0.2
  %v1636 = vmul.f32 %v1240, 0.2
  %v1637 = vmul.f32 %v1243, 0.2
  %v1638 = vmul.f32 %v1245, 0.2
  %v1639 = vmul.f32 %v1248, 0.2
  %v1640 = vmul.f32 %v1250, 0.2
  %v1641 = vmul.f32 %v1253, 0.2
  %v1642 = vmul.f32 %v1255, 0.2
  %v1643 = vmul.f32 %v1258, 0.2
  %v1644 = vmul.f32 %v1260, 0.2
  %v1645 = vmul.f32 %v1263, 0.2
  %v1646 = vmul.f32 %v1265, 0.2
  %v1647 = vmul.f32 %v1268, 0.2
  %v1648 = vmul.f32 %v1270, 0.2
  %v1649 = vmul.f32 %v1273, 0.2
  %v1650 = vmul.f32 %v1275, 0.2
  %v1651 = vmul.f32 %v1278, 0.2
  %v1652 = vmul.f32 %v1280, 0.2
  %v1653 = vmul.f32 %v1283, 0.2
  %v1654 = vmul.f32 %v1285, 0.2
  %v1655 = vsel %vm1287, %v828, %v1471
  %v1656 = vsel %vm1288, %v830, %v1472
  %v1657 = vsel %vm1289, %v833, %v1473
  %v1658 = vsel %vm1290, %v835, %v1474
  %v1659 = vsel %vm1291, %v838, %v1475
  %v1660 = vsel %vm1292, %v840, %v1476
  %v1661 = vsel %vm1293, %v843, %v1477
  %v1662 = vsel %vm1294, %v845, %v1478
  %v1663 = vsel %vm1295, %v848, %v1479
  %v1664 = vsel %vm1296, %v850, %v1480
  %v1665 = vsel %vm1297, %v853, %v1481
  %v1666 = vsel %vm1298, %v855, %v1482
  %v1667 = vsel %vm1299, %v858, %v1483
  %v1668 = vsel %vm1300, %v860, %v1484
  %v1669 = vsel %vm1301, %v863, %v1485
  %v1670 = vsel %vm1302, %v865, %v1486
  %v1671 = vsel %vm1303, %v868, %v1487
  %v1672 = vsel %vm1304, %v870, %v1488
  %v1673 = vsel %vm1305, %v873, %v1489
  %v1674 = vsel %vm1306, %v875, %v1490
  %v1675 = vsel %vm1307, %v878, %v1491
  %v1676 = vsel %vm1308, %v880, %v1492
  %v1677 = vsel %vm1309, %v883, %v1493
  %v1678 = vsel %vm1310, %v885, %v1494
  %v1679 = vsel %vm1311, %v888, %v1495
  %v1680 = vsel %vm1312, %v890, %v1496
  %v1681 = vsel %vm1313, %v893, %v1497
  %v1682 = vsel %vm1314, %v895, %v1498
  %v1683 = vsel %vm1315, %v898, %v1499
  %v1684 = vsel %vm1316, %v900, %v1500
  %v1685 = vsel %vm1317, %v903, %v1501
  %v1686 = vsel %vm1318, %v905, %v1502
  %v1687 = vsel %vm1319, %v908, %v1503
  %v1688 = vsel %vm1320, %v910, %v1504
  %v1689 = vsel %vm1321, %v913, %v1505
  %v1690 = vsel %vm1322, %v915, %v1506
  %v1691 = vsel %vm1323, %v918, %v1507
  %v1692 = vsel %vm1324, %v920, %v1508
  %v1693 = vsel %vm1325, %v923, %v1509
  %v1694 = vsel %vm1326, %v925, %v1510
  %v1695 = vsel %vm1327, %v928, %v1511
  %v1696 = vsel %vm1328, %v930, %v1512
  %v1697 = vsel %vm1329, %v933, %v1513
  %v1698 = vsel %vm1330, %v935, %v1514
  %v1699 = vsel %vm1331, %v938, %v1515
  %v1700 = vsel %vm1332, %v940, %v1516
  %v1701 = vsel %vm1333, %v943, %v1517
  %v1702 = vsel %vm1334, %v945, %v1518
  %v1703 = vsel %vm1335, %v948, %v1519
  %v1704 = vsel %vm1336, %v950, %v1520
  %v1705 = vsel %vm1337, %v953, %v1521
  %v1706 = vsel %vm1338, %v955, %v1522
  %v1707 = vsel %vm1339, %v958, %v1523
  %v1708 = vsel %vm1340, %v960, %v1524
  %v1709 = vsel %vm1341, %v963, %v1525
  %v1710 = vsel %vm1342, %v965, %v1526
  %v1711 = vsel %vm1343, %v968, %v1527
  %v1712 = vsel %vm1344, %v970, %v1528
  %v1713 = vsel %vm1345, %v973, %v1529
  %v1714 = vsel %vm1346, %v975, %v1530
  %v1715 = vsel %vm1347, %v978, %v1531
  %v1716 = vsel %vm1348, %v980, %v1532
  %v1717 = vsel %vm1349, %v983, %v1533
  %v1718 = vsel %vm1350, %v985, %v1534
  %v1719 = vsel %vm1351, %v988, %v1535
  %v1720 = vsel %vm1352, %v990, %v1536
  %v1721 = vsel %vm1353, %v993, %v1537
  %v1722 = vsel %vm1354, %v995, %v1538
  %v1723 = vsel %vm1355, %v998, %v1539
  %v1724 = vsel %vm1356, %v1000, %v1540
  %v1725 = vsel %vm1357, %v1003, %v1541
  %v1726 = vsel %vm1358, %v1005, %v1542
  %v1727 = vsel %vm1359, %v1008, %v1543
  %v1728 = vsel %vm1360, %v1010, %v1544
  %v1729 = vsel %vm1361, %v1013, %v1545
  %v1730 = vsel %vm1362, %v1015, %v1546
  %v1731 = vsel %vm1363, %v1018, %v1547
  %v1732 = vsel %vm1364, %v1020, %v1548
  %v1733 = vsel %vm1365, %v1023, %v1549
  %v1734 = vsel %vm1366, %v1025, %v1550
  %v1735 = vsel %vm1367, %v1028, %v1551
  %v1736 = vsel %vm1368, %v1030, %v1552
  %v1737 = vsel %vm1369, %v1033, %v1553
  %v1738 = vsel %vm1370, %v1035, %v1554
  %v1739 = vsel %vm1371, %v1038, %v1555
  %v1740 = vsel %vm1372, %v1040, %v1556
  %v1741 = vsel %vm1373, %v1043, %v1557
  %v1742 = vsel %vm1374, %v1045, %v1558
  %v1743 = vsel %vm1375, %v1048, %v1559
  %v1744 = vsel %vm1376, %v1050, %v1560
  %v1745 = vsel %vm1377, %v1053, %v1561
  %v1746 = vsel %vm1378, %v1055, %v1562
  %v1747 = vsel %vm1379, %v1058, %v1563
  %v1748 = vsel %vm1380, %v1060, %v1564
  %v1749 = vsel %vm1381, %v1063, %v1565
  %v1750 = vsel %vm1382, %v1065, %v1566
  %v1751 = vsel %vm1383, %v1068, %v1567
  %v1752 = vsel %vm1384, %v1070, %v1568
  %v1753 = vsel %vm1385, %v1073, %v1569
  %v1754 = vsel %vm1386, %v1075, %v1570
  %v1755 = vsel %vm1387, %v1078, %v1571
  %v1756 = vsel %vm1388, %v1080, %v1572
  %v1757 = vsel %vm1389, %v1083, %v1573
  %v1758 = vsel %vm1390, %v1085, %v1574
  %v1759 = vsel %vm1391, %v1088, %v1575
  %v1760 = vsel %vm1392, %v1090, %v1576
  %v1761 = vsel %vm1393, %v1093, %v1577
  %v1762 = vsel %vm1394, %v1095, %v1578
  %v1763 = vsel %vm1395, %v1098, %v1579
  %v1764 = vsel %vm1396, %v1100, %v1580
  %v1765 = vsel %vm1397, %v1103, %v1581
  %v1766 = vsel %vm1398, %v1105, %v1582
  %v1767 = vsel %vm1399, %v1108, %v1583
  %v1768 = vsel %vm1400, %v1110, %v1584
  %v1769 = vsel %vm1401, %v1113, %v1585
  %v1770 = vsel %vm1402, %v1115, %v1586
  %v1771 = vsel %vm1403, %v1118, %v1587
  %v1772 = vsel %vm1404, %v1120, %v1588
  %v1773 = vsel %vm1405, %v1123, %v1589
  %v1774 = vsel %vm1406, %v1125, %v1590
  %v1775 = vsel %vm1407, %v1128, %v1591
  %v1776 = vsel %vm1408, %v1130, %v1592
  %v1777 = vsel %vm1409, %v1133, %v1593
  %v1778 = vsel %vm1410, %v1135, %v1594
  %v1779 = vsel %vm1411, %v1138, %v1595
  %v1780 = vsel %vm1412, %v1140, %v1596
  %v1781 = vsel %vm1413, %v1143, %v1597
  %v1782 = vsel %vm1414, %v1145, %v1598
  %v1783 = vsel %vm1415, %v1148, %v1599
  %v1784 = vsel %vm1416, %v1150, %v1600
  %v1785 = vsel %vm1417, %v1153, %v1601
  %v1786 = vsel %vm1418, %v1155, %v1602
  %v1787 = vsel %vm1419, %v1158, %v1603
  %v1788 = vsel %vm1420, %v1160, %v1604
  %v1789 = vsel %vm1421, %v1163, %v1605
  %v1790 = vsel %vm1422, %v1165, %v1606
  %v1791 = vsel %vm1423, %v1168, %v1607
  %v1792 = vsel %vm1424, %v1170, %v1608
  %v1793 = vsel %vm1425, %v1173, %v1609
  %v1794 = vsel %vm1426, %v1175, %v1610
  %v1795 = vsel %vm1427, %v1178, %v1611
  %v1796 = vsel %vm1428, %v1180, %v1612
  %v1797 = vsel %vm1429, %v1183, %v1613
  %v1798 = vsel %vm1430, %v1185, %v1614
  %v1799 = vsel %vm1431, %v1188, %v1615
  %v1800 = vsel %vm1432, %v1190, %v1616
  %v1801 = vsel %vm1433, %v1193, %v1617
  %v1802 = vsel %vm1434, %v1195, %v1618
  %v1803 = vsel %vm1435, %v1198, %v1619
  %v1804 = vsel %vm1436, %v1200, %v1620
  %v1805 = vsel %vm1437, %v1203, %v1621
  %v1806 = vsel %vm1438, %v1205, %v1622
  %v1807 = vsel %vm1439, %v1208, %v1623
  %v1808 = vsel %vm1440, %v1210, %v1624
  %v1809 = vsel %vm1441, %v1213, %v1625
  %v1810 = vsel %vm1442, %v1215, %v1626
  %v1811 = vsel %vm1443, %v1218, %v1627
  %v1812 = vsel %vm1444, %v1220, %v1628
  %v1813 = vsel %vm1445, %v1223, %v1629
  %v1814 = vsel %vm1446, %v1225, %v1630
  %v1815 = vsel %vm1447, %v1228, %v1631
  %v1816 = vsel %vm1448, %v1230, %v1632
  %v1817 = vsel %vm1449, %v1233, %v1633
  %v1818 = vsel %vm1450, %v1235, %v1634
  %v1819 = vsel %vm1451, %v1238, %v1635
  %v1820 = vsel %vm1452, %v1240, %v1636
  %v1821 = vsel %vm1453, %v1243, %v1637
  %v1822 = vsel %vm1454, %v1245, %v1638
  %v1823 = vsel %vm1455, %v1248, %v1639
  %v1824 = vsel %vm1456, %v1250, %v1640
  %v1825 = vsel %vm1457, %v1253, %v1641
  %v1826 = vsel %vm1458, %v1255, %v1642
  %v1827 = vsel %vm1459, %v1258, %v1643
  %v1828 = vsel %vm1460, %v1260, %v1644
  %v1829 = vsel %vm1461, %v1263, %v1645
  %v1830 = vsel %vm1462, %v1265, %v1646
  %v1831 = vsel %vm1463, %v1268, %v1647
  %v1832 = vsel %vm1464, %v1270, %v1648
  %v1833 = vsel %vm1465, %v1273, %v1649
  %v1834 = vsel %vm1466, %v1275, %v1650
  %v1835 = vsel %vm1467, %v1278, %v1651
  %v1836 = vsel %vm1468, %v1280, %v1652
  %v1837 = vsel %vm1469, %v1283, %v1653
  %v1838 = vsel %vm1470, %v1285, %v1654
  %1839 = vst [vmem:[%s3] sm:$0xff] %v1655
  %1840 = vst [vmem:[%s3 + $0x8] sm:$0xff] %v1656
  %1841 = vst [vmem:[%s3 + $0x10] sm:$0xff] %v1657
  %1842 = vst [vmem:[%s3 + $0x18] sm:$0xff] %v1658
  %1843 = vst [vmem:[%s3 + $0x20] sm:$0xff] %v1659
  %1844 = vst [vmem:[%s3 + $0x28] sm:$0xff] %v1660
  %1845 = vst [vmem:[%s3 + $0x30] sm:$0xff] %v1661
  %1846 = vst [vmem:[%s3 + $0x38] sm:$0xff] %v1662
  %1847 = vst [vmem:[%s3 + $0x40] sm:$0xff] %v1663
  %1848 = vst [vmem:[%s3 + $0x48] sm:$0xff] %v1664
  %1849 = vst [vmem:[%s3 + $0x50] sm:$0xff] %v1665
  %1850 = vst [vmem:[%s3 + $0x58] sm:$0xff] %v1666
  %1851 = vst [vmem:[%s3 + $0x60] sm:$0xff] %v1667
  %1852 = vst [vmem:[%s3 + $0x68] sm:$0xff] %v1668
  %1853 = vst [vmem:[%s3 + $0x70] sm:$0xff] %v1669
  %1854 = vst [vmem:[%s3 + $0x78] sm:$0xff] %v1670
  %1855 = vst [vmem:[%s3 + $0x80] sm:$0xff] %v1671
  %1856 = vst [vmem:[%s3 + $0x88] sm:$0xff] %v1672
  %1857 = vst [vmem:[%s3 + $0x90] sm:$0xff] %v1673
  %1858 = vst [vmem:[%s3 + $0x98] sm:$0xff] %v1674
  %1859 = vst [vmem:[%s3 + $0xa0] sm:$0xff] %v1675
  %1860 = vst [vmem:[%s3 + $0xa8] sm:$0xff] %v1676
  %1861 = vst [vmem:[%s3 + $0xb0] sm:$0xff] %v1677
  %1862 = vst [vmem:[%s3 + $0xb8] sm:$0xff] %v1678
  %1863 = vst [vmem:[%s3 + $0xc0] sm:$0xff] %v1679
  %1864 = vst [vmem:[%s3 + $0xc8] sm:$0xff] %v1680
  %1865 = vst [vmem:[%s3 + $0xd0] sm:$0xff] %v1681
  %1866 = vst [vmem:[%s3 + $0xd8] sm:$0xff] %v1682
  %1867 = vst [vmem:[%s3 + $0xe0] sm:$0xff] %v1683
  %1868 = vst [vmem:[%s3 + $0xe8] sm:$0xff] %v1684
  %1869 = vst [vmem:[%s3 + $0xf0] sm:$0xff] %v1685
  %1870 = vst [vmem:[%s3 + $0xf8] sm:$0xff] %v1686
  %1871 = vst [vmem:[%s3 + $0x100] sm:$0xff] %v1687
  %1872 = vst [vmem:[%s3 + $0x108] sm:$0xff] %v1688
  %1873 = vst [vmem:[%s3 + $0x110] sm:$0xff] %v1689
  %1874 = vst [vmem:[%s3 + $0x118] sm:$0xff] %v1690
  %1875 = vst [vmem:[%s3 + $0x120] sm:$0xff] %v1691
  %1876 = vst [vmem:[%s3 + $0x128] sm:$0xff] %v1692
  %1877 = vst [vmem:[%s3 + $0x130] sm:$0xff] %v1693
  %1878 = vst [vmem:[%s3 + $0x138] sm:$0xff] %v1694
  %1879 = vst [vmem:[%s3 + $0x140] sm:$0xff] %v1695
  %1880 = vst [vmem:[%s3 + $0x148] sm:$0xff] %v1696
  %1881 = vst [vmem:[%s3 + $0x150] sm:$0xff] %v1697
  %1882 = vst [vmem:[%s3 + $0x158] sm:$0xff] %v1698
  %1883 = vst [vmem:[%s3 + $0x160] sm:$0xff] %v1699
  %1884 = vst [vmem:[%s3 + $0x168] sm:$0xff] %v1700
  %1885 = vst [vmem:[%s3 + $0x170] sm:$0xff] %v1701
  %1886 = vst [vmem:[%s3 + $0x178] sm:$0xff] %v1702
  %1887 = vst [vmem:[%s3 + $0x180] sm:$0xff] %v1703
  %1888 = vst [vmem:[%s3 + $0x188] sm:$0xff] %v1704
  %1889 = vst [vmem:[%s3 + $0x190] sm:$0xff] %v1705
  %1890 = vst [vmem:[%s3 + $0x198] sm:$0xff] %v1706
  %1891 = vst [vmem:[%s3 + $0x1a0] sm:$0xff] %v1707
  %1892 = vst [vmem:[%s3 + $0x1a8] sm:$0xff] %v1708
  %1893 = vst [vmem:[%s3 + $0x1b0] sm:$0xff] %v1709
  %1894 = vst [vmem:[%s3 + $0x1b8] sm:$0xff] %v1710
  %1895 = vst [vmem:[%s3 + $0x1c0] sm:$0xff] %v1711
  %1896 = vst [vmem:[%s3 + $0x1c8] sm:$0xff] %v1712
  %1897 = vst [vmem:[%s3 + $0x1d0] sm:$0xff] %v1713
  %1898 = vst [vmem:[%s3 + $0x1d8] sm:$0xff] %v1714
  %1899 = vst [vmem:[%s3 + $0x1e0] sm:$0xff] %v1715
  %1900 = vst [vmem:[%s3 + $0x1e8] sm:$0xff] %v1716
  %1901 = vst [vmem:[%s3 + $0x1f0] sm:$0xff] %v1717
  %1902 = vst [vmem:[%s3 + $0x1f8] sm:$0xff] %v1718
  %1903 = vst [vmem:[%s3 + $0x200] sm:$0xff] %v1719
  %1904 = vst [vmem:[%s3 + $0x208] sm:$0xff] %v1720
  %1905 = vst [vmem:[%s3 + $0x210] sm:$0xff] %v1721
  %1906 = vst [vmem:[%s3 + $0x218] sm:$0xff] %v1722
  %1907 = vst [vmem:[%s3 + $0x220] sm:$0xff] %v1723
  %1908 = vst [vmem:[%s3 + $0x228] sm:$0xff] %v1724
  %1909 = vst [vmem:[%s3 + $0x230] sm:$0xff] %v1725
  %1910 = vst [vmem:[%s3 + $0x238] sm:$0xff] %v1726
  %1911 = vst [vmem:[%s3 + $0x240] sm:$0xff] %v1727
  %1912 = vst [vmem:[%s3 + $0x248] sm:$0xff] %v1728
  %1913 = vst [vmem:[%s3 + $0x250] sm:$0xff] %v1729
  %1914 = vst [vmem:[%s3 + $0x258] sm:$0xff] %v1730
  %1915 = vst [vmem:[%s3 + $0x260] sm:$0xff] %v1731
  %1916 = vst [vmem:[%s3 + $0x268] sm:$0xff] %v1732
  %1917 = vst [vmem:[%s3 + $0x270] sm:$0xff] %v1733
  %1918 = vst [vmem:[%s3 + $0x278] sm:$0xff] %v1734
  %1919 = vst [vmem:[%s3 + $0x280] sm:$0xff] %v1735
  %1920 = vst [vmem:[%s3 + $0x288] sm:$0xff] %v1736
  %1921 = vst [vmem:[%s3 + $0x290] sm:$0xff] %v1737
  %1922 = vst [vmem:[%s3 + $0x298] sm:$0xff] %v1738
  %1923 = vst [vmem:[%s3 + $0x2a0] sm:$0xff] %v1739
  %1924 = vst [vmem:[%s3 + $0x2a8] sm:$0xff] %v1740
  %1925 = vst [vmem:[%s3 + $0x2b0] sm:$0xff] %v1741
  %1926 = vst [vmem:[%s3 + $0x2b8] sm:$0xff] %v1742
  %1927 = vst [vmem:[%s3 + $0x2c0] sm:$0xff] %v1743
  %1928 = vst [vmem:[%s3 + $0x2c8] sm:$0xff] %v1744
  %1929 = vst [vmem:[%s3 + $0x2d0] sm:$0xff] %v1745
  %1930 = vst [vmem:[%s3 + $0x2d8] sm:$0xff] %v1746
  %1931 = vst [vmem:[%s3 + $0x2e0] sm:$0xff] %v1747
  %1932 = vst [vmem:[%s3 + $0x2e8] sm:$0xff] %v1748
  %1933 = vst [vmem:[%s3 + $0x2f0] sm:$0xff] %v1749
  %1934 = vst [vmem:[%s3 + $0x2f8] sm:$0xff] %v1750
  %1935 = vst [vmem:[%s3 + $0x300] sm:$0xff] %v1751
  %1936 = vst [vmem:[%s3 + $0x308] sm:$0xff] %v1752
  %1937 = vst [vmem:[%s3 + $0x310] sm:$0xff] %v1753
  %1938 = vst [vmem:[%s3 + $0x318] sm:$0xff] %v1754
  %1939 = vst [vmem:[%s3 + $0x320] sm:$0xff] %v1755
  %1940 = vst [vmem:[%s3 + $0x328] sm:$0xff] %v1756
  %1941 = vst [vmem:[%s3 + $0x330] sm:$0xff] %v1757
  %1942 = vst [vmem:[%s3 + $0x338] sm:$0xff] %v1758
  %1943 = vst [vmem:[%s3 + $0x340] sm:$0xff] %v1759
  %1944 = vst [vmem:[%s3 + $0x348] sm:$0xff] %v1760
  %1945 = vst [vmem:[%s3 + $0x350] sm:$0xff] %v1761
  %1946 = vst [vmem:[%s3 + $0x358] sm:$0xff] %v1762
  %1947 = vst [vmem:[%s3 + $0x360] sm:$0xff] %v1763
  %1948 = vst [vmem:[%s3 + $0x368] sm:$0xff] %v1764
  %1949 = vst [vmem:[%s3 + $0x370] sm:$0xff] %v1765
  %1950 = vst [vmem:[%s3 + $0x378] sm:$0xff] %v1766
  %1951 = vst [vmem:[%s3 + $0x380] sm:$0xff] %v1767
  %1952 = vst [vmem:[%s3 + $0x388] sm:$0xff] %v1768
  %1953 = vst [vmem:[%s3 + $0x390] sm:$0xff] %v1769
  %1954 = vst [vmem:[%s3 + $0x398] sm:$0xff] %v1770
  %1955 = vst [vmem:[%s3 + $0x3a0] sm:$0xff] %v1771
  %1956 = vst [vmem:[%s3 + $0x3a8] sm:$0xff] %v1772
  %1957 = vst [vmem:[%s3 + $0x3b0] sm:$0xff] %v1773
  %1958 = vst [vmem:[%s3 + $0x3b8] sm:$0xff] %v1774
  %1959 = vst [vmem:[%s3 + $0x3c0] sm:$0xff] %v1775
  %1960 = vst [vmem:[%s3 + $0x3c8] sm:$0xff] %v1776
  %1961 = vst [vmem:[%s3 + $0x3d0] sm:$0xff] %v1777
  %1962 = vst [vmem:[%s3 + $0x3d8] sm:$0xff] %v1778
  %1963 = vst [vmem:[%s3 + $0x3e0] sm:$0xff] %v1779
  %1964 = vst [vmem:[%s3 + $0x3e8] sm:$0xff] %v1780
  %1965 = vst [vmem:[%s3 + $0x3f0] sm:$0xff] %v1781
  %1966 = vst [vmem:[%s3 + $0x3f8] sm:$0xff] %v1782
  %1967 = vst [vmem:[%s3 + $0x400] sm:$0xff] %v1783
  %1968 = vst [vmem:[%s3 + $0x408] sm:$0xff] %v1784
  %1969 = vst [vmem:[%s3 + $0x410] sm:$0xff] %v1785
  %1970 = vst [vmem:[%s3 + $0x418] sm:$0xff] %v1786
  %1971 = vst [vmem:[%s3 + $0x420] sm:$0xff] %v1787
  %1972 = vst [vmem:[%s3 + $0x428] sm:$0xff] %v1788
  %1973 = vst [vmem:[%s3 + $0x430] sm:$0xff] %v1789
  %1974 = vst [vmem:[%s3 + $0x438] sm:$0xff] %v1790
  %1975 = vst [vmem:[%s3 + $0x440] sm:$0xff] %v1791
  %1976 = vst [vmem:[%s3 + $0x448] sm:$0xff] %v1792
  %1977 = vst [vmem:[%s3 + $0x450] sm:$0xff] %v1793
  %1978 = vst [vmem:[%s3 + $0x458] sm:$0xff] %v1794
  %1979 = vst [vmem:[%s3 + $0x460] sm:$0xff] %v1795
  %1980 = vst [vmem:[%s3 + $0x468] sm:$0xff] %v1796
  %1981 = vst [vmem:[%s3 + $0x470] sm:$0xff] %v1797
  %1982 = vst [vmem:[%s3 + $0x478] sm:$0xff] %v1798
  %1983 = vst [vmem:[%s3 + $0x480] sm:$0xff] %v1799
  %1984 = vst [vmem:[%s3 + $0x488] sm:$0xff] %v1800
  %1985 = vst [vmem:[%s3 + $0x490] sm:$0xff] %v1801
  %1986 = vst [vmem:[%s3 + $0x498] sm:$0xff] %v1802
  %1987 = vst [vmem:[%s3 + $0x4a0] sm:$0xff] %v1803
  %1988 = vst [vmem:[%s3 + $0x4a8] sm:$0xff] %v1804
  %1989 = vst [vmem:[%s3 + $0x4b0] sm:$0xff] %v1805
  %1990 = vst [vmem:[%s3 + $0x4b8] sm:$0xff] %v1806
  %1991 = vst [vmem:[%s3 + $0x4c0] sm:$0xff] %v1807
  %1992 = vst [vmem:[%s3 + $0x4c8] sm:$0xff] %v1808
  %1993 = vst [vmem:[%s3 + $0x4d0] sm:$0xff] %v1809
  %1994 = vst [vmem:[%s3 + $0x4d8] sm:$0xff] %v1810
  %1995 = vst [vmem:[%s3 + $0x4e0] sm:$0xff] %v1811
  %1996 = vst [vmem:[%s3 + $0x4e8] sm:$0xff] %v1812
  %1997 = vst [vmem:[%s3 + $0x4f0] sm:$0xff] %v1813
  %1998 = vst [vmem:[%s3 + $0x4f8] sm:$0xff] %v1814
  %1999 = vst [vmem:[%s3 + $0x500] sm:$0xff] %v1815
  %2000 = vst [vmem:[%s3 + $0x508] sm:$0xff] %v1816
  %2001 = vst [vmem:[%s3 + $0x510] sm:$0xff] %v1817
  %2002 = vst [vmem:[%s3 + $0x518] sm:$0xff] %v1818
  %2003 = vst [vmem:[%s3 + $0x520] sm:$0xff] %v1819
  %2004 = vst [vmem:[%s3 + $0x528] sm:$0xff] %v1820
  %2005 = vst [vmem:[%s3 + $0x530] sm:$0xff] %v1821
  %2006 = vst [vmem:[%s3 + $0x538] sm:$0xff] %v1822
  %2007 = vst [vmem:[%s3 + $0x540] sm:$0xff] %v1823
  %2008 = vst [vmem:[%s3 + $0x548] sm:$0xff] %v1824
  %2009 = vst [vmem:[%s3 + $0x550] sm:$0xff] %v1825
  %2010 = vst [vmem:[%s3 + $0x558] sm:$0xff] %v1826
  %2011 = vst [vmem:[%s3 + $0x560] sm:$0xff] %v1827
  %2012 = vst [vmem:[%s3 + $0x568] sm:$0xff] %v1828
  %2013 = vst [vmem:[%s3 + $0x570] sm:$0xff] %v1829
  %2014 = vst [vmem:[%s3 + $0x578] sm:$0xff] %v1830
  %2015 = vst [vmem:[%s3 + $0x580] sm:$0xff] %v1831
  %2016 = vst [vmem:[%s3 + $0x588] sm:$0xff] %v1832
  %2017 = vst [vmem:[%s3 + $0x590] sm:$0xff] %v1833
  %2018 = vst [vmem:[%s3 + $0x598] sm:$0xff] %v1834
  %2019 = vst [vmem:[%s3 + $0x5a0] sm:$0xff] %v1835
  %2020 = vst [vmem:[%s3 + $0x5a8] sm:$0xff] %v1836
  %2021 = vst [vmem:[%s3 + $0x5b0] sm:$0xff] %v1837
  %2022 = vst [vmem:[%s3 + $0x5b8] sm:$0xff] %v1838
  // Predicated region
  $region14: #{cnn_encoder_forward.6} parent=0 // pred_check
    _
  $region15: #{cnn_encoder_forward.6} parent=0 // pred_check_branch
    %2024 = sbr.rel (0) target = $region17
  $region16: #{cnn_encoder_forward.6} parent=0 // pred_region
    _
  $region17: #{cnn_encoder_forward.6} parent=0 // pred_fallthru
    _
  // Predicated region
  $region18: #{cnn_encoder_forward.6} parent=0 // pred_check
    _
  $region19: #{cnn_encoder_forward.6} parent=0 // pred_check_branch
    %2026 = sbr.rel (0) target = $region21
  $region20: #{cnn_encoder_forward.6} parent=0 // pred_region
    _
  $region21: #{cnn_encoder_forward.6} parent=0 // pred_fallthru
    _

// kernel: cnn_encoder_forward.7
$region0: #{cnn_encoder_forward.7}
  #allocation0 [shape = 'u32[]', space=smem, size = 0x4, offset = 0x4, fixed_abs, tag = 'smem constant byte address 0x4 - core index']
  #allocation1 [shape = 'u32[72,128]{1,0:T(1,128)}', space=vmem, size = 0x9000, scoped, tag = 'internal scratch']
  %s0 = inlined_call_operand.vmem [shape: bf16[352,256], index: 0, kind: input, shape index: {}]
  %s1 = inlined_call_operand.vmem [shape: bf16[256,128], index: 1, kind: input, shape index: {}]
  %s2 = inlined_call_operand.vmem [shape: f32[1,128], index: 2, kind: input, shape index: {}]
  %s3 = inlined_call_operand.vmem [shape: f32[1,128], index: 3, kind: input, shape index: {}]
  %s4 = inlined_call_operand.vmem [shape: f32[352,128], index: 4, kind: output, shape index: {}]
  %s5 = sld [smem:[#allocation0]]
  $region26: #{cnn_encoder_forward.7} parent=0
    _
  %s7 = ssub.s32 1, %s5
  %s8 = scalar_select 0, %s7, %s5
  // Predicated region
  $region2: #{cnn_encoder_forward.7} parent=0 // pred_check
    _
  $region3: #{cnn_encoder_forward.7} parent=0 // pred_check_branch
    %10 = sbr.rel (0) target = $region5
  $region4: #{cnn_encoder_forward.7} parent=0 // pred_region
    _
  $region5: #{cnn_encoder_forward.7} parent=0 // pred_fallthru
    _
  // Predicated region
  $region6: #{cnn_encoder_forward.7} parent=0 // pred_check
    _
  $region7: #{cnn_encoder_forward.7} parent=0 // pred_check_branch
    %12 = sbr.rel (0) target = $region9
  $region8: #{cnn_encoder_forward.7} parent=0 // pred_region
    _
  $region9: #{cnn_encoder_forward.7} parent=0 // pred_fallthru
    _
  // Predicated region
  $region10: #{cnn_encoder_forward.7} parent=0 // pred_check
    _
  $region11: #{cnn_encoder_forward.7} parent=0 // pred_check_branch
    %14 = sbr.rel (0) target = $region13
  $region12: #{cnn_encoder_forward.7} parent=0 // pred_region
    _
  $region13: #{cnn_encoder_forward.7} parent=0 // pred_fallthru
    _
  // Predicated region
  $region14: #{cnn_encoder_forward.7} parent=0 // pred_check
    _
  $region15: #{cnn_encoder_forward.7} parent=0 // pred_check_branch
    %16 = sbr.rel (0) target = $region17
  $region16: #{cnn_encoder_forward.7} parent=0 // pred_region
    _
  $region17: #{cnn_encoder_forward.7} parent=0 // pred_fallthru
    _
  %v17 = vld [vmem:[%s0] sm:$0xff]
  %v18 = vld [vmem:[%s0 + $0x8] sm:$0xff]
  %v19 = vld [vmem:[%s0 + $0x10] sm:$0xff]
  %v20 = vld [vmem:[%s0 + $0x18] sm:$0xff]
  %v21 = vld [vmem:[%s0 + $0x20] sm:$0xff]
  %v22 = vld [vmem:[%s0 + $0x28] sm:$0xff]
  %v23 = vld [vmem:[%s0 + $0x30] sm:$0xff]
  %v24 = vld [vmem:[%s0 + $0x38] sm:$0xff]
  %v25 = vld [vmem:[%s0 + $0x40] sm:$0xff]
  %v26 = vld [vmem:[%s0 + $0x48] sm:$0xff]
  %v27 = vld [vmem:[%s0 + $0x50] sm:$0xff]
  %v28 = vld [vmem:[%s0 + $0x58] sm:$0xff]
  %v29 = vld [vmem:[%s0 + $0x60] sm:$0xff]
  %v30 = vld [vmem:[%s0 + $0x68] sm:$0xff]
  %v31 = vld [vmem:[%s0 + $0x70] sm:$0xff]
  %v32 = vld [vmem:[%s0 + $0x78] sm:$0xff]
  %v33 = vld [vmem:[%s0 + $0x80] sm:$0xff]
  %v34 = vld [vmem:[%s0 + $0x88] sm:$0xff]
  %v35 = vld [vmem:[%s0 + $0x90] sm:$0xff]
  %v36 = vld [vmem:[%s0 + $0x98] sm:$0xff]
  %v37 = vld [vmem:[%s0 + $0xa0] sm:$0xff]
  %v38 = vld [vmem:[%s0 + $0xa8] sm:$0xff]
  %v39 = vld [vmem:[%s0 + $0xb0] sm:$0xff]
  %v40 = vld [vmem:[%s0 + $0xb8] sm:$0xff]
  %v41 = vld [vmem:[%s0 + $0xc0] sm:$0xff]
  %v42 = vld [vmem:[%s0 + $0xc8] sm:$0xff]
  %v43 = vld [vmem:[%s0 + $0xd0] sm:$0xff]
  %v44 = vld [vmem:[%s0 + $0xd8] sm:$0xff]
  %v45 = vld [vmem:[%s0 + $0xe0] sm:$0xff]
  %v46 = vld [vmem:[%s0 + $0xe8] sm:$0xff]
  %v47 = vld [vmem:[%s0 + $0xf0] sm:$0xff]
  %v48 = vld [vmem:[%s0 + $0xf8] sm:$0xff]
  %v49 = vld [vmem:[%s0 + $0x100] sm:$0xff]
  %v50 = vld [vmem:[%s0 + $0x108] sm:$0xff]
  %v51 = vld [vmem:[%s0 + $0x110] sm:$0xff]
  %v52 = vld [vmem:[%s0 + $0x118] sm:$0xff]
  %v53 = vld [vmem:[%s0 + $0x120] sm:$0xff]
  %v54 = vld [vmem:[%s0 + $0x128] sm:$0xff]
  %v55 = vld [vmem:[%s0 + $0x130] sm:$0xff]
  %v56 = vld [vmem:[%s0 + $0x138] sm:$0xff]
  %v57 = vld [vmem:[%s0 + $0x140] sm:$0xff]
  %v58 = vld [vmem:[%s0 + $0x148] sm:$0xff]
  %v59 = vld [vmem:[%s0 + $0x150] sm:$0xff]
  %v60 = vld [vmem:[%s0 + $0x158] sm:$0xff]
  %v61 = vld [vmem:[%s1] sm:$0xf]
  %v62 = vld [vmem:[%s1 + $0x4] sm:$0xf]
  %v63 = vld [vmem:[%s1 + $0x8] sm:$0xf]
  %v64 = vld [vmem:[%s1 + $0xc] sm:$0xf]
  %v65 = vld [vmem:[%s1 + $0x10] sm:$0xf]
  %v66 = vld [vmem:[%s1 + $0x14] sm:$0xf]
  %v67 = vld [vmem:[%s1 + $0x18] sm:$0xf]
  %v68 = vld [vmem:[%s1 + $0x1c] sm:$0xf]
  %v69 = vld [vmem:[%s1 + $0x20] sm:$0xf]
  %v70 = vld [vmem:[%s1 + $0x24] sm:$0xf]
  %v71 = vld [vmem:[%s1 + $0x28] sm:$0xf]
  %v72 = vld [vmem:[%s1 + $0x2c] sm:$0xf]
  %v73 = vld [vmem:[%s1 + $0x30] sm:$0xf]
  %v74 = vld [vmem:[%s1 + $0x34] sm:$0xf]
  %v75 = vld [vmem:[%s1 + $0x38] sm:$0xf]
  %v76 = vld [vmem:[%s1 + $0x3c] sm:$0xf]
  %v77 = vld [vmem:[%s1 + $0x40] sm:$0xf]
  %v78 = vld [vmem:[%s1 + $0x44] sm:$0xf]
  %v79 = vld [vmem:[%s1 + $0x48] sm:$0xf]
  %v80 = vld [vmem:[%s1 + $0x4c] sm:$0xf]
  %v81 = vld [vmem:[%s1 + $0x50] sm:$0xf]
  %v82 = vld [vmem:[%s1 + $0x54] sm:$0xf]
  %v83 = vld [vmem:[%s1 + $0x58] sm:$0xf]
  %v84 = vld [vmem:[%s1 + $0x5c] sm:$0xf]
  %v85 = vld [vmem:[%s1 + $0x60] sm:$0xf]
  %v86 = vld [vmem:[%s1 + $0x64] sm:$0xf]
  %v87 = vld [vmem:[%s1 + $0x68] sm:$0xf]
  %v88 = vld [vmem:[%s1 + $0x6c] sm:$0xf]
  %v89 = vld [vmem:[%s1 + $0x70] sm:$0xf]
  %v90 = vld [vmem:[%s1 + $0x74] sm:$0xf]
  %v91 = vld [vmem:[%s1 + $0x78] sm:$0xf]
  %v92 = vld [vmem:[%s1 + $0x7c] sm:$0xf]
  %v137 = vunpack.c.l.b16 %v17
  %v138 = vunpack.c.h.b16 %v17
  %v139 = vunpack.c.l.b16 %v18
  %v140 = vunpack.c.h.b16 %v18
  %v141 = vunpack.c.l.b16 %v19
  %v142 = vunpack.c.h.b16 %v19
  %v143 = vunpack.c.l.b16 %v20
  %v144 = vunpack.c.h.b16 %v20
  %v145 = vunpack.c.l.b16 %v21
  %v146 = vunpack.c.h.b16 %v21
  %v147 = vunpack.c.l.b16 %v22
  %v148 = vunpack.c.h.b16 %v22
  %v149 = vunpack.c.l.b16 %v23
  %v150 = vunpack.c.h.b16 %v23
  %v151 = vunpack.c.l.b16 %v24
  %v152 = vunpack.c.h.b16 %v24
  %v153 = vunpack.c.l.b16 %v25
  %v154 = vunpack.c.h.b16 %v25
  %v155 = vunpack.c.l.b16 %v26
  %v156 = vunpack.c.h.b16 %v26
  %v157 = vunpack.c.l.b16 %v27
  %v158 = vunpack.c.h.b16 %v27
  %v159 = vunpack.c.l.b16 %v28
  %v160 = vunpack.c.h.b16 %v28
  %v161 = vunpack.c.l.b16 %v29
  %v162 = vunpack.c.h.b16 %v29
  %v163 = vunpack.c.l.b16 %v30
  %v164 = vunpack.c.h.b16 %v30
  %v165 = vunpack.c.l.b16 %v31
  %v166 = vunpack.c.h.b16 %v31
  %v167 = vunpack.c.l.b16 %v32
  %v168 = vunpack.c.h.b16 %v32
  %v169 = vunpack.c.l.b16 %v33
  %v170 = vunpack.c.h.b16 %v33
  %v171 = vunpack.c.l.b16 %v34
  %v172 = vunpack.c.h.b16 %v34
  %v173 = vunpack.c.l.b16 %v35
  %v174 = vunpack.c.h.b16 %v35
  %v175 = vunpack.c.l.b16 %v36
  %v176 = vunpack.c.h.b16 %v36
  %v177 = vunpack.c.l.b16 %v37
  %v178 = vunpack.c.h.b16 %v37
  %v179 = vunpack.c.l.b16 %v38
  %v180 = vunpack.c.h.b16 %v38
  %v181 = vunpack.c.l.b16 %v39
  %v182 = vunpack.c.h.b16 %v39
  %v183 = vunpack.c.l.b16 %v40
  %v184 = vunpack.c.h.b16 %v40
  %v185 = vunpack.c.l.b16 %v41
  %v186 = vunpack.c.h.b16 %v41
  %v187 = vunpack.c.l.b16 %v42
  %v188 = vunpack.c.h.b16 %v42
  %v189 = vunpack.c.l.b16 %v43
  %v190 = vunpack.c.h.b16 %v43
  %v191 = vunpack.c.l.b16 %v44
  %v192 = vunpack.c.h.b16 %v44
  %v193 = vunpack.c.l.b16 %v45
  %v194 = vunpack.c.h.b16 %v45
  %v195 = vunpack.c.l.b16 %v46
  %v196 = vunpack.c.h.b16 %v46
  %v197 = vunpack.c.l.b16 %v47
  %v198 = vunpack.c.h.b16 %v47
  %v199 = vunpack.c.l.b16 %v48
  %v200 = vunpack.c.h.b16 %v48
  %v201 = vunpack.c.l.b16 %v49
  %v202 = vunpack.c.h.b16 %v49
  %v203 = vunpack.c.l.b16 %v50
  %v204 = vunpack.c.h.b16 %v50
  %v205 = vunpack.c.l.b16 %v51
  %v206 = vunpack.c.h.b16 %v51
  %v207 = vunpack.c.l.b16 %v52
  %v208 = vunpack.c.h.b16 %v52
  %v209 = vunpack.c.l.b16 %v53
  %v210 = vunpack.c.h.b16 %v53
  %v211 = vunpack.c.l.b16 %v54
  %v212 = vunpack.c.h.b16 %v54
  %v213 = vunpack.c.l.b16 %v55
  %v214 = vunpack.c.h.b16 %v55
  %v215 = vunpack.c.l.b16 %v56
  %v216 = vunpack.c.h.b16 %v56
  %v217 = vunpack.c.l.b16 %v57
  %v218 = vunpack.c.h.b16 %v57
  %v219 = vunpack.c.l.b16 %v58
  %v220 = vunpack.c.h.b16 %v58
  %v221 = vunpack.c.l.b16 %v59
  %v222 = vunpack.c.h.b16 %v59
  %v223 = vunpack.c.l.b16 %v60
  %v224 = vunpack.c.h.b16 %v60
  %v225 = vpack.c.b16 %v139, %v137
  %v226 = vpack.c.b16 %v140, %v138
  %v227 = vpack.c.b16 %v143, %v141
  %v228 = vpack.c.b16 %v144, %v142
  %v229 = vpack.c.b16 %v147, %v145
  %v230 = vpack.c.b16 %v148, %v146
  %v231 = vpack.c.b16 %v151, %v149
  %v232 = vpack.c.b16 %v152, %v150
  %v233 = vpack.c.b16 %v155, %v153
  %v234 = vpack.c.b16 %v156, %v154
  %v235 = vpack.c.b16 %v159, %v157
  %v236 = vpack.c.b16 %v160, %v158
  %v237 = vpack.c.b16 %v163, %v161
  %v238 = vpack.c.b16 %v164, %v162
  %v239 = vpack.c.b16 %v167, %v165
  %v240 = vpack.c.b16 %v168, %v166
  %v241 = vpack.c.b16 %v171, %v169
  %v242 = vpack.c.b16 %v172, %v170
  %v243 = vpack.c.b16 %v175, %v173
  %v244 = vpack.c.b16 %v176, %v174
  %v245 = vpack.c.b16 %v179, %v177
  %v246 = vpack.c.b16 %v180, %v178
  %v247 = vpack.c.b16 %v183, %v181
  %v248 = vpack.c.b16 %v184, %v182
  %v249 = vpack.c.b16 %v187, %v185
  %v250 = vpack.c.b16 %v188, %v186
  %v251 = vpack.c.b16 %v191, %v189
  %v252 = vpack.c.b16 %v192, %v190
  %v253 = vpack.c.b16 %v195, %v193
  %v254 = vpack.c.b16 %v196, %v194
  %v255 = vpack.c.b16 %v199, %v197
  %v256 = vpack.c.b16 %v200, %v198
  %v257 = vpack.c.b16 %v203, %v201
  %v258 = vpack.c.b16 %v204, %v202
  %v259 = vpack.c.b16 %v207, %v205
  %v260 = vpack.c.b16 %v208, %v206
  %v261 = vpack.c.b16 %v211, %v209
  %v262 = vpack.c.b16 %v212, %v210
  %v263 = vpack.c.b16 %v215, %v213
  %v264 = vpack.c.b16 %v216, %v214
  %v265 = vpack.c.b16 %v219, %v217
  %v266 = vpack.c.b16 %v220, %v218
  %v267 = vpack.c.b16 %v223, %v221
  %v268 = vpack.c.b16 %v224, %v222
  %v345 = vunpack.c.l.b16 %v61
  %v346 = vunpack.c.l.b16 %v62
  %v347 = vunpack.c.l.b16 %v63
  %v348 = vunpack.c.l.b16 %v64
  %v349 = vunpack.c.l.b16 %v65
  %v350 = vunpack.c.l.b16 %v66
  %v351 = vunpack.c.l.b16 %v67
  %v352 = vunpack.c.l.b16 %v68
  %v353 = vunpack.c.l.b16 %v69
  %v354 = vunpack.c.l.b16 %v70
  %v355 = vunpack.c.l.b16 %v71
  %v356 = vunpack.c.l.b16 %v72
  %v357 = vunpack.c.l.b16 %v73
  %v358 = vunpack.c.l.b16 %v74
  %v359 = vunpack.c.l.b16 %v75
  %v360 = vunpack.c.l.b16 %v76
  %v361 = vunpack.c.l.b16 %v77
  %v362 = vunpack.c.l.b16 %v78
  %v363 = vunpack.c.l.b16 %v79
  %v364 = vunpack.c.l.b16 %v80
  %v365 = vunpack.c.l.b16 %v81
  %v366 = vunpack.c.l.b16 %v82
  %v367 = vunpack.c.l.b16 %v83
  %v368 = vunpack.c.l.b16 %v84
  %v369 = vunpack.c.l.b16 %v85
  %v370 = vunpack.c.l.b16 %v86
  %v371 = vunpack.c.l.b16 %v87
  %v372 = vunpack.c.l.b16 %v88
  %v373 = vunpack.c.l.b16 %v89
  %v374 = vunpack.c.l.b16 %v90
  %v375 = vunpack.c.l.b16 %v91
  %v376 = vunpack.c.l.b16 %v92
  %v377 = vpack.c.b16 %v346, %v345
  %v378 = vpack.c.b16 %v348, %v347
  %v379 = vpack.c.b16 %v350, %v349
  %v380 = vpack.c.b16 %v352, %v351
  %v381 = vpack.c.b16 %v354, %v353
  %v382 = vpack.c.b16 %v356, %v355
  %v383 = vpack.c.b16 %v358, %v357
  %v384 = vpack.c.b16 %v360, %v359
  %v385 = vpack.c.b16 %v362, %v361
  %v386 = vpack.c.b16 %v364, %v363
  %v387 = vpack.c.b16 %v366, %v365
  %v388 = vpack.c.b16 %v368, %v367
  %v389 = vpack.c.b16 %v370, %v369
  %v390 = vpack.c.b16 %v372, %v371
  %v391 = vpack.c.b16 %v374, %v373
  %v392 = vpack.c.b16 %v376, %v375
  %409 = vmatpush.bf16.msra.mxu0 %v384
  %410 = vmatpush.bf16.msra.mxu0 %v383
  %411 = vmatpush.bf16.msra.mxu0 %v382
  %412 = vmatpush.bf16.msra.mxu0 %v381
  %413 = vmatpush.bf16.msra.mxu0 %v380
  %414 = vmatpush.bf16.msra.mxu0 %v379
  %415 = vmatpush.bf16.msra.mxu0 %v378
  %416 = vmatpush.bf16.msra.mxu0 %v377
  %417 = vmatmul.bf16.gmra.mxu0 %v225
  %v418 = vpop.f32.mrf.mxu0
  %v419 = vadd.f32 0.0, %v418
  %v420 = vpop.f32.mrf.mxu0
  %v421 = vadd.f32 0.0, %v420
  %422 = vmatmul.bf16.gmra.mxu0 %v227
  %v423 = vpop.f32.mrf.mxu0
  %v424 = vadd.f32 0.0, %v423
  %v425 = vpop.f32.mrf.mxu0
  %v426 = vadd.f32 0.0, %v425
  %427 = vmatmul.bf16.gmra.mxu0 %v229
  %v428 = vpop.f32.mrf.mxu0
  %v429 = vadd.f32 0.0, %v428
  %v430 = vpop.f32.mrf.mxu0
  %v431 = vadd.f32 0.0, %v430
  %432 = vmatmul.bf16.gmra.mxu0 %v231
  %v433 = vpop.f32.mrf.mxu0
  %v434 = vadd.f32 0.0, %v433
  %v435 = vpop.f32.mrf.mxu0
  %v436 = vadd.f32 0.0, %v435
  %437 = vmatmul.bf16.gmra.mxu0 %v233
  %v438 = vpop.f32.mrf.mxu0
  %v439 = vadd.f32 0.0, %v438
  %v440 = vpop.f32.mrf.mxu0
  %v441 = vadd.f32 0.0, %v440
  %442 = vmatmul.bf16.gmra.mxu0 %v235
  %v443 = vpop.f32.mrf.mxu0
  %v444 = vadd.f32 0.0, %v443
  %v445 = vpop.f32.mrf.mxu0
  %v446 = vadd.f32 0.0, %v445
  %447 = vmatmul.bf16.gmra.mxu0 %v237
  %v448 = vpop.f32.mrf.mxu0
  %v449 = vadd.f32 0.0, %v448
  %v450 = vpop.f32.mrf.mxu0
  %v451 = vadd.f32 0.0, %v450
  %452 = vmatmul.bf16.gmra.mxu0 %v239
  %v453 = vpop.f32.mrf.mxu0
  %v454 = vadd.f32 0.0, %v453
  %v455 = vpop.f32.mrf.mxu0
  %v456 = vadd.f32 0.0, %v455
  %457 = vmatmul.bf16.gmra.mxu0 %v241
  %v458 = vpop.f32.mrf.mxu0
  %v459 = vadd.f32 0.0, %v458
  %v460 = vpop.f32.mrf.mxu0
  %v461 = vadd.f32 0.0, %v460
  %462 = vmatmul.bf16.gmra.mxu0 %v243
  %v463 = vpop.f32.mrf.mxu0
  %v464 = vadd.f32 0.0, %v463
  %v465 = vpop.f32.mrf.mxu0
  %v466 = vadd.f32 0.0, %v465
  %467 = vmatmul.bf16.gmra.mxu0 %v245
  %v468 = vpop.f32.mrf.mxu0
  %v469 = vadd.f32 0.0, %v468
  %v470 = vpop.f32.mrf.mxu0
  %v471 = vadd.f32 0.0, %v470
  %472 = vmatmul.bf16.gmra.mxu0 %v247
  %v473 = vpop.f32.mrf.mxu0
  %v474 = vadd.f32 0.0, %v473
  %v475 = vpop.f32.mrf.mxu0
  %v476 = vadd.f32 0.0, %v475
  %477 = vmatmul.bf16.gmra.mxu0 %v249
  %v478 = vpop.f32.mrf.mxu0
  %v479 = vadd.f32 0.0, %v478
  %v480 = vpop.f32.mrf.mxu0
  %v481 = vadd.f32 0.0, %v480
  %482 = vmatmul.bf16.gmra.mxu0 %v251
  %v483 = vpop.f32.mrf.mxu0
  %v484 = vadd.f32 0.0, %v483
  %v485 = vpop.f32.mrf.mxu0
  %v486 = vadd.f32 0.0, %v485
  %487 = vmatmul.bf16.gmra.mxu0 %v253
  %v488 = vpop.f32.mrf.mxu0
  %v489 = vadd.f32 0.0, %v488
  %v490 = vpop.f32.mrf.mxu0
  %v491 = vadd.f32 0.0, %v490
  %492 = vmatmul.bf16.gmra.mxu0 %v255
  %v493 = vpop.f32.mrf.mxu0
  %v494 = vadd.f32 0.0, %v493
  %v495 = vpop.f32.mrf.mxu0
  %v496 = vadd.f32 0.0, %v495
  %497 = vmatmul.bf16.gmra.mxu0 %v257
  %v498 = vpop.f32.mrf.mxu0
  %v499 = vadd.f32 0.0, %v498
  %v500 = vpop.f32.mrf.mxu0
  %v501 = vadd.f32 0.0, %v500
  %502 = vmatmul.bf16.gmra.mxu0 %v259
  %v503 = vpop.f32.mrf.mxu0
  %v504 = vadd.f32 0.0, %v503
  %v505 = vpop.f32.mrf.mxu0
  %v506 = vadd.f32 0.0, %v505
  %507 = vmatmul.bf16.gmra.mxu0 %v261
  %v508 = vpop.f32.mrf.mxu0
  %v509 = vadd.f32 0.0, %v508
  %v510 = vpop.f32.mrf.mxu0
  %v511 = vadd.f32 0.0, %v510
  %512 = vmatmul.bf16.gmra.mxu0 %v263
  %v513 = vpop.f32.mrf.mxu0
  %v514 = vadd.f32 0.0, %v513
  %v515 = vpop.f32.mrf.mxu0
  %v516 = vadd.f32 0.0, %v515
  %517 = vmatmul.bf16.gmra.mxu0 %v265
  %v518 = vpop.f32.mrf.mxu0
  %v519 = vadd.f32 0.0, %v518
  %v520 = vpop.f32.mrf.mxu0
  %v521 = vadd.f32 0.0, %v520
  %522 = vmatmul.bf16.gmra.mxu0 %v267
  %v523 = vpop.f32.mrf.mxu0
  %v524 = vadd.f32 0.0, %v523
  %v525 = vpop.f32.mrf.mxu0
  %v526 = vadd.f32 0.0, %v525
  %527 = vdwg.mxu0
  %528 = vmatpush.bf16.msra.mxu0 %v392
  %529 = vmatpush.bf16.msra.mxu0 %v391
  %530 = vmatpush.bf16.msra.mxu0 %v390
  %531 = vmatpush.bf16.msra.mxu0 %v389
  %532 = vmatpush.bf16.msra.mxu0 %v388
  %533 = vmatpush.bf16.msra.mxu0 %v387
  %534 = vmatpush.bf16.msra.mxu0 %v386
  %535 = vmatpush.bf16.msra.mxu0 %v385
  %536 = vmatmul.bf16.gmra.mxu0 %v226
  %v537 = vpop.f32.mrf.mxu0
  %v538 = vadd.f32 %v419, %v537
  %v539 = vpop.f32.mrf.mxu0
  %v540 = vadd.f32 %v421, %v539
  %541 = vmatmul.bf16.gmra.mxu0 %v228
  %v542 = vpop.f32.mrf.mxu0
  %v543 = vadd.f32 %v424, %v542
  %v544 = vpop.f32.mrf.mxu0
  %v545 = vadd.f32 %v426, %v544
  %546 = vmatmul.bf16.gmra.mxu0 %v230
  %v547 = vpop.f32.mrf.mxu0
  %v548 = vadd.f32 %v429, %v547
  %v549 = vpop.f32.mrf.mxu0
  %v550 = vadd.f32 %v431, %v549
  %551 = vmatmul.bf16.gmra.mxu0 %v232
  %v552 = vpop.f32.mrf.mxu0
  %v553 = vadd.f32 %v434, %v552
  %v554 = vpop.f32.mrf.mxu0
  %v555 = vadd.f32 %v436, %v554
  %556 = vmatmul.bf16.gmra.mxu0 %v234
  %v557 = vpop.f32.mrf.mxu0
  %v558 = vadd.f32 %v439, %v557
  %v559 = vpop.f32.mrf.mxu0
  %v560 = vadd.f32 %v441, %v559
  %561 = vmatmul.bf16.gmra.mxu0 %v236
  %v562 = vpop.f32.mrf.mxu0
  %v563 = vadd.f32 %v444, %v562
  %v564 = vpop.f32.mrf.mxu0
  %v565 = vadd.f32 %v446, %v564
  %566 = vmatmul.bf16.gmra.mxu0 %v238
  %v567 = vpop.f32.mrf.mxu0
  %v568 = vadd.f32 %v449, %v567
  %v569 = vpop.f32.mrf.mxu0
  %v570 = vadd.f32 %v451, %v569
  %571 = vmatmul.bf16.gmra.mxu0 %v240
  %v572 = vpop.f32.mrf.mxu0
  %v573 = vadd.f32 %v454, %v572
  %v574 = vpop.f32.mrf.mxu0
  %v575 = vadd.f32 %v456, %v574
  %576 = vmatmul.bf16.gmra.mxu0 %v242
  %v577 = vpop.f32.mrf.mxu0
  %v578 = vadd.f32 %v459, %v577
  %v579 = vpop.f32.mrf.mxu0
  %v580 = vadd.f32 %v461, %v579
  %581 = vmatmul.bf16.gmra.mxu0 %v244
  %v582 = vpop.f32.mrf.mxu0
  %v583 = vadd.f32 %v464, %v582
  %v584 = vpop.f32.mrf.mxu0
  %v585 = vadd.f32 %v466, %v584
  %586 = vmatmul.bf16.gmra.mxu0 %v246
  %v587 = vpop.f32.mrf.mxu0
  %v588 = vadd.f32 %v469, %v587
  %v589 = vpop.f32.mrf.mxu0
  %v590 = vadd.f32 %v471, %v589
  %591 = vmatmul.bf16.gmra.mxu0 %v248
  %v592 = vpop.f32.mrf.mxu0
  %v593 = vadd.f32 %v474, %v592
  %v594 = vpop.f32.mrf.mxu0
  %v595 = vadd.f32 %v476, %v594
  %596 = vmatmul.bf16.gmra.mxu0 %v250
  %v597 = vpop.f32.mrf.mxu0
  %v598 = vadd.f32 %v479, %v597
  %v599 = vpop.f32.mrf.mxu0
  %v600 = vadd.f32 %v481, %v599
  %601 = vmatmul.bf16.gmra.mxu0 %v252
  %v602 = vpop.f32.mrf.mxu0
  %v603 = vadd.f32 %v484, %v602
  %v604 = vpop.f32.mrf.mxu0
  %v605 = vadd.f32 %v486, %v604
  %606 = vmatmul.bf16.gmra.mxu0 %v254
  %v607 = vpop.f32.mrf.mxu0
  %v608 = vadd.f32 %v489, %v607
  %v609 = vpop.f32.mrf.mxu0
  %v610 = vadd.f32 %v491, %v609
  %611 = vmatmul.bf16.gmra.mxu0 %v256
  %v612 = vpop.f32.mrf.mxu0
  %v613 = vadd.f32 %v494, %v612
  %v614 = vpop.f32.mrf.mxu0
  %v615 = vadd.f32 %v496, %v614
  %616 = vmatmul.bf16.gmra.mxu0 %v258
  %v617 = vpop.f32.mrf.mxu0
  %v618 = vadd.f32 %v499, %v617
  %v619 = vpop.f32.mrf.mxu0
  %v620 = vadd.f32 %v501, %v619
  %621 = vmatmul.bf16.gmra.mxu0 %v260
  %v622 = vpop.f32.mrf.mxu0
  %v623 = vadd.f32 %v504, %v622
  %v624 = vpop.f32.mrf.mxu0
  %v625 = vadd.f32 %v506, %v624
  %626 = vmatmul.bf16.gmra.mxu0 %v262
  %v627 = vpop.f32.mrf.mxu0
  %v628 = vadd.f32 %v509, %v627
  %v629 = vpop.f32.mrf.mxu0
  %v630 = vadd.f32 %v511, %v629
  %631 = vmatmul.bf16.gmra.mxu0 %v264
  %v632 = vpop.f32.mrf.mxu0
  %v633 = vadd.f32 %v514, %v632
  %v634 = vpop.f32.mrf.mxu0
  %v635 = vadd.f32 %v516, %v634
  %636 = vmatmul.bf16.gmra.mxu0 %v266
  %v637 = vpop.f32.mrf.mxu0
  %v638 = vadd.f32 %v519, %v637
  %v639 = vpop.f32.mrf.mxu0
  %v640 = vadd.f32 %v521, %v639
  %641 = vmatmul.bf16.gmra.mxu0 %v268
  %v642 = vpop.f32.mrf.mxu0
  %v643 = vadd.f32 %v524, %v642
  %v644 = vpop.f32.mrf.mxu0
  %v645 = vadd.f32 %v526, %v644
  %646 = vdwg.mxu0
  %v647 = vld [vmem:[%s2] sm:$0x1]
  %v648 = vld [vmem:[%s3] sm:$0x1]
  %v649 = vadd.f32 %v538, %v540
  %v650 = vadd.f32 %v649, %v543
  %v651 = vadd.f32 %v650, %v545
  %v652 = vadd.f32 %v651, %v548
  %v653 = vadd.f32 %v652, %v550
  %v654 = vadd.f32 %v653, %v553
  %v655 = vadd.f32 %v654, %v555
  %v656 = vadd.f32 %v655, %v558
  %v657 = vadd.f32 %v656, %v560
  %v658 = vadd.f32 %v657, %v563
  %v659 = vadd.f32 %v658, %v565
  %v660 = vadd.f32 %v659, %v568
  %v661 = vadd.f32 %v660, %v570
  %v662 = vadd.f32 %v661, %v573
  %v663 = vadd.f32 %v662, %v575
  %v664 = vadd.f32 %v663, %v578
  %v665 = vadd.f32 %v664, %v580
  %v666 = vadd.f32 %v665, %v583
  %v667 = vadd.f32 %v666, %v585
  %v668 = vadd.f32 %v667, %v588
  %v669 = vadd.f32 %v668, %v590
  %v670 = vadd.f32 %v669, %v593
  %v671 = vadd.f32 %v670, %v595
  %v672 = vadd.f32 %v671, %v598
  %v673 = vadd.f32 %v672, %v600
  %v674 = vadd.f32 %v673, %v603
  %v675 = vadd.f32 %v674, %v605
  %v676 = vadd.f32 %v675, %v608
  %v677 = vadd.f32 %v676, %v610
  %v678 = vadd.f32 %v677, %v613
  %v679 = vadd.f32 %v678, %v615
  %v680 = vadd.f32 %v679, %v618
  %v681 = vadd.f32 %v680, %v620
  %v682 = vadd.f32 %v681, %v623
  %v683 = vadd.f32 %v682, %v625
  %v684 = vadd.f32 %v683, %v628
  %v685 = vadd.f32 %v684, %v630
  %v686 = vadd.f32 %v685, %v633
  %v687 = vadd.f32 %v686, %v635
  %v688 = vadd.f32 %v687, %v638
  %v689 = vadd.f32 %v688, %v640
  %v690 = vadd.f32 %v689, %v643
  %v691 = vadd.f32 %v690, %v645
  %v692 = vrot.slane %v691, 4
  %v693 = vadd.f32 %v691, %v692
  %v694 = vrot.slane %v693, 2
  %v695 = vadd.f32 %v693, %v694
  %v696 = vrot.slane %v695, 1
  %v697 = vadd.f32 %v695, %v696
  %v698 = vmul.f32 %v538, %v538
  %v699 = vmul.f32 %v540, %v540
  %v700 = vmul.f32 %v543, %v543
  %v701 = vmul.f32 %v545, %v545
  %v702 = vmul.f32 %v548, %v548
  %v703 = vmul.f32 %v550, %v550
  %v704 = vmul.f32 %v553, %v553
  %v705 = vmul.f32 %v555, %v555
  %v706 = vmul.f32 %v558, %v558
  %v707 = vmul.f32 %v560, %v560
  %v708 = vmul.f32 %v563, %v563
  %v709 = vmul.f32 %v565, %v565
  %v710 = vmul.f32 %v568, %v568
  %v711 = vmul.f32 %v570, %v570
  %v712 = vmul.f32 %v573, %v573
  %v713 = vmul.f32 %v575, %v575
  %v714 = vmul.f32 %v578, %v578
  %v715 = vmul.f32 %v580, %v580
  %v716 = vmul.f32 %v583, %v583
  %v717 = vmul.f32 %v585, %v585
  %v718 = vmul.f32 %v588, %v588
  %v719 = vmul.f32 %v590, %v590
  %v720 = vmul.f32 %v593, %v593
  %v721 = vmul.f32 %v595, %v595
  %v722 = vmul.f32 %v598, %v598
  %v723 = vmul.f32 %v600, %v600
  %v724 = vmul.f32 %v603, %v603
  %v725 = vmul.f32 %v605, %v605
  %v726 = vmul.f32 %v608, %v608
  %v727 = vmul.f32 %v610, %v610
  %v728 = vmul.f32 %v613, %v613
  %v729 = vmul.f32 %v615, %v615
  %v730 = vmul.f32 %v618, %v618
  %v731 = vmul.f32 %v620, %v620
  %v732 = vmul.f32 %v623, %v623
  %v733 = vmul.f32 %v625, %v625
  %v734 = vmul.f32 %v628, %v628
  %v735 = vmul.f32 %v630, %v630
  %v736 = vmul.f32 %v633, %v633
  %v737 = vmul.f32 %v635, %v635
  %v738 = vmul.f32 %v638, %v638
  %v739 = vmul.f32 %v640, %v640
  %v740 = vmul.f32 %v643, %v643
  %v741 = vmul.f32 %v645, %v645
  %v742 = vadd.f32 %v698, %v699
  %v743 = vadd.f32 %v742, %v700
  %v744 = vadd.f32 %v743, %v701
  %v745 = vadd.f32 %v744, %v702
  %v746 = vadd.f32 %v745, %v703
  %v747 = vadd.f32 %v746, %v704
  %v748 = vadd.f32 %v747, %v705
  %v749 = vadd.f32 %v748, %v706
  %v750 = vadd.f32 %v749, %v707
  %v751 = vadd.f32 %v750, %v708
  %v752 = vadd.f32 %v751, %v709
  %v753 = vadd.f32 %v752, %v710
  %v754 = vadd.f32 %v753, %v711
  %v755 = vadd.f32 %v754, %v712
  %v756 = vadd.f32 %v755, %v713
  %v757 = vadd.f32 %v756, %v714
  %v758 = vadd.f32 %v757, %v715
  %v759 = vadd.f32 %v758, %v716
  %v760 = vadd.f32 %v759, %v717
  %v761 = vadd.f32 %v760, %v718
  %v762 = vadd.f32 %v761, %v719
  %v763 = vadd.f32 %v762, %v720
  %v764 = vadd.f32 %v763, %v721
  %v765 = vadd.f32 %v764, %v722
  %v766 = vadd.f32 %v765, %v723
  %v767 = vadd.f32 %v766, %v724
  %v768 = vadd.f32 %v767, %v725
  %v769 = vadd.f32 %v768, %v726
  %v770 = vadd.f32 %v769, %v727
  %v771 = vadd.f32 %v770, %v728
  %v772 = vadd.f32 %v771, %v729
  %v773 = vadd.f32 %v772, %v730
  %v774 = vadd.f32 %v773, %v731
  %v775 = vadd.f32 %v774, %v732
  %v776 = vadd.f32 %v775, %v733
  %v777 = vadd.f32 %v776, %v734
  %v778 = vadd.f32 %v777, %v735
  %v779 = vadd.f32 %v778, %v736
  %v780 = vadd.f32 %v779, %v737
  %v781 = vadd.f32 %v780, %v738
  %v782 = vadd.f32 %v781, %v739
  %v783 = vadd.f32 %v782, %v740
  %v784 = vadd.f32 %v783, %v741
  %v785 = vrot.slane %v784, 4
  %v786 = vadd.f32 %v784, %v785
  %v787 = vrot.slane %v786, 2
  %v788 = vadd.f32 %v786, %v787
  %v789 = vrot.slane %v788, 1
  %v790 = vadd.f32 %v788, %v789
  %v791 = vmul.f32 %v697, 0.00295858
  %v792 = vmul.f32 %v790, 0.00295858
  %v793 = vmul.f32 %v791, %v791
  %v794 = vsub.f32 %v792, %v793
  %v795 = vmax.f32 %v794, 0.0
  %v796 = vsub.f32 %v538, %v791
  %v797 = vsub.f32 %v540, %v791
  %v798 = vsub.f32 %v543, %v791
  %v799 = vsub.f32 %v545, %v791
  %v800 = vsub.f32 %v548, %v791
  %v801 = vsub.f32 %v550, %v791
  %v802 = vsub.f32 %v553, %v791
  %v803 = vsub.f32 %v555, %v791
  %v804 = vsub.f32 %v558, %v791
  %v805 = vsub.f32 %v560, %v791
  %v806 = vsub.f32 %v563, %v791
  %v807 = vsub.f32 %v565, %v791
  %v808 = vsub.f32 %v568, %v791
  %v809 = vsub.f32 %v570, %v791
  %v810 = vsub.f32 %v573, %v791
  %v811 = vsub.f32 %v575, %v791
  %v812 = vsub.f32 %v578, %v791
  %v813 = vsub.f32 %v580, %v791
  %v814 = vsub.f32 %v583, %v791
  %v815 = vsub.f32 %v585, %v791
  %v816 = vsub.f32 %v588, %v791
  %v817 = vsub.f32 %v590, %v791
  %v818 = vsub.f32 %v593, %v791
  %v819 = vsub.f32 %v595, %v791
  %v820 = vsub.f32 %v598, %v791
  %v821 = vsub.f32 %v600, %v791
  %v822 = vsub.f32 %v603, %v791
  %v823 = vsub.f32 %v605, %v791
  %v824 = vsub.f32 %v608, %v791
  %v825 = vsub.f32 %v610, %v791
  %v826 = vsub.f32 %v613, %v791
  %v827 = vsub.f32 %v615, %v791
  %v828 = vsub.f32 %v618, %v791
  %v829 = vsub.f32 %v620, %v791
  %v830 = vsub.f32 %v623, %v791
  %v831 = vsub.f32 %v625, %v791
  %v832 = vsub.f32 %v628, %v791
  %v833 = vsub.f32 %v630, %v791
  %v834 = vsub.f32 %v633, %v791
  %v835 = vsub.f32 %v635, %v791
  %v836 = vsub.f32 %v638, %v791
  %v837 = vsub.f32 %v640, %v791
  %v838 = vsub.f32 %v643, %v791
  %v839 = vsub.f32 %v645, %v791
  %v840 = vadd.f32 %v795, 1e-05
  %v841 = vrsqrt.pop %v840
  %v842 = vmul.f32 %v841, %v840
  %v843 = vmul.f32 %v842, %v841
  %v844 = vmul.f32 0.5, %v843
  %v845 = vsub.f32 1.5, %v844
  %v846 = vmul.f32 %v841, %v845
  %vm847 = vweird.f32 %v840
  %vm848 = vweird.f32 %v841
  %vm849 = vmor %vm847, %vm848
  %v850 = vsel %vm849, %v841, %v846
  %v851 = vmul.f32 %v796, %v850
  %v852 = vmul.f32 %v797, %v850
  %v853 = vmul.f32 %v798, %v850
  %v854 = vmul.f32 %v799, %v850
  %v855 = vmul.f32 %v800, %v850
  %v856 = vmul.f32 %v801, %v850
  %v857 = vmul.f32 %v802, %v850
  %v858 = vmul.f32 %v803, %v850
  %v859 = vmul.f32 %v804, %v850
  %v860 = vmul.f32 %v805, %v850
  %v861 = vmul.f32 %v806, %v850
  %v862 = vmul.f32 %v807, %v850
  %v863 = vmul.f32 %v808, %v850
  %v864 = vmul.f32 %v809, %v850
  %v865 = vmul.f32 %v810, %v850
  %v866 = vmul.f32 %v811, %v850
  %v867 = vmul.f32 %v812, %v850
  %v868 = vmul.f32 %v813, %v850
  %v869 = vmul.f32 %v814, %v850
  %v870 = vmul.f32 %v815, %v850
  %v871 = vmul.f32 %v816, %v850
  %v872 = vmul.f32 %v817, %v850
  %v873 = vmul.f32 %v818, %v850
  %v874 = vmul.f32 %v819, %v850
  %v875 = vmul.f32 %v820, %v850
  %v876 = vmul.f32 %v821, %v850
  %v877 = vmul.f32 %v822, %v850
  %v878 = vmul.f32 %v823, %v850
  %v879 = vmul.f32 %v824, %v850
  %v880 = vmul.f32 %v825, %v850
  %v881 = vmul.f32 %v826, %v850
  %v882 = vmul.f32 %v827, %v850
  %v883 = vmul.f32 %v828, %v850
  %v884 = vmul.f32 %v829, %v850
  %v885 = vmul.f32 %v830, %v850
  %v886 = vmul.f32 %v831, %v850
  %v887 = vmul.f32 %v832, %v850
  %v888 = vmul.f32 %v833, %v850
  %v889 = vmul.f32 %v834, %v850
  %v890 = vmul.f32 %v835, %v850
  %v891 = vmul.f32 %v836, %v850
  %v892 = vmul.f32 %v837, %v850
  %v893 = vmul.f32 %v838, %v850
  %v894 = vmul.f32 %v839, %v850
  %v896 = vperm.slane %v647, 0
  %v898 = vmul.f32 %v896, %v851
  %v899 = vmul.f32 %v896, %v852
  %v900 = vmul.f32 %v896, %v853
  %v901 = vmul.f32 %v896, %v854
  %v902 = vmul.f32 %v896, %v855
  %v903 = vmul.f32 %v896, %v856
  %v904 = vmul.f32 %v896, %v857
  %v905 = vmul.f32 %v896, %v858
  %v906 = vmul.f32 %v896, %v859
  %v907 = vmul.f32 %v896, %v860
  %v908 = vmul.f32 %v896, %v861
  %v909 = vmul.f32 %v896, %v862
  %v910 = vmul.f32 %v896, %v863
  %v911 = vmul.f32 %v896, %v864
  %v912 = vmul.f32 %v896, %v865
  %v913 = vmul.f32 %v896, %v866
  %v914 = vmul.f32 %v896, %v867
  %v915 = vmul.f32 %v896, %v868
  %v916 = vmul.f32 %v896, %v869
  %v917 = vmul.f32 %v896, %v870
  %v918 = vmul.f32 %v896, %v871
  %v919 = vmul.f32 %v896, %v872
  %v920 = vmul.f32 %v896, %v873
  %v921 = vmul.f32 %v896, %v874
  %v922 = vmul.f32 %v896, %v875
  %v923 = vmul.f32 %v896, %v876
  %v924 = vmul.f32 %v896, %v877
  %v925 = vmul.f32 %v896, %v878
  %v926 = vmul.f32 %v896, %v879
  %v927 = vmul.f32 %v896, %v880
  %v928 = vmul.f32 %v896, %v881
  %v929 = vmul.f32 %v896, %v882
  %v930 = vmul.f32 %v896, %v883
  %v931 = vmul.f32 %v896, %v884
  %v932 = vmul.f32 %v896, %v885
  %v933 = vmul.f32 %v896, %v886
  %v934 = vmul.f32 %v896, %v887
  %v935 = vmul.f32 %v896, %v888
  %v936 = vmul.f32 %v896, %v889
  %v937 = vmul.f32 %v896, %v890
  %v938 = vmul.f32 %v896, %v891
  %v939 = vmul.f32 %v896, %v892
  %v940 = vmul.f32 %v896, %v893
  %v941 = vmul.f32 %v896, %v894
  %v943 = vperm.slane %v648, 0
  %v945 = vadd.f32 %v898, %v943
  %v946 = vadd.f32 %v899, %v943
  %v947 = vadd.f32 %v900, %v943
  %v948 = vadd.f32 %v901, %v943
  %v949 = vadd.f32 %v902, %v943
  %v950 = vadd.f32 %v903, %v943
  %v951 = vadd.f32 %v904, %v943
  %v952 = vadd.f32 %v905, %v943
  %v953 = vadd.f32 %v906, %v943
  %v954 = vadd.f32 %v907, %v943
  %v955 = vadd.f32 %v908, %v943
  %v956 = vadd.f32 %v909, %v943
  %v957 = vadd.f32 %v910, %v943
  %v958 = vadd.f32 %v911, %v943
  %v959 = vadd.f32 %v912, %v943
  %v960 = vadd.f32 %v913, %v943
  %v961 = vadd.f32 %v914, %v943
  %v962 = vadd.f32 %v915, %v943
  %v963 = vadd.f32 %v916, %v943
  %v964 = vadd.f32 %v917, %v943
  %v965 = vadd.f32 %v918, %v943
  %v966 = vadd.f32 %v919, %v943
  %v967 = vadd.f32 %v920, %v943
  %v968 = vadd.f32 %v921, %v943
  %v969 = vadd.f32 %v922, %v943
  %v970 = vadd.f32 %v923, %v943
  %v971 = vadd.f32 %v924, %v943
  %v972 = vadd.f32 %v925, %v943
  %v973 = vadd.f32 %v926, %v943
  %v974 = vadd.f32 %v927, %v943
  %v975 = vadd.f32 %v928, %v943
  %v976 = vadd.f32 %v929, %v943
  %v977 = vadd.f32 %v930, %v943
  %v978 = vadd.f32 %v931, %v943
  %v979 = vadd.f32 %v932, %v943
  %v980 = vadd.f32 %v933, %v943
  %v981 = vadd.f32 %v934, %v943
  %v982 = vadd.f32 %v935, %v943
  %v983 = vadd.f32 %v936, %v943
  %v984 = vadd.f32 %v937, %v943
  %v985 = vadd.f32 %v938, %v943
  %v986 = vadd.f32 %v939, %v943
  %v987 = vadd.f32 %v940, %v943
  %v988 = vadd.f32 %v941, %v943
  %vm989 = vcmp.gt.f32.partialorder %v945, 0.0
  %vm990 = vcmp.gt.f32.partialorder %v946, 0.0
  %vm991 = vcmp.gt.f32.partialorder %v947, 0.0
  %vm992 = vcmp.gt.f32.partialorder %v948, 0.0
  %vm993 = vcmp.gt.f32.partialorder %v949, 0.0
  %vm994 = vcmp.gt.f32.partialorder %v950, 0.0
  %vm995 = vcmp.gt.f32.partialorder %v951, 0.0
  %vm996 = vcmp.gt.f32.partialorder %v952, 0.0
  %vm997 = vcmp.gt.f32.partialorder %v953, 0.0
  %vm998 = vcmp.gt.f32.partialorder %v954, 0.0
  %vm999 = vcmp.gt.f32.partialorder %v955, 0.0
  %vm1000 = vcmp.gt.f32.partialorder %v956, 0.0
  %vm1001 = vcmp.gt.f32.partialorder %v957, 0.0
  %vm1002 = vcmp.gt.f32.partialorder %v958, 0.0
  %vm1003 = vcmp.gt.f32.partialorder %v959, 0.0
  %vm1004 = vcmp.gt.f32.partialorder %v960, 0.0
  %vm1005 = vcmp.gt.f32.partialorder %v961, 0.0
  %vm1006 = vcmp.gt.f32.partialorder %v962, 0.0
  %vm1007 = vcmp.gt.f32.partialorder %v963, 0.0
  %vm1008 = vcmp.gt.f32.partialorder %v964, 0.0
  %vm1009 = vcmp.gt.f32.partialorder %v965, 0.0
  %vm1010 = vcmp.gt.f32.partialorder %v966, 0.0
  %vm1011 = vcmp.gt.f32.partialorder %v967, 0.0
  %vm1012 = vcmp.gt.f32.partialorder %v968, 0.0
  %vm1013 = vcmp.gt.f32.partialorder %v969, 0.0
  %vm1014 = vcmp.gt.f32.partialorder %v970, 0.0
  %vm1015 = vcmp.gt.f32.partialorder %v971, 0.0
  %vm1016 = vcmp.gt.f32.partialorder %v972, 0.0
  %vm1017 = vcmp.gt.f32.partialorder %v973, 0.0
  %vm1018 = vcmp.gt.f32.partialorder %v974, 0.0
  %vm1019 = vcmp.gt.f32.partialorder %v975, 0.0
  %vm1020 = vcmp.gt.f32.partialorder %v976, 0.0
  %vm1021 = vcmp.gt.f32.partialorder %v977, 0.0
  %vm1022 = vcmp.gt.f32.partialorder %v978, 0.0
  %vm1023 = vcmp.gt.f32.partialorder %v979, 0.0
  %vm1024 = vcmp.gt.f32.partialorder %v980, 0.0
  %vm1025 = vcmp.gt.f32.partialorder %v981, 0.0
  %vm1026 = vcmp.gt.f32.partialorder %v982, 0.0
  %vm1027 = vcmp.gt.f32.partialorder %v983, 0.0
  %vm1028 = vcmp.gt.f32.partialorder %v984, 0.0
  %vm1029 = vcmp.gt.f32.partialorder %v985, 0.0
  %vm1030 = vcmp.gt.f32.partialorder %v986, 0.0
  %vm1031 = vcmp.gt.f32.partialorder %v987, 0.0
  %vm1032 = vcmp.gt.f32.partialorder %v988, 0.0
  %v1033 = vmul.f32 %v945, 0.2
  %v1034 = vmul.f32 %v946, 0.2
  %v1035 = vmul.f32 %v947, 0.2
  %v1036 = vmul.f32 %v948, 0.2
  %v1037 = vmul.f32 %v949, 0.2
  %v1038 = vmul.f32 %v950, 0.2
  %v1039 = vmul.f32 %v951, 0.2
  %v1040 = vmul.f32 %v952, 0.2
  %v1041 = vmul.f32 %v953, 0.2
  %v1042 = vmul.f32 %v954, 0.2
  %v1043 = vmul.f32 %v955, 0.2
  %v1044 = vmul.f32 %v956, 0.2
  %v1045 = vmul.f32 %v957, 0.2
  %v1046 = vmul.f32 %v958, 0.2
  %v1047 = vmul.f32 %v959, 0.2
  %v1048 = vmul.f32 %v960, 0.2
  %v1049 = vmul.f32 %v961, 0.2
  %v1050 = vmul.f32 %v962, 0.2
  %v1051 = vmul.f32 %v963, 0.2
  %v1052 = vmul.f32 %v964, 0.2
  %v1053 = vmul.f32 %v965, 0.2
  %v1054 = vmul.f32 %v966, 0.2
  %v1055 = vmul.f32 %v967, 0.2
  %v1056 = vmul.f32 %v968, 0.2
  %v1057 = vmul.f32 %v969, 0.2
  %v1058 = vmul.f32 %v970, 0.2
  %v1059 = vmul.f32 %v971, 0.2
  %v1060 = vmul.f32 %v972, 0.2
  %v1061 = vmul.f32 %v973, 0.2
  %v1062 = vmul.f32 %v974, 0.2
  %v1063 = vmul.f32 %v975, 0.2
  %v1064 = vmul.f32 %v976, 0.2
  %v1065 = vmul.f32 %v977, 0.2
  %v1066 = vmul.f32 %v978, 0.2
  %v1067 = vmul.f32 %v979, 0.2
  %v1068 = vmul.f32 %v980, 0.2
  %v1069 = vmul.f32 %v981, 0.2
  %v1070 = vmul.f32 %v982, 0.2
  %v1071 = vmul.f32 %v983, 0.2
  %v1072 = vmul.f32 %v984, 0.2
  %v1073 = vmul.f32 %v985, 0.2
  %v1074 = vmul.f32 %v986, 0.2
  %v1075 = vmul.f32 %v987, 0.2
  %v1076 = vmul.f32 %v988, 0.2
  %v1077 = vsel %vm989, %v945, %v1033
  %v1078 = vsel %vm990, %v946, %v1034
  %v1079 = vsel %vm991, %v947, %v1035
  %v1080 = vsel %vm992, %v948, %v1036
  %v1081 = vsel %vm993, %v949, %v1037
  %v1082 = vsel %vm994, %v950, %v1038
  %v1083 = vsel %vm995, %v951, %v1039
  %v1084 = vsel %vm996, %v952, %v1040
  %v1085 = vsel %vm997, %v953, %v1041
  %v1086 = vsel %vm998, %v954, %v1042
  %v1087 = vsel %vm999, %v955, %v1043
  %v1088 = vsel %vm1000, %v956, %v1044
  %v1089 = vsel %vm1001, %v957, %v1045
  %v1090 = vsel %vm1002, %v958, %v1046
  %v1091 = vsel %vm1003, %v959, %v1047
  %v1092 = vsel %vm1004, %v960, %v1048
  %v1093 = vsel %vm1005, %v961, %v1049
  %v1094 = vsel %vm1006, %v962, %v1050
  %v1095 = vsel %vm1007, %v963, %v1051
  %v1096 = vsel %vm1008, %v964, %v1052
  %v1097 = vsel %vm1009, %v965, %v1053
  %v1098 = vsel %vm1010, %v966, %v1054
  %v1099 = vsel %vm1011, %v967, %v1055
  %v1100 = vsel %vm1012, %v968, %v1056
  %v1101 = vsel %vm1013, %v969, %v1057
  %v1102 = vsel %vm1014, %v970, %v1058
  %v1103 = vsel %vm1015, %v971, %v1059
  %v1104 = vsel %vm1016, %v972, %v1060
  %v1105 = vsel %vm1017, %v973, %v1061
  %v1106 = vsel %vm1018, %v974, %v1062
  %v1107 = vsel %vm1019, %v975, %v1063
  %v1108 = vsel %vm1020, %v976, %v1064
  %v1109 = vsel %vm1021, %v977, %v1065
  %v1110 = vsel %vm1022, %v978, %v1066
  %v1111 = vsel %vm1023, %v979, %v1067
  %v1112 = vsel %vm1024, %v980, %v1068
  %v1113 = vsel %vm1025, %v981, %v1069
  %v1114 = vsel %vm1026, %v982, %v1070
  %v1115 = vsel %vm1027, %v983, %v1071
  %v1116 = vsel %vm1028, %v984, %v1072
  %v1117 = vsel %vm1029, %v985, %v1073
  %v1118 = vsel %vm1030, %v986, %v1074
  %v1119 = vsel %vm1031, %v987, %v1075
  %v1120 = vsel %vm1032, %v988, %v1076
  %1121 = vst [vmem:[%s4] sm:$0xff] %v1077
  %1122 = vst [vmem:[%s4 + $0x8] sm:$0xff] %v1078
  %1123 = vst [vmem:[%s4 + $0x10] sm:$0xff] %v1079
  %1124 = vst [vmem:[%s4 + $0x18] sm:$0xff] %v1080
  %1125 = vst [vmem:[%s4 + $0x20] sm:$0xff] %v1081
  %1126 = vst [vmem:[%s4 + $0x28] sm:$0xff] %v1082
  %1127 = vst [vmem:[%s4 + $0x30] sm:$0xff] %v1083
  %1128 = vst [vmem:[%s4 + $0x38] sm:$0xff] %v1084
  %1129 = vst [vmem:[%s4 + $0x40] sm:$0xff] %v1085
  %1130 = vst [vmem:[%s4 + $0x48] sm:$0xff] %v1086
  %1131 = vst [vmem:[%s4 + $0x50] sm:$0xff] %v1087
  %1132 = vst [vmem:[%s4 + $0x58] sm:$0xff] %v1088
  %1133 = vst [vmem:[%s4 + $0x60] sm:$0xff] %v1089
  %1134 = vst [vmem:[%s4 + $0x68] sm:$0xff] %v1090
  %1135 = vst [vmem:[%s4 + $0x70] sm:$0xff] %v1091
  %1136 = vst [vmem:[%s4 + $0x78] sm:$0xff] %v1092
  %1137 = vst [vmem:[%s4 + $0x80] sm:$0xff] %v1093
  %1138 = vst [vmem:[%s4 + $0x88] sm:$0xff] %v1094
  %1139 = vst [vmem:[%s4 + $0x90] sm:$0xff] %v1095
  %1140 = vst [vmem:[%s4 + $0x98] sm:$0xff] %v1096
  %1141 = vst [vmem:[%s4 + $0xa0] sm:$0xff] %v1097
  %1142 = vst [vmem:[%s4 + $0xa8] sm:$0xff] %v1098
  %1143 = vst [vmem:[%s4 + $0xb0] sm:$0xff] %v1099
  %1144 = vst [vmem:[%s4 + $0xb8] sm:$0xff] %v1100
  %1145 = vst [vmem:[%s4 + $0xc0] sm:$0xff] %v1101
  %1146 = vst [vmem:[%s4 + $0xc8] sm:$0xff] %v1102
  %1147 = vst [vmem:[%s4 + $0xd0] sm:$0xff] %v1103
  %1148 = vst [vmem:[%s4 + $0xd8] sm:$0xff] %v1104
  %1149 = vst [vmem:[%s4 + $0xe0] sm:$0xff] %v1105
  %1150 = vst [vmem:[%s4 + $0xe8] sm:$0xff] %v1106
  %1151 = vst [vmem:[%s4 + $0xf0] sm:$0xff] %v1107
  %1152 = vst [vmem:[%s4 + $0xf8] sm:$0xff] %v1108
  %1153 = vst [vmem:[%s4 + $0x100] sm:$0xff] %v1109
  %1154 = vst [vmem:[%s4 + $0x108] sm:$0xff] %v1110
  %1155 = vst [vmem:[%s4 + $0x110] sm:$0xff] %v1111
  %1156 = vst [vmem:[%s4 + $0x118] sm:$0xff] %v1112
  %1157 = vst [vmem:[%s4 + $0x120] sm:$0xff] %v1113
  %1158 = vst [vmem:[%s4 + $0x128] sm:$0xff] %v1114
  %1159 = vst [vmem:[%s4 + $0x130] sm:$0xff] %v1115
  %1160 = vst [vmem:[%s4 + $0x138] sm:$0xff] %v1116
  %1161 = vst [vmem:[%s4 + $0x140] sm:$0xff] %v1117
  %1162 = vst [vmem:[%s4 + $0x148] sm:$0xff] %v1118
  %1163 = vst [vmem:[%s4 + $0x150] sm:$0xff] %v1119
  %1164 = vst [vmem:[%s4 + $0x158] sm:$0xff] %v1120
  // Predicated region
  $region18: #{cnn_encoder_forward.7} parent=0 // pred_check
    _
  $region19: #{cnn_encoder_forward.7} parent=0 // pred_check_branch
    %1166 = sbr.rel (0) target = $region21
  $region20: #{cnn_encoder_forward.7} parent=0 // pred_region
    _
  $region21: #{cnn_encoder_forward.7} parent=0 // pred_fallthru
    _
  // Predicated region
  $region22: #{cnn_encoder_forward.7} parent=0 // pred_check
    _
  $region23: #{cnn_encoder_forward.7} parent=0 // pred_check_branch
    %1168 = sbr.rel (0) target = $region25
  $region24: #{cnn_encoder_forward.7} parent=0 // pred_region
    _
  $region25: #{cnn_encoder_forward.7} parent=0 // pred_fallthru
    _

// kernel: cnn_encoder_forward.8
$region0: #{cnn_encoder_forward.8}
  #allocation0 [shape = 'u32[]', space=smem, size = 0x4, offset = 0x4, fixed_abs, tag = 'smem constant byte address 0x4 - core index']
  #allocation1 [shape = 'u32[72,128]{1,0:T(1,128)}', space=vmem, size = 0x9000, scoped, tag = 'internal scratch']
  %s0 = inlined_call_operand.vmem [shape: bf16[80,512], index: 0, kind: input, shape index: {}]
  %s1 = inlined_call_operand.vmem [shape: bf16[512,128], index: 1, kind: input, shape index: {}]
  %s2 = inlined_call_operand.vmem [shape: f32[1,128], index: 2, kind: input, shape index: {}]
  %s3 = inlined_call_operand.vmem [shape: f32[1,128], index: 3, kind: input, shape index: {}]
  %s4 = inlined_call_operand.vmem [shape: f32[80,128], index: 4, kind: output, shape index: {}]
  %s5 = sld [smem:[#allocation0]]
  $region26: #{cnn_encoder_forward.8} parent=0
    _
  %s7 = ssub.s32 1, %s5
  %s8 = scalar_select 0, %s7, %s5
  // Predicated region
  $region2: #{cnn_encoder_forward.8} parent=0 // pred_check
    _
  $region3: #{cnn_encoder_forward.8} parent=0 // pred_check_branch
    %10 = sbr.rel (0) target = $region5
  $region4: #{cnn_encoder_forward.8} parent=0 // pred_region
    _
  $region5: #{cnn_encoder_forward.8} parent=0 // pred_fallthru
    _
  // Predicated region
  $region6: #{cnn_encoder_forward.8} parent=0 // pred_check
    _
  $region7: #{cnn_encoder_forward.8} parent=0 // pred_check_branch
    %12 = sbr.rel (0) target = $region9
  $region8: #{cnn_encoder_forward.8} parent=0 // pred_region
    _
  $region9: #{cnn_encoder_forward.8} parent=0 // pred_fallthru
    _
  // Predicated region
  $region10: #{cnn_encoder_forward.8} parent=0 // pred_check
    _
  $region11: #{cnn_encoder_forward.8} parent=0 // pred_check_branch
    %14 = sbr.rel (0) target = $region13
  $region12: #{cnn_encoder_forward.8} parent=0 // pred_region
    _
  $region13: #{cnn_encoder_forward.8} parent=0 // pred_fallthru
    _
  // Predicated region
  $region14: #{cnn_encoder_forward.8} parent=0 // pred_check
    _
  $region15: #{cnn_encoder_forward.8} parent=0 // pred_check_branch
    %16 = sbr.rel (0) target = $region17
  $region16: #{cnn_encoder_forward.8} parent=0 // pred_region
    _
  $region17: #{cnn_encoder_forward.8} parent=0 // pred_fallthru
    _
  %v17 = vld [vmem:[%s0] sm:$0xff]
  %v18 = vld [vmem:[%s0 + $0x8] sm:$0xff]
  %v19 = vld [vmem:[%s0 + $0x10] sm:$0xff]
  %v20 = vld [vmem:[%s0 + $0x18] sm:$0xff]
  %v21 = vld [vmem:[%s0 + $0x20] sm:$0xff]
  %v22 = vld [vmem:[%s0 + $0x28] sm:$0xff]
  %v23 = vld [vmem:[%s0 + $0x30] sm:$0xff]
  %v24 = vld [vmem:[%s0 + $0x38] sm:$0xff]
  %v25 = vld [vmem:[%s0 + $0x40] sm:$0xff]
  %v26 = vld [vmem:[%s0 + $0x48] sm:$0xff]
  %v27 = vld [vmem:[%s0 + $0x50] sm:$0xff]
  %v28 = vld [vmem:[%s0 + $0x58] sm:$0xff]
  %v29 = vld [vmem:[%s0 + $0x60] sm:$0xff]
  %v30 = vld [vmem:[%s0 + $0x68] sm:$0xff]
  %v31 = vld [vmem:[%s0 + $0x70] sm:$0xff]
  %v32 = vld [vmem:[%s0 + $0x78] sm:$0xff]
  %v33 = vld [vmem:[%s0 + $0x80] sm:$0xff]
  %v34 = vld [vmem:[%s0 + $0x88] sm:$0xff]
  %v35 = vld [vmem:[%s0 + $0x90] sm:$0xff]
  %v36 = vld [vmem:[%s0 + $0x98] sm:$0xff]
  %v37 = vld [vmem:[%s1] sm:$0xf]
  %v38 = vld [vmem:[%s1 + $0x4] sm:$0xf]
  %v39 = vld [vmem:[%s1 + $0x8] sm:$0xf]
  %v40 = vld [vmem:[%s1 + $0xc] sm:$0xf]
  %v41 = vld [vmem:[%s1 + $0x10] sm:$0xf]
  %v42 = vld [vmem:[%s1 + $0x14] sm:$0xf]
  %v43 = vld [vmem:[%s1 + $0x18] sm:$0xf]
  %v44 = vld [vmem:[%s1 + $0x1c] sm:$0xf]
  %v45 = vld [vmem:[%s1 + $0x20] sm:$0xf]
  %v46 = vld [vmem:[%s1 + $0x24] sm:$0xf]
  %v47 = vld [vmem:[%s1 + $0x28] sm:$0xf]
  %v48 = vld [vmem:[%s1 + $0x2c] sm:$0xf]
  %v49 = vld [vmem:[%s1 + $0x30] sm:$0xf]
  %v50 = vld [vmem:[%s1 + $0x34] sm:$0xf]
  %v51 = vld [vmem:[%s1 + $0x38] sm:$0xf]
  %v52 = vld [vmem:[%s1 + $0x3c] sm:$0xf]
  %v53 = vld [vmem:[%s1 + $0x40] sm:$0xf]
  %v54 = vld [vmem:[%s1 + $0x44] sm:$0xf]
  %v55 = vld [vmem:[%s1 + $0x48] sm:$0xf]
  %v56 = vld [vmem:[%s1 + $0x4c] sm:$0xf]
  %v57 = vld [vmem:[%s1 + $0x50] sm:$0xf]
  %v58 = vld [vmem:[%s1 + $0x54] sm:$0xf]
  %v59 = vld [vmem:[%s1 + $0x58] sm:$0xf]
  %v60 = vld [vmem:[%s1 + $0x5c] sm:$0xf]
  %v61 = vld [vmem:[%s1 + $0x60] sm:$0xf]
  %v62 = vld [vmem:[%s1 + $0x64] sm:$0xf]
  %v63 = vld [vmem:[%s1 + $0x68] sm:$0xf]
  %v64 = vld [vmem:[%s1 + $0x6c] sm:$0xf]
  %v65 = vld [vmem:[%s1 + $0x70] sm:$0xf]
  %v66 = vld [vmem:[%s1 + $0x74] sm:$0xf]
  %v67 = vld [vmem:[%s1 + $0x78] sm:$0xf]
  %v68 = vld [vmem:[%s1 + $0x7c] sm:$0xf]
  %v69 = vld [vmem:[%s1 + $0x80] sm:$0xf]
  %v70 = vld [vmem:[%s1 + $0x84] sm:$0xf]
  %v71 = vld [vmem:[%s1 + $0x88] sm:$0xf]
  %v72 = vld [vmem:[%s1 + $0x8c] sm:$0xf]
  %v73 = vld [vmem:[%s1 + $0x90] sm:$0xf]
  %v74 = vld [vmem:[%s1 + $0x94] sm:$0xf]
  %v75 = vld [vmem:[%s1 + $0x98] sm:$0xf]
  %v76 = vld [vmem:[%s1 + $0x9c] sm:$0xf]
  %v77 = vld [vmem:[%s1 + $0xa0] sm:$0xf]
  %v78 = vld [vmem:[%s1 + $0xa4] sm:$0xf]
  %v79 = vld [vmem:[%s1 + $0xa8] sm:$0xf]
  %v80 = vld [vmem:[%s1 + $0xac] sm:$0xf]
  %v81 = vld [vmem:[%s1 + $0xb0] sm:$0xf]
  %v82 = vld [vmem:[%s1 + $0xb4] sm:$0xf]
  %v83 = vld [vmem:[%s1 + $0xb8] sm:$0xf]
  %v84 = vld [vmem:[%s1 + $0xbc] sm:$0xf]
  %v85 = vld [vmem:[%s1 + $0xc0] sm:$0xf]
  %v86 = vld [vmem:[%s1 + $0xc4] sm:$0xf]
  %v87 = vld [vmem:[%s1 + $0xc8] sm:$0xf]
  %v88 = vld [vmem:[%s1 + $0xcc] sm:$0xf]
  %v89 = vld [vmem:[%s1 + $0xd0] sm:$0xf]
  %v90 = vld [vmem:[%s1 + $0xd4] sm:$0xf]
  %v91 = vld [vmem:[%s1 + $0xd8] sm:$0xf]
  %v92 = vld [vmem:[%s1 + $0xdc] sm:$0xf]
  %v93 = vld [vmem:[%s1 + $0xe0] sm:$0xf]
  %v94 = vld [vmem:[%s1 + $0xe4] sm:$0xf]
  %v95 = vld [vmem:[%s1 + $0xe8] sm:$0xf]
  %v96 = vld [vmem:[%s1 + $0xec] sm:$0xf]
  %v97 = vld [vmem:[%s1 + $0xf0] sm:$0xf]
  %v98 = vld [vmem:[%s1 + $0xf4] sm:$0xf]
  %v99 = vld [vmem:[%s1 + $0xf8] sm:$0xf]
  %v100 = vld [vmem:[%s1 + $0xfc] sm:$0xf]
  %v121 = vunpack.c.l.b16 %v17
  %v122 = vunpack.c.h.b16 %v17
  %v123 = vunpack.c.l.b16 %v18
  %v124 = vunpack.c.h.b16 %v18
  %v125 = vunpack.c.l.b16 %v19
  %v126 = vunpack.c.h.b16 %v19
  %v127 = vunpack.c.l.b16 %v20
  %v128 = vunpack.c.h.b16 %v20
  %v129 = vunpack.c.l.b16 %v21
  %v130 = vunpack.c.h.b16 %v21
  %v131 = vunpack.c.l.b16 %v22
  %v132 = vunpack.c.h.b16 %v22
  %v133 = vunpack.c.l.b16 %v23
  %v134 = vunpack.c.h.b16 %v23
  %v135 = vunpack.c.l.b16 %v24
  %v136 = vunpack.c.h.b16 %v24
  %v137 = vunpack.c.l.b16 %v25
  %v138 = vunpack.c.h.b16 %v25
  %v139 = vunpack.c.l.b16 %v26
  %v140 = vunpack.c.h.b16 %v26
  %v141 = vunpack.c.l.b16 %v27
  %v142 = vunpack.c.h.b16 %v27
  %v143 = vunpack.c.l.b16 %v28
  %v144 = vunpack.c.h.b16 %v28
  %v145 = vunpack.c.l.b16 %v29
  %v146 = vunpack.c.h.b16 %v29
  %v147 = vunpack.c.l.b16 %v30
  %v148 = vunpack.c.h.b16 %v30
  %v149 = vunpack.c.l.b16 %v31
  %v150 = vunpack.c.h.b16 %v31
  %v151 = vunpack.c.l.b16 %v32
  %v152 = vunpack.c.h.b16 %v32
  %v153 = vunpack.c.l.b16 %v33
  %v154 = vunpack.c.h.b16 %v33
  %v155 = vunpack.c.l.b16 %v34
  %v156 = vunpack.c.h.b16 %v34
  %v157 = vunpack.c.l.b16 %v35
  %v158 = vunpack.c.h.b16 %v35
  %v159 = vunpack.c.l.b16 %v36
  %v160 = vunpack.c.h.b16 %v36
  %v161 = vpack.c.b16 %v125, %v121
  %v162 = vpack.c.b16 %v126, %v122
  %v163 = vpack.c.b16 %v127, %v123
  %v164 = vpack.c.b16 %v128, %v124
  %v165 = vpack.c.b16 %v133, %v129
  %v166 = vpack.c.b16 %v134, %v130
  %v167 = vpack.c.b16 %v135, %v131
  %v168 = vpack.c.b16 %v136, %v132
  %v169 = vpack.c.b16 %v141, %v137
  %v170 = vpack.c.b16 %v142, %v138
  %v171 = vpack.c.b16 %v143, %v139
  %v172 = vpack.c.b16 %v144, %v140
  %v173 = vpack.c.b16 %v149, %v145
  %v174 = vpack.c.b16 %v150, %v146
  %v175 = vpack.c.b16 %v151, %v147
  %v176 = vpack.c.b16 %v152, %v148
  %v177 = vpack.c.b16 %v157, %v153
  %v178 = vpack.c.b16 %v158, %v154
  %v179 = vpack.c.b16 %v159, %v155
  %v180 = vpack.c.b16 %v160, %v156
  %v265 = vunpack.c.l.b16 %v37
  %v266 = vunpack.c.l.b16 %v38
  %v267 = vunpack.c.l.b16 %v39
  %v268 = vunpack.c.l.b16 %v40
  %v269 = vunpack.c.l.b16 %v41
  %v270 = vunpack.c.l.b16 %v42
  %v271 = vunpack.c.l.b16 %v43
  %v272 = vunpack.c.l.b16 %v44
  %v273 = vunpack.c.l.b16 %v45
  %v274 = vunpack.c.l.b16 %v46
  %v275 = vunpack.c.l.b16 %v47
  %v276 = vunpack.c.l.b16 %v48
  %v277 = vunpack.c.l.b16 %v49
  %v278 = vunpack.c.l.b16 %v50
  %v279 = vunpack.c.l.b16 %v51
  %v280 = vunpack.c.l.b16 %v52
  %v281 = vunpack.c.l.b16 %v53
  %v282 = vunpack.c.l.b16 %v54
  %v283 = vunpack.c.l.b16 %v55
  %v284 = vunpack.c.l.b16 %v56
  %v285 = vunpack.c.l.b16 %v57
  %v286 = vunpack.c.l.b16 %v58
  %v287 = vunpack.c.l.b16 %v59
  %v288 = vunpack.c.l.b16 %v60
  %v289 = vunpack.c.l.b16 %v61
  %v290 = vunpack.c.l.b16 %v62
  %v291 = vunpack.c.l.b16 %v63
  %v292 = vunpack.c.l.b16 %v64
  %v293 = vunpack.c.l.b16 %v65
  %v294 = vunpack.c.l.b16 %v66
  %v295 = vunpack.c.l.b16 %v67
  %v296 = vunpack.c.l.b16 %v68
  %v297 = vunpack.c.l.b16 %v69
  %v298 = vunpack.c.l.b16 %v70
  %v299 = vunpack.c.l.b16 %v71
  %v300 = vunpack.c.l.b16 %v72
  %v301 = vunpack.c.l.b16 %v73
  %v302 = vunpack.c.l.b16 %v74
  %v303 = vunpack.c.l.b16 %v75
  %v304 = vunpack.c.l.b16 %v76
  %v305 = vunpack.c.l.b16 %v77
  %v306 = vunpack.c.l.b16 %v78
  %v307 = vunpack.c.l.b16 %v79
  %v308 = vunpack.c.l.b16 %v80
  %v309 = vunpack.c.l.b16 %v81
  %v310 = vunpack.c.l.b16 %v82
  %v311 = vunpack.c.l.b16 %v83
  %v312 = vunpack.c.l.b16 %v84
  %v313 = vunpack.c.l.b16 %v85
  %v314 = vunpack.c.l.b16 %v86
  %v315 = vunpack.c.l.b16 %v87
  %v316 = vunpack.c.l.b16 %v88
  %v317 = vunpack.c.l.b16 %v89
  %v318 = vunpack.c.l.b16 %v90
  %v319 = vunpack.c.l.b16 %v91
  %v320 = vunpack.c.l.b16 %v92
  %v321 = vunpack.c.l.b16 %v93
  %v322 = vunpack.c.l.b16 %v94
  %v323 = vunpack.c.l.b16 %v95
  %v324 = vunpack.c.l.b16 %v96
  %v325 = vunpack.c.l.b16 %v97
  %v326 = vunpack.c.l.b16 %v98
  %v327 = vunpack.c.l.b16 %v99
  %v328 = vunpack.c.l.b16 %v100
  %v329 = vpack.c.b16 %v266, %v265
  %v330 = vpack.c.b16 %v268, %v267
  %v331 = vpack.c.b16 %v270, %v269
  %v332 = vpack.c.b16 %v272, %v271
  %v333 = vpack.c.b16 %v274, %v273
  %v334 = vpack.c.b16 %v276, %v275
  %v335 = vpack.c.b16 %v278, %v277
  %v336 = vpack.c.b16 %v280, %v279
  %v337 = vpack.c.b16 %v282, %v281
  %v338 = vpack.c.b16 %v284, %v283
  %v339 = vpack.c.b16 %v286, %v285
  %v340 = vpack.c.b16 %v288, %v287
  %v341 = vpack.c.b16 %v290, %v289
  %v342 = vpack.c.b16 %v292, %v291
  %v343 = vpack.c.b16 %v294, %v293
  %v344 = vpack.c.b16 %v296, %v295
  %v345 = vpack.c.b16 %v298, %v297
  %v346 = vpack.c.b16 %v300, %v299
  %v347 = vpack.c.b16 %v302, %v301
  %v348 = vpack.c.b16 %v304, %v303
  %v349 = vpack.c.b16 %v306, %v305
  %v350 = vpack.c.b16 %v308, %v307
  %v351 = vpack.c.b16 %v310, %v309
  %v352 = vpack.c.b16 %v312, %v311
  %v353 = vpack.c.b16 %v314, %v313
  %v354 = vpack.c.b16 %v316, %v315
  %v355 = vpack.c.b16 %v318, %v317
  %v356 = vpack.c.b16 %v320, %v319
  %v357 = vpack.c.b16 %v322, %v321
  %v358 = vpack.c.b16 %v324, %v323
  %v359 = vpack.c.b16 %v326, %v325
  %v360 = vpack.c.b16 %v328, %v327
  %393 = vmatpush.bf16.msra.mxu0 %v336
  %394 = vmatpush.bf16.msra.mxu0 %v335
  %395 = vmatpush.bf16.msra.mxu0 %v334
  %396 = vmatpush.bf16.msra.mxu0 %v333
  %397 = vmatpush.bf16.msra.mxu0 %v332
  %398 = vmatpush.bf16.msra.mxu0 %v331
  %399 = vmatpush.bf16.msra.mxu0 %v330
  %400 = vmatpush.bf16.msra.mxu0 %v329
  %401 = vmatmul.bf16.gmra.mxu0 %v161
  %v402 = vpop.f32.mrf.mxu0
  %v403 = vadd.f32 0.0, %v402
  %v404 = vpop.f32.mrf.mxu0
  %v405 = vadd.f32 0.0, %v404
  %406 = vmatmul.bf16.gmra.mxu0 %v165
  %v407 = vpop.f32.mrf.mxu0
  %v408 = vadd.f32 0.0, %v407
  %v409 = vpop.f32.mrf.mxu0
  %v410 = vadd.f32 0.0, %v409
  %411 = vmatmul.bf16.gmra.mxu0 %v169
  %v412 = vpop.f32.mrf.mxu0
  %v413 = vadd.f32 0.0, %v412
  %v414 = vpop.f32.mrf.mxu0
  %v415 = vadd.f32 0.0, %v414
  %416 = vmatmul.bf16.gmra.mxu0 %v173
  %v417 = vpop.f32.mrf.mxu0
  %v418 = vadd.f32 0.0, %v417
  %v419 = vpop.f32.mrf.mxu0
  %v420 = vadd.f32 0.0, %v419
  %421 = vmatmul.bf16.gmra.mxu0 %v177
  %v422 = vpop.f32.mrf.mxu0
  %v423 = vadd.f32 0.0, %v422
  %v424 = vpop.f32.mrf.mxu0
  %v425 = vadd.f32 0.0, %v424
  %426 = vdwg.mxu0
  %427 = vmatpush.bf16.msra.mxu0 %v344
  %428 = vmatpush.bf16.msra.mxu0 %v343
  %429 = vmatpush.bf16.msra.mxu0 %v342
  %430 = vmatpush.bf16.msra.mxu0 %v341
  %431 = vmatpush.bf16.msra.mxu0 %v340
  %432 = vmatpush.bf16.msra.mxu0 %v339
  %433 = vmatpush.bf16.msra.mxu0 %v338
  %434 = vmatpush.bf16.msra.mxu0 %v337
  %435 = vmatmul.bf16.gmra.mxu0 %v162
  %v436 = vpop.f32.mrf.mxu0
  %v437 = vadd.f32 %v403, %v436
  %v438 = vpop.f32.mrf.mxu0
  %v439 = vadd.f32 %v405, %v438
  %440 = vmatmul.bf16.gmra.mxu0 %v166
  %v441 = vpop.f32.mrf.mxu0
  %v442 = vadd.f32 %v408, %v441
  %v443 = vpop.f32.mrf.mxu0
  %v444 = vadd.f32 %v410, %v443
  %445 = vmatmul.bf16.gmra.mxu0 %v170
  %v446 = vpop.f32.mrf.mxu0
  %v447 = vadd.f32 %v413, %v446
  %v448 = vpop.f32.mrf.mxu0
  %v449 = vadd.f32 %v415, %v448
  %450 = vmatmul.bf16.gmra.mxu0 %v174
  %v451 = vpop.f32.mrf.mxu0
  %v452 = vadd.f32 %v418, %v451
  %v453 = vpop.f32.mrf.mxu0
  %v454 = vadd.f32 %v420, %v453
  %455 = vmatmul.bf16.gmra.mxu0 %v178
  %v456 = vpop.f32.mrf.mxu0
  %v457 = vadd.f32 %v423, %v456
  %v458 = vpop.f32.mrf.mxu0
  %v459 = vadd.f32 %v425, %v458
  %460 = vdwg.mxu0
  %461 = vmatpush.bf16.msra.mxu0 %v352
  %462 = vmatpush.bf16.msra.mxu0 %v351
  %463 = vmatpush.bf16.msra.mxu0 %v350
  %464 = vmatpush.bf16.msra.mxu0 %v349
  %465 = vmatpush.bf16.msra.mxu0 %v348
  %466 = vmatpush.bf16.msra.mxu0 %v347
  %467 = vmatpush.bf16.msra.mxu0 %v346
  %468 = vmatpush.bf16.msra.mxu0 %v345
  %469 = vmatmul.bf16.gmra.mxu0 %v163
  %v470 = vpop.f32.mrf.mxu0
  %v471 = vadd.f32 %v437, %v470
  %v472 = vpop.f32.mrf.mxu0
  %v473 = vadd.f32 %v439, %v472
  %474 = vmatmul.bf16.gmra.mxu0 %v167
  %v475 = vpop.f32.mrf.mxu0
  %v476 = vadd.f32 %v442, %v475
  %v477 = vpop.f32.mrf.mxu0
  %v478 = vadd.f32 %v444, %v477
  %479 = vmatmul.bf16.gmra.mxu0 %v171
  %v480 = vpop.f32.mrf.mxu0
  %v481 = vadd.f32 %v447, %v480
  %v482 = vpop.f32.mrf.mxu0
  %v483 = vadd.f32 %v449, %v482
  %484 = vmatmul.bf16.gmra.mxu0 %v175
  %v485 = vpop.f32.mrf.mxu0
  %v486 = vadd.f32 %v452, %v485
  %v487 = vpop.f32.mrf.mxu0
  %v488 = vadd.f32 %v454, %v487
  %489 = vmatmul.bf16.gmra.mxu0 %v179
  %v490 = vpop.f32.mrf.mxu0
  %v491 = vadd.f32 %v457, %v490
  %v492 = vpop.f32.mrf.mxu0
  %v493 = vadd.f32 %v459, %v492
  %494 = vdwg.mxu0
  %495 = vmatpush.bf16.msra.mxu0 %v360
  %496 = vmatpush.bf16.msra.mxu0 %v359
  %497 = vmatpush.bf16.msra.mxu0 %v358
  %498 = vmatpush.bf16.msra.mxu0 %v357
  %499 = vmatpush.bf16.msra.mxu0 %v356
  %500 = vmatpush.bf16.msra.mxu0 %v355
  %501 = vmatpush.bf16.msra.mxu0 %v354
  %502 = vmatpush.bf16.msra.mxu0 %v353
  %503 = vmatmul.bf16.gmra.mxu0 %v164
  %v504 = vpop.f32.mrf.mxu0
  %v505 = vadd.f32 %v471, %v504
  %v506 = vpop.f32.mrf.mxu0
  %v507 = vadd.f32 %v473, %v506
  %508 = vmatmul.bf16.gmra.mxu0 %v168
  %v509 = vpop.f32.mrf.mxu0
  %v510 = vadd.f32 %v476, %v509
  %v511 = vpop.f32.mrf.mxu0
  %v512 = vadd.f32 %v478, %v511
  %513 = vmatmul.bf16.gmra.mxu0 %v172
  %v514 = vpop.f32.mrf.mxu0
  %v515 = vadd.f32 %v481, %v514
  %v516 = vpop.f32.mrf.mxu0
  %v517 = vadd.f32 %v483, %v516
  %518 = vmatmul.bf16.gmra.mxu0 %v176
  %v519 = vpop.f32.mrf.mxu0
  %v520 = vadd.f32 %v486, %v519
  %v521 = vpop.f32.mrf.mxu0
  %v522 = vadd.f32 %v488, %v521
  %523 = vmatmul.bf16.gmra.mxu0 %v180
  %v524 = vpop.f32.mrf.mxu0
  %v525 = vadd.f32 %v491, %v524
  %v526 = vpop.f32.mrf.mxu0
  %v527 = vadd.f32 %v493, %v526
  %528 = vdwg.mxu0
  %v529 = vld [vmem:[%s2] sm:$0x1]
  %v530 = vld [vmem:[%s3] sm:$0x1]
  %v531 = vadd.f32 %v505, %v507
  %v532 = vadd.f32 %v531, %v510
  %v533 = vadd.f32 %v532, %v512
  %v534 = vadd.f32 %v533, %v515
  %v535 = vadd.f32 %v534, %v517
  %v536 = vadd.f32 %v535, %v520
  %v537 = vadd.f32 %v536, %v522
  %v538 = vadd.f32 %v537, %v525
  %v539 = vadd.f32 %v538, %v527
  %v540 = vrot.slane %v539, 4
  %v541 = vadd.f32 %v539, %v540
  %v542 = vrot.slane %v541, 2
  %v543 = vadd.f32 %v541, %v542
  %v544 = vrot.slane %v543, 1
  %v545 = vadd.f32 %v543, %v544
  %v546 = vmul.f32 %v505, %v505
  %v547 = vmul.f32 %v507, %v507
  %v548 = vmul.f32 %v510, %v510
  %v549 = vmul.f32 %v512, %v512
  %v550 = vmul.f32 %v515, %v515
  %v551 = vmul.f32 %v517, %v517
  %v552 = vmul.f32 %v520, %v520
  %v553 = vmul.f32 %v522, %v522
  %v554 = vmul.f32 %v525, %v525
  %v555 = vmul.f32 %v527, %v527
  %v556 = vadd.f32 %v546, %v547
  %v557 = vadd.f32 %v556, %v548
  %v558 = vadd.f32 %v557, %v549
  %v559 = vadd.f32 %v558, %v550
  %v560 = vadd.f32 %v559, %v551
  %v561 = vadd.f32 %v560, %v552
  %v562 = vadd.f32 %v561, %v553
  %v563 = vadd.f32 %v562, %v554
  %v564 = vadd.f32 %v563, %v555
  %v565 = vrot.slane %v564, 4
  %v566 = vadd.f32 %v564, %v565
  %v567 = vrot.slane %v566, 2
  %v568 = vadd.f32 %v566, %v567
  %v569 = vrot.slane %v568, 1
  %v570 = vadd.f32 %v568, %v569
  %v571 = vmul.f32 %v545, 0.013888889
  %v572 = vmul.f32 %v570, 0.013888889
  %v573 = vmul.f32 %v571, %v571
  %v574 = vsub.f32 %v572, %v573
  %v575 = vmax.f32 %v574, 0.0
  %v576 = vsub.f32 %v505, %v571
  %v577 = vsub.f32 %v507, %v571
  %v578 = vsub.f32 %v510, %v571
  %v579 = vsub.f32 %v512, %v571
  %v580 = vsub.f32 %v515, %v571
  %v581 = vsub.f32 %v517, %v571
  %v582 = vsub.f32 %v520, %v571
  %v583 = vsub.f32 %v522, %v571
  %v584 = vsub.f32 %v525, %v571
  %v585 = vsub.f32 %v527, %v571
  %v586 = vadd.f32 %v575, 1e-05
  %v587 = vrsqrt.pop %v586
  %v588 = vmul.f32 %v587, %v586
  %v589 = vmul.f32 %v588, %v587
  %v590 = vmul.f32 0.5, %v589
  %v591 = vsub.f32 1.5, %v590
  %v592 = vmul.f32 %v587, %v591
  %vm593 = vweird.f32 %v586
  %vm594 = vweird.f32 %v587
  %vm595 = vmor %vm593, %vm594
  %v596 = vsel %vm595, %v587, %v592
  %v597 = vmul.f32 %v576, %v596
  %v598 = vmul.f32 %v577, %v596
  %v599 = vmul.f32 %v578, %v596
  %v600 = vmul.f32 %v579, %v596
  %v601 = vmul.f32 %v580, %v596
  %v602 = vmul.f32 %v581, %v596
  %v603 = vmul.f32 %v582, %v596
  %v604 = vmul.f32 %v583, %v596
  %v605 = vmul.f32 %v584, %v596
  %v606 = vmul.f32 %v585, %v596
  %v608 = vperm.slane %v529, 0
  %v610 = vmul.f32 %v608, %v597
  %v611 = vmul.f32 %v608, %v598
  %v612 = vmul.f32 %v608, %v599
  %v613 = vmul.f32 %v608, %v600
  %v614 = vmul.f32 %v608, %v601
  %v615 = vmul.f32 %v608, %v602
  %v616 = vmul.f32 %v608, %v603
  %v617 = vmul.f32 %v608, %v604
  %v618 = vmul.f32 %v608, %v605
  %v619 = vmul.f32 %v608, %v606
  %v621 = vperm.slane %v530, 0
  %v623 = vadd.f32 %v610, %v621
  %v624 = vadd.f32 %v611, %v621
  %v625 = vadd.f32 %v612, %v621
  %v626 = vadd.f32 %v613, %v621
  %v627 = vadd.f32 %v614, %v621
  %v628 = vadd.f32 %v615, %v621
  %v629 = vadd.f32 %v616, %v621
  %v630 = vadd.f32 %v617, %v621
  %v631 = vadd.f32 %v618, %v621
  %v632 = vadd.f32 %v619, %v621
  %vm633 = vcmp.gt.f32.partialorder %v623, 0.0
  %vm634 = vcmp.gt.f32.partialorder %v624, 0.0
  %vm635 = vcmp.gt.f32.partialorder %v625, 0.0
  %vm636 = vcmp.gt.f32.partialorder %v626, 0.0
  %vm637 = vcmp.gt.f32.partialorder %v627, 0.0
  %vm638 = vcmp.gt.f32.partialorder %v628, 0.0
  %vm639 = vcmp.gt.f32.partialorder %v629, 0.0
  %vm640 = vcmp.gt.f32.partialorder %v630, 0.0
  %vm641 = vcmp.gt.f32.partialorder %v631, 0.0
  %vm642 = vcmp.gt.f32.partialorder %v632, 0.0
  %v643 = vmul.f32 %v623, 0.2
  %v644 = vmul.f32 %v624, 0.2
  %v645 = vmul.f32 %v625, 0.2
  %v646 = vmul.f32 %v626, 0.2
  %v647 = vmul.f32 %v627, 0.2
  %v648 = vmul.f32 %v628, 0.2
  %v649 = vmul.f32 %v629, 0.2
  %v650 = vmul.f32 %v630, 0.2
  %v651 = vmul.f32 %v631, 0.2
  %v652 = vmul.f32 %v632, 0.2
  %v653 = vsel %vm633, %v623, %v643
  %v654 = vsel %vm634, %v624, %v644
  %v655 = vsel %vm635, %v625, %v645
  %v656 = vsel %vm636, %v626, %v646
  %v657 = vsel %vm637, %v627, %v647
  %v658 = vsel %vm638, %v628, %v648
  %v659 = vsel %vm639, %v629, %v649
  %v660 = vsel %vm640, %v630, %v650
  %v661 = vsel %vm641, %v631, %v651
  %v662 = vsel %vm642, %v632, %v652
  %663 = vst [vmem:[%s4] sm:$0xff] %v653
  %664 = vst [vmem:[%s4 + $0x8] sm:$0xff] %v654
  %665 = vst [vmem:[%s4 + $0x10] sm:$0xff] %v655
  %666 = vst [vmem:[%s4 + $0x18] sm:$0xff] %v656
  %667 = vst [vmem:[%s4 + $0x20] sm:$0xff] %v657
  %668 = vst [vmem:[%s4 + $0x28] sm:$0xff] %v658
  %669 = vst [vmem:[%s4 + $0x30] sm:$0xff] %v659
  %670 = vst [vmem:[%s4 + $0x38] sm:$0xff] %v660
  %671 = vst [vmem:[%s4 + $0x40] sm:$0xff] %v661
  %672 = vst [vmem:[%s4 + $0x48] sm:$0xff] %v662
  // Predicated region
  $region18: #{cnn_encoder_forward.8} parent=0 // pred_check
    _
  $region19: #{cnn_encoder_forward.8} parent=0 // pred_check_branch
    %674 = sbr.rel (0) target = $region21
  $region20: #{cnn_encoder_forward.8} parent=0 // pred_region
    _
  $region21: #{cnn_encoder_forward.8} parent=0 // pred_fallthru
    _
  // Predicated region
  $region22: #{cnn_encoder_forward.8} parent=0 // pred_check
    _
  $region23: #{cnn_encoder_forward.8} parent=0 // pred_check_branch
    %676 = sbr.rel (0) target = $region25
  $region24: #{cnn_encoder_forward.8} parent=0 // pred_region
    _
  $region25: #{cnn_encoder_forward.8} parent=0 // pred_fallthru
    _

// kernel: cnn_encoder_forward.9
$region0: #{cnn_encoder_forward.9}
  #allocation0 [shape = 'u32[]', space=smem, size = 0x4, offset = 0x4, fixed_abs, tag = 'smem constant byte address 0x4 - core index']
  #allocation1 [shape = 'u32[72,128]{1,0:T(1,128)}', space=vmem, size = 0x9000, scoped, tag = 'internal scratch']
  %s0 = inlined_call_operand.vmem [shape: bf16[32,1024], index: 0, kind: input, shape index: {}]
  %s1 = inlined_call_operand.vmem [shape: bf16[1024,128], index: 1, kind: input, shape index: {}]
  %s2 = inlined_call_operand.vmem [shape: f32[1,128], index: 2, kind: input, shape index: {}]
  %s3 = inlined_call_operand.vmem [shape: f32[1,128], index: 3, kind: input, shape index: {}]
  %s4 = inlined_call_operand.vmem [shape: f32[32,128], index: 4, kind: output, shape index: {}]
  %s5 = sld [smem:[#allocation0]]
  $region26: #{cnn_encoder_forward.9} parent=0
    _
  %s7 = ssub.s32 1, %s5
  %s8 = scalar_select 0, %s7, %s5
  // Predicated region
  $region2: #{cnn_encoder_forward.9} parent=0 // pred_check
    _
  $region3: #{cnn_encoder_forward.9} parent=0 // pred_check_branch
    %10 = sbr.rel (0) target = $region5
  $region4: #{cnn_encoder_forward.9} parent=0 // pred_region
    _
  $region5: #{cnn_encoder_forward.9} parent=0 // pred_fallthru
    _
  // Predicated region
  $region6: #{cnn_encoder_forward.9} parent=0 // pred_check
    _
  $region7: #{cnn_encoder_forward.9} parent=0 // pred_check_branch
    %12 = sbr.rel (0) target = $region9
  $region8: #{cnn_encoder_forward.9} parent=0 // pred_region
    _
  $region9: #{cnn_encoder_forward.9} parent=0 // pred_fallthru
    _
  // Predicated region
  $region10: #{cnn_encoder_forward.9} parent=0 // pred_check
    _
  $region11: #{cnn_encoder_forward.9} parent=0 // pred_check_branch
    %14 = sbr.rel (0) target = $region13
  $region12: #{cnn_encoder_forward.9} parent=0 // pred_region
    _
  $region13: #{cnn_encoder_forward.9} parent=0 // pred_fallthru
    _
  // Predicated region
  $region14: #{cnn_encoder_forward.9} parent=0 // pred_check
    _
  $region15: #{cnn_encoder_forward.9} parent=0 // pred_check_branch
    %16 = sbr.rel (0) target = $region17
  $region16: #{cnn_encoder_forward.9} parent=0 // pred_region
    _
  $region17: #{cnn_encoder_forward.9} parent=0 // pred_fallthru
    _
  %v17 = vld [vmem:[%s0] sm:$0xff]
  %v18 = vld [vmem:[%s0 + $0x8] sm:$0xff]
  %v19 = vld [vmem:[%s0 + $0x10] sm:$0xff]
  %v20 = vld [vmem:[%s0 + $0x18] sm:$0xff]
  %v21 = vld [vmem:[%s0 + $0x20] sm:$0xff]
  %v22 = vld [vmem:[%s0 + $0x28] sm:$0xff]
  %v23 = vld [vmem:[%s0 + $0x30] sm:$0xff]
  %v24 = vld [vmem:[%s0 + $0x38] sm:$0xff]
  %v25 = vld [vmem:[%s0 + $0x40] sm:$0xff]
  %v26 = vld [vmem:[%s0 + $0x48] sm:$0xff]
  %v27 = vld [vmem:[%s0 + $0x50] sm:$0xff]
  %v28 = vld [vmem:[%s0 + $0x58] sm:$0xff]
  %v29 = vld [vmem:[%s0 + $0x60] sm:$0xff]
  %v30 = vld [vmem:[%s0 + $0x68] sm:$0xff]
  %v31 = vld [vmem:[%s0 + $0x70] sm:$0xff]
  %v32 = vld [vmem:[%s0 + $0x78] sm:$0xff]
  %v33 = vld [vmem:[%s1] sm:$0xf]
  %v34 = vld [vmem:[%s1 + $0x4] sm:$0xf]
  %v35 = vld [vmem:[%s1 + $0x8] sm:$0xf]
  %v36 = vld [vmem:[%s1 + $0xc] sm:$0xf]
  %v37 = vld [vmem:[%s1 + $0x10] sm:$0xf]
  %v38 = vld [vmem:[%s1 + $0x14] sm:$0xf]
  %v39 = vld [vmem:[%s1 + $0x18] sm:$0xf]
  %v40 = vld [vmem:[%s1 + $0x1c] sm:$0xf]
  %v41 = vld [vmem:[%s1 + $0x20] sm:$0xf]
  %v42 = vld [vmem:[%s1 + $0x24] sm:$0xf]
  %v43 = vld [vmem:[%s1 + $0x28] sm:$0xf]
  %v44 = vld [vmem:[%s1 + $0x2c] sm:$0xf]
  %v45 = vld [vmem:[%s1 + $0x30] sm:$0xf]
  %v46 = vld [vmem:[%s1 + $0x34] sm:$0xf]
  %v47 = vld [vmem:[%s1 + $0x38] sm:$0xf]
  %v48 = vld [vmem:[%s1 + $0x3c] sm:$0xf]
  %v49 = vld [vmem:[%s1 + $0x40] sm:$0xf]
  %v50 = vld [vmem:[%s1 + $0x44] sm:$0xf]
  %v51 = vld [vmem:[%s1 + $0x48] sm:$0xf]
  %v52 = vld [vmem:[%s1 + $0x4c] sm:$0xf]
  %v53 = vld [vmem:[%s1 + $0x50] sm:$0xf]
  %v54 = vld [vmem:[%s1 + $0x54] sm:$0xf]
  %v55 = vld [vmem:[%s1 + $0x58] sm:$0xf]
  %v56 = vld [vmem:[%s1 + $0x5c] sm:$0xf]
  %v57 = vld [vmem:[%s1 + $0x60] sm:$0xf]
  %v58 = vld [vmem:[%s1 + $0x64] sm:$0xf]
  %v59 = vld [vmem:[%s1 + $0x68] sm:$0xf]
  %v60 = vld [vmem:[%s1 + $0x6c] sm:$0xf]
  %v61 = vld [vmem:[%s1 + $0x70] sm:$0xf]
  %v62 = vld [vmem:[%s1 + $0x74] sm:$0xf]
  %v63 = vld [vmem:[%s1 + $0x78] sm:$0xf]
  %v64 = vld [vmem:[%s1 + $0x7c] sm:$0xf]
  %v65 = vld [vmem:[%s1 + $0x80] sm:$0xf]
  %v66 = vld [vmem:[%s1 + $0x84] sm:$0xf]
  %v67 = vld [vmem:[%s1 + $0x88] sm:$0xf]
  %v68 = vld [vmem:[%s1 + $0x8c] sm:$0xf]
  %v69 = vld [vmem:[%s1 + $0x90] sm:$0xf]
  %v70 = vld [vmem:[%s1 + $0x94] sm:$0xf]
  %v71 = vld [vmem:[%s1 + $0x98] sm:$0xf]
  %v72 = vld [vmem:[%s1 + $0x9c] sm:$0xf]
  %v73 = vld [vmem:[%s1 + $0xa0] sm:$0xf]
  %v74 = vld [vmem:[%s1 + $0xa4] sm:$0xf]
  %v75 = vld [vmem:[%s1 + $0xa8] sm:$0xf]
  %v76 = vld [vmem:[%s1 + $0xac] sm:$0xf]
  %v77 = vld [vmem:[%s1 + $0xb0] sm:$0xf]
  %v78 = vld [vmem:[%s1 + $0xb4] sm:$0xf]
  %v79 = vld [vmem:[%s1 + $0xb8] sm:$0xf]
  %v80 = vld [vmem:[%s1 + $0xbc] sm:$0xf]
  %v81 = vld [vmem:[%s1 + $0xc0] sm:$0xf]
  %v82 = vld [vmem:[%s1 + $0xc4] sm:$0xf]
  %v83 = vld [vmem:[%s1 + $0xc8] sm:$0xf]
  %v84 = vld [vmem:[%s1 + $0xcc] sm:$0xf]
  %v85 = vld [vmem:[%s1 + $0xd0] sm:$0xf]
  %v86 = vld [vmem:[%s1 + $0xd4] sm:$0xf]
  %v87 = vld [vmem:[%s1 + $0xd8] sm:$0xf]
  %v88 = vld [vmem:[%s1 + $0xdc] sm:$0xf]
  %v89 = vld [vmem:[%s1 + $0xe0] sm:$0xf]
  %v90 = vld [vmem:[%s1 + $0xe4] sm:$0xf]
  %v91 = vld [vmem:[%s1 + $0xe8] sm:$0xf]
  %v92 = vld [vmem:[%s1 + $0xec] sm:$0xf]
  %v93 = vld [vmem:[%s1 + $0xf0] sm:$0xf]
  %v94 = vld [vmem:[%s1 + $0xf4] sm:$0xf]
  %v95 = vld [vmem:[%s1 + $0xf8] sm:$0xf]
  %v96 = vld [vmem:[%s1 + $0xfc] sm:$0xf]
  %v97 = vld [vmem:[%s1 + $0x100] sm:$0xf]
  %v98 = vld [vmem:[%s1 + $0x104] sm:$0xf]
  %v99 = vld [vmem:[%s1 + $0x108] sm:$0xf]
  %v100 = vld [vmem:[%s1 + $0x10c] sm:$0xf]
  %v101 = vld [vmem:[%s1 + $0x110] sm:$0xf]
  %v102 = vld [vmem:[%s1 + $0x114] sm:$0xf]
  %v103 = vld [vmem:[%s1 + $0x118] sm:$0xf]
  %v104 = vld [vmem:[%s1 + $0x11c] sm:$0xf]
  %v105 = vld [vmem:[%s1 + $0x120] sm:$0xf]
  %v106 = vld [vmem:[%s1 + $0x124] sm:$0xf]
  %v107 = vld [vmem:[%s1 + $0x128] sm:$0xf]
  %v108 = vld [vmem:[%s1 + $0x12c] sm:$0xf]
  %v109 = vld [vmem:[%s1 + $0x130] sm:$0xf]
  %v110 = vld [vmem:[%s1 + $0x134] sm:$0xf]
  %v111 = vld [vmem:[%s1 + $0x138] sm:$0xf]
  %v112 = vld [vmem:[%s1 + $0x13c] sm:$0xf]
  %v113 = vld [vmem:[%s1 + $0x140] sm:$0xf]
  %v114 = vld [vmem:[%s1 + $0x144] sm:$0xf]
  %v115 = vld [vmem:[%s1 + $0x148] sm:$0xf]
  %v116 = vld [vmem:[%s1 + $0x14c] sm:$0xf]
  %v117 = vld [vmem:[%s1 + $0x150] sm:$0xf]
  %v118 = vld [vmem:[%s1 + $0x154] sm:$0xf]
  %v119 = vld [vmem:[%s1 + $0x158] sm:$0xf]
  %v120 = vld [vmem:[%s1 + $0x15c] sm:$0xf]
  %v121 = vld [vmem:[%s1 + $0x160] sm:$0xf]
  %v122 = vld [vmem:[%s1 + $0x164] sm:$0xf]
  %v123 = vld [vmem:[%s1 + $0x168] sm:$0xf]
  %v124 = vld [vmem:[%s1 + $0x16c] sm:$0xf]
  %v125 = vld [vmem:[%s1 + $0x170] sm:$0xf]
  %v126 = vld [vmem:[%s1 + $0x174] sm:$0xf]
  %v127 = vld [vmem:[%s1 + $0x178] sm:$0xf]
  %v128 = vld [vmem:[%s1 + $0x17c] sm:$0xf]
  %v129 = vld [vmem:[%s1 + $0x180] sm:$0xf]
  %v130 = vld [vmem:[%s1 + $0x184] sm:$0xf]
  %v131 = vld [vmem:[%s1 + $0x188] sm:$0xf]
  %v132 = vld [vmem:[%s1 + $0x18c] sm:$0xf]
  %v133 = vld [vmem:[%s1 + $0x190] sm:$0xf]
  %v134 = vld [vmem:[%s1 + $0x194] sm:$0xf]
  %v135 = vld [vmem:[%s1 + $0x198] sm:$0xf]
  %v136 = vld [vmem:[%s1 + $0x19c] sm:$0xf]
  %v137 = vld [vmem:[%s1 + $0x1a0] sm:$0xf]
  %v138 = vld [vmem:[%s1 + $0x1a4] sm:$0xf]
  %v139 = vld [vmem:[%s1 + $0x1a8] sm:$0xf]
  %v140 = vld [vmem:[%s1 + $0x1ac] sm:$0xf]
  %v141 = vld [vmem:[%s1 + $0x1b0] sm:$0xf]
  %v142 = vld [vmem:[%s1 + $0x1b4] sm:$0xf]
  %v143 = vld [vmem:[%s1 + $0x1b8] sm:$0xf]
  %v144 = vld [vmem:[%s1 + $0x1bc] sm:$0xf]
  %v145 = vld [vmem:[%s1 + $0x1c0] sm:$0xf]
  %v146 = vld [vmem:[%s1 + $0x1c4] sm:$0xf]
  %v147 = vld [vmem:[%s1 + $0x1c8] sm:$0xf]
  %v148 = vld [vmem:[%s1 + $0x1cc] sm:$0xf]
  %v149 = vld [vmem:[%s1 + $0x1d0] sm:$0xf]
  %v150 = vld [vmem:[%s1 + $0x1d4] sm:$0xf]
  %v151 = vld [vmem:[%s1 + $0x1d8] sm:$0xf]
  %v152 = vld [vmem:[%s1 + $0x1dc] sm:$0xf]
  %v153 = vld [vmem:[%s1 + $0x1e0] sm:$0xf]
  %v154 = vld [vmem:[%s1 + $0x1e4] sm:$0xf]
  %v155 = vld [vmem:[%s1 + $0x1e8] sm:$0xf]
  %v156 = vld [vmem:[%s1 + $0x1ec] sm:$0xf]
  %v157 = vld [vmem:[%s1 + $0x1f0] sm:$0xf]
  %v158 = vld [vmem:[%s1 + $0x1f4] sm:$0xf]
  %v159 = vld [vmem:[%s1 + $0x1f8] sm:$0xf]
  %v160 = vld [vmem:[%s1 + $0x1fc] sm:$0xf]
  %v177 = vunpack.c.l.b16 %v17
  %v178 = vunpack.c.h.b16 %v17
  %v179 = vunpack.c.l.b16 %v18
  %v180 = vunpack.c.h.b16 %v18
  %v181 = vunpack.c.l.b16 %v19
  %v182 = vunpack.c.h.b16 %v19
  %v183 = vunpack.c.l.b16 %v20
  %v184 = vunpack.c.h.b16 %v20
  %v185 = vunpack.c.l.b16 %v21
  %v186 = vunpack.c.h.b16 %v21
  %v187 = vunpack.c.l.b16 %v22
  %v188 = vunpack.c.h.b16 %v22
  %v189 = vunpack.c.l.b16 %v23
  %v190 = vunpack.c.h.b16 %v23
  %v191 = vunpack.c.l.b16 %v24
  %v192 = vunpack.c.h.b16 %v24
  %v193 = vunpack.c.l.b16 %v25
  %v194 = vunpack.c.h.b16 %v25
  %v195 = vunpack.c.l.b16 %v26
  %v196 = vunpack.c.h.b16 %v26
  %v197 = vunpack.c.l.b16 %v27
  %v198 = vunpack.c.h.b16 %v27
  %v199 = vunpack.c.l.b16 %v28
  %v200 = vunpack.c.h.b16 %v28
  %v201 = vunpack.c.l.b16 %v29
  %v202 = vunpack.c.h.b16 %v29
  %v203 = vunpack.c.l.b16 %v30
  %v204 = vunpack.c.h.b16 %v30
  %v205 = vunpack.c.l.b16 %v31
  %v206 = vunpack.c.h.b16 %v31
  %v207 = vunpack.c.l.b16 %v32
  %v208 = vunpack.c.h.b16 %v32
  %v209 = vpack.c.b16 %v185, %v177
  %v210 = vpack.c.b16 %v186, %v178
  %v211 = vpack.c.b16 %v187, %v179
  %v212 = vpack.c.b16 %v188, %v180
  %v213 = vpack.c.b16 %v189, %v181
  %v214 = vpack.c.b16 %v190, %v182
  %v215 = vpack.c.b16 %v191, %v183
  %v216 = vpack.c.b16 %v192, %v184
  %v217 = vpack.c.b16 %v201, %v193
  %v218 = vpack.c.b16 %v202, %v194
  %v219 = vpack.c.b16 %v203, %v195
  %v220 = vpack.c.b16 %v204, %v196
  %v221 = vpack.c.b16 %v205, %v197
  %v222 = vpack.c.b16 %v206, %v198
  %v223 = vpack.c.b16 %v207, %v199
  %v224 = vpack.c.b16 %v208, %v200
  %v369 = vunpack.c.l.b16 %v33
  %v370 = vunpack.c.l.b16 %v34
  %v371 = vunpack.c.l.b16 %v35
  %v372 = vunpack.c.l.b16 %v36
  %v373 = vunpack.c.l.b16 %v37
  %v374 = vunpack.c.l.b16 %v38
  %v375 = vunpack.c.l.b16 %v39
  %v376 = vunpack.c.l.b16 %v40
  %v377 = vunpack.c.l.b16 %v41
  %v378 = vunpack.c.l.b16 %v42
  %v379 = vunpack.c.l.b16 %v43
  %v380 = vunpack.c.l.b16 %v44
  %v381 = vunpack.c.l.b16 %v45
  %v382 = vunpack.c.l.b16 %v46
  %v383 = vunpack.c.l.b16 %v47
  %v384 = vunpack.c.l.b16 %v48
  %v385 = vunpack.c.l.b16 %v49
  %v386 = vunpack.c.l.b16 %v50
  %v387 = vunpack.c.l.b16 %v51
  %v388 = vunpack.c.l.b16 %v52
  %v389 = vunpack.c.l.b16 %v53
  %v390 = vunpack.c.l.b16 %v54
  %v391 = vunpack.c.l.b16 %v55
  %v392 = vunpack.c.l.b16 %v56
  %v393 = vunpack.c.l.b16 %v57
  %v394 = vunpack.c.l.b16 %v58
  %v395 = vunpack.c.l.b16 %v59
  %v396 = vunpack.c.l.b16 %v60
  %v397 = vunpack.c.l.b16 %v61
  %v398 = vunpack.c.l.b16 %v62
  %v399 = vunpack.c.l.b16 %v63
  %v400 = vunpack.c.l.b16 %v64
  %v401 = vunpack.c.l.b16 %v65
  %v402 = vunpack.c.l.b16 %v66
  %v403 = vunpack.c.l.b16 %v67
  %v404 = vunpack.c.l.b16 %v68
  %v405 = vunpack.c.l.b16 %v69
  %v406 = vunpack.c.l.b16 %v70
  %v407 = vunpack.c.l.b16 %v71
  %v408 = vunpack.c.l.b16 %v72
  %v409 = vunpack.c.l.b16 %v73
  %v410 = vunpack.c.l.b16 %v74
  %v411 = vunpack.c.l.b16 %v75
  %v412 = vunpack.c.l.b16 %v76
  %v413 = vunpack.c.l.b16 %v77
  %v414 = vunpack.c.l.b16 %v78
  %v415 = vunpack.c.l.b16 %v79
  %v416 = vunpack.c.l.b16 %v80
  %v417 = vunpack.c.l.b16 %v81
  %v418 = vunpack.c.l.b16 %v82
  %v419 = vunpack.c.l.b16 %v83
  %v420 = vunpack.c.l.b16 %v84
  %v421 = vunpack.c.l.b16 %v85
  %v422 = vunpack.c.l.b16 %v86
  %v423 = vunpack.c.l.b16 %v87
  %v424 = vunpack.c.l.b16 %v88
  %v425 = vunpack.c.l.b16 %v89
  %v426 = vunpack.c.l.b16 %v90
  %v427 = vunpack.c.l.b16 %v91
  %v428 = vunpack.c.l.b16 %v92
  %v429 = vunpack.c.l.b16 %v93
  %v430 = vunpack.c.l.b16 %v94
  %v431 = vunpack.c.l.b16 %v95
  %v432 = vunpack.c.l.b16 %v96
  %v433 = vunpack.c.l.b16 %v97
  %v434 = vunpack.c.l.b16 %v98
  %v435 = vunpack.c.l.b16 %v99
  %v436 = vunpack.c.l.b16 %v100
  %v437 = vunpack.c.l.b16 %v101
  %v438 = vunpack.c.l.b16 %v102
  %v439 = vunpack.c.l.b16 %v103
  %v440 = vunpack.c.l.b16 %v104
  %v441 = vunpack.c.l.b16 %v105
  %v442 = vunpack.c.l.b16 %v106
  %v443 = vunpack.c.l.b16 %v107
  %v444 = vunpack.c.l.b16 %v108
  %v445 = vunpack.c.l.b16 %v109
  %v446 = vunpack.c.l.b16 %v110
  %v447 = vunpack.c.l.b16 %v111
  %v448 = vunpack.c.l.b16 %v112
  %v449 = vunpack.c.l.b16 %v113
  %v450 = vunpack.c.l.b16 %v114
  %v451 = vunpack.c.l.b16 %v115
  %v452 = vunpack.c.l.b16 %v116
  %v453 = vunpack.c.l.b16 %v117
  %v454 = vunpack.c.l.b16 %v118
  %v455 = vunpack.c.l.b16 %v119
  %v456 = vunpack.c.l.b16 %v120
  %v457 = vunpack.c.l.b16 %v121
  %v458 = vunpack.c.l.b16 %v122
  %v459 = vunpack.c.l.b16 %v123
  %v460 = vunpack.c.l.b16 %v124
  %v461 = vunpack.c.l.b16 %v125
  %v462 = vunpack.c.l.b16 %v126
  %v463 = vunpack.c.l.b16 %v127
  %v464 = vunpack.c.l.b16 %v128
  %v465 = vunpack.c.l.b16 %v129
  %v466 = vunpack.c.l.b16 %v130
  %v467 = vunpack.c.l.b16 %v131
  %v468 = vunpack.c.l.b16 %v132
  %v469 = vunpack.c.l.b16 %v133
  %v470 = vunpack.c.l.b16 %v134
  %v471 = vunpack.c.l.b16 %v135
  %v472 = vunpack.c.l.b16 %v136
  %v473 = vunpack.c.l.b16 %v137
  %v474 = vunpack.c.l.b16 %v138
  %v475 = vunpack.c.l.b16 %v139
  %v476 = vunpack.c.l.b16 %v140
  %v477 = vunpack.c.l.b16 %v141
  %v478 = vunpack.c.l.b16 %v142
  %v479 = vunpack.c.l.b16 %v143
  %v480 = vunpack.c.l.b16 %v144
  %v481 = vunpack.c.l.b16 %v145
  %v482 = vunpack.c.l.b16 %v146
  %v483 = vunpack.c.l.b16 %v147
  %v484 = vunpack.c.l.b16 %v148
  %v485 = vunpack.c.l.b16 %v149
  %v486 = vunpack.c.l.b16 %v150
  %v487 = vunpack.c.l.b16 %v151
  %v488 = vunpack.c.l.b16 %v152
  %v489 = vunpack.c.l.b16 %v153
  %v490 = vunpack.c.l.b16 %v154
  %v491 = vunpack.c.l.b16 %v155
  %v492 = vunpack.c.l.b16 %v156
  %v493 = vunpack.c.l.b16 %v157
  %v494 = vunpack.c.l.b16 %v158
  %v495 = vunpack.c.l.b16 %v159
  %v496 = vunpack.c.l.b16 %v160
  %v497 = vpack.c.b16 %v370, %v369
  %v498 = vpack.c.b16 %v372, %v371
  %v499 = vpack.c.b16 %v374, %v373
  %v500 = vpack.c.b16 %v376, %v375
  %v501 = vpack.c.b16 %v378, %v377
  %v502 = vpack.c.b16 %v380, %v379
  %v503 = vpack.c.b16 %v382, %v381
  %v504 = vpack.c.b16 %v384, %v383
  %v505 = vpack.c.b16 %v386, %v385
  %v506 = vpack.c.b16 %v388, %v387
  %v507 = vpack.c.b16 %v390, %v389
  %v508 = vpack.c.b16 %v392, %v391
  %v509 = vpack.c.b16 %v394, %v393
  %v510 = vpack.c.b16 %v396, %v395
  %v511 = vpack.c.b16 %v398, %v397
  %v512 = vpack.c.b16 %v400, %v399
  %v513 = vpack.c.b16 %v402, %v401
  %v514 = vpack.c.b16 %v404, %v403
  %v515 = vpack.c.b16 %v406, %v405
  %v516 = vpack.c.b16 %v408, %v407
  %v517 = vpack.c.b16 %v410, %v409
  %v518 = vpack.c.b16 %v412, %v411
  %v519 = vpack.c.b16 %v414, %v413
  %v520 = vpack.c.b16 %v416, %v415
  %v521 = vpack.c.b16 %v418, %v417
  %v522 = vpack.c.b16 %v420, %v419
  %v523 = vpack.c.b16 %v422, %v421
  %v524 = vpack.c.b16 %v424, %v423
  %v525 = vpack.c.b16 %v426, %v425
  %v526 = vpack.c.b16 %v428, %v427
  %v527 = vpack.c.b16 %v430, %v429
  %v528 = vpack.c.b16 %v432, %v431
  %v529 = vpack.c.b16 %v434, %v433
  %v530 = vpack.c.b16 %v436, %v435
  %v531 = vpack.c.b16 %v438, %v437
  %v532 = vpack.c.b16 %v440, %v439
  %v533 = vpack.c.b16 %v442, %v441
  %v534 = vpack.c.b16 %v444, %v443
  %v535 = vpack.c.b16 %v446, %v445
  %v536 = vpack.c.b16 %v448, %v447
  %v537 = vpack.c.b16 %v450, %v449
  %v538 = vpack.c.b16 %v452, %v451
  %v539 = vpack.c.b16 %v454, %v453
  %v540 = vpack.c.b16 %v456, %v455
  %v541 = vpack.c.b16 %v458, %v457
  %v542 = vpack.c.b16 %v460, %v459
  %v543 = vpack.c.b16 %v462, %v461
  %v544 = vpack.c.b16 %v464, %v463
  %v545 = vpack.c.b16 %v466, %v465
  %v546 = vpack.c.b16 %v468, %v467
  %v547 = vpack.c.b16 %v470, %v469
  %v548 = vpack.c.b16 %v472, %v471
  %v549 = vpack.c.b16 %v474, %v473
  %v550 = vpack.c.b16 %v476, %v475
  %v551 = vpack.c.b16 %v478, %v477
  %v552 = vpack.c.b16 %v480, %v479
  %v553 = vpack.c.b16 %v482, %v481
  %v554 = vpack.c.b16 %v484, %v483
  %v555 = vpack.c.b16 %v486, %v485
  %v556 = vpack.c.b16 %v488, %v487
  %v557 = vpack.c.b16 %v490, %v489
  %v558 = vpack.c.b16 %v492, %v491
  %v559 = vpack.c.b16 %v494, %v493
  %v560 = vpack.c.b16 %v496, %v495
  %625 = vmatpush.bf16.msra.mxu0 %v504
  %626 = vmatpush.bf16.msra.mxu0 %v503
  %627 = vmatpush.bf16.msra.mxu0 %v502
  %628 = vmatpush.bf16.msra.mxu0 %v501
  %629 = vmatpush.bf16.msra.mxu0 %v500
  %630 = vmatpush.bf16.msra.mxu0 %v499
  %631 = vmatpush.bf16.msra.mxu0 %v498
  %632 = vmatpush.bf16.msra.mxu0 %v497
  %633 = vmatmul.bf16.gmra.mxu0 %v209
  %v634 = vpop.f32.mrf.mxu0
  %v635 = vadd.f32 0.0, %v634
  %v636 = vpop.f32.mrf.mxu0
  %v637 = vadd.f32 0.0, %v636
  %638 = vmatmul.bf16.gmra.mxu0 %v217
  %v639 = vpop.f32.mrf.mxu0
  %v640 = vadd.f32 0.0, %v639
  %v641 = vpop.f32.mrf.mxu0
  %v642 = vadd.f32 0.0, %v641
  %643 = vdwg.mxu0
  %644 = vmatpush.bf16.msra.mxu0 %v512
  %645 = vmatpush.bf16.msra.mxu0 %v511
  %646 = vmatpush.bf16.msra.mxu0 %v510
  %647 = vmatpush.bf16.msra.mxu0 %v509
  %648 = vmatpush.bf16.msra.mxu0 %v508
  %649 = vmatpush.bf16.msra.mxu0 %v507
  %650 = vmatpush.bf16.msra.mxu0 %v506
  %651 = vmatpush.bf16.msra.mxu0 %v505
  %652 = vmatmul.bf16.gmra.mxu0 %v210
  %v653 = vpop.f32.mrf.mxu0
  %v654 = vadd.f32 %v635, %v653
  %v655 = vpop.f32.mrf.mxu0
  %v656 = vadd.f32 %v637, %v655
  %657 = vmatmul.bf16.gmra.mxu0 %v218
  %v658 = vpop.f32.mrf.mxu0
  %v659 = vadd.f32 %v640, %v658
  %v660 = vpop.f32.mrf.mxu0
  %v661 = vadd.f32 %v642, %v660
  %662 = vdwg.mxu0
  %663 = vmatpush.bf16.msra.mxu0 %v520
  %664 = vmatpush.bf16.msra.mxu0 %v519
  %665 = vmatpush.bf16.msra.mxu0 %v518
  %666 = vmatpush.bf16.msra.mxu0 %v517
  %667 = vmatpush.bf16.msra.mxu0 %v516
  %668 = vmatpush.bf16.msra.mxu0 %v515
  %669 = vmatpush.bf16.msra.mxu0 %v514
  %670 = vmatpush.bf16.msra.mxu0 %v513
  %671 = vmatmul.bf16.gmra.mxu0 %v211
  %v672 = vpop.f32.mrf.mxu0
  %v673 = vadd.f32 %v654, %v672
  %v674 = vpop.f32.mrf.mxu0
  %v675 = vadd.f32 %v656, %v674
  %676 = vmatmul.bf16.gmra.mxu0 %v219
  %v677 = vpop.f32.mrf.mxu0
  %v678 = vadd.f32 %v659, %v677
  %v679 = vpop.f32.mrf.mxu0
  %v680 = vadd.f32 %v661, %v679
  %681 = vdwg.mxu0
  %682 = vmatpush.bf16.msra.mxu0 %v528
  %683 = vmatpush.bf16.msra.mxu0 %v527
  %684 = vmatpush.bf16.msra.mxu0 %v526
  %685 = vmatpush.bf16.msra.mxu0 %v525
  %686 = vmatpush.bf16.msra.mxu0 %v524
  %687 = vmatpush.bf16.msra.mxu0 %v523
  %688 = vmatpush.bf16.msra.mxu0 %v522
  %689 = vmatpush.bf16.msra.mxu0 %v521
  %690 = vmatmul.bf16.gmra.mxu0 %v212
  %v691 = vpop.f32.mrf.mxu0
  %v692 = vadd.f32 %v673, %v691
  %v693 = vpop.f32.mrf.mxu0
  %v694 = vadd.f32 %v675, %v693
  %695 = vmatmul.bf16.gmra.mxu0 %v220
  %v696 = vpop.f32.mrf.mxu0
  %v697 = vadd.f32 %v678, %v696
  %v698 = vpop.f32.mrf.mxu0
  %v699 = vadd.f32 %v680, %v698
  %700 = vdwg.mxu0
  %701 = vmatpush.bf16.msra.mxu0 %v536
  %702 = vmatpush.bf16.msra.mxu0 %v535
  %703 = vmatpush.bf16.msra.mxu0 %v534
  %704 = vmatpush.bf16.msra.mxu0 %v533
  %705 = vmatpush.bf16.msra.mxu0 %v532
  %706 = vmatpush.bf16.msra.mxu0 %v531
  %707 = vmatpush.bf16.msra.mxu0 %v530
  %708 = vmatpush.bf16.msra.mxu0 %v529
  %709 = vmatmul.bf16.gmra.mxu0 %v213
  %v710 = vpop.f32.mrf.mxu0
  %v711 = vadd.f32 %v692, %v710
  %v712 = vpop.f32.mrf.mxu0
  %v713 = vadd.f32 %v694, %v712
  %714 = vmatmul.bf16.gmra.mxu0 %v221
  %v715 = vpop.f32.mrf.mxu0
  %v716 = vadd.f32 %v697, %v715
  %v717 = vpop.f32.mrf.mxu0
  %v718 = vadd.f32 %v699, %v717
  %719 = vdwg.mxu0
  %720 = vmatpush.bf16.msra.mxu0 %v544
  %721 = vmatpush.bf16.msra.mxu0 %v543
  %722 = vmatpush.bf16.msra.mxu0 %v542
  %723 = vmatpush.bf16.msra.mxu0 %v541
  %724 = vmatpush.bf16.msra.mxu0 %v540
  %725 = vmatpush.bf16.msra.mxu0 %v539
  %726 = vmatpush.bf16.msra.mxu0 %v538
  %727 = vmatpush.bf16.msra.mxu0 %v537
  %728 = vmatmul.bf16.gmra.mxu0 %v214
  %v729 = vpop.f32.mrf.mxu0
  %v730 = vadd.f32 %v711, %v729
  %v731 = vpop.f32.mrf.mxu0
  %v732 = vadd.f32 %v713, %v731
  %733 = vmatmul.bf16.gmra.mxu0 %v222
  %v734 = vpop.f32.mrf.mxu0
  %v735 = vadd.f32 %v716, %v734
  %v736 = vpop.f32.mrf.mxu0
  %v737 = vadd.f32 %v718, %v736
  %738 = vdwg.mxu0
  %739 = vmatpush.bf16.msra.mxu0 %v552
  %740 = vmatpush.bf16.msra.mxu0 %v551
  %741 = vmatpush.bf16.msra.mxu0 %v550
  %742 = vmatpush.bf16.msra.mxu0 %v549
  %743 = vmatpush.bf16.msra.mxu0 %v548
  %744 = vmatpush.bf16.msra.mxu0 %v547
  %745 = vmatpush.bf16.msra.mxu0 %v546
  %746 = vmatpush.bf16.msra.mxu0 %v545
  %747 = vmatmul.bf16.gmra.mxu0 %v215
  %v748 = vpop.f32.mrf.mxu0
  %v749 = vadd.f32 %v730, %v748
  %v750 = vpop.f32.mrf.mxu0
  %v751 = vadd.f32 %v732, %v750
  %752 = vmatmul.bf16.gmra.mxu0 %v223
  %v753 = vpop.f32.mrf.mxu0
  %v754 = vadd.f32 %v735, %v753
  %v755 = vpop.f32.mrf.mxu0
  %v756 = vadd.f32 %v737, %v755
  %757 = vdwg.mxu0
  %758 = vmatpush.bf16.msra.mxu0 %v560
  %759 = vmatpush.bf16.msra.mxu0 %v559
  %760 = vmatpush.bf16.msra.mxu0 %v558
  %761 = vmatpush.bf16.msra.mxu0 %v557
  %762 = vmatpush.bf16.msra.mxu0 %v556
  %763 = vmatpush.bf16.msra.mxu0 %v555
  %764 = vmatpush.bf16.msra.mxu0 %v554
  %765 = vmatpush.bf16.msra.mxu0 %v553
  %766 = vmatmul.bf16.gmra.mxu0 %v216
  %v767 = vpop.f32.mrf.mxu0
  %v768 = vadd.f32 %v749, %v767
  %v769 = vpop.f32.mrf.mxu0
  %v770 = vadd.f32 %v751, %v769
  %771 = vmatmul.bf16.gmra.mxu0 %v224
  %v772 = vpop.f32.mrf.mxu0
  %v773 = vadd.f32 %v754, %v772
  %v774 = vpop.f32.mrf.mxu0
  %v775 = vadd.f32 %v756, %v774
  %776 = vdwg.mxu0
  %v777 = vld [vmem:[%s2] sm:$0x1]
  %v778 = vld [vmem:[%s3] sm:$0x1]
  %v779 = vadd.f32 %v768, %v770
  %v780 = vadd.f32 %v779, %v773
  %v781 = vadd.f32 %v780, %v775
  %v782 = vrot.slane %v781, 4
  %v783 = vadd.f32 %v781, %v782
  %v784 = vrot.slane %v783, 2
  %v785 = vadd.f32 %v783, %v784
  %v786 = vrot.slane %v785, 1
  %v787 = vadd.f32 %v785, %v786
  %v788 = vmul.f32 %v768, %v768
  %v789 = vmul.f32 %v770, %v770
  %v790 = vmul.f32 %v773, %v773
  %v791 = vmul.f32 %v775, %v775
  %v792 = vadd.f32 %v788, %v789
  %v793 = vadd.f32 %v792, %v790
  %v794 = vadd.f32 %v793, %v791
  %v795 = vrot.slane %v794, 4
  %v796 = vadd.f32 %v794, %v795
  %v797 = vrot.slane %v796, 2
  %v798 = vadd.f32 %v796, %v797
  %v799 = vrot.slane %v798, 1
  %v800 = vadd.f32 %v798, %v799
  %v801 = vmul.f32 %v787, 0.055555556
  %v802 = vmul.f32 %v800, 0.055555556
  %v803 = vmul.f32 %v801, %v801
  %v804 = vsub.f32 %v802, %v803
  %v805 = vmax.f32 %v804, 0.0
  %v806 = vsub.f32 %v768, %v801
  %v807 = vsub.f32 %v770, %v801
  %v808 = vsub.f32 %v773, %v801
  %v809 = vsub.f32 %v775, %v801
  %v810 = vadd.f32 %v805, 1e-05
  %v811 = vrsqrt.pop %v810
  %v812 = vmul.f32 %v811, %v810
  %v813 = vmul.f32 %v812, %v811
  %v814 = vmul.f32 0.5, %v813
  %v815 = vsub.f32 1.5, %v814
  %v816 = vmul.f32 %v811, %v815
  %vm817 = vweird.f32 %v810
  %vm818 = vweird.f32 %v811
  %vm819 = vmor %vm817, %vm818
  %v820 = vsel %vm819, %v811, %v816
  %v821 = vmul.f32 %v806, %v820
  %v822 = vmul.f32 %v807, %v820
  %v823 = vmul.f32 %v808, %v820
  %v824 = vmul.f32 %v809, %v820
  %v826 = vperm.slane %v777, 0
  %v828 = vmul.f32 %v826, %v821
  %v829 = vmul.f32 %v826, %v822
  %v830 = vmul.f32 %v826, %v823
  %v831 = vmul.f32 %v826, %v824
  %v833 = vperm.slane %v778, 0
  %v835 = vadd.f32 %v828, %v833
  %v836 = vadd.f32 %v829, %v833
  %v837 = vadd.f32 %v830, %v833
  %v838 = vadd.f32 %v831, %v833
  %vm839 = vcmp.gt.f32.partialorder %v835, 0.0
  %vm840 = vcmp.gt.f32.partialorder %v836, 0.0
  %vm841 = vcmp.gt.f32.partialorder %v837, 0.0
  %vm842 = vcmp.gt.f32.partialorder %v838, 0.0
  %v843 = vmul.f32 %v835, 0.2
  %v844 = vmul.f32 %v836, 0.2
  %v845 = vmul.f32 %v837, 0.2
  %v846 = vmul.f32 %v838, 0.2
  %v847 = vsel %vm839, %v835, %v843
  %v848 = vsel %vm840, %v836, %v844
  %v849 = vsel %vm841, %v837, %v845
  %v850 = vsel %vm842, %v838, %v846
  %851 = vst [vmem:[%s4] sm:$0xff] %v847
  %852 = vst [vmem:[%s4 + $0x8] sm:$0xff] %v848
  %853 = vst [vmem:[%s4 + $0x10] sm:$0xff] %v849
  %854 = vst [vmem:[%s4 + $0x18] sm:$0xff] %v850
  // Predicated region
  $region18: #{cnn_encoder_forward.9} parent=0 // pred_check
    _
  $region19: #{cnn_encoder_forward.9} parent=0 // pred_check_branch
    %856 = sbr.rel (0) target = $region21
  $region20: #{cnn_encoder_forward.9} parent=0 // pred_region
    _
  $region21: #{cnn_encoder_forward.9} parent=0 // pred_fallthru
    _
  // Predicated region
  $region22: #{cnn_encoder_forward.9} parent=0 // pred_check
    _
  $region23: #{cnn_encoder_forward.9} parent=0 // pred_check_branch
    %858 = sbr.rel (0) target = $region25
  $region24: #{cnn_encoder_forward.9} parent=0 // pred_region
    _
  $region25: #{cnn_encoder_forward.9} parent=0 // pred_fallthru
    _

// kernel: cnn_encoder_forward.10
$region0: #{cnn_encoder_forward.10}
  #allocation0 [shape = 'u32[]', space=smem, size = 0x4, offset = 0x4, fixed_abs, tag = 'smem constant byte address 0x4 - core index']
  #allocation1 [shape = 'u32[72,128]{1,0:T(1,128)}', space=vmem, size = 0x9000, scoped, tag = 'internal scratch']
  %s0 = inlined_call_operand.vmem [shape: bf16[16,1152], index: 0, kind: input, shape index: {}]
  %s1 = inlined_call_operand.vmem [shape: bf16[1152,256], index: 1, kind: input, shape index: {}]
  %s2 = inlined_call_operand.vmem [shape: f32[1,256], index: 2, kind: input, shape index: {}]
  %s3 = inlined_call_operand.vmem [shape: f32[1,256], index: 3, kind: input, shape index: {}]
  %s4 = inlined_call_operand.vmem [shape: f32[16,256], index: 4, kind: output, shape index: {}]
  %s5 = sld [smem:[#allocation0]]
  $region26: #{cnn_encoder_forward.10} parent=0
    _
  %s7 = ssub.s32 1, %s5
  %s8 = scalar_select 0, %s7, %s5
  // Predicated region
  $region2: #{cnn_encoder_forward.10} parent=0 // pred_check
    _
  $region3: #{cnn_encoder_forward.10} parent=0 // pred_check_branch
    %10 = sbr.rel (0) target = $region5
  $region4: #{cnn_encoder_forward.10} parent=0 // pred_region
    _
  $region5: #{cnn_encoder_forward.10} parent=0 // pred_fallthru
    _
  // Predicated region
  $region6: #{cnn_encoder_forward.10} parent=0 // pred_check
    _
  $region7: #{cnn_encoder_forward.10} parent=0 // pred_check_branch
    %12 = sbr.rel (0) target = $region9
  $region8: #{cnn_encoder_forward.10} parent=0 // pred_region
    _
  $region9: #{cnn_encoder_forward.10} parent=0 // pred_fallthru
    _
  // Predicated region
  $region10: #{cnn_encoder_forward.10} parent=0 // pred_check
    _
  $region11: #{cnn_encoder_forward.10} parent=0 // pred_check_branch
    %14 = sbr.rel (0) target = $region13
  $region12: #{cnn_encoder_forward.10} parent=0 // pred_region
    _
  $region13: #{cnn_encoder_forward.10} parent=0 // pred_fallthru
    _
  // Predicated region
  $region14: #{cnn_encoder_forward.10} parent=0 // pred_check
    _
  $region15: #{cnn_encoder_forward.10} parent=0 // pred_check_branch
    %16 = sbr.rel (0) target = $region17
  $region16: #{cnn_encoder_forward.10} parent=0 // pred_region
    _
  $region17: #{cnn_encoder_forward.10} parent=0 // pred_fallthru
    _
  %v17 = vld [vmem:[%s0] sm:$0xff]
  %v18 = vld [vmem:[%s0 + $0x8] sm:$0xff]
  %v19 = vld [vmem:[%s0 + $0x10] sm:$0xff]
  %v20 = vld [vmem:[%s0 + $0x18] sm:$0xff]
  %v21 = vld [vmem:[%s0 + $0x20] sm:$0xf]
  %v22 = vld [vmem:[%s0 + $0x24] sm:$0xff]
  %v23 = vld [vmem:[%s0 + $0x2c] sm:$0xff]
  %v24 = vld [vmem:[%s0 + $0x34] sm:$0xff]
  %v25 = vld [vmem:[%s0 + $0x3c] sm:$0xff]
  %v26 = vld [vmem:[%s0 + $0x44] sm:$0xf]
  %v27 = vld [vmem:[%s1] sm:$0xff]
  %v28 = vld [vmem:[%s1 + $0x8] sm:$0xff]
  %v29 = vld [vmem:[%s1 + $0x10] sm:$0xff]
  %v30 = vld [vmem:[%s1 + $0x18] sm:$0xff]
  %v31 = vld [vmem:[%s1 + $0x20] sm:$0xff]
  %v32 = vld [vmem:[%s1 + $0x28] sm:$0xff]
  %v33 = vld [vmem:[%s1 + $0x30] sm:$0xff]
  %v34 = vld [vmem:[%s1 + $0x38] sm:$0xff]
  %v35 = vld [vmem:[%s1 + $0x40] sm:$0xff]
  %v36 = vld [vmem:[%s1 + $0x48] sm:$0xff]
  %v37 = vld [vmem:[%s1 + $0x50] sm:$0xff]
  %v38 = vld [vmem:[%s1 + $0x58] sm:$0xff]
  %v39 = vld [vmem:[%s1 + $0x60] sm:$0xff]
  %v40 = vld [vmem:[%s1 + $0x68] sm:$0xff]
  %v41 = vld [vmem:[%s1 + $0x70] sm:$0xff]
  %v42 = vld [vmem:[%s1 + $0x78] sm:$0xff]
  %v43 = vld [vmem:[%s1 + $0x80] sm:$0xff]
  %v44 = vld [vmem:[%s1 + $0x88] sm:$0xff]
  %v45 = vld [vmem:[%s1 + $0x90] sm:$0xff]
  %v46 = vld [vmem:[%s1 + $0x98] sm:$0xff]
  %v47 = vld [vmem:[%s1 + $0xa0] sm:$0xff]
  %v48 = vld [vmem:[%s1 + $0xa8] sm:$0xff]
  %v49 = vld [vmem:[%s1 + $0xb0] sm:$0xff]
  %v50 = vld [vmem:[%s1 + $0xb8] sm:$0xff]
  %v51 = vld [vmem:[%s1 + $0xc0] sm:$0xff]
  %v52 = vld [vmem:[%s1 + $0xc8] sm:$0xff]
  %v53 = vld [vmem:[%s1 + $0xd0] sm:$0xff]
  %v54 = vld [vmem:[%s1 + $0xd8] sm:$0xff]
  %v55 = vld [vmem:[%s1 + $0xe0] sm:$0xff]
  %v56 = vld [vmem:[%s1 + $0xe8] sm:$0xff]
  %v57 = vld [vmem:[%s1 + $0xf0] sm:$0xff]
  %v58 = vld [vmem:[%s1 + $0xf8] sm:$0xff]
  %v59 = vld [vmem:[%s1 + $0x100] sm:$0xff]
  %v60 = vld [vmem:[%s1 + $0x108] sm:$0xff]
  %v61 = vld [vmem:[%s1 + $0x110] sm:$0xff]
  %v62 = vld [vmem:[%s1 + $0x118] sm:$0xff]
  %v63 = vld [vmem:[%s1 + $0x120] sm:$0xff]
  %v64 = vld [vmem:[%s1 + $0x128] sm:$0xff]
  %v65 = vld [vmem:[%s1 + $0x130] sm:$0xff]
  %v66 = vld [vmem:[%s1 + $0x138] sm:$0xff]
  %v67 = vld [vmem:[%s1 + $0x140] sm:$0xff]
  %v68 = vld [vmem:[%s1 + $0x148] sm:$0xff]
  %v69 = vld [vmem:[%s1 + $0x150] sm:$0xff]
  %v70 = vld [vmem:[%s1 + $0x158] sm:$0xff]
  %v71 = vld [vmem:[%s1 + $0x160] sm:$0xff]
  %v72 = vld [vmem:[%s1 + $0x168] sm:$0xff]
  %v73 = vld [vmem:[%s1 + $0x170] sm:$0xff]
  %v74 = vld [vmem:[%s1 + $0x178] sm:$0xff]
  %v75 = vld [vmem:[%s1 + $0x180] sm:$0xff]
  %v76 = vld [vmem:[%s1 + $0x188] sm:$0xff]
  %v77 = vld [vmem:[%s1 + $0x190] sm:$0xff]
  %v78 = vld [vmem:[%s1 + $0x198] sm:$0xff]
  %v79 = vld [vmem:[%s1 + $0x1a0] sm:$0xff]
  %v80 = vld [vmem:[%s1 + $0x1a8] sm:$0xff]
  %v81 = vld [vmem:[%s1 + $0x1b0] sm:$0xff]
  %v82 = vld [vmem:[%s1 + $0x1b8] sm:$0xff]
  %v83 = vld [vmem:[%s1 + $0x1c0] sm:$0xff]
  %v84 = vld [vmem:[%s1 + $0x1c8] sm:$0xff]
  %v85 = vld [vmem:[%s1 + $0x1d0] sm:$0xff]
  %v86 = vld [vmem:[%s1 + $0x1d8] sm:$0xff]
  %v87 = vld [vmem:[%s1 + $0x1e0] sm:$0xff]
  %v88 = vld [vmem:[%s1 + $0x1e8] sm:$0xff]
  %v89 = vld [vmem:[%s1 + $0x1f0] sm:$0xff]
  %v90 = vld [vmem:[%s1 + $0x1f8] sm:$0xff]
  %v91 = vld [vmem:[%s1 + $0x200] sm:$0xff]
  %v92 = vld [vmem:[%s1 + $0x208] sm:$0xff]
  %v93 = vld [vmem:[%s1 + $0x210] sm:$0xff]
  %v94 = vld [vmem:[%s1 + $0x218] sm:$0xff]
  %v95 = vld [vmem:[%s1 + $0x220] sm:$0xff]
  %v96 = vld [vmem:[%s1 + $0x228] sm:$0xff]
  %v97 = vld [vmem:[%s1 + $0x230] sm:$0xff]
  %v98 = vld [vmem:[%s1 + $0x238] sm:$0xff]
  %v99 = vld [vmem:[%s1 + $0x240] sm:$0xff]
  %v100 = vld [vmem:[%s1 + $0x248] sm:$0xff]
  %v101 = vld [vmem:[%s1 + $0x250] sm:$0xff]
  %v102 = vld [vmem:[%s1 + $0x258] sm:$0xff]
  %v103 = vld [vmem:[%s1 + $0x260] sm:$0xff]
  %v104 = vld [vmem:[%s1 + $0x268] sm:$0xff]
  %v105 = vld [vmem:[%s1 + $0x270] sm:$0xff]
  %v106 = vld [vmem:[%s1 + $0x278] sm:$0xff]
  %v107 = vld [vmem:[%s1 + $0x280] sm:$0xff]
  %v108 = vld [vmem:[%s1 + $0x288] sm:$0xff]
  %v109 = vld [vmem:[%s1 + $0x290] sm:$0xff]
  %v110 = vld [vmem:[%s1 + $0x298] sm:$0xff]
  %v111 = vld [vmem:[%s1 + $0x2a0] sm:$0xff]
  %v112 = vld [vmem:[%s1 + $0x2a8] sm:$0xff]
  %v113 = vld [vmem:[%s1 + $0x2b0] sm:$0xff]
  %v114 = vld [vmem:[%s1 + $0x2b8] sm:$0xff]
  %v115 = vld [vmem:[%s1 + $0x2c0] sm:$0xff]
  %v116 = vld [vmem:[%s1 + $0x2c8] sm:$0xff]
  %v117 = vld [vmem:[%s1 + $0x2d0] sm:$0xff]
  %v118 = vld [vmem:[%s1 + $0x2d8] sm:$0xff]
  %v119 = vld [vmem:[%s1 + $0x2e0] sm:$0xff]
  %v120 = vld [vmem:[%s1 + $0x2e8] sm:$0xff]
  %v121 = vld [vmem:[%s1 + $0x2f0] sm:$0xff]
  %v122 = vld [vmem:[%s1 + $0x2f8] sm:$0xff]
  %v123 = vld [vmem:[%s1 + $0x300] sm:$0xff]
  %v124 = vld [vmem:[%s1 + $0x308] sm:$0xff]
  %v125 = vld [vmem:[%s1 + $0x310] sm:$0xff]
  %v126 = vld [vmem:[%s1 + $0x318] sm:$0xff]
  %v127 = vld [vmem:[%s1 + $0x320] sm:$0xff]
  %v128 = vld [vmem:[%s1 + $0x328] sm:$0xff]
  %v129 = vld [vmem:[%s1 + $0x330] sm:$0xff]
  %v130 = vld [vmem:[%s1 + $0x338] sm:$0xff]
  %v131 = vld [vmem:[%s1 + $0x340] sm:$0xff]
  %v132 = vld [vmem:[%s1 + $0x348] sm:$0xff]
  %v133 = vld [vmem:[%s1 + $0x350] sm:$0xff]
  %v134 = vld [vmem:[%s1 + $0x358] sm:$0xff]
  %v135 = vld [vmem:[%s1 + $0x360] sm:$0xff]
  %v136 = vld [vmem:[%s1 + $0x368] sm:$0xff]
  %v137 = vld [vmem:[%s1 + $0x370] sm:$0xff]
  %v138 = vld [vmem:[%s1 + $0x378] sm:$0xff]
  %v139 = vld [vmem:[%s1 + $0x380] sm:$0xff]
  %v140 = vld [vmem:[%s1 + $0x388] sm:$0xff]
  %v141 = vld [vmem:[%s1 + $0x390] sm:$0xff]
  %v142 = vld [vmem:[%s1 + $0x398] sm:$0xff]
  %v143 = vld [vmem:[%s1 + $0x3a0] sm:$0xff]
  %v144 = vld [vmem:[%s1 + $0x3a8] sm:$0xff]
  %v145 = vld [vmem:[%s1 + $0x3b0] sm:$0xff]
  %v146 = vld [vmem:[%s1 + $0x3b8] sm:$0xff]
  %v147 = vld [vmem:[%s1 + $0x3c0] sm:$0xff]
  %v148 = vld [vmem:[%s1 + $0x3c8] sm:$0xff]
  %v149 = vld [vmem:[%s1 + $0x3d0] sm:$0xff]
  %v150 = vld [vmem:[%s1 + $0x3d8] sm:$0xff]
  %v151 = vld [vmem:[%s1 + $0x3e0] sm:$0xff]
  %v152 = vld [vmem:[%s1 + $0x3e8] sm:$0xff]
  %v153 = vld [vmem:[%s1 + $0x3f0] sm:$0xff]
  %v154 = vld [vmem:[%s1 + $0x3f8] sm:$0xff]
  %v155 = vld [vmem:[%s1 + $0x400] sm:$0xff]
  %v156 = vld [vmem:[%s1 + $0x408] sm:$0xff]
  %v157 = vld [vmem:[%s1 + $0x410] sm:$0xff]
  %v158 = vld [vmem:[%s1 + $0x418] sm:$0xff]
  %v159 = vld [vmem:[%s1 + $0x420] sm:$0xff]
  %v160 = vld [vmem:[%s1 + $0x428] sm:$0xff]
  %v161 = vld [vmem:[%s1 + $0x430] sm:$0xff]
  %v162 = vld [vmem:[%s1 + $0x438] sm:$0xff]
  %v163 = vld [vmem:[%s1 + $0x440] sm:$0xff]
  %v164 = vld [vmem:[%s1 + $0x448] sm:$0xff]
  %v165 = vld [vmem:[%s1 + $0x450] sm:$0xff]
  %v166 = vld [vmem:[%s1 + $0x458] sm:$0xff]
  %v167 = vld [vmem:[%s1 + $0x460] sm:$0xff]
  %v168 = vld [vmem:[%s1 + $0x468] sm:$0xff]
  %v169 = vld [vmem:[%s1 + $0x470] sm:$0xff]
  %v170 = vld [vmem:[%s1 + $0x478] sm:$0xff]
  %v181 = vunpack.c.l.b16 %v17
  %v182 = vunpack.c.h.b16 %v17
  %v183 = vunpack.c.l.b16 %v18
  %v184 = vunpack.c.h.b16 %v18
  %v185 = vunpack.c.l.b16 %v19
  %v186 = vunpack.c.h.b16 %v19
  %v187 = vunpack.c.l.b16 %v20
  %v188 = vunpack.c.h.b16 %v20
  %v189 = vunpack.c.l.b16 %v21
  %v190 = vunpack.c.l.b16 %v22
  %v191 = vunpack.c.h.b16 %v22
  %v192 = vunpack.c.l.b16 %v23
  %v193 = vunpack.c.h.b16 %v23
  %v194 = vunpack.c.l.b16 %v24
  %v195 = vunpack.c.h.b16 %v24
  %v196 = vunpack.c.l.b16 %v25
  %v197 = vunpack.c.h.b16 %v25
  %v198 = vunpack.c.l.b16 %v26
  %v199 = vpack.c.b16 %v190, %v181
  %v200 = vpack.c.b16 %v191, %v182
  %v201 = vpack.c.b16 %v192, %v183
  %v202 = vpack.c.b16 %v193, %v184
  %v203 = vpack.c.b16 %v194, %v185
  %v204 = vpack.c.b16 %v195, %v186
  %v205 = vpack.c.b16 %v196, %v187
  %v206 = vpack.c.b16 %v197, %v188
  %v207 = vpack.c.b16 %v198, %v189
  %v361 = vunpack.c.l.b16 %v27
  %v362 = vunpack.c.h.b16 %v27
  %v363 = vunpack.c.l.b16 %v28
  %v364 = vunpack.c.h.b16 %v28
  %v365 = vunpack.c.l.b16 %v29
  %v366 = vunpack.c.h.b16 %v29
  %v367 = vunpack.c.l.b16 %v30
  %v368 = vunpack.c.h.b16 %v30
  %v369 = vunpack.c.l.b16 %v31
  %v370 = vunpack.c.h.b16 %v31
  %v371 = vunpack.c.l.b16 %v32
  %v372 = vunpack.c.h.b16 %v32
  %v373 = vunpack.c.l.b16 %v33
  %v374 = vunpack.c.h.b16 %v33
  %v375 = vunpack.c.l.b16 %v34
  %v376 = vunpack.c.h.b16 %v34
  %v377 = vunpack.c.l.b16 %v35
  %v378 = vunpack.c.h.b16 %v35
  %v379 = vunpack.c.l.b16 %v36
  %v380 = vunpack.c.h.b16 %v36
  %v381 = vunpack.c.l.b16 %v37
  %v382 = vunpack.c.h.b16 %v37
  %v383 = vunpack.c.l.b16 %v38
  %v384 = vunpack.c.h.b16 %v38
  %v385 = vunpack.c.l.b16 %v39
  %v386 = vunpack.c.h.b16 %v39
  %v387 = vunpack.c.l.b16 %v40
  %v388 = vunpack.c.h.b16 %v40
  %v389 = vunpack.c.l.b16 %v41
  %v390 = vunpack.c.h.b16 %v41
  %v391 = vunpack.c.l.b16 %v42
  %v392 = vunpack.c.h.b16 %v42
  %v393 = vunpack.c.l.b16 %v43
  %v394 = vunpack.c.h.b16 %v43
  %v395 = vunpack.c.l.b16 %v44
  %v396 = vunpack.c.h.b16 %v44
  %v397 = vunpack.c.l.b16 %v45
  %v398 = vunpack.c.h.b16 %v45
  %v399 = vunpack.c.l.b16 %v46
  %v400 = vunpack.c.h.b16 %v46
  %v401 = vunpack.c.l.b16 %v47
  %v402 = vunpack.c.h.b16 %v47
  %v403 = vunpack.c.l.b16 %v48
  %v404 = vunpack.c.h.b16 %v48
  %v405 = vunpack.c.l.b16 %v49
  %v406 = vunpack.c.h.b16 %v49
  %v407 = vunpack.c.l.b16 %v50
  %v408 = vunpack.c.h.b16 %v50
  %v409 = vunpack.c.l.b16 %v51
  %v410 = vunpack.c.h.b16 %v51
  %v411 = vunpack.c.l.b16 %v52
  %v412 = vunpack.c.h.b16 %v52
  %v413 = vunpack.c.l.b16 %v53
  %v414 = vunpack.c.h.b16 %v53
  %v415 = vunpack.c.l.b16 %v54
  %v416 = vunpack.c.h.b16 %v54
  %v417 = vunpack.c.l.b16 %v55
  %v418 = vunpack.c.h.b16 %v55
  %v419 = vunpack.c.l.b16 %v56
  %v420 = vunpack.c.h.b16 %v56
  %v421 = vunpack.c.l.b16 %v57
  %v422 = vunpack.c.h.b16 %v57
  %v423 = vunpack.c.l.b16 %v58
  %v424 = vunpack.c.h.b16 %v58
  %v425 = vunpack.c.l.b16 %v59
  %v426 = vunpack.c.h.b16 %v59
  %v427 = vunpack.c.l.b16 %v60
  %v428 = vunpack.c.h.b16 %v60
  %v429 = vunpack.c.l.b16 %v61
  %v430 = vunpack.c.h.b16 %v61
  %v431 = vunpack.c.l.b16 %v62
  %v432 = vunpack.c.h.b16 %v62
  %v433 = vunpack.c.l.b16 %v63
  %v434 = vunpack.c.h.b16 %v63
  %v435 = vunpack.c.l.b16 %v64
  %v436 = vunpack.c.h.b16 %v64
  %v437 = vunpack.c.l.b16 %v65
  %v438 = vunpack.c.h.b16 %v65
  %v439 = vunpack.c.l.b16 %v66
  %v440 = vunpack.c.h.b16 %v66
  %v441 = vunpack.c.l.b16 %v67
  %v442 = vunpack.c.h.b16 %v67
  %v443 = vunpack.c.l.b16 %v68
  %v444 = vunpack.c.h.b16 %v68
  %v445 = vunpack.c.l.b16 %v69
  %v446 = vunpack.c.h.b16 %v69
  %v447 = vunpack.c.l.b16 %v70
  %v448 = vunpack.c.h.b16 %v70
  %v449 = vunpack.c.l.b16 %v71
  %v450 = vunpack.c.h.b16 %v71
  %v451 = vunpack.c.l.b16 %v72
  %v452 = vunpack.c.h.b16 %v72
  %v453 = vunpack.c.l.b16 %v73
  %v454 = vunpack.c.h.b16 %v73
  %v455 = vunpack.c.l.b16 %v74
  %v456 = vunpack.c.h.b16 %v74
  %v457 = vunpack.c.l.b16 %v75
  %v458 = vunpack.c.h.b16 %v75
  %v459 = vunpack.c.l.b16 %v76
  %v460 = vunpack.c.h.b16 %v76
  %v461 = vunpack.c.l.b16 %v77
  %v462 = vunpack.c.h.b16 %v77
  %v463 = vunpack.c.l.b16 %v78
  %v464 = vunpack.c.h.b16 %v78
  %v465 = vunpack.c.l.b16 %v79
  %v466 = vunpack.c.h.b16 %v79
  %v467 = vunpack.c.l.b16 %v80
  %v468 = vunpack.c.h.b16 %v80
  %v469 = vunpack.c.l.b16 %v81
  %v470 = vunpack.c.h.b16 %v81
  %v471 = vunpack.c.l.b16 %v82
  %v472 = vunpack.c.h.b16 %v82
  %v473 = vunpack.c.l.b16 %v83
  %v474 = vunpack.c.h.b16 %v83
  %v475 = vunpack.c.l.b16 %v84
  %v476 = vunpack.c.h.b16 %v84
  %v477 = vunpack.c.l.b16 %v85
  %v478 = vunpack.c.h.b16 %v85
  %v479 = vunpack.c.l.b16 %v86
  %v480 = vunpack.c.h.b16 %v86
  %v481 = vunpack.c.l.b16 %v87
  %v482 = vunpack.c.h.b16 %v87
  %v483 = vunpack.c.l.b16 %v88
  %v484 = vunpack.c.h.b16 %v88
  %v485 = vunpack.c.l.b16 %v89
  %v486 = vunpack.c.h.b16 %v89
  %v487 = vunpack.c.l.b16 %v90
  %v488 = vunpack.c.h.b16 %v90
  %v489 = vunpack.c.l.b16 %v91
  %v490 = vunpack.c.h.b16 %v91
  %v491 = vunpack.c.l.b16 %v92
  %v492 = vunpack.c.h.b16 %v92
  %v493 = vunpack.c.l.b16 %v93
  %v494 = vunpack.c.h.b16 %v93
  %v495 = vunpack.c.l.b16 %v94
  %v496 = vunpack.c.h.b16 %v94
  %v497 = vunpack.c.l.b16 %v95
  %v498 = vunpack.c.h.b16 %v95
  %v499 = vunpack.c.l.b16 %v96
  %v500 = vunpack.c.h.b16 %v96
  %v501 = vunpack.c.l.b16 %v97
  %v502 = vunpack.c.h.b16 %v97
  %v503 = vunpack.c.l.b16 %v98
  %v504 = vunpack.c.h.b16 %v98
  %v505 = vunpack.c.l.b16 %v99
  %v506 = vunpack.c.h.b16 %v99
  %v507 = vunpack.c.l.b16 %v100
  %v508 = vunpack.c.h.b16 %v100
  %v509 = vunpack.c.l.b16 %v101
  %v510 = vunpack.c.h.b16 %v101
  %v511 = vunpack.c.l.b16 %v102
  %v512 = vunpack.c.h.b16 %v102
  %v513 = vunpack.c.l.b16 %v103
  %v514 = vunpack.c.h.b16 %v103
  %v515 = vunpack.c.l.b16 %v104
  %v516 = vunpack.c.h.b16 %v104
  %v517 = vunpack.c.l.b16 %v105
  %v518 = vunpack.c.h.b16 %v105
  %v519 = vunpack.c.l.b16 %v106
  %v520 = vunpack.c.h.b16 %v106
  %v521 = vunpack.c.l.b16 %v107
  %v522 = vunpack.c.h.b16 %v107
  %v523 = vunpack.c.l.b16 %v108
  %v524 = vunpack.c.h.b16 %v108
  %v525 = vunpack.c.l.b16 %v109
  %v526 = vunpack.c.h.b16 %v109
  %v527 = vunpack.c.l.b16 %v110
  %v528 = vunpack.c.h.b16 %v110
  %v529 = vunpack.c.l.b16 %v111
  %v530 = vunpack.c.h.b16 %v111
  %v531 = vunpack.c.l.b16 %v112
  %v532 = vunpack.c.h.b16 %v112
  %v533 = vunpack.c.l.b16 %v113
  %v534 = vunpack.c.h.b16 %v113
  %v535 = vunpack.c.l.b16 %v114
  %v536 = vunpack.c.h.b16 %v114
  %v537 = vunpack.c.l.b16 %v115
  %v538 = vunpack.c.h.b16 %v115
  %v539 = vunpack.c.l.b16 %v116
  %v540 = vunpack.c.h.b16 %v116
  %v541 = vunpack.c.l.b16 %v117
  %v542 = vunpack.c.h.b16 %v117
  %v543 = vunpack.c.l.b16 %v118
  %v544 = vunpack.c.h.b16 %v118
  %v545 = vunpack.c.l.b16 %v119
  %v546 = vunpack.c.h.b16 %v119
  %v547 = vunpack.c.l.b16 %v120
  %v548 = vunpack.c.h.b16 %v120
  %v549 = vunpack.c.l.b16 %v121
  %v550 = vunpack.c.h.b16 %v121
  %v551 = vunpack.c.l.b16 %v122
  %v552 = vunpack.c.h.b16 %v122
  %v553 = vunpack.c.l.b16 %v123
  %v554 = vunpack.c.h.b16 %v123
  %v555 = vunpack.c.l.b16 %v124
  %v556 = vunpack.c.h.b16 %v124
  %v557 = vunpack.c.l.b16 %v125
  %v558 = vunpack.c.h.b16 %v125
  %v559 = vunpack.c.l.b16 %v126
  %v560 = vunpack.c.h.b16 %v126
  %v561 = vunpack.c.l.b16 %v127
  %v562 = vunpack.c.h.b16 %v127
  %v563 = vunpack.c.l.b16 %v128
  %v564 = vunpack.c.h.b16 %v128
  %v565 = vunpack.c.l.b16 %v129
  %v566 = vunpack.c.h.b16 %v129
  %v567 = vunpack.c.l.b16 %v130
  %v568 = vunpack.c.h.b16 %v130
  %v569 = vunpack.c.l.b16 %v131
  %v570 = vunpack.c.h.b16 %v131
  %v571 = vunpack.c.l.b16 %v132
  %v572 = vunpack.c.h.b16 %v132
  %v573 = vunpack.c.l.b16 %v133
  %v574 = vunpack.c.h.b16 %v133
  %v575 = vunpack.c.l.b16 %v134
  %v576 = vunpack.c.h.b16 %v134
  %v577 = vunpack.c.l.b16 %v135
  %v578 = vunpack.c.h.b16 %v135
  %v579 = vunpack.c.l.b16 %v136
  %v580 = vunpack.c.h.b16 %v136
  %v581 = vunpack.c.l.b16 %v137
  %v582 = vunpack.c.h.b16 %v137
  %v583 = vunpack.c.l.b16 %v138
  %v584 = vunpack.c.h.b16 %v138
  %v585 = vunpack.c.l.b16 %v139
  %v586 = vunpack.c.h.b16 %v139
  %v587 = vunpack.c.l.b16 %v140
  %v588 = vunpack.c.h.b16 %v140
  %v589 = vunpack.c.l.b16 %v141
  %v590 = vunpack.c.h.b16 %v141
  %v591 = vunpack.c.l.b16 %v142
  %v592 = vunpack.c.h.b16 %v142
  %v593 = vunpack.c.l.b16 %v143
  %v594 = vunpack.c.h.b16 %v143
  %v595 = vunpack.c.l.b16 %v144
  %v596 = vunpack.c.h.b16 %v144
  %v597 = vunpack.c.l.b16 %v145
  %v598 = vunpack.c.h.b16 %v145
  %v599 = vunpack.c.l.b16 %v146
  %v600 = vunpack.c.h.b16 %v146
  %v601 = vunpack.c.l.b16 %v147
  %v602 = vunpack.c.h.b16 %v147
  %v603 = vunpack.c.l.b16 %v148
  %v604 = vunpack.c.h.b16 %v148
  %v605 = vunpack.c.l.b16 %v149
  %v606 = vunpack.c.h.b16 %v149
  %v607 = vunpack.c.l.b16 %v150
  %v608 = vunpack.c.h.b16 %v150
  %v609 = vunpack.c.l.b16 %v151
  %v610 = vunpack.c.h.b16 %v151
  %v611 = vunpack.c.l.b16 %v152
  %v612 = vunpack.c.h.b16 %v152
  %v613 = vunpack.c.l.b16 %v153
  %v614 = vunpack.c.h.b16 %v153
  %v615 = vunpack.c.l.b16 %v154
  %v616 = vunpack.c.h.b16 %v154
  %v617 = vunpack.c.l.b16 %v155
  %v618 = vunpack.c.h.b16 %v155
  %v619 = vunpack.c.l.b16 %v156
  %v620 = vunpack.c.h.b16 %v156
  %v621 = vunpack.c.l.b16 %v157
  %v622 = vunpack.c.h.b16 %v157
  %v623 = vunpack.c.l.b16 %v158
  %v624 = vunpack.c.h.b16 %v158
  %v625 = vunpack.c.l.b16 %v159
  %v626 = vunpack.c.h.b16 %v159
  %v627 = vunpack.c.l.b16 %v160
  %v628 = vunpack.c.h.b16 %v160
  %v629 = vunpack.c.l.b16 %v161
  %v630 = vunpack.c.h.b16 %v161
  %v631 = vunpack.c.l.b16 %v162
  %v632 = vunpack.c.h.b16 %v162
  %v633 = vunpack.c.l.b16 %v163
  %v634 = vunpack.c.h.b16 %v163
  %v635 = vunpack.c.l.b16 %v164
  %v636 = vunpack.c.h.b16 %v164
  %v637 = vunpack.c.l.b16 %v165
  %v638 = vunpack.c.h.b16 %v165
  %v639 = vunpack.c.l.b16 %v166
  %v640 = vunpack.c.h.b16 %v166
  %v641 = vunpack.c.l.b16 %v167
  %v642 = vunpack.c.h.b16 %v167
  %v643 = vunpack.c.l.b16 %v168
  %v644 = vunpack.c.h.b16 %v168
  %v645 = vunpack.c.l.b16 %v169
  %v646 = vunpack.c.h.b16 %v169
  %v647 = vunpack.c.l.b16 %v170
  %v648 = vunpack.c.h.b16 %v170
  %v649 = vpack.c.b16 %v363, %v361
  %v650 = vpack.c.b16 %v364, %v362
  %v651 = vpack.c.b16 %v367, %v365
  %v652 = vpack.c.b16 %v368, %v366
  %v653 = vpack.c.b16 %v371, %v369
  %v654 = vpack.c.b16 %v372, %v370
  %v655 = vpack.c.b16 %v375, %v373
  %v656 = vpack.c.b16 %v376, %v374
  %v657 = vpack.c.b16 %v379, %v377
  %v658 = vpack.c.b16 %v380, %v378
  %v659 = vpack.c.b16 %v383, %v381
  %v660 = vpack.c.b16 %v384, %v382
  %v661 = vpack.c.b16 %v387, %v385
  %v662 = vpack.c.b16 %v388, %v386
  %v663 = vpack.c.b16 %v391, %v389
  %v664 = vpack.c.b16 %v392, %v390
  %v665 = vpack.c.b16 %v395, %v393
  %v666 = vpack.c.b16 %v396, %v394
  %v667 = vpack.c.b16 %v399, %v397
  %v668 = vpack.c.b16 %v400, %v398
  %v669 = vpack.c.b16 %v403, %v401
  %v670 = vpack.c.b16 %v404, %v402
  %v671 = vpack.c.b16 %v407, %v405
  %v672 = vpack.c.b16 %v408, %v406
  %v673 = vpack.c.b16 %v411, %v409
  %v674 = vpack.c.b16 %v412, %v410
  %v675 = vpack.c.b16 %v415, %v413
  %v676 = vpack.c.b16 %v416, %v414
  %v677 = vpack.c.b16 %v419, %v417
  %v678 = vpack.c.b16 %v420, %v418
  %v679 = vpack.c.b16 %v423, %v421
  %v680 = vpack.c.b16 %v424, %v422
  %v681 = vpack.c.b16 %v427, %v425
  %v682 = vpack.c.b16 %v428, %v426
  %v683 = vpack.c.b16 %v431, %v429
  %v684 = vpack.c.b16 %v432, %v430
  %v685 = vpack.c.b16 %v435, %v433
  %v686 = vpack.c.b16 %v436, %v434
  %v687 = vpack.c.b16 %v439, %v437
  %v688 = vpack.c.b16 %v440, %v438
  %v689 = vpack.c.b16 %v443, %v441
  %v690 = vpack.c.b16 %v444, %v442
  %v691 = vpack.c.b16 %v447, %v445
  %v692 = vpack.c.b16 %v448, %v446
  %v693 = vpack.c.b16 %v451, %v449
  %v694 = vpack.c.b16 %v452, %v450
  %v695 = vpack.c.b16 %v455, %v453
  %v696 = vpack.c.b16 %v456, %v454
  %v697 = vpack.c.b16 %v459, %v457
  %v698 = vpack.c.b16 %v460, %v458
  %v699 = vpack.c.b16 %v463, %v461
  %v700 = vpack.c.b16 %v464, %v462
  %v701 = vpack.c.b16 %v467, %v465
  %v702 = vpack.c.b16 %v468, %v466
  %v703 = vpack.c.b16 %v471, %v469
  %v704 = vpack.c.b16 %v472, %v470
  %v705 = vpack.c.b16 %v475, %v473
  %v706 = vpack.c.b16 %v476, %v474
  %v707 = vpack.c.b16 %v479, %v477
  %v708 = vpack.c.b16 %v480, %v478
  %v709 = vpack.c.b16 %v483, %v481
  %v710 = vpack.c.b16 %v484, %v482
  %v711 = vpack.c.b16 %v487, %v485
  %v712 = vpack.c.b16 %v488, %v486
  %v713 = vpack.c.b16 %v491, %v489
  %v714 = vpack.c.b16 %v492, %v490
  %v715 = vpack.c.b16 %v495, %v493
  %v716 = vpack.c.b16 %v496, %v494
  %v717 = vpack.c.b16 %v499, %v497
  %v718 = vpack.c.b16 %v500, %v498
  %v719 = vpack.c.b16 %v503, %v501
  %v720 = vpack.c.b16 %v504, %v502
  %v721 = vpack.c.b16 %v507, %v505
  %v722 = vpack.c.b16 %v508, %v506
  %v723 = vpack.c.b16 %v511, %v509
  %v724 = vpack.c.b16 %v512, %v510
  %v725 = vpack.c.b16 %v515, %v513
  %v726 = vpack.c.b16 %v516, %v514
  %v727 = vpack.c.b16 %v519, %v517
  %v728 = vpack.c.b16 %v520, %v518
  %v729 = vpack.c.b16 %v523, %v521
  %v730 = vpack.c.b16 %v524, %v522
  %v731 = vpack.c.b16 %v527, %v525
  %v732 = vpack.c.b16 %v528, %v526
  %v733 = vpack.c.b16 %v531, %v529
  %v734 = vpack.c.b16 %v532, %v530
  %v735 = vpack.c.b16 %v535, %v533
  %v736 = vpack.c.b16 %v536, %v534
  %v737 = vpack.c.b16 %v539, %v537
  %v738 = vpack.c.b16 %v540, %v538
  %v739 = vpack.c.b16 %v543, %v541
  %v740 = vpack.c.b16 %v544, %v542
  %v741 = vpack.c.b16 %v547, %v545
  %v742 = vpack.c.b16 %v548, %v546
  %v743 = vpack.c.b16 %v551, %v549
  %v744 = vpack.c.b16 %v552, %v550
  %v745 = vpack.c.b16 %v555, %v553
  %v746 = vpack.c.b16 %v556, %v554
  %v747 = vpack.c.b16 %v559, %v557
  %v748 = vpack.c.b16 %v560, %v558
  %v749 = vpack.c.b16 %v563, %v561
  %v750 = vpack.c.b16 %v564, %v562
  %v751 = vpack.c.b16 %v567, %v565
  %v752 = vpack.c.b16 %v568, %v566
  %v753 = vpack.c.b16 %v571, %v569
  %v754 = vpack.c.b16 %v572, %v570
  %v755 = vpack.c.b16 %v575, %v573
  %v756 = vpack.c.b16 %v576, %v574
  %v757 = vpack.c.b16 %v579, %v577
  %v758 = vpack.c.b16 %v580, %v578
  %v759 = vpack.c.b16 %v583, %v581
  %v760 = vpack.c.b16 %v584, %v582
  %v761 = vpack.c.b16 %v587, %v585
  %v762 = vpack.c.b16 %v588, %v586
  %v763 = vpack.c.b16 %v591, %v589
  %v764 = vpack.c.b16 %v592, %v590
  %v765 = vpack.c.b16 %v595, %v593
  %v766 = vpack.c.b16 %v596, %v594
  %v767 = vpack.c.b16 %v599, %v597
  %v768 = vpack.c.b16 %v600, %v598
  %v769 = vpack.c.b16 %v603, %v601
  %v770 = vpack.c.b16 %v604, %v602
  %v771 = vpack.c.b16 %v607, %v605
  %v772 = vpack.c.b16 %v608, %v606
  %v773 = vpack.c.b16 %v611, %v609
  %v774 = vpack.c.b16 %v612, %v610
  %v775 = vpack.c.b16 %v615, %v613
  %v776 = vpack.c.b16 %v616, %v614
  %v777 = vpack.c.b16 %v619, %v617
  %v778 = vpack.c.b16 %v620, %v618
  %v779 = vpack.c.b16 %v623, %v621
  %v780 = vpack.c.b16 %v624, %v622
  %v781 = vpack.c.b16 %v627, %v625
  %v782 = vpack.c.b16 %v628, %v626
  %v783 = vpack.c.b16 %v631, %v629
  %v784 = vpack.c.b16 %v632, %v630
  %v785 = vpack.c.b16 %v635, %v633
  %v786 = vpack.c.b16 %v636, %v634
  %v787 = vpack.c.b16 %v639, %v637
  %v788 = vpack.c.b16 %v640, %v638
  %v789 = vpack.c.b16 %v643, %v641
  %v790 = vpack.c.b16 %v644, %v642
  %v791 = vpack.c.b16 %v647, %v645
  %v792 = vpack.c.b16 %v648, %v646
  %937 = vmatpush.bf16.msra.mxu0 %v663
  %938 = vmatpush.bf16.msra.mxu0 %v661
  %939 = vmatpush.bf16.msra.mxu0 %v659
  %940 = vmatpush.bf16.msra.mxu0 %v657
  %941 = vmatpush.bf16.msra.mxu0 %v655
  %942 = vmatpush.bf16.msra.mxu0 %v653
  %943 = vmatpush.bf16.msra.mxu0 %v651
  %944 = vmatpush.bf16.msra.mxu0 %v649
  %945 = vmatmul.bf16.gmra.mxu0 %v199
  %v946 = vpop.f32.mrf.mxu0
  %v947 = vadd.f32 0.0, %v946
  %v948 = vpop.f32.mrf.mxu0
  %v949 = vadd.f32 0.0, %v948
  %950 = vdwg.mxu0
  %951 = vmatpush.bf16.msra.mxu0 %v679
  %952 = vmatpush.bf16.msra.mxu0 %v677
  %953 = vmatpush.bf16.msra.mxu0 %v675
  %954 = vmatpush.bf16.msra.mxu0 %v673
  %955 = vmatpush.bf16.msra.mxu0 %v671
  %956 = vmatpush.bf16.msra.mxu0 %v669
  %957 = vmatpush.bf16.msra.mxu0 %v667
  %958 = vmatpush.bf16.msra.mxu0 %v665
  %959 = vmatmul.bf16.gmra.mxu0 %v200
  %v960 = vpop.f32.mrf.mxu0
  %v961 = vadd.f32 %v947, %v960
  %v962 = vpop.f32.mrf.mxu0
  %v963 = vadd.f32 %v949, %v962
  %964 = vdwg.mxu0
  %965 = vmatpush.bf16.msra.mxu0 %v695
  %966 = vmatpush.bf16.msra.mxu0 %v693
  %967 = vmatpush.bf16.msra.mxu0 %v691
  %968 = vmatpush.bf16.msra.mxu0 %v689
  %969 = vmatpush.bf16.msra.mxu0 %v687
  %970 = vmatpush.bf16.msra.mxu0 %v685
  %971 = vmatpush.bf16.msra.mxu0 %v683
  %972 = vmatpush.bf16.msra.mxu0 %v681
  %973 = vmatmul.bf16.gmra.mxu0 %v201
  %v974 = vpop.f32.mrf.mxu0
  %v975 = vadd.f32 %v961, %v974
  %v976 = vpop.f32.mrf.mxu0
  %v977 = vadd.f32 %v963, %v976
  %978 = vdwg.mxu0
  %979 = vmatpush.bf16.msra.mxu0 %v711
  %980 = vmatpush.bf16.msra.mxu0 %v709
  %981 = vmatpush.bf16.msra.mxu0 %v707
  %982 = vmatpush.bf16.msra.mxu0 %v705
  %983 = vmatpush.bf16.msra.mxu0 %v703
  %984 = vmatpush.bf16.msra.mxu0 %v701
  %985 = vmatpush.bf16.msra.mxu0 %v699
  %986 = vmatpush.bf16.msra.mxu0 %v697
  %987 = vmatmul.bf16.gmra.mxu0 %v202
  %v988 = vpop.f32.mrf.mxu0
  %v989 = vadd.f32 %v975, %v988
  %v990 = vpop.f32.mrf.mxu0
  %v991 = vadd.f32 %v977, %v990
  %992 = vdwg.mxu0
  %993 = vmatpush.bf16.msra.mxu0 %v727
  %994 = vmatpush.bf16.msra.mxu0 %v725
  %995 = vmatpush.bf16.msra.mxu0 %v723
  %996 = vmatpush.bf16.msra.mxu0 %v721
  %997 = vmatpush.bf16.msra.mxu0 %v719
  %998 = vmatpush.bf16.msra.mxu0 %v717
  %999 = vmatpush.bf16.msra.mxu0 %v715
  %1000 = vmatpush.bf16.msra.mxu0 %v713
  %1001 = vmatmul.bf16.gmra.mxu0 %v203
  %v1002 = vpop.f32.mrf.mxu0
  %v1003 = vadd.f32 %v989, %v1002
  %v1004 = vpop.f32.mrf.mxu0
  %v1005 = vadd.f32 %v991, %v1004
  %1006 = vdwg.mxu0
  %1007 = vmatpush.bf16.msra.mxu0 %v743
  %1008 = vmatpush.bf16.msra.mxu0 %v741
  %1009 = vmatpush.bf16.msra.mxu0 %v739
  %1010 = vmatpush.bf16.msra.mxu0 %v737
  %1011 = vmatpush.bf16.msra.mxu0 %v735
  %1012 = vmatpush.bf16.msra.mxu0 %v733
  %1013 = vmatpush.bf16.msra.mxu0 %v731
  %1014 = vmatpush.bf16.msra.mxu0 %v729
  %1015 = vmatmul.bf16.gmra.mxu0 %v204
  %v1016 = vpop.f32.mrf.mxu0
  %v1017 = vadd.f32 %v1003, %v1016
  %v1018 = vpop.f32.mrf.mxu0
  %v1019 = vadd.f32 %v1005, %v1018
  %1020 = vdwg.mxu0
  %1021 = vmatpush.bf16.msra.mxu0 %v759
  %1022 = vmatpush.bf16.msra.mxu0 %v757
  %1023 = vmatpush.bf16.msra.mxu0 %v755
  %1024 = vmatpush.bf16.msra.mxu0 %v753
  %1025 = vmatpush.bf16.msra.mxu0 %v751
  %1026 = vmatpush.bf16.msra.mxu0 %v749
  %1027 = vmatpush.bf16.msra.mxu0 %v747
  %1028 = vmatpush.bf16.msra.mxu0 %v745
  %1029 = vmatmul.bf16.gmra.mxu0 %v205
  %v1030 = vpop.f32.mrf.mxu0
  %v1031 = vadd.f32 %v1017, %v1030
  %v1032 = vpop.f32.mrf.mxu0
  %v1033 = vadd.f32 %v1019, %v1032
  %1034 = vdwg.mxu0
  %1035 = vmatpush.bf16.msra.mxu0 %v775
  %1036 = vmatpush.bf16.msra.mxu0 %v773
  %1037 = vmatpush.bf16.msra.mxu0 %v771
  %1038 = vmatpush.bf16.msra.mxu0 %v769
  %1039 = vmatpush.bf16.msra.mxu0 %v767
  %1040 = vmatpush.bf16.msra.mxu0 %v765
  %1041 = vmatpush.bf16.msra.mxu0 %v763
  %1042 = vmatpush.bf16.msra.mxu0 %v761
  %1043 = vmatmul.bf16.gmra.mxu0 %v206
  %v1044 = vpop.f32.mrf.mxu0
  %v1045 = vadd.f32 %v1031, %v1044
  %v1046 = vpop.f32.mrf.mxu0
  %v1047 = vadd.f32 %v1033, %v1046
  %1048 = vdwg.mxu0
  %1049 = vmatpush.bf16.msra.mxu0 %v791
  %1050 = vmatpush.bf16.msra.mxu0 %v789
  %1051 = vmatpush.bf16.msra.mxu0 %v787
  %1052 = vmatpush.bf16.msra.mxu0 %v785
  %1053 = vmatpush.bf16.msra.mxu0 %v783
  %1054 = vmatpush.bf16.msra.mxu0 %v781
  %1055 = vmatpush.bf16.msra.mxu0 %v779
  %1056 = vmatpush.bf16.msra.mxu0 %v777
  %1057 = vmatmul.bf16.gmra.mxu0 %v207
  %v1058 = vpop.f32.mrf.mxu0
  %v1059 = vadd.f32 %v1045, %v1058
  %v1060 = vpop.f32.mrf.mxu0
  %v1061 = vadd.f32 %v1047, %v1060
  %1062 = vdwg.mxu0
  %1063 = vmatpush.bf16.msra.mxu0 %v664
  %1064 = vmatpush.bf16.msra.mxu0 %v662
  %1065 = vmatpush.bf16.msra.mxu0 %v660
  %1066 = vmatpush.bf16.msra.mxu0 %v658
  %1067 = vmatpush.bf16.msra.mxu0 %v656
  %1068 = vmatpush.bf16.msra.mxu0 %v654
  %1069 = vmatpush.bf16.msra.mxu0 %v652
  %1070 = vmatpush.bf16.msra.mxu0 %v650
  %1071 = vmatmul.bf16.gmra.mxu0 %v199
  %v1072 = vpop.f32.mrf.mxu0
  %v1073 = vadd.f32 0.0, %v1072
  %v1074 = vpop.f32.mrf.mxu0
  %v1075 = vadd.f32 0.0, %v1074
  %1076 = vdwg.mxu0
  %1077 = vmatpush.bf16.msra.mxu0 %v680
  %1078 = vmatpush.bf16.msra.mxu0 %v678
  %1079 = vmatpush.bf16.msra.mxu0 %v676
  %1080 = vmatpush.bf16.msra.mxu0 %v674
  %1081 = vmatpush.bf16.msra.mxu0 %v672
  %1082 = vmatpush.bf16.msra.mxu0 %v670
  %1083 = vmatpush.bf16.msra.mxu0 %v668
  %1084 = vmatpush.bf16.msra.mxu0 %v666
  %1085 = vmatmul.bf16.gmra.mxu0 %v200
  %v1086 = vpop.f32.mrf.mxu0
  %v1087 = vadd.f32 %v1073, %v1086
  %v1088 = vpop.f32.mrf.mxu0
  %v1089 = vadd.f32 %v1075, %v1088
  %1090 = vdwg.mxu0
  %1091 = vmatpush.bf16.msra.mxu0 %v696
  %1092 = vmatpush.bf16.msra.mxu0 %v694
  %1093 = vmatpush.bf16.msra.mxu0 %v692
  %1094 = vmatpush.bf16.msra.mxu0 %v690
  %1095 = vmatpush.bf16.msra.mxu0 %v688
  %1096 = vmatpush.bf16.msra.mxu0 %v686
  %1097 = vmatpush.bf16.msra.mxu0 %v684
  %1098 = vmatpush.bf16.msra.mxu0 %v682
  %1099 = vmatmul.bf16.gmra.mxu0 %v201
  %v1100 = vpop.f32.mrf.mxu0
  %v1101 = vadd.f32 %v1087, %v1100
  %v1102 = vpop.f32.mrf.mxu0
  %v1103 = vadd.f32 %v1089, %v1102
  %1104 = vdwg.mxu0
  %1105 = vmatpush.bf16.msra.mxu0 %v712
  %1106 = vmatpush.bf16.msra.mxu0 %v710
  %1107 = vmatpush.bf16.msra.mxu0 %v708
  %1108 = vmatpush.bf16.msra.mxu0 %v706
  %1109 = vmatpush.bf16.msra.mxu0 %v704
  %1110 = vmatpush.bf16.msra.mxu0 %v702
  %1111 = vmatpush.bf16.msra.mxu0 %v700
  %1112 = vmatpush.bf16.msra.mxu0 %v698
  %1113 = vmatmul.bf16.gmra.mxu0 %v202
  %v1114 = vpop.f32.mrf.mxu0
  %v1115 = vadd.f32 %v1101, %v1114
  %v1116 = vpop.f32.mrf.mxu0
  %v1117 = vadd.f32 %v1103, %v1116
  %1118 = vdwg.mxu0
  %1119 = vmatpush.bf16.msra.mxu0 %v728
  %1120 = vmatpush.bf16.msra.mxu0 %v726
  %1121 = vmatpush.bf16.msra.mxu0 %v724
  %1122 = vmatpush.bf16.msra.mxu0 %v722
  %1123 = vmatpush.bf16.msra.mxu0 %v720
  %1124 = vmatpush.bf16.msra.mxu0 %v718
  %1125 = vmatpush.bf16.msra.mxu0 %v716
  %1126 = vmatpush.bf16.msra.mxu0 %v714
  %1127 = vmatmul.bf16.gmra.mxu0 %v203
  %v1128 = vpop.f32.mrf.mxu0
  %v1129 = vadd.f32 %v1115, %v1128
  %v1130 = vpop.f32.mrf.mxu0
  %v1131 = vadd.f32 %v1117, %v1130
  %1132 = vdwg.mxu0
  %1133 = vmatpush.bf16.msra.mxu0 %v744
  %1134 = vmatpush.bf16.msra.mxu0 %v742
  %1135 = vmatpush.bf16.msra.mxu0 %v740
  %1136 = vmatpush.bf16.msra.mxu0 %v738
  %1137 = vmatpush.bf16.msra.mxu0 %v736
  %1138 = vmatpush.bf16.msra.mxu0 %v734
  %1139 = vmatpush.bf16.msra.mxu0 %v732
  %1140 = vmatpush.bf16.msra.mxu0 %v730
  %1141 = vmatmul.bf16.gmra.mxu0 %v204
  %v1142 = vpop.f32.mrf.mxu0
  %v1143 = vadd.f32 %v1129, %v1142
  %v1144 = vpop.f32.mrf.mxu0
  %v1145 = vadd.f32 %v1131, %v1144
  %1146 = vdwg.mxu0
  %1147 = vmatpush.bf16.msra.mxu0 %v760
  %1148 = vmatpush.bf16.msra.mxu0 %v758
  %1149 = vmatpush.bf16.msra.mxu0 %v756
  %1150 = vmatpush.bf16.msra.mxu0 %v754
  %1151 = vmatpush.bf16.msra.mxu0 %v752
  %1152 = vmatpush.bf16.msra.mxu0 %v750
  %1153 = vmatpush.bf16.msra.mxu0 %v748
  %1154 = vmatpush.bf16.msra.mxu0 %v746
  %1155 = vmatmul.bf16.gmra.mxu0 %v205
  %v1156 = vpop.f32.mrf.mxu0
  %v1157 = vadd.f32 %v1143, %v1156
  %v1158 = vpop.f32.mrf.mxu0
  %v1159 = vadd.f32 %v1145, %v1158
  %1160 = vdwg.mxu0
  %1161 = vmatpush.bf16.msra.mxu0 %v776
  %1162 = vmatpush.bf16.msra.mxu0 %v774
  %1163 = vmatpush.bf16.msra.mxu0 %v772
  %1164 = vmatpush.bf16.msra.mxu0 %v770
  %1165 = vmatpush.bf16.msra.mxu0 %v768
  %1166 = vmatpush.bf16.msra.mxu0 %v766
  %1167 = vmatpush.bf16.msra.mxu0 %v764
  %1168 = vmatpush.bf16.msra.mxu0 %v762
  %1169 = vmatmul.bf16.gmra.mxu0 %v206
  %v1170 = vpop.f32.mrf.mxu0
  %v1171 = vadd.f32 %v1157, %v1170
  %v1172 = vpop.f32.mrf.mxu0
  %v1173 = vadd.f32 %v1159, %v1172
  %1174 = vdwg.mxu0
  %1175 = vmatpush.bf16.msra.mxu0 %v792
  %1176 = vmatpush.bf16.msra.mxu0 %v790
  %1177 = vmatpush.bf16.msra.mxu0 %v788
  %1178 = vmatpush.bf16.msra.mxu0 %v786
  %1179 = vmatpush.bf16.msra.mxu0 %v784
  %1180 = vmatpush.bf16.msra.mxu0 %v782
  %1181 = vmatpush.bf16.msra.mxu0 %v780
  %1182 = vmatpush.bf16.msra.mxu0 %v778
  %1183 = vmatmul.bf16.gmra.mxu0 %v207
  %v1184 = vpop.f32.mrf.mxu0
  %v1185 = vadd.f32 %v1171, %v1184
  %v1186 = vpop.f32.mrf.mxu0
  %v1187 = vadd.f32 %v1173, %v1186
  %1188 = vdwg.mxu0
  %v1189 = vld [vmem:[%s2] sm:$0x3]
  %v1190 = vld [vmem:[%s3] sm:$0x3]
  %v1191 = vadd.f32 %v1059, %v1061
  %v1192 = vrot.slane %v1191, 4
  %v1193 = vadd.f32 %v1191, %v1192
  %v1194 = vrot.slane %v1193, 2
  %v1195 = vadd.f32 %v1193, %v1194
  %v1196 = vrot.slane %v1195, 1
  %v1197 = vadd.f32 %v1195, %v1196
  %v1198 = vadd.f32 %v1185, %v1187
  %v1199 = vrot.slane %v1198, 4
  %v1200 = vadd.f32 %v1198, %v1199
  %v1201 = vrot.slane %v1200, 2
  %v1202 = vadd.f32 %v1200, %v1201
  %v1203 = vrot.slane %v1202, 1
  %v1204 = vadd.f32 %v1202, %v1203
  %v1205 = vmul.f32 %v1059, %v1059
  %v1206 = vmul.f32 %v1185, %v1185
  %v1207 = vmul.f32 %v1061, %v1061
  %v1208 = vmul.f32 %v1187, %v1187
  %v1209 = vadd.f32 %v1205, %v1207
  %v1210 = vrot.slane %v1209, 4
  %v1211 = vadd.f32 %v1209, %v1210
  %v1212 = vrot.slane %v1211, 2
  %v1213 = vadd.f32 %v1211, %v1212
  %v1214 = vrot.slane %v1213, 1
  %v1215 = vadd.f32 %v1213, %v1214
  %v1216 = vadd.f32 %v1206, %v1208
  %v1217 = vrot.slane %v1216, 4
  %v1218 = vadd.f32 %v1216, %v1217
  %v1219 = vrot.slane %v1218, 2
  %v1220 = vadd.f32 %v1218, %v1219
  %v1221 = vrot.slane %v1220, 1
  %v1222 = vadd.f32 %v1220, %v1221
  %v1223 = vmul.f32 %v1197, 0.125
  %v1224 = vmul.f32 %v1204, 0.125
  %v1225 = vmul.f32 %v1215, 0.125
  %v1226 = vmul.f32 %v1222, 0.125
  %v1227 = vmul.f32 %v1223, %v1223
  %v1228 = vmul.f32 %v1224, %v1224
  %v1229 = vsub.f32 %v1225, %v1227
  %v1230 = vsub.f32 %v1226, %v1228
  %v1231 = vmax.f32 %v1229, 0.0
  %v1232 = vmax.f32 %v1230, 0.0
  %v1233 = vsub.f32 %v1059, %v1223
  %v1234 = vsub.f32 %v1185, %v1224
  %v1235 = vsub.f32 %v1061, %v1223
  %v1236 = vsub.f32 %v1187, %v1224
  %v1237 = vadd.f32 %v1231, 1e-05
  %v1238 = vadd.f32 %v1232, 1e-05
  %v1239 = vrsqrt.pop %v1237
  %v1240 = vmul.f32 %v1239, %v1237
  %v1241 = vmul.f32 %v1240, %v1239
  %v1242 = vmul.f32 0.5, %v1241
  %v1243 = vsub.f32 1.5, %v1242
  %v1244 = vmul.f32 %v1239, %v1243
  %vm1245 = vweird.f32 %v1237
  %vm1246 = vweird.f32 %v1239
  %vm1247 = vmor %vm1245, %vm1246
  %v1248 = vsel %vm1247, %v1239, %v1244
  %v1249 = vrsqrt.pop %v1238
  %v1250 = vmul.f32 %v1249, %v1238
  %v1251 = vmul.f32 %v1250, %v1249
  %v1252 = vmul.f32 0.5, %v1251
  %v1253 = vsub.f32 1.5, %v1252
  %v1254 = vmul.f32 %v1249, %v1253
  %vm1255 = vweird.f32 %v1238
  %vm1256 = vweird.f32 %v1249
  %vm1257 = vmor %vm1255, %vm1256
  %v1258 = vsel %vm1257, %v1249, %v1254
  %v1259 = vmul.f32 %v1233, %v1248
  %v1260 = vmul.f32 %v1234, %v1258
  %v1261 = vmul.f32 %v1235, %v1248
  %v1262 = vmul.f32 %v1236, %v1258
  %v1264 = vperm.slane %v1189, 0
  %v1265 = vperm.slane %v1189, 1
  %v1268 = vmul.f32 %v1264, %v1259
  %v1269 = vmul.f32 %v1265, %v1260
  %v1270 = vmul.f32 %v1264, %v1261
  %v1271 = vmul.f32 %v1265, %v1262
  %v1273 = vperm.slane %v1190, 0
  %v1274 = vperm.slane %v1190, 1
  %v1277 = vadd.f32 %v1268, %v1273
  %v1278 = vadd.f32 %v1269, %v1274
  %v1279 = vadd.f32 %v1270, %v1273
  %v1280 = vadd.f32 %v1271, %v1274
  %vm1281 = vcmp.gt.f32.partialorder %v1277, 0.0
  %vm1282 = vcmp.gt.f32.partialorder %v1278, 0.0
  %vm1283 = vcmp.gt.f32.partialorder %v1279, 0.0
  %vm1284 = vcmp.gt.f32.partialorder %v1280, 0.0
  %v1285 = vmul.f32 %v1277, 0.2
  %v1286 = vmul.f32 %v1278, 0.2
  %v1287 = vmul.f32 %v1279, 0.2
  %v1288 = vmul.f32 %v1280, 0.2
  %v1289 = vsel %vm1281, %v1277, %v1285
  %v1290 = vsel %vm1282, %v1278, %v1286
  %v1291 = vsel %vm1283, %v1279, %v1287
  %v1292 = vsel %vm1284, %v1280, %v1288
  %1293 = vst [vmem:[%s4] sm:$0xff] %v1289
  %1294 = vst [vmem:[%s4 + $0x8] sm:$0xff] %v1290
  %1295 = vst [vmem:[%s4 + $0x10] sm:$0xff] %v1291
  %1296 = vst [vmem:[%s4 + $0x18] sm:$0xff] %v1292
  // Predicated region
  $region18: #{cnn_encoder_forward.10} parent=0 // pred_check
    _
  $region19: #{cnn_encoder_forward.10} parent=0 // pred_check_branch
    %1298 = sbr.rel (0) target = $region21
  $region20: #{cnn_encoder_forward.10} parent=0 // pred_region
    _
  $region21: #{cnn_encoder_forward.10} parent=0 // pred_fallthru
    _
  // Predicated region
  $region22: #{cnn_encoder_forward.10} parent=0 // pred_check
    _
  $region23: #{cnn_encoder_forward.10} parent=0 // pred_check_branch
    %1300 = sbr.rel (0) target = $region25
  $region24: #{cnn_encoder_forward.10} parent=0 // pred_region
    _
  $region25: #{cnn_encoder_forward.10} parent=0 // pred_fallthru
    _

// kernel: cnn_encoder_forward.11
$region0: #{cnn_encoder_forward.11}
  #allocation0 [shape = 'u32[]', space=smem, size = 0x4, offset = 0x4, fixed_abs, tag = 'smem constant byte address 0x4 - core index']
  #allocation1 [shape = 'u32[72,128]{1,0:T(1,128)}', space=vmem, size = 0x9000, scoped, tag = 'internal scratch']
  %s0 = inlined_call_operand.vmem [shape: bf16[16,1024], index: 0, kind: input, shape index: {}]
  %s1 = inlined_call_operand.vmem [shape: bf16[1024,1024], index: 1, kind: input, shape index: {}]
  %s2 = inlined_call_operand.vmem [shape: f32[1,1024], index: 2, kind: input, shape index: {}]
  %s3 = inlined_call_operand.vmem [shape: f32[1,1024], index: 3, kind: input, shape index: {}]
  %s4 = inlined_call_operand.vmem [shape: bf16[1024,128], index: 4, kind: input, shape index: {}]
  %s5 = inlined_call_operand.vmem [shape: f32[1,128], index: 5, kind: input, shape index: {}]
  %s6 = inlined_call_operand.vmem [shape: f32[16,128], index: 6, kind: output, shape index: {}]
  %s7 = sld [smem:[#allocation0]]
  $region34: #{cnn_encoder_forward.11} parent=0
    _
  %s9 = ssub.s32 1, %s7
  %s10 = scalar_select 0, %s9, %s7
  // Predicated region
  $region2: #{cnn_encoder_forward.11} parent=0 // pred_check
    _
  $region3: #{cnn_encoder_forward.11} parent=0 // pred_check_branch
    %12 = sbr.rel (0) target = $region5
  $region4: #{cnn_encoder_forward.11} parent=0 // pred_region
    _
  $region5: #{cnn_encoder_forward.11} parent=0 // pred_fallthru
    _
  // Predicated region
  $region6: #{cnn_encoder_forward.11} parent=0 // pred_check
    _
  $region7: #{cnn_encoder_forward.11} parent=0 // pred_check_branch
    %14 = sbr.rel (0) target = $region9
  $region8: #{cnn_encoder_forward.11} parent=0 // pred_region
    _
  $region9: #{cnn_encoder_forward.11} parent=0 // pred_fallthru
    _
  // Predicated region
  $region10: #{cnn_encoder_forward.11} parent=0 // pred_check
    _
  $region11: #{cnn_encoder_forward.11} parent=0 // pred_check_branch
    %16 = sbr.rel (0) target = $region13
  $region12: #{cnn_encoder_forward.11} parent=0 // pred_region
    _
  $region13: #{cnn_encoder_forward.11} parent=0 // pred_fallthru
    _
  // Predicated region
  $region14: #{cnn_encoder_forward.11} parent=0 // pred_check
    _
  $region15: #{cnn_encoder_forward.11} parent=0 // pred_check_branch
    %18 = sbr.rel (0) target = $region17
  $region16: #{cnn_encoder_forward.11} parent=0 // pred_region
    _
  $region17: #{cnn_encoder_forward.11} parent=0 // pred_fallthru
    _
  // Predicated region
  $region18: #{cnn_encoder_forward.11} parent=0 // pred_check
    _
  $region19: #{cnn_encoder_forward.11} parent=0 // pred_check_branch
    %20 = sbr.rel (0) target = $region21
  $region20: #{cnn_encoder_forward.11} parent=0 // pred_region
    _
  $region21: #{cnn_encoder_forward.11} parent=0 // pred_fallthru
    _
  // Predicated region
  $region22: #{cnn_encoder_forward.11} parent=0 // pred_check
    _
  $region23: #{cnn_encoder_forward.11} parent=0 // pred_check_branch
    %22 = sbr.rel (0) target = $region25
  $region24: #{cnn_encoder_forward.11} parent=0 // pred_region
    _
  $region25: #{cnn_encoder_forward.11} parent=0 // pred_fallthru
    _
  %v23 = vld [vmem:[%s0] sm:$0xff]
  %v24 = vld [vmem:[%s0 + $0x8] sm:$0xff]
  %v25 = vld [vmem:[%s0 + $0x10] sm:$0xff]
  %v26 = vld [vmem:[%s0 + $0x18] sm:$0xff]
  %v27 = vld [vmem:[%s0 + $0x20] sm:$0xff]
  %v28 = vld [vmem:[%s0 + $0x28] sm:$0xff]
  %v29 = vld [vmem:[%s0 + $0x30] sm:$0xff]
  %v30 = vld [vmem:[%s0 + $0x38] sm:$0xff]
  %v31 = vld [vmem:[%s1] sm:$0xff]
  %v32 = vld [vmem:[%s1 + $0x8] sm:$0xff]
  %v33 = vld [vmem:[%s1 + $0x10] sm:$0xff]
  %v34 = vld [vmem:[%s1 + $0x18] sm:$0xff]
  %v35 = vld [vmem:[%s1 + $0x20] sm:$0xff]
  %v36 = vld [vmem:[%s1 + $0x28] sm:$0xff]
  %v37 = vld [vmem:[%s1 + $0x30] sm:$0xff]
  %v38 = vld [vmem:[%s1 + $0x38] sm:$0xff]
  %v39 = vld [vmem:[%s1 + $0x40] sm:$0xff]
  %v40 = vld [vmem:[%s1 + $0x48] sm:$0xff]
  %v41 = vld [vmem:[%s1 + $0x50] sm:$0xff]
  %v42 = vld [vmem:[%s1 + $0x58] sm:$0xff]
  %v43 = vld [vmem:[%s1 + $0x60] sm:$0xff]
  %v44 = vld [vmem:[%s1 + $0x68] sm:$0xff]
  %v45 = vld [vmem:[%s1 + $0x70] sm:$0xff]
  %v46 = vld [vmem:[%s1 + $0x78] sm:$0xff]
  %v47 = vld [vmem:[%s1 + $0x80] sm:$0xff]
  %v48 = vld [vmem:[%s1 + $0x88] sm:$0xff]
  %v49 = vld [vmem:[%s1 + $0x90] sm:$0xff]
  %v50 = vld [vmem:[%s1 + $0x98] sm:$0xff]
  %v51 = vld [vmem:[%s1 + $0xa0] sm:$0xff]
  %v52 = vld [vmem:[%s1 + $0xa8] sm:$0xff]
  %v53 = vld [vmem:[%s1 + $0xb0] sm:$0xff]
  %v54 = vld [vmem:[%s1 + $0xb8] sm:$0xff]
  %v55 = vld [vmem:[%s1 + $0xc0] sm:$0xff]
  %v56 = vld [vmem:[%s1 + $0xc8] sm:$0xff]
  %v57 = vld [vmem:[%s1 + $0xd0] sm:$0xff]
  %v58 = vld [vmem:[%s1 + $0xd8] sm:$0xff]
  %v59 = vld [vmem:[%s1 + $0xe0] sm:$0xff]
  %v60 = vld [vmem:[%s1 + $0xe8] sm:$0xff]
  %v61 = vld [vmem:[%s1 + $0xf0] sm:$0xff]
  %v62 = vld [vmem:[%s1 + $0xf8] sm:$0xff]
  %v63 = vld [vmem:[%s1 + $0x100] sm:$0xff]
  %v64 = vld [vmem:[%s1 + $0x108] sm:$0xff]
  %v65 = vld [vmem:[%s1 + $0x110] sm:$0xff]
  %v66 = vld [vmem:[%s1 + $0x118] sm:$0xff]
  %v67 = vld [vmem:[%s1 + $0x120] sm:$0xff]
  %v68 = vld [vmem:[%s1 + $0x128] sm:$0xff]
  %v69 = vld [vmem:[%s1 + $0x130] sm:$0xff]
  %v70 = vld [vmem:[%s1 + $0x138] sm:$0xff]
  %v71 = vld [vmem:[%s1 + $0x140] sm:$0xff]
  %v72 = vld [vmem:[%s1 + $0x148] sm:$0xff]
  %v73 = vld [vmem:[%s1 + $0x150] sm:$0xff]
  %v74 = vld [vmem:[%s1 + $0x158] sm:$0xff]
  %v75 = vld [vmem:[%s1 + $0x160] sm:$0xff]
  %v76 = vld [vmem:[%s1 + $0x168] sm:$0xff]
  %v77 = vld [vmem:[%s1 + $0x170] sm:$0xff]
  %v78 = vld [vmem:[%s1 + $0x178] sm:$0xff]
  %v79 = vld [vmem:[%s1 + $0x180] sm:$0xff]
  %v80 = vld [vmem:[%s1 + $0x188] sm:$0xff]
  %v81 = vld [vmem:[%s1 + $0x190] sm:$0xff]
  %v82 = vld [vmem:[%s1 + $0x198] sm:$0xff]
  %v83 = vld [vmem:[%s1 + $0x1a0] sm:$0xff]
  %v84 = vld [vmem:[%s1 + $0x1a8] sm:$0xff]
  %v85 = vld [vmem:[%s1 + $0x1b0] sm:$0xff]
  %v86 = vld [vmem:[%s1 + $0x1b8] sm:$0xff]
  %v87 = vld [vmem:[%s1 + $0x1c0] sm:$0xff]
  %v88 = vld [vmem:[%s1 + $0x1c8] sm:$0xff]
  %v89 = vld [vmem:[%s1 + $0x1d0] sm:$0xff]
  %v90 = vld [vmem:[%s1 + $0x1d8] sm:$0xff]
  %v91 = vld [vmem:[%s1 + $0x1e0] sm:$0xff]
  %v92 = vld [vmem:[%s1 + $0x1e8] sm:$0xff]
  %v93 = vld [vmem:[%s1 + $0x1f0] sm:$0xff]
  %v94 = vld [vmem:[%s1 + $0x1f8] sm:$0xff]
  %v95 = vld [vmem:[%s1 + $0x200] sm:$0xff]
  %v96 = vld [vmem:[%s1 + $0x208] sm:$0xff]
  %v97 = vld [vmem:[%s1 + $0x210] sm:$0xff]
  %v98 = vld [vmem:[%s1 + $0x218] sm:$0xff]
  %v99 = vld [vmem:[%s1 + $0x220] sm:$0xff]
  %v100 = vld [vmem:[%s1 + $0x228] sm:$0xff]
  %v101 = vld [vmem:[%s1 + $0x230] sm:$0xff]
  %v102 = vld [vmem:[%s1 + $0x238] sm:$0xff]
  %v103 = vld [vmem:[%s1 + $0x240] sm:$0xff]
  %v104 = vld [vmem:[%s1 + $0x248] sm:$0xff]
  %v105 = vld [vmem:[%s1 + $0x250] sm:$0xff]
  %v106 = vld [vmem:[%s1 + $0x258] sm:$0xff]
  %v107 = vld [vmem:[%s1 + $0x260] sm:$0xff]
  %v108 = vld [vmem:[%s1 + $0x268] sm:$0xff]
  %v109 = vld [vmem:[%s1 + $0x270] sm:$0xff]
  %v110 = vld [vmem:[%s1 + $0x278] sm:$0xff]
  %v111 = vld [vmem:[%s1 + $0x280] sm:$0xff]
  %v112 = vld [vmem:[%s1 + $0x288] sm:$0xff]
  %v113 = vld [vmem:[%s1 + $0x290] sm:$0xff]
  %v114 = vld [vmem:[%s1 + $0x298] sm:$0xff]
  %v115 = vld [vmem:[%s1 + $0x2a0] sm:$0xff]
  %v116 = vld [vmem:[%s1 + $0x2a8] sm:$0xff]
  %v117 = vld [vmem:[%s1 + $0x2b0] sm:$0xff]
  %v118 = vld [vmem:[%s1 + $0x2b8] sm:$0xff]
  %v119 = vld [vmem:[%s1 + $0x2c0] sm:$0xff]
  %v120 = vld [vmem:[%s1 + $0x2c8] sm:$0xff]
  %v121 = vld [vmem:[%s1 + $0x2d0] sm:$0xff]
  %v122 = vld [vmem:[%s1 + $0x2d8] sm:$0xff]
  %v123 = vld [vmem:[%s1 + $0x2e0] sm:$0xff]
  %v124 = vld [vmem:[%s1 + $0x2e8] sm:$0xff]
  %v125 = vld [vmem:[%s1 + $0x2f0] sm:$0xff]
  %v126 = vld [vmem:[%s1 + $0x2f8] sm:$0xff]
  %v127 = vld [vmem:[%s1 + $0x300] sm:$0xff]
  %v128 = vld [vmem:[%s1 + $0x308] sm:$0xff]
  %v129 = vld [vmem:[%s1 + $0x310] sm:$0xff]
  %v130 = vld [vmem:[%s1 + $0x318] sm:$0xff]
  %v131 = vld [vmem:[%s1 + $0x320] sm:$0xff]
  %v132 = vld [vmem:[%s1 + $0x328] sm:$0xff]
  %v133 = vld [vmem:[%s1 + $0x330] sm:$0xff]
  %v134 = vld [vmem:[%s1 + $0x338] sm:$0xff]
  %v135 = vld [vmem:[%s1 + $0x340] sm:$0xff]
  %v136 = vld [vmem:[%s1 + $0x348] sm:$0xff]
  %v137 = vld [vmem:[%s1 + $0x350] sm:$0xff]
  %v138 = vld [vmem:[%s1 + $0x358] sm:$0xff]
  %v139 = vld [vmem:[%s1 + $0x360] sm:$0xff]
  %v140 = vld [vmem:[%s1 + $0x368] sm:$0xff]
  %v141 = vld [vmem:[%s1 + $0x370] sm:$0xff]
  %v142 = vld [vmem:[%s1 + $0x378] sm:$0xff]
  %v143 = vld [vmem:[%s1 + $0x380] sm:$0xff]
  %v144 = vld [vmem:[%s1 + $0x388] sm:$0xff]
  %v145 = vld [vmem:[%s1 + $0x390] sm:$0xff]
  %v146 = vld [vmem:[%s1 + $0x398] sm:$0xff]
  %v147 = vld [vmem:[%s1 + $0x3a0] sm:$0xff]
  %v148 = vld [vmem:[%s1 + $0x3a8] sm:$0xff]
  %v149 = vld [vmem:[%s1 + $0x3b0] sm:$0xff]
  %v150 = vld [vmem:[%s1 + $0x3b8] sm:$0xff]
  %v151 = vld [vmem:[%s1 + $0x3c0] sm:$0xff]
  %v152 = vld [vmem:[%s1 + $0x3c8] sm:$0xff]
  %v153 = vld [vmem:[%s1 + $0x3d0] sm:$0xff]
  %v154 = vld [vmem:[%s1 + $0x3d8] sm:$0xff]
  %v155 = vld [vmem:[%s1 + $0x3e0] sm:$0xff]
  %v156 = vld [vmem:[%s1 + $0x3e8] sm:$0xff]
  %v157 = vld [vmem:[%s1 + $0x3f0] sm:$0xff]
  %v158 = vld [vmem:[%s1 + $0x3f8] sm:$0xff]
  %v159 = vld [vmem:[%s1 + $0x400] sm:$0xff]
  %v160 = vld [vmem:[%s1 + $0x408] sm:$0xff]
  %v161 = vld [vmem:[%s1 + $0x410] sm:$0xff]
  %v162 = vld [vmem:[%s1 + $0x418] sm:$0xff]
  %v163 = vld [vmem:[%s1 + $0x420] sm:$0xff]
  %v164 = vld [vmem:[%s1 + $0x428] sm:$0xff]
  %v165 = vld [vmem:[%s1 + $0x430] sm:$0xff]
  %v166 = vld [vmem:[%s1 + $0x438] sm:$0xff]
  %v167 = vld [vmem:[%s1 + $0x440] sm:$0xff]
  %v168 = vld [vmem:[%s1 + $0x448] sm:$0xff]
  %v169 = vld [vmem:[%s1 + $0x450] sm:$0xff]
  %v170 = vld [vmem:[%s1 + $0x458] sm:$0xff]
  %v171 = vld [vmem:[%s1 + $0x460] sm:$0xff]
  %v172 = vld [vmem:[%s1 + $0x468] sm:$0xff]
  %v173 = vld [vmem:[%s1 + $0x470] sm:$0xff]
  %v174 = vld [vmem:[%s1 + $0x478] sm:$0xff]
  %v175 = vld [vmem:[%s1 + $0x480] sm:$0xff]
  %v176 = vld [vmem:[%s1 + $0x488] sm:$0xff]
  %v177 = vld [vmem:[%s1 + $0x490] sm:$0xff]
  %v178 = vld [vmem:[%s1 + $0x498] sm:$0xff]
  %v179 = vld [vmem:[%s1 + $0x4a0] sm:$0xff]
  %v180 = vld [vmem:[%s1 + $0x4a8] sm:$0xff]
  %v181 = vld [vmem:[%s1 + $0x4b0] sm:$0xff]
  %v182 = vld [vmem:[%s1 + $0x4b8] sm:$0xff]
  %v183 = vld [vmem:[%s1 + $0x4c0] sm:$0xff]
  %v184 = vld [vmem:[%s1 + $0x4c8] sm:$0xff]
  %v185 = vld [vmem:[%s1 + $0x4d0] sm:$0xff]
  %v186 = vld [vmem:[%s1 + $0x4d8] sm:$0xff]
  %v187 = vld [vmem:[%s1 + $0x4e0] sm:$0xff]
  %v188 = vld [vmem:[%s1 + $0x4e8] sm:$0xff]
  %v189 = vld [vmem:[%s1 + $0x4f0] sm:$0xff]
  %v190 = vld [vmem:[%s1 + $0x4f8] sm:$0xff]
  %v191 = vld [vmem:[%s1 + $0x500] sm:$0xff]
  %v192 = vld [vmem:[%s1 + $0x508] sm:$0xff]
  %v193 = vld [vmem:[%s1 + $0x510] sm:$0xff]
  %v194 = vld [vmem:[%s1 + $0x518] sm:$0xff]
  %v195 = vld [vmem:[%s1 + $0x520] sm:$0xff]
  %v196 = vld [vmem:[%s1 + $0x528] sm:$0xff]
  %v197 = vld [vmem:[%s1 + $0x530] sm:$0xff]
  %v198 = vld [vmem:[%s1 + $0x538] sm:$0xff]
  %v199 = vld [vmem:[%s1 + $0x540] sm:$0xff]
  %v200 = vld [vmem:[%s1 + $0x548] sm:$0xff]
  %v201 = vld [vmem:[%s1 + $0x550] sm:$0xff]
  %v202 = vld [vmem:[%s1 + $0x558] sm:$0xff]
  %v203 = vld [vmem:[%s1 + $0x560] sm:$0xff]
  %v204 = vld [vmem:[%s1 + $0x568] sm:$0xff]
  %v205 = vld [vmem:[%s1 + $0x570] sm:$0xff]
  %v206 = vld [vmem:[%s1 + $0x578] sm:$0xff]
  %v207 = vld [vmem:[%s1 + $0x580] sm:$0xff]
  %v208 = vld [vmem:[%s1 + $0x588] sm:$0xff]
  %v209 = vld [vmem:[%s1 + $0x590] sm:$0xff]
  %v210 = vld [vmem:[%s1 + $0x598] sm:$0xff]
  %v211 = vld [vmem:[%s1 + $0x5a0] sm:$0xff]
  %v212 = vld [vmem:[%s1 + $0x5a8] sm:$0xff]
  %v213 = vld [vmem:[%s1 + $0x5b0] sm:$0xff]
  %v214 = vld [vmem:[%s1 + $0x5b8] sm:$0xff]
  %v215 = vld [vmem:[%s1 + $0x5c0] sm:$0xff]
  %v216 = vld [vmem:[%s1 + $0x5c8] sm:$0xff]
  %v217 = vld [vmem:[%s1 + $0x5d0] sm:$0xff]
  %v218 = vld [vmem:[%s1 + $0x5d8] sm:$0xff]
  %v219 = vld [vmem:[%s1 + $0x5e0] sm:$0xff]
  %v220 = vld [vmem:[%s1 + $0x5e8] sm:$0xff]
  %v221 = vld [vmem:[%s1 + $0x5f0] sm:$0xff]
  %v222 = vld [vmem:[%s1 + $0x5f8] sm:$0xff]
  %v223 = vld [vmem:[%s1 + $0x600] sm:$0xff]
  %v224 = vld [vmem:[%s1 + $0x608] sm:$0xff]
  %v225 = vld [vmem:[%s1 + $0x610] sm:$0xff]
  %v226 = vld [vmem:[%s1 + $0x618] sm:$0xff]
  %v227 = vld [vmem:[%s1 + $0x620] sm:$0xff]
  %v228 = vld [vmem:[%s1 + $0x628] sm:$0xff]
  %v229 = vld [vmem:[%s1 + $0x630] sm:$0xff]
  %v230 = vld [vmem:[%s1 + $0x638] sm:$0xff]
  %v231 = vld [vmem:[%s1 + $0x640] sm:$0xff]
  %v232 = vld [vmem:[%s1 + $0x648] sm:$0xff]
  %v233 = vld [vmem:[%s1 + $0x650] sm:$0xff]
  %v234 = vld [vmem:[%s1 + $0x658] sm:$0xff]
  %v235 = vld [vmem:[%s1 + $0x660] sm:$0xff]
  %v236 = vld [vmem:[%s1 + $0x668] sm:$0xff]
  %v237 = vld [vmem:[%s1 + $0x670] sm:$0xff]
  %v238 = vld [vmem:[%s1 + $0x678] sm:$0xff]
  %v239 = vld [vmem:[%s1 + $0x680] sm:$0xff]
  %v240 = vld [vmem:[%s1 + $0x688] sm:$0xff]
  %v241 = vld [vmem:[%s1 + $0x690] sm:$0xff]
  %v242 = vld [vmem:[%s1 + $0x698] sm:$0xff]
  %v243 = vld [vmem:[%s1 + $0x6a0] sm:$0xff]
  %v244 = vld [vmem:[%s1 + $0x6a8] sm:$0xff]
  %v245 = vld [vmem:[%s1 + $0x6b0] sm:$0xff]
  %v246 = vld [vmem:[%s1 + $0x6b8] sm:$0xff]
  %v247 = vld [vmem:[%s1 + $0x6c0] sm:$0xff]
  %v248 = vld [vmem:[%s1 + $0x6c8] sm:$0xff]
  %v249 = vld [vmem:[%s1 + $0x6d0] sm:$0xff]
  %v250 = vld [vmem:[%s1 + $0x6d8] sm:$0xff]
  %v251 = vld [vmem:[%s1 + $0x6e0] sm:$0xff]
  %v252 = vld [vmem:[%s1 + $0x6e8] sm:$0xff]
  %v253 = vld [vmem:[%s1 + $0x6f0] sm:$0xff]
  %v254 = vld [vmem:[%s1 + $0x6f8] sm:$0xff]
  %v255 = vld [vmem:[%s1 + $0x700] sm:$0xff]
  %v256 = vld [vmem:[%s1 + $0x708] sm:$0xff]
  %v257 = vld [vmem:[%s1 + $0x710] sm:$0xff]
  %v258 = vld [vmem:[%s1 + $0x718] sm:$0xff]
  %v259 = vld [vmem:[%s1 + $0x720] sm:$0xff]
  %v260 = vld [vmem:[%s1 + $0x728] sm:$0xff]
  %v261 = vld [vmem:[%s1 + $0x730] sm:$0xff]
  %v262 = vld [vmem:[%s1 + $0x738] sm:$0xff]
  %v263 = vld [vmem:[%s1 + $0x740] sm:$0xff]
  %v264 = vld [vmem:[%s1 + $0x748] sm:$0xff]
  %v265 = vld [vmem:[%s1 + $0x750] sm:$0xff]
  %v266 = vld [vmem:[%s1 + $0x758] sm:$0xff]
  %v267 = vld [vmem:[%s1 + $0x760] sm:$0xff]
  %v268 = vld [vmem:[%s1 + $0x768] sm:$0xff]
  %v269 = vld [vmem:[%s1 + $0x770] sm:$0xff]
  %v270 = vld [vmem:[%s1 + $0x778] sm:$0xff]
  %v271 = vld [vmem:[%s1 + $0x780] sm:$0xff]
  %v272 = vld [vmem:[%s1 + $0x788] sm:$0xff]
  %v273 = vld [vmem:[%s1 + $0x790] sm:$0xff]
  %v274 = vld [vmem:[%s1 + $0x798] sm:$0xff]
  %v275 = vld [vmem:[%s1 + $0x7a0] sm:$0xff]
  %v276 = vld [vmem:[%s1 + $0x7a8] sm:$0xff]
  %v277 = vld [vmem:[%s1 + $0x7b0] sm:$0xff]
  %v278 = vld [vmem:[%s1 + $0x7b8] sm:$0xff]
  %v279 = vld [vmem:[%s1 + $0x7c0] sm:$0xff]
  %v280 = vld [vmem:[%s1 + $0x7c8] sm:$0xff]
  %v281 = vld [vmem:[%s1 + $0x7d0] sm:$0xff]
  %v282 = vld [vmem:[%s1 + $0x7d8] sm:$0xff]
  %v283 = vld [vmem:[%s1 + $0x7e0] sm:$0xff]
  %v284 = vld [vmem:[%s1 + $0x7e8] sm:$0xff]
  %v285 = vld [vmem:[%s1 + $0x7f0] sm:$0xff]
  %v286 = vld [vmem:[%s1 + $0x7f8] sm:$0xff]
  %v287 = vld [vmem:[%s1 + $0x800] sm:$0xff]
  %v288 = vld [vmem:[%s1 + $0x808] sm:$0xff]
  %v289 = vld [vmem:[%s1 + $0x810] sm:$0xff]
  %v290 = vld [vmem:[%s1 + $0x818] sm:$0xff]
  %v291 = vld [vmem:[%s1 + $0x820] sm:$0xff]
  %v292 = vld [vmem:[%s1 + $0x828] sm:$0xff]
  %v293 = vld [vmem:[%s1 + $0x830] sm:$0xff]
  %v294 = vld [vmem:[%s1 + $0x838] sm:$0xff]
  %v295 = vld [vmem:[%s1 + $0x840] sm:$0xff]
  %v296 = vld [vmem:[%s1 + $0x848] sm:$0xff]
  %v297 = vld [vmem:[%s1 + $0x850] sm:$0xff]
  %v298 = vld [vmem:[%s1 + $0x858] sm:$0xff]
  %v299 = vld [vmem:[%s1 + $0x860] sm:$0xff]
  %v300 = vld [vmem:[%s1 + $0x868] sm:$0xff]
  %v301 = vld [vmem:[%s1 + $0x870] sm:$0xff]
  %v302 = vld [vmem:[%s1 + $0x878] sm:$0xff]
  %v303 = vld [vmem:[%s1 + $0x880] sm:$0xff]
  %v304 = vld [vmem:[%s1 + $0x888] sm:$0xff]
  %v305 = vld [vmem:[%s1 + $0x890] sm:$0xff]
  %v306 = vld [vmem:[%s1 + $0x898] sm:$0xff]
  %v307 = vld [vmem:[%s1 + $0x8a0] sm:$0xff]
  %v308 = vld [vmem:[%s1 + $0x8a8] sm:$0xff]
  %v309 = vld [vmem:[%s1 + $0x8b0] sm:$0xff]
  %v310 = vld [vmem:[%s1 + $0x8b8] sm:$0xff]
  %v311 = vld [vmem:[%s1 + $0x8c0] sm:$0xff]
  %v312 = vld [vmem:[%s1 + $0x8c8] sm:$0xff]
  %v313 = vld [vmem:[%s1 + $0x8d0] sm:$0xff]
  %v314 = vld [vmem:[%s1 + $0x8d8] sm:$0xff]
  %v315 = vld [vmem:[%s1 + $0x8e0] sm:$0xff]
  %v316 = vld [vmem:[%s1 + $0x8e8] sm:$0xff]
  %v317 = vld [vmem:[%s1 + $0x8f0] sm:$0xff]
  %v318 = vld [vmem:[%s1 + $0x8f8] sm:$0xff]
  %v319 = vld [vmem:[%s1 + $0x900] sm:$0xff]
  %v320 = vld [vmem:[%s1 + $0x908] sm:$0xff]
  %v321 = vld [vmem:[%s1 + $0x910] sm:$0xff]
  %v322 = vld [vmem:[%s1 + $0x918] sm:$0xff]
  %v323 = vld [vmem:[%s1 + $0x920] sm:$0xff]
  %v324 = vld [vmem:[%s1 + $0x928] sm:$0xff]
  %v325 = vld [vmem:[%s1 + $0x930] sm:$0xff]
  %v326 = vld [vmem:[%s1 + $0x938] sm:$0xff]
  %v327 = vld [vmem:[%s1 + $0x940] sm:$0xff]
  %v328 = vld [vmem:[%s1 + $0x948] sm:$0xff]
  %v329 = vld [vmem:[%s1 + $0x950] sm:$0xff]
  %v330 = vld [vmem:[%s1 + $0x958] sm:$0xff]
  %v331 = vld [vmem:[%s1 + $0x960] sm:$0xff]
  %v332 = vld [vmem:[%s1 + $0x968] sm:$0xff]
  %v333 = vld [vmem:[%s1 + $0x970] sm:$0xff]
  %v334 = vld [vmem:[%s1 + $0x978] sm:$0xff]
  %v335 = vld [vmem:[%s1 + $0x980] sm:$0xff]
  %v336 = vld [vmem:[%s1 + $0x988] sm:$0xff]
  %v337 = vld [vmem:[%s1 + $0x990] sm:$0xff]
  %v338 = vld [vmem:[%s1 + $0x998] sm:$0xff]
  %v339 = vld [vmem:[%s1 + $0x9a0] sm:$0xff]
  %v340 = vld [vmem:[%s1 + $0x9a8] sm:$0xff]
  %v341 = vld [vmem:[%s1 + $0x9b0] sm:$0xff]
  %v342 = vld [vmem:[%s1 + $0x9b8] sm:$0xff]
  %v343 = vld [vmem:[%s1 + $0x9c0] sm:$0xff]
  %v344 = vld [vmem:[%s1 + $0x9c8] sm:$0xff]
  %v345 = vld [vmem:[%s1 + $0x9d0] sm:$0xff]
  %v346 = vld [vmem:[%s1 + $0x9d8] sm:$0xff]
  %v347 = vld [vmem:[%s1 + $0x9e0] sm:$0xff]
  %v348 = vld [vmem:[%s1 + $0x9e8] sm:$0xff]
  %v349 = vld [vmem:[%s1 + $0x9f0] sm:$0xff]
  %v350 = vld [vmem:[%s1 + $0x9f8] sm:$0xff]
  %v351 = vld [vmem:[%s1 + $0xa00] sm:$0xff]
  %v352 = vld [vmem:[%s1 + $0xa08] sm:$0xff]
  %v353 = vld [vmem:[%s1 + $0xa10] sm:$0xff]
  %v354 = vld [vmem:[%s1 + $0xa18] sm:$0xff]
  %v355 = vld [vmem:[%s1 + $0xa20] sm:$0xff]
  %v356 = vld [vmem:[%s1 + $0xa28] sm:$0xff]
  %v357 = vld [vmem:[%s1 + $0xa30] sm:$0xff]
  %v358 = vld [vmem:[%s1 + $0xa38] sm:$0xff]
  %v359 = vld [vmem:[%s1 + $0xa40] sm:$0xff]
  %v360 = vld [vmem:[%s1 + $0xa48] sm:$0xff]
  %v361 = vld [vmem:[%s1 + $0xa50] sm:$0xff]
  %v362 = vld [vmem:[%s1 + $0xa58] sm:$0xff]
  %v363 = vld [vmem:[%s1 + $0xa60] sm:$0xff]
  %v364 = vld [vmem:[%s1 + $0xa68] sm:$0xff]
  %v365 = vld [vmem:[%s1 + $0xa70] sm:$0xff]
  %v366 = vld [vmem:[%s1 + $0xa78] sm:$0xff]
  %v367 = vld [vmem:[%s1 + $0xa80] sm:$0xff]
  %v368 = vld [vmem:[%s1 + $0xa88] sm:$0xff]
  %v369 = vld [vmem:[%s1 + $0xa90] sm:$0xff]
  %v370 = vld [vmem:[%s1 + $0xa98] sm:$0xff]
  %v371 = vld [vmem:[%s1 + $0xaa0] sm:$0xff]
  %v372 = vld [vmem:[%s1 + $0xaa8] sm:$0xff]
  %v373 = vld [vmem:[%s1 + $0xab0] sm:$0xff]
  %v374 = vld [vmem:[%s1 + $0xab8] sm:$0xff]
  %v375 = vld [vmem:[%s1 + $0xac0] sm:$0xff]
  %v376 = vld [vmem:[%s1 + $0xac8] sm:$0xff]
  %v377 = vld [vmem:[%s1 + $0xad0] sm:$0xff]
  %v378 = vld [vmem:[%s1 + $0xad8] sm:$0xff]
  %v379 = vld [vmem:[%s1 + $0xae0] sm:$0xff]
  %v380 = vld [vmem:[%s1 + $0xae8] sm:$0xff]
  %v381 = vld [vmem:[%s1 + $0xaf0] sm:$0xff]
  %v382 = vld [vmem:[%s1 + $0xaf8] sm:$0xff]
  %v383 = vld [vmem:[%s1 + $0xb00] sm:$0xff]
  %v384 = vld [vmem:[%s1 + $0xb08] sm:$0xff]
  %v385 = vld [vmem:[%s1 + $0xb10] sm:$0xff]
  %v386 = vld [vmem:[%s1 + $0xb18] sm:$0xff]
  %v387 = vld [vmem:[%s1 + $0xb20] sm:$0xff]
  %v388 = vld [vmem:[%s1 + $0xb28] sm:$0xff]
  %v389 = vld [vmem:[%s1 + $0xb30] sm:$0xff]
  %v390 = vld [vmem:[%s1 + $0xb38] sm:$0xff]
  %v391 = vld [vmem:[%s1 + $0xb40] sm:$0xff]
  %v392 = vld [vmem:[%s1 + $0xb48] sm:$0xff]
  %v393 = vld [vmem:[%s1 + $0xb50] sm:$0xff]
  %v394 = vld [vmem:[%s1 + $0xb58] sm:$0xff]
  %v395 = vld [vmem:[%s1 + $0xb60] sm:$0xff]
  %v396 = vld [vmem:[%s1 + $0xb68] sm:$0xff]
  %v397 = vld [vmem:[%s1 + $0xb70] sm:$0xff]
  %v398 = vld [vmem:[%s1 + $0xb78] sm:$0xff]
  %v399 = vld [vmem:[%s1 + $0xb80] sm:$0xff]
  %v400 = vld [vmem:[%s1 + $0xb88] sm:$0xff]
  %v401 = vld [vmem:[%s1 + $0xb90] sm:$0xff]
  %v402 = vld [vmem:[%s1 + $0xb98] sm:$0xff]
  %v403 = vld [vmem:[%s1 + $0xba0] sm:$0xff]
  %v404 = vld [vmem:[%s1 + $0xba8] sm:$0xff]
  %v405 = vld [vmem:[%s1 + $0xbb0] sm:$0xff]
  %v406 = vld [vmem:[%s1 + $0xbb8] sm:$0xff]
  %v407 = vld [vmem:[%s1 + $0xbc0] sm:$0xff]
  %v408 = vld [vmem:[%s1 + $0xbc8] sm:$0xff]
  %v409 = vld [vmem:[%s1 + $0xbd0] sm:$0xff]
  %v410 = vld [vmem:[%s1 + $0xbd8] sm:$0xff]
  %v411 = vld [vmem:[%s1 + $0xbe0] sm:$0xff]
  %v412 = vld [vmem:[%s1 + $0xbe8] sm:$0xff]
  %v413 = vld [vmem:[%s1 + $0xbf0] sm:$0xff]
  %v414 = vld [vmem:[%s1 + $0xbf8] sm:$0xff]
  %v415 = vld [vmem:[%s1 + $0xc00] sm:$0xff]
  %v416 = vld [vmem:[%s1 + $0xc08] sm:$0xff]
  %v417 = vld [vmem:[%s1 + $0xc10] sm:$0xff]
  %v418 = vld [vmem:[%s1 + $0xc18] sm:$0xff]
  %v419 = vld [vmem:[%s1 + $0xc20] sm:$0xff]
  %v420 = vld [vmem:[%s1 + $0xc28] sm:$0xff]
  %v421 = vld [vmem:[%s1 + $0xc30] sm:$0xff]
  %v422 = vld [vmem:[%s1 + $0xc38] sm:$0xff]
  %v423 = vld [vmem:[%s1 + $0xc40] sm:$0xff]
  %v424 = vld [vmem:[%s1 + $0xc48] sm:$0xff]
  %v425 = vld [vmem:[%s1 + $0xc50] sm:$0xff]
  %v426 = vld [vmem:[%s1 + $0xc58] sm:$0xff]
  %v427 = vld [vmem:[%s1 + $0xc60] sm:$0xff]
  %v428 = vld [vmem:[%s1 + $0xc68] sm:$0xff]
  %v429 = vld [vmem:[%s1 + $0xc70] sm:$0xff]
  %v430 = vld [vmem:[%s1 + $0xc78] sm:$0xff]
  %v431 = vld [vmem:[%s1 + $0xc80] sm:$0xff]
  %v432 = vld [vmem:[%s1 + $0xc88] sm:$0xff]
  %v433 = vld [vmem:[%s1 + $0xc90] sm:$0xff]
  %v434 = vld [vmem:[%s1 + $0xc98] sm:$0xff]
  %v435 = vld [vmem:[%s1 + $0xca0] sm:$0xff]
  %v436 = vld [vmem:[%s1 + $0xca8] sm:$0xff]
  %v437 = vld [vmem:[%s1 + $0xcb0] sm:$0xff]
  %v438 = vld [vmem:[%s1 + $0xcb8] sm:$0xff]
  %v439 = vld [vmem:[%s1 + $0xcc0] sm:$0xff]
  %v440 = vld [vmem:[%s1 + $0xcc8] sm:$0xff]
  %v441 = vld [vmem:[%s1 + $0xcd0] sm:$0xff]
  %v442 = vld [vmem:[%s1 + $0xcd8] sm:$0xff]
  %v443 = vld [vmem:[%s1 + $0xce0] sm:$0xff]
  %v444 = vld [vmem:[%s1 + $0xce8] sm:$0xff]
  %v445 = vld [vmem:[%s1 + $0xcf0] sm:$0xff]
  %v446 = vld [vmem:[%s1 + $0xcf8] sm:$0xff]
  %v447 = vld [vmem:[%s1 + $0xd00] sm:$0xff]
  %v448 = vld [vmem:[%s1 + $0xd08] sm:$0xff]
  %v449 = vld [vmem:[%s1 + $0xd10] sm:$0xff]
  %v450 = vld [vmem:[%s1 + $0xd18] sm:$0xff]
  %v451 = vld [vmem:[%s1 + $0xd20] sm:$0xff]
  %v452 = vld [vmem:[%s1 + $0xd28] sm:$0xff]
  %v453 = vld [vmem:[%s1 + $0xd30] sm:$0xff]
  %v454 = vld [vmem:[%s1 + $0xd38] sm:$0xff]
  %v455 = vld [vmem:[%s1 + $0xd40] sm:$0xff]
  %v456 = vld [vmem:[%s1 + $0xd48] sm:$0xff]
  %v457 = vld [vmem:[%s1 + $0xd50] sm:$0xff]
  %v458 = vld [vmem:[%s1 + $0xd58] sm:$0xff]
  %v459 = vld [vmem:[%s1 + $0xd60] sm:$0xff]
  %v460 = vld [vmem:[%s1 + $0xd68] sm:$0xff]
  %v461 = vld [vmem:[%s1 + $0xd70] sm:$0xff]
  %v462 = vld [vmem:[%s1 + $0xd78] sm:$0xff]
  %v463 = vld [vmem:[%s1 + $0xd80] sm:$0xff]
  %v464 = vld [vmem:[%s1 + $0xd88] sm:$0xff]
  %v465 = vld [vmem:[%s1 + $0xd90] sm:$0xff]
  %v466 = vld [vmem:[%s1 + $0xd98] sm:$0xff]
  %v467 = vld [vmem:[%s1 + $0xda0] sm:$0xff]
  %v468 = vld [vmem:[%s1 + $0xda8] sm:$0xff]
  %v469 = vld [vmem:[%s1 + $0xdb0] sm:$0xff]
  %v470 = vld [vmem:[%s1 + $0xdb8] sm:$0xff]
  %v471 = vld [vmem:[%s1 + $0xdc0] sm:$0xff]
  %v472 = vld [vmem:[%s1 + $0xdc8] sm:$0xff]
  %v473 = vld [vmem:[%s1 + $0xdd0] sm:$0xff]
  %v474 = vld [vmem:[%s1 + $0xdd8] sm:$0xff]
  %v475 = vld [vmem:[%s1 + $0xde0] sm:$0xff]
  %v476 = vld [vmem:[%s1 + $0xde8] sm:$0xff]
  %v477 = vld [vmem:[%s1 + $0xdf0] sm:$0xff]
  %v478 = vld [vmem:[%s1 + $0xdf8] sm:$0xff]
  %v479 = vld [vmem:[%s1 + $0xe00] sm:$0xff]
  %v480 = vld [vmem:[%s1 + $0xe08] sm:$0xff]
  %v481 = vld [vmem:[%s1 + $0xe10] sm:$0xff]
  %v482 = vld [vmem:[%s1 + $0xe18] sm:$0xff]
  %v483 = vld [vmem:[%s1 + $0xe20] sm:$0xff]
  %v484 = vld [vmem:[%s1 + $0xe28] sm:$0xff]
  %v485 = vld [vmem:[%s1 + $0xe30] sm:$0xff]
  %v486 = vld [vmem:[%s1 + $0xe38] sm:$0xff]
  %v487 = vld [vmem:[%s1 + $0xe40] sm:$0xff]
  %v488 = vld [vmem:[%s1 + $0xe48] sm:$0xff]
  %v489 = vld [vmem:[%s1 + $0xe50] sm:$0xff]
  %v490 = vld [vmem:[%s1 + $0xe58] sm:$0xff]
  %v491 = vld [vmem:[%s1 + $0xe60] sm:$0xff]
  %v492 = vld [vmem:[%s1 + $0xe68] sm:$0xff]
  %v493 = vld [vmem:[%s1 + $0xe70] sm:$0xff]
  %v494 = vld [vmem:[%s1 + $0xe78] sm:$0xff]
  %v495 = vld [vmem:[%s1 + $0xe80] sm:$0xff]
  %v496 = vld [vmem:[%s1 + $0xe88] sm:$0xff]
  %v497 = vld [vmem:[%s1 + $0xe90] sm:$0xff]
  %v498 = vld [vmem:[%s1 + $0xe98] sm:$0xff]
  %v499 = vld [vmem:[%s1 + $0xea0] sm:$0xff]
  %v500 = vld [vmem:[%s1 + $0xea8] sm:$0xff]
  %v501 = vld [vmem:[%s1 + $0xeb0] sm:$0xff]
  %v502 = vld [vmem:[%s1 + $0xeb8] sm:$0xff]
  %v503 = vld [vmem:[%s1 + $0xec0] sm:$0xff]
  %v504 = vld [vmem:[%s1 + $0xec8] sm:$0xff]
  %v505 = vld [vmem:[%s1 + $0xed0] sm:$0xff]
  %v506 = vld [vmem:[%s1 + $0xed8] sm:$0xff]
  %v507 = vld [vmem:[%s1 + $0xee0] sm:$0xff]
  %v508 = vld [vmem:[%s1 + $0xee8] sm:$0xff]
  %v509 = vld [vmem:[%s1 + $0xef0] sm:$0xff]
  %v510 = vld [vmem:[%s1 + $0xef8] sm:$0xff]
  %v511 = vld [vmem:[%s1 + $0xf00] sm:$0xff]
  %v512 = vld [vmem:[%s1 + $0xf08] sm:$0xff]
  %v513 = vld [vmem:[%s1 + $0xf10] sm:$0xff]
  %v514 = vld [vmem:[%s1 + $0xf18] sm:$0xff]
  %v515 = vld [vmem:[%s1 + $0xf20] sm:$0xff]
  %v516 = vld [vmem:[%s1 + $0xf28] sm:$0xff]
  %v517 = vld [vmem:[%s1 + $0xf30] sm:$0xff]
  %v518 = vld [vmem:[%s1 + $0xf38] sm:$0xff]
  %v519 = vld [vmem:[%s1 + $0xf40] sm:$0xff]
  %v520 = vld [vmem:[%s1 + $0xf48] sm:$0xff]
  %v521 = vld [vmem:[%s1 + $0xf50] sm:$0xff]
  %v522 = vld [vmem:[%s1 + $0xf58] sm:$0xff]
  %v523 = vld [vmem:[%s1 + $0xf60] sm:$0xff]
  %v524 = vld [vmem:[%s1 + $0xf68] sm:$0xff]
  %v525 = vld [vmem:[%s1 + $0xf70] sm:$0xff]
  %v526 = vld [vmem:[%s1 + $0xf78] sm:$0xff]
  %v527 = vld [vmem:[%s1 + $0xf80] sm:$0xff]
  %v528 = vld [vmem:[%s1 + $0xf88] sm:$0xff]
  %v529 = vld [vmem:[%s1 + $0xf90] sm:$0xff]
  %v530 = vld [vmem:[%s1 + $0xf98] sm:$0xff]
  %v531 = vld [vmem:[%s1 + $0xfa0] sm:$0xff]
  %v532 = vld [vmem:[%s1 + $0xfa8] sm:$0xff]
  %v533 = vld [vmem:[%s1 + $0xfb0] sm:$0xff]
  %v534 = vld [vmem:[%s1 + $0xfb8] sm:$0xff]
  %v535 = vld [vmem:[%s1 + $0xfc0] sm:$0xff]
  %v536 = vld [vmem:[%s1 + $0xfc8] sm:$0xff]
  %v537 = vld [vmem:[%s1 + $0xfd0] sm:$0xff]
  %v538 = vld [vmem:[%s1 + $0xfd8] sm:$0xff]
  %v539 = vld [vmem:[%s1 + $0xfe0] sm:$0xff]
  %v540 = vld [vmem:[%s1 + $0xfe8] sm:$0xff]
  %v541 = vld [vmem:[%s1 + $0xff0] sm:$0xff]
  %v542 = vld [vmem:[%s1 + $0xff8] sm:$0xff]
  %v551 = vunpack.c.l.b16 %v23
  %v552 = vunpack.c.h.b16 %v23
  %v553 = vunpack.c.l.b16 %v24
  %v554 = vunpack.c.h.b16 %v24
  %v555 = vunpack.c.l.b16 %v25
  %v556 = vunpack.c.h.b16 %v25
  %v557 = vunpack.c.l.b16 %v26
  %v558 = vunpack.c.h.b16 %v26
  %v559 = vunpack.c.l.b16 %v27
  %v560 = vunpack.c.h.b16 %v27
  %v561 = vunpack.c.l.b16 %v28
  %v562 = vunpack.c.h.b16 %v28
  %v563 = vunpack.c.l.b16 %v29
  %v564 = vunpack.c.h.b16 %v29
  %v565 = vunpack.c.l.b16 %v30
  %v566 = vunpack.c.h.b16 %v30
  %v567 = vpack.c.b16 %v559, %v551
  %v568 = vpack.c.b16 %v560, %v552
  %v569 = vpack.c.b16 %v561, %v553
  %v570 = vpack.c.b16 %v562, %v554
  %v571 = vpack.c.b16 %v563, %v555
  %v572 = vpack.c.b16 %v564, %v556
  %v573 = vpack.c.b16 %v565, %v557
  %v574 = vpack.c.b16 %v566, %v558
  %v1095 = vunpack.c.l.b16 %v31
  %v1096 = vunpack.c.h.b16 %v31
  %v1097 = vunpack.c.l.b16 %v32
  %v1098 = vunpack.c.h.b16 %v32
  %v1099 = vunpack.c.l.b16 %v33
  %v1100 = vunpack.c.h.b16 %v33
  %v1101 = vunpack.c.l.b16 %v34
  %v1102 = vunpack.c.h.b16 %v34
  %v1103 = vunpack.c.l.b16 %v35
  %v1104 = vunpack.c.h.b16 %v35
  %v1105 = vunpack.c.l.b16 %v36
  %v1106 = vunpack.c.h.b16 %v36
  %v1107 = vunpack.c.l.b16 %v37
  %v1108 = vunpack.c.h.b16 %v37
  %v1109 = vunpack.c.l.b16 %v38
  %v1110 = vunpack.c.h.b16 %v38
  %v1111 = vunpack.c.l.b16 %v39
  %v1112 = vunpack.c.h.b16 %v39
  %v1113 = vunpack.c.l.b16 %v40
  %v1114 = vunpack.c.h.b16 %v40
  %v1115 = vunpack.c.l.b16 %v41
  %v1116 = vunpack.c.h.b16 %v41
  %v1117 = vunpack.c.l.b16 %v42
  %v1118 = vunpack.c.h.b16 %v42
  %v1119 = vunpack.c.l.b16 %v43
  %v1120 = vunpack.c.h.b16 %v43
  %v1121 = vunpack.c.l.b16 %v44
  %v1122 = vunpack.c.h.b16 %v44
  %v1123 = vunpack.c.l.b16 %v45
  %v1124 = vunpack.c.h.b16 %v45
  %v1125 = vunpack.c.l.b16 %v46
  %v1126 = vunpack.c.h.b16 %v46
  %v1127 = vunpack.c.l.b16 %v47
  %v1128 = vunpack.c.h.b16 %v47
  %v1129 = vunpack.c.l.b16 %v48
  %v1130 = vunpack.c.h.b16 %v48
  %v1131 = vunpack.c.l.b16 %v49
  %v1132 = vunpack.c.h.b16 %v49
  %v1133 = vunpack.c.l.b16 %v50
  %v1134 = vunpack.c.h.b16 %v50
  %v1135 = vunpack.c.l.b16 %v51
  %v1136 = vunpack.c.h.b16 %v51
  %v1137 = vunpack.c.l.b16 %v52
  %v1138 = vunpack.c.h.b16 %v52
  %v1139 = vunpack.c.l.b16 %v53
  %v1140 = vunpack.c.h.b16 %v53
  %v1141 = vunpack.c.l.b16 %v54
  %v1142 = vunpack.c.h.b16 %v54
  %v1143 = vunpack.c.l.b16 %v55
  %v1144 = vunpack.c.h.b16 %v55
  %v1145 = vunpack.c.l.b16 %v56
  %v1146 = vunpack.c.h.b16 %v56
  %v1147 = vunpack.c.l.b16 %v57
  %v1148 = vunpack.c.h.b16 %v57
  %v1149 = vunpack.c.l.b16 %v58
  %v1150 = vunpack.c.h.b16 %v58
  %v1151 = vunpack.c.l.b16 %v59
  %v1152 = vunpack.c.h.b16 %v59
  %v1153 = vunpack.c.l.b16 %v60
  %v1154 = vunpack.c.h.b16 %v60
  %v1155 = vunpack.c.l.b16 %v61
  %v1156 = vunpack.c.h.b16 %v61
  %v1157 = vunpack.c.l.b16 %v62
  %v1158 = vunpack.c.h.b16 %v62
  %v1159 = vunpack.c.l.b16 %v63
  %v1160 = vunpack.c.h.b16 %v63
  %v1161 = vunpack.c.l.b16 %v64
  %v1162 = vunpack.c.h.b16 %v64
  %v1163 = vunpack.c.l.b16 %v65
  %v1164 = vunpack.c.h.b16 %v65
  %v1165 = vunpack.c.l.b16 %v66
  %v1166 = vunpack.c.h.b16 %v66
  %v1167 = vunpack.c.l.b16 %v67
  %v1168 = vunpack.c.h.b16 %v67
  %v1169 = vunpack.c.l.b16 %v68
  %v1170 = vunpack.c.h.b16 %v68
  %v1171 = vunpack.c.l.b16 %v69
  %v1172 = vunpack.c.h.b16 %v69
  %v1173 = vunpack.c.l.b16 %v70
  %v1174 = vunpack.c.h.b16 %v70
  %v1175 = vunpack.c.l.b16 %v71
  %v1176 = vunpack.c.h.b16 %v71
  %v1177 = vunpack.c.l.b16 %v72
  %v1178 = vunpack.c.h.b16 %v72
  %v1179 = vunpack.c.l.b16 %v73
  %v1180 = vunpack.c.h.b16 %v73
  %v1181 = vunpack.c.l.b16 %v74
  %v1182 = vunpack.c.h.b16 %v74
  %v1183 = vunpack.c.l.b16 %v75
  %v1184 = vunpack.c.h.b16 %v75
  %v1185 = vunpack.c.l.b16 %v76
  %v1186 = vunpack.c.h.b16 %v76
  %v1187 = vunpack.c.l.b16 %v77
  %v1188 = vunpack.c.h.b16 %v77
  %v1189 = vunpack.c.l.b16 %v78
  %v1190 = vunpack.c.h.b16 %v78
  %v1191 = vunpack.c.l.b16 %v79
  %v1192 = vunpack.c.h.b16 %v79
  %v1193 = vunpack.c.l.b16 %v80
  %v1194 = vunpack.c.h.b16 %v80
  %v1195 = vunpack.c.l.b16 %v81
  %v1196 = vunpack.c.h.b16 %v81
  %v1197 = vunpack.c.l.b16 %v82
  %v1198 = vunpack.c.h.b16 %v82
  %v1199 = vunpack.c.l.b16 %v83
  %v1200 = vunpack.c.h.b16 %v83
  %v1201 = vunpack.c.l.b16 %v84
  %v1202 = vunpack.c.h.b16 %v84
  %v1203 = vunpack.c.l.b16 %v85
  %v1204 = vunpack.c.h.b16 %v85
  %v1205 = vunpack.c.l.b16 %v86
  %v1206 = vunpack.c.h.b16 %v86
  %v1207 = vunpack.c.l.b16 %v87
  %v1208 = vunpack.c.h.b16 %v87
  %v1209 = vunpack.c.l.b16 %v88
  %v1210 = vunpack.c.h.b16 %v88
  %v1211 = vunpack.c.l.b16 %v89
  %v1212 = vunpack.c.h.b16 %v89
  %v1213 = vunpack.c.l.b16 %v90
  %v1214 = vunpack.c.h.b16 %v90
  %v1215 = vunpack.c.l.b16 %v91
  %v1216 = vunpack.c.h.b16 %v91
  %v1217 = vunpack.c.l.b16 %v92
  %v1218 = vunpack.c.h.b16 %v92
  %v1219 = vunpack.c.l.b16 %v93
  %v1220 = vunpack.c.h.b16 %v93
  %v1221 = vunpack.c.l.b16 %v94
  %v1222 = vunpack.c.h.b16 %v94
  %v1223 = vunpack.c.l.b16 %v95
  %v1224 = vunpack.c.h.b16 %v95
  %v1225 = vunpack.c.l.b16 %v96
  %v1226 = vunpack.c.h.b16 %v96
  %v1227 = vunpack.c.l.b16 %v97
  %v1228 = vunpack.c.h.b16 %v97
  %v1229 = vunpack.c.l.b16 %v98
  %v1230 = vunpack.c.h.b16 %v98
  %v1231 = vunpack.c.l.b16 %v99
  %v1232 = vunpack.c.h.b16 %v99
  %v1233 = vunpack.c.l.b16 %v100
  %v1234 = vunpack.c.h.b16 %v100
  %v1235 = vunpack.c.l.b16 %v101
  %v1236 = vunpack.c.h.b16 %v101
  %v1237 = vunpack.c.l.b16 %v102
  %v1238 = vunpack.c.h.b16 %v102
  %v1239 = vunpack.c.l.b16 %v103
  %v1240 = vunpack.c.h.b16 %v103
  %v1241 = vunpack.c.l.b16 %v104
  %v1242 = vunpack.c.h.b16 %v104
  %v1243 = vunpack.c.l.b16 %v105
  %v1244 = vunpack.c.h.b16 %v105
  %v1245 = vunpack.c.l.b16 %v106
  %v1246 = vunpack.c.h.b16 %v106
  %v1247 = vunpack.c.l.b16 %v107
  %v1248 = vunpack.c.h.b16 %v107
  %v1249 = vunpack.c.l.b16 %v108
  %v1250 = vunpack.c.h.b16 %v108
  %v1251 = vunpack.c.l.b16 %v109
  %v1252 = vunpack.c.h.b16 %v109
  %v1253 = vunpack.c.l.b16 %v110
  %v1254 = vunpack.c.h.b16 %v110
  %v1255 = vunpack.c.l.b16 %v111
  %v1256 = vunpack.c.h.b16 %v111
  %v1257 = vunpack.c.l.b16 %v112
  %v1258 = vunpack.c.h.b16 %v112
  %v1259 = vunpack.c.l.b16 %v113
  %v1260 = vunpack.c.h.b16 %v113
  %v1261 = vunpack.c.l.b16 %v114
  %v1262 = vunpack.c.h.b16 %v114
  %v1263 = vunpack.c.l.b16 %v115
  %v1264 = vunpack.c.h.b16 %v115
  %v1265 = vunpack.c.l.b16 %v116
  %v1266 = vunpack.c.h.b16 %v116
  %v1267 = vunpack.c.l.b16 %v117
  %v1268 = vunpack.c.h.b16 %v117
  %v1269 = vunpack.c.l.b16 %v118
  %v1270 = vunpack.c.h.b16 %v118
  %v1271 = vunpack.c.l.b16 %v119
  %v1272 = vunpack.c.h.b16 %v119
  %v1273 = vunpack.c.l.b16 %v120
  %v1274 = vunpack.c.h.b16 %v120
  %v1275 = vunpack.c.l.b16 %v121
  %v1276 = vunpack.c.h.b16 %v121
  %v1277 = vunpack.c.l.b16 %v122
  %v1278 = vunpack.c.h.b16 %v122
  %v1279 = vunpack.c.l.b16 %v123
  %v1280 = vunpack.c.h.b16 %v123
  %v1281 = vunpack.c.l.b16 %v124
  %v1282 = vunpack.c.h.b16 %v124
  %v1283 = vunpack.c.l.b16 %v125
  %v1284 = vunpack.c.h.b16 %v125
  %v1285 = vunpack.c.l.b16 %v126
  %v1286 = vunpack.c.h.b16 %v126
  %v1287 = vunpack.c.l.b16 %v127
  %v1288 = vunpack.c.h.b16 %v127
  %v1289 = vunpack.c.l.b16 %v128
  %v1290 = vunpack.c.h.b16 %v128
  %v1291 = vunpack.c.l.b16 %v129
  %v1292 = vunpack.c.h.b16 %v129
  %v1293 = vunpack.c.l.b16 %v130
  %v1294 = vunpack.c.h.b16 %v130
  %v1295 = vunpack.c.l.b16 %v131
  %v1296 = vunpack.c.h.b16 %v131
  %v1297 = vunpack.c.l.b16 %v132
  %v1298 = vunpack.c.h.b16 %v132
  %v1299 = vunpack.c.l.b16 %v133
  %v1300 = vunpack.c.h.b16 %v133
  %v1301 = vunpack.c.l.b16 %v134
  %v1302 = vunpack.c.h.b16 %v134
  %v1303 = vunpack.c.l.b16 %v135
  %v1304 = vunpack.c.h.b16 %v135
  %v1305 = vunpack.c.l.b16 %v136
  %v1306 = vunpack.c.h.b16 %v136
  %v1307 = vunpack.c.l.b16 %v137
  %v1308 = vunpack.c.h.b16 %v137
  %v1309 = vunpack.c.l.b16 %v138
  %v1310 = vunpack.c.h.b16 %v138
  %v1311 = vunpack.c.l.b16 %v139
  %v1312 = vunpack.c.h.b16 %v139
  %v1313 = vunpack.c.l.b16 %v140
  %v1314 = vunpack.c.h.b16 %v140
  %v1315 = vunpack.c.l.b16 %v141
  %v1316 = vunpack.c.h.b16 %v141
  %v1317 = vunpack.c.l.b16 %v142
  %v1318 = vunpack.c.h.b16 %v142
  %v1319 = vunpack.c.l.b16 %v143
  %v1320 = vunpack.c.h.b16 %v143
  %v1321 = vunpack.c.l.b16 %v144
  %v1322 = vunpack.c.h.b16 %v144
  %v1323 = vunpack.c.l.b16 %v145
  %v1324 = vunpack.c.h.b16 %v145
  %v1325 = vunpack.c.l.b16 %v146
  %v1326 = vunpack.c.h.b16 %v146
  %v1327 = vunpack.c.l.b16 %v147
  %v1328 = vunpack.c.h.b16 %v147
  %v1329 = vunpack.c.l.b16 %v148
  %v1330 = vunpack.c.h.b16 %v148
  %v1331 = vunpack.c.l.b16 %v149
  %v1332 = vunpack.c.h.b16 %v149
  %v1333 = vunpack.c.l.b16 %v150
  %v1334 = vunpack.c.h.b16 %v150
  %v1335 = vunpack.c.l.b16 %v151
  %v1336 = vunpack.c.h.b16 %v151
  %v1337 = vunpack.c.l.b16 %v152
  %v1338 = vunpack.c.h.b16 %v152
  %v1339 = vunpack.c.l.b16 %v153
  %v1340 = vunpack.c.h.b16 %v153
  %v1341 = vunpack.c.l.b16 %v154
  %v1342 = vunpack.c.h.b16 %v154
  %v1343 = vunpack.c.l.b16 %v155
  %v1344 = vunpack.c.h.b16 %v155
  %v1345 = vunpack.c.l.b16 %v156
  %v1346 = vunpack.c.h.b16 %v156
  %v1347 = vunpack.c.l.b16 %v157
  %v1348 = vunpack.c.h.b16 %v157
  %v1349 = vunpack.c.l.b16 %v158
  %v1350 = vunpack.c.h.b16 %v158
  %v1351 = vunpack.c.l.b16 %v159
  %v1352 = vunpack.c.h.b16 %v159
  %v1353 = vunpack.c.l.b16 %v160
  %v1354 = vunpack.c.h.b16 %v160
  %v1355 = vunpack.c.l.b16 %v161
  %v1356 = vunpack.c.h.b16 %v161
  %v1357 = vunpack.c.l.b16 %v162
  %v1358 = vunpack.c.h.b16 %v162
  %v1359 = vunpack.c.l.b16 %v163
  %v1360 = vunpack.c.h.b16 %v163
  %v1361 = vunpack.c.l.b16 %v164
  %v1362 = vunpack.c.h.b16 %v164
  %v1363 = vunpack.c.l.b16 %v165
  %v1364 = vunpack.c.h.b16 %v165
  %v1365 = vunpack.c.l.b16 %v166
  %v1366 = vunpack.c.h.b16 %v166
  %v1367 = vunpack.c.l.b16 %v167
  %v1368 = vunpack.c.h.b16 %v167
  %v1369 = vunpack.c.l.b16 %v168
  %v1370 = vunpack.c.h.b16 %v168
  %v1371 = vunpack.c.l.b16 %v169
  %v1372 = vunpack.c.h.b16 %v169
  %v1373 = vunpack.c.l.b16 %v170
  %v1374 = vunpack.c.h.b16 %v170
  %v1375 = vunpack.c.l.b16 %v171
  %v1376 = vunpack.c.h.b16 %v171
  %v1377 = vunpack.c.l.b16 %v172
  %v1378 = vunpack.c.h.b16 %v172
  %v1379 = vunpack.c.l.b16 %v173
  %v1380 = vunpack.c.h.b16 %v173
  %v1381 = vunpack.c.l.b16 %v174
  %v1382 = vunpack.c.h.b16 %v174
  %v1383 = vunpack.c.l.b16 %v175
  %v1384 = vunpack.c.h.b16 %v175
  %v1385 = vunpack.c.l.b16 %v176
  %v1386 = vunpack.c.h.b16 %v176
  %v1387 = vunpack.c.l.b16 %v177
  %v1388 = vunpack.c.h.b16 %v177
  %v1389 = vunpack.c.l.b16 %v178
  %v1390 = vunpack.c.h.b16 %v178
  %v1391 = vunpack.c.l.b16 %v179
  %v1392 = vunpack.c.h.b16 %v179
  %v1393 = vunpack.c.l.b16 %v180
  %v1394 = vunpack.c.h.b16 %v180
  %v1395 = vunpack.c.l.b16 %v181
  %v1396 = vunpack.c.h.b16 %v181
  %v1397 = vunpack.c.l.b16 %v182
  %v1398 = vunpack.c.h.b16 %v182
  %v1399 = vunpack.c.l.b16 %v183
  %v1400 = vunpack.c.h.b16 %v183
  %v1401 = vunpack.c.l.b16 %v184
  %v1402 = vunpack.c.h.b16 %v184
  %v1403 = vunpack.c.l.b16 %v185
  %v1404 = vunpack.c.h.b16 %v185
  %v1405 = vunpack.c.l.b16 %v186
  %v1406 = vunpack.c.h.b16 %v186
  %v1407 = vunpack.c.l.b16 %v187
  %v1408 = vunpack.c.h.b16 %v187
  %v1409 = vunpack.c.l.b16 %v188
  %v1410 = vunpack.c.h.b16 %v188
  %v1411 = vunpack.c.l.b16 %v189
  %v1412 = vunpack.c.h.b16 %v189
  %v1413 = vunpack.c.l.b16 %v190
  %v1414 = vunpack.c.h.b16 %v190
  %v1415 = vunpack.c.l.b16 %v191
  %v1416 = vunpack.c.h.b16 %v191
  %v1417 = vunpack.c.l.b16 %v192
  %v1418 = vunpack.c.h.b16 %v192
  %v1419 = vunpack.c.l.b16 %v193
  %v1420 = vunpack.c.h.b16 %v193
  %v1421 = vunpack.c.l.b16 %v194
  %v1422 = vunpack.c.h.b16 %v194
  %v1423 = vunpack.c.l.b16 %v195
  %v1424 = vunpack.c.h.b16 %v195
  %v1425 = vunpack.c.l.b16 %v196
  %v1426 = vunpack.c.h.b16 %v196
  %v1427 = vunpack.c.l.b16 %v197
  %v1428 = vunpack.c.h.b16 %v197
  %v1429 = vunpack.c.l.b16 %v198
  %v1430 = vunpack.c.h.b16 %v198
  %v1431 = vunpack.c.l.b16 %v199
  %v1432 = vunpack.c.h.b16 %v199
  %v1433 = vunpack.c.l.b16 %v200
  %v1434 = vunpack.c.h.b16 %v200
  %v1435 = vunpack.c.l.b16 %v201
  %v1436 = vunpack.c.h.b16 %v201
  %v1437 = vunpack.c.l.b16 %v202
  %v1438 = vunpack.c.h.b16 %v202
  %v1439 = vunpack.c.l.b16 %v203
  %v1440 = vunpack.c.h.b16 %v203
  %v1441 = vunpack.c.l.b16 %v204
  %v1442 = vunpack.c.h.b16 %v204
  %v1443 = vunpack.c.l.b16 %v205
  %v1444 = vunpack.c.h.b16 %v205
  %v1445 = vunpack.c.l.b16 %v206
  %v1446 = vunpack.c.h.b16 %v206
  %v1447 = vunpack.c.l.b16 %v207
  %v1448 = vunpack.c.h.b16 %v207
  %v1449 = vunpack.c.l.b16 %v208
  %v1450 = vunpack.c.h.b16 %v208
  %v1451 = vunpack.c.l.b16 %v209
  %v1452 = vunpack.c.h.b16 %v209
  %v1453 = vunpack.c.l.b16 %v210
  %v1454 = vunpack.c.h.b16 %v210
  %v1455 = vunpack.c.l.b16 %v211
  %v1456 = vunpack.c.h.b16 %v211
  %v1457 = vunpack.c.l.b16 %v212
  %v1458 = vunpack.c.h.b16 %v212
  %v1459 = vunpack.c.l.b16 %v213
  %v1460 = vunpack.c.h.b16 %v213
  %v1461 = vunpack.c.l.b16 %v214
  %v1462 = vunpack.c.h.b16 %v214
  %v1463 = vunpack.c.l.b16 %v215
  %v1464 = vunpack.c.h.b16 %v215
  %v1465 = vunpack.c.l.b16 %v216
  %v1466 = vunpack.c.h.b16 %v216
  %v1467 = vunpack.c.l.b16 %v217
  %v1468 = vunpack.c.h.b16 %v217
  %v1469 = vunpack.c.l.b16 %v218
  %v1470 = vunpack.c.h.b16 %v218
  %v1471 = vunpack.c.l.b16 %v219
  %v1472 = vunpack.c.h.b16 %v219
  %v1473 = vunpack.c.l.b16 %v220
  %v1474 = vunpack.c.h.b16 %v220
  %v1475 = vunpack.c.l.b16 %v221
  %v1476 = vunpack.c.h.b16 %v221
  %v1477 = vunpack.c.l.b16 %v222
  %v1478 = vunpack.c.h.b16 %v222
  %v1479 = vunpack.c.l.b16 %v223
  %v1480 = vunpack.c.h.b16 %v223
  %v1481 = vunpack.c.l.b16 %v224
  %v1482 = vunpack.c.h.b16 %v224
  %v1483 = vunpack.c.l.b16 %v225
  %v1484 = vunpack.c.h.b16 %v225
  %v1485 = vunpack.c.l.b16 %v226
  %v1486 = vunpack.c.h.b16 %v226
  %v1487 = vunpack.c.l.b16 %v227
  %v1488 = vunpack.c.h.b16 %v227
  %v1489 = vunpack.c.l.b16 %v228
  %v1490 = vunpack.c.h.b16 %v228
  %v1491 = vunpack.c.l.b16 %v229
  %v1492 = vunpack.c.h.b16 %v229
  %v1493 = vunpack.c.l.b16 %v230
  %v1494 = vunpack.c.h.b16 %v230
  %v1495 = vunpack.c.l.b16 %v231
  %v1496 = vunpack.c.h.b16 %v231
  %v1497 = vunpack.c.l.b16 %v232
  %v1498 = vunpack.c.h.b16 %v232
  %v1499 = vunpack.c.l.b16 %v233
  %v1500 = vunpack.c.h.b16 %v233
  %v1501 = vunpack.c.l.b16 %v234
  %v1502 = vunpack.c.h.b16 %v234
  %v1503 = vunpack.c.l.b16 %v235
  %v1504 = vunpack.c.h.b16 %v235
  %v1505 = vunpack.c.l.b16 %v236
  %v1506 = vunpack.c.h.b16 %v236
  %v1507 = vunpack.c.l.b16 %v237
  %v1508 = vunpack.c.h.b16 %v237
  %v1509 = vunpack.c.l.b16 %v238
  %v1510 = vunpack.c.h.b16 %v238
  %v1511 = vunpack.c.l.b16 %v239
  %v1512 = vunpack.c.h.b16 %v239
  %v1513 = vunpack.c.l.b16 %v240
  %v1514 = vunpack.c.h.b16 %v240
  %v1515 = vunpack.c.l.b16 %v241
  %v1516 = vunpack.c.h.b16 %v241
  %v1517 = vunpack.c.l.b16 %v242
  %v1518 = vunpack.c.h.b16 %v242
  %v1519 = vunpack.c.l.b16 %v243
  %v1520 = vunpack.c.h.b16 %v243
  %v1521 = vunpack.c.l.b16 %v244
  %v1522 = vunpack.c.h.b16 %v244
  %v1523 = vunpack.c.l.b16 %v245
  %v1524 = vunpack.c.h.b16 %v245
  %v1525 = vunpack.c.l.b16 %v246
  %v1526 = vunpack.c.h.b16 %v246
  %v1527 = vunpack.c.l.b16 %v247
  %v1528 = vunpack.c.h.b16 %v247
  %v1529 = vunpack.c.l.b16 %v248
  %v1530 = vunpack.c.h.b16 %v248
  %v1531 = vunpack.c.l.b16 %v249
  %v1532 = vunpack.c.h.b16 %v249
  %v1533 = vunpack.c.l.b16 %v250
  %v1534 = vunpack.c.h.b16 %v250
  %v1535 = vunpack.c.l.b16 %v251
  %v1536 = vunpack.c.h.b16 %v251
  %v1537 = vunpack.c.l.b16 %v252
  %v1538 = vunpack.c.h.b16 %v252
  %v1539 = vunpack.c.l.b16 %v253
  %v1540 = vunpack.c.h.b16 %v253
  %v1541 = vunpack.c.l.b16 %v254
  %v1542 = vunpack.c.h.b16 %v254
  %v1543 = vunpack.c.l.b16 %v255
  %v1544 = vunpack.c.h.b16 %v255
  %v1545 = vunpack.c.l.b16 %v256
  %v1546 = vunpack.c.h.b16 %v256
  %v1547 = vunpack.c.l.b16 %v257
  %v1548 = vunpack.c.h.b16 %v257
  %v1549 = vunpack.c.l.b16 %v258
  %v1550 = vunpack.c.h.b16 %v258
  %v1551 = vunpack.c.l.b16 %v259
  %v1552 = vunpack.c.h.b16 %v259
  %v1553 = vunpack.c.l.b16 %v260
  %v1554 = vunpack.c.h.b16 %v260
  %v1555 = vunpack.c.l.b16 %v261
  %v1556 = vunpack.c.h.b16 %v261
  %v1557 = vunpack.c.l.b16 %v262
  %v1558 = vunpack.c.h.b16 %v262
  %v1559 = vunpack.c.l.b16 %v263
  %v1560 = vunpack.c.h.b16 %v263
  %v1561 = vunpack.c.l.b16 %v264
  %v1562 = vunpack.c.h.b16 %v264
  %v1563 = vunpack.c.l.b16 %v265
  %v1564 = vunpack.c.h.b16 %v265
  %v1565 = vunpack.c.l.b16 %v266
  %v1566 = vunpack.c.h.b16 %v266
  %v1567 = vunpack.c.l.b16 %v267
  %v1568 = vunpack.c.h.b16 %v267
  %v1569 = vunpack.c.l.b16 %v268
  %v1570 = vunpack.c.h.b16 %v268
  %v1571 = vunpack.c.l.b16 %v269
  %v1572 = vunpack.c.h.b16 %v269
  %v1573 = vunpack.c.l.b16 %v270
  %v1574 = vunpack.c.h.b16 %v270
  %v1575 = vunpack.c.l.b16 %v271
  %v1576 = vunpack.c.h.b16 %v271
  %v1577 = vunpack.c.l.b16 %v272
  %v1578 = vunpack.c.h.b16 %v272
  %v1579 = vunpack.c.l.b16 %v273
  %v1580 = vunpack.c.h.b16 %v273
  %v1581 = vunpack.c.l.b16 %v274
  %v1582 = vunpack.c.h.b16 %v274
  %v1583 = vunpack.c.l.b16 %v275
  %v1584 = vunpack.c.h.b16 %v275
  %v1585 = vunpack.c.l.b16 %v276
  %v1586 = vunpack.c.h.b16 %v276
  %v1587 = vunpack.c.l.b16 %v277
  %v1588 = vunpack.c.h.b16 %v277
  %v1589 = vunpack.c.l.b16 %v278
  %v1590 = vunpack.c.h.b16 %v278
  %v1591 = vunpack.c.l.b16 %v279
  %v1592 = vunpack.c.h.b16 %v279
  %v1593 = vunpack.c.l.b16 %v280
  %v1594 = vunpack.c.h.b16 %v280
  %v1595 = vunpack.c.l.b16 %v281
  %v1596 = vunpack.c.h.b16 %v281
  %v1597 = vunpack.c.l.b16 %v282
  %v1598 = vunpack.c.h.b16 %v282
  %v1599 = vunpack.c.l.b16 %v283
  %v1600 = vunpack.c.h.b16 %v283
  %v1601 = vunpack.c.l.b16 %v284
  %v1602 = vunpack.c.h.b16 %v284
  %v1603 = vunpack.c.l.b16 %v285
  %v1604 = vunpack.c.h.b16 %v285
  %v1605 = vunpack.c.l.b16 %v286
  %v1606 = vunpack.c.h.b16 %v286
  %v1607 = vunpack.c.l.b16 %v287
  %v1608 = vunpack.c.h.b16 %v287
  %v1609 = vunpack.c.l.b16 %v288
  %v1610 = vunpack.c.h.b16 %v288
  %v1611 = vunpack.c.l.b16 %v289
  %v1612 = vunpack.c.h.b16 %v289
  %v1613 = vunpack.c.l.b16 %v290
  %v1614 = vunpack.c.h.b16 %v290
  %v1615 = vunpack.c.l.b16 %v291
  %v1616 = vunpack.c.h.b16 %v291
  %v1617 = vunpack.c.l.b16 %v292
  %v1618 = vunpack.c.h.b16 %v292
  %v1619 = vunpack.c.l.b16 %v293
  %v1620 = vunpack.c.h.b16 %v293
  %v1621 = vunpack.c.l.b16 %v294
  %v1622 = vunpack.c.h.b16 %v294
  %v1623 = vunpack.c.l.b16 %v295
  %v1624 = vunpack.c.h.b16 %v295
  %v1625 = vunpack.c.l.b16 %v296
  %v1626 = vunpack.c.h.b16 %v296
  %v1627 = vunpack.c.l.b16 %v297
  %v1628 = vunpack.c.h.b16 %v297
  %v1629 = vunpack.c.l.b16 %v298
  %v1630 = vunpack.c.h.b16 %v298
  %v1631 = vunpack.c.l.b16 %v299
  %v1632 = vunpack.c.h.b16 %v299
  %v1633 = vunpack.c.l.b16 %v300
  %v1634 = vunpack.c.h.b16 %v300
  %v1635 = vunpack.c.l.b16 %v301
  %v1636 = vunpack.c.h.b16 %v301
  %v1637 = vunpack.c.l.b16 %v302
  %v1638 = vunpack.c.h.b16 %v302
  %v1639 = vunpack.c.l.b16 %v303
  %v1640 = vunpack.c.h.b16 %v303
  %v1641 = vunpack.c.l.b16 %v304
  %v1642 = vunpack.c.h.b16 %v304
  %v1643 = vunpack.c.l.b16 %v305
  %v1644 = vunpack.c.h.b16 %v305
  %v1645 = vunpack.c.l.b16 %v306
  %v1646 = vunpack.c.h.b16 %v306
  %v1647 = vunpack.c.l.b16 %v307
  %v1648 = vunpack.c.h.b16 %v307
  %v1649 = vunpack.c.l.b16 %v308
  %v1650 = vunpack.c.h.b16 %v308
  %v1651 = vunpack.c.l.b16 %v309
  %v1652 = vunpack.c.h.b16 %v309
  %v1653 = vunpack.c.l.b16 %v310
  %v1654 = vunpack.c.h.b16 %v310
  %v1655 = vunpack.c.l.b16 %v311
  %v1656 = vunpack.c.h.b16 %v311
  %v1657 = vunpack.c.l.b16 %v312
  %v1658 = vunpack.c.h.b16 %v312
  %v1659 = vunpack.c.l.b16 %v313
  %v1660 = vunpack.c.h.b16 %v313
  %v1661 = vunpack.c.l.b16 %v314
  %v1662 = vunpack.c.h.b16 %v314
  %v1663 = vunpack.c.l.b16 %v315
  %v1664 = vunpack.c.h.b16 %v315
  %v1665 = vunpack.c.l.b16 %v316
  %v1666 = vunpack.c.h.b16 %v316
  %v1667 = vunpack.c.l.b16 %v317
  %v1668 = vunpack.c.h.b16 %v317
  %v1669 = vunpack.c.l.b16 %v318
  %v1670 = vunpack.c.h.b16 %v318
  %v1671 = vunpack.c.l.b16 %v319
  %v1672 = vunpack.c.h.b16 %v319
  %v1673 = vunpack.c.l.b16 %v320
  %v1674 = vunpack.c.h.b16 %v320
  %v1675 = vunpack.c.l.b16 %v321
  %v1676 = vunpack.c.h.b16 %v321
  %v1677 = vunpack.c.l.b16 %v322
  %v1678 = vunpack.c.h.b16 %v322
  %v1679 = vunpack.c.l.b16 %v323
  %v1680 = vunpack.c.h.b16 %v323
  %v1681 = vunpack.c.l.b16 %v324
  %v1682 = vunpack.c.h.b16 %v324
  %v1683 = vunpack.c.l.b16 %v325
  %v1684 = vunpack.c.h.b16 %v325
  %v1685 = vunpack.c.l.b16 %v326
  %v1686 = vunpack.c.h.b16 %v326
  %v1687 = vunpack.c.l.b16 %v327
  %v1688 = vunpack.c.h.b16 %v327
  %v1689 = vunpack.c.l.b16 %v328
  %v1690 = vunpack.c.h.b16 %v328
  %v1691 = vunpack.c.l.b16 %v329
  %v1692 = vunpack.c.h.b16 %v329
  %v1693 = vunpack.c.l.b16 %v330
  %v1694 = vunpack.c.h.b16 %v330
  %v1695 = vunpack.c.l.b16 %v331
  %v1696 = vunpack.c.h.b16 %v331
  %v1697 = vunpack.c.l.b16 %v332
  %v1698 = vunpack.c.h.b16 %v332
  %v1699 = vunpack.c.l.b16 %v333
  %v1700 = vunpack.c.h.b16 %v333
  %v1701 = vunpack.c.l.b16 %v334
  %v1702 = vunpack.c.h.b16 %v334
  %v1703 = vunpack.c.l.b16 %v335
  %v1704 = vunpack.c.h.b16 %v335
  %v1705 = vunpack.c.l.b16 %v336
  %v1706 = vunpack.c.h.b16 %v336
  %v1707 = vunpack.c.l.b16 %v337
  %v1708 = vunpack.c.h.b16 %v337
  %v1709 = vunpack.c.l.b16 %v338
  %v1710 = vunpack.c.h.b16 %v338
  %v1711 = vunpack.c.l.b16 %v339
  %v1712 = vunpack.c.h.b16 %v339
  %v1713 = vunpack.c.l.b16 %v340
  %v1714 = vunpack.c.h.b16 %v340
  %v1715 = vunpack.c.l.b16 %v341
  %v1716 = vunpack.c.h.b16 %v341
  %v1717 = vunpack.c.l.b16 %v342
  %v1718 = vunpack.c.h.b16 %v342
  %v1719 = vunpack.c.l.b16 %v343
  %v1720 = vunpack.c.h.b16 %v343
  %v1721 = vunpack.c.l.b16 %v344
  %v1722 = vunpack.c.h.b16 %v344
  %v1723 = vunpack.c.l.b16 %v345
  %v1724 = vunpack.c.h.b16 %v345
  %v1725 = vunpack.c.l.b16 %v346
  %v1726 = vunpack.c.h.b16 %v346
  %v1727 = vunpack.c.l.b16 %v347
  %v1728 = vunpack.c.h.b16 %v347
  %v1729 = vunpack.c.l.b16 %v348
  %v1730 = vunpack.c.h.b16 %v348
  %v1731 = vunpack.c.l.b16 %v349
  %v1732 = vunpack.c.h.b16 %v349
  %v1733 = vunpack.c.l.b16 %v350
  %v1734 = vunpack.c.h.b16 %v350
  %v1735 = vunpack.c.l.b16 %v351
  %v1736 = vunpack.c.h.b16 %v351
  %v1737 = vunpack.c.l.b16 %v352
  %v1738 = vunpack.c.h.b16 %v352
  %v1739 = vunpack.c.l.b16 %v353
  %v1740 = vunpack.c.h.b16 %v353
  %v1741 = vunpack.c.l.b16 %v354
  %v1742 = vunpack.c.h.b16 %v354
  %v1743 = vunpack.c.l.b16 %v355
  %v1744 = vunpack.c.h.b16 %v355
  %v1745 = vunpack.c.l.b16 %v356
  %v1746 = vunpack.c.h.b16 %v356
  %v1747 = vunpack.c.l.b16 %v357
  %v1748 = vunpack.c.h.b16 %v357
  %v1749 = vunpack.c.l.b16 %v358
  %v1750 = vunpack.c.h.b16 %v358
  %v1751 = vunpack.c.l.b16 %v359
  %v1752 = vunpack.c.h.b16 %v359
  %v1753 = vunpack.c.l.b16 %v360
  %v1754 = vunpack.c.h.b16 %v360
  %v1755 = vunpack.c.l.b16 %v361
  %v1756 = vunpack.c.h.b16 %v361
  %v1757 = vunpack.c.l.b16 %v362
  %v1758 = vunpack.c.h.b16 %v362
  %v1759 = vunpack.c.l.b16 %v363
  %v1760 = vunpack.c.h.b16 %v363
  %v1761 = vunpack.c.l.b16 %v364
  %v1762 = vunpack.c.h.b16 %v364
  %v1763 = vunpack.c.l.b16 %v365
  %v1764 = vunpack.c.h.b16 %v365
  %v1765 = vunpack.c.l.b16 %v366
  %v1766 = vunpack.c.h.b16 %v366
  %v1767 = vunpack.c.l.b16 %v367
  %v1768 = vunpack.c.h.b16 %v367
  %v1769 = vunpack.c.l.b16 %v368
  %v1770 = vunpack.c.h.b16 %v368
  %v1771 = vunpack.c.l.b16 %v369
  %v1772 = vunpack.c.h.b16 %v369
  %v1773 = vunpack.c.l.b16 %v370
  %v1774 = vunpack.c.h.b16 %v370
  %v1775 = vunpack.c.l.b16 %v371
  %v1776 = vunpack.c.h.b16 %v371
  %v1777 = vunpack.c.l.b16 %v372
  %v1778 = vunpack.c.h.b16 %v372
  %v1779 = vunpack.c.l.b16 %v373
  %v1780 = vunpack.c.h.b16 %v373
  %v1781 = vunpack.c.l.b16 %v374
  %v1782 = vunpack.c.h.b16 %v374
  %v1783 = vunpack.c.l.b16 %v375
  %v1784 = vunpack.c.h.b16 %v375
  %v1785 = vunpack.c.l.b16 %v376
  %v1786 = vunpack.c.h.b16 %v376
  %v1787 = vunpack.c.l.b16 %v377
  %v1788 = vunpack.c.h.b16 %v377
  %v1789 = vunpack.c.l.b16 %v378
  %v1790 = vunpack.c.h.b16 %v378
  %v1791 = vunpack.c.l.b16 %v379
  %v1792 = vunpack.c.h.b16 %v379
  %v1793 = vunpack.c.l.b16 %v380
  %v1794 = vunpack.c.h.b16 %v380
  %v1795 = vunpack.c.l.b16 %v381
  %v1796 = vunpack.c.h.b16 %v381
  %v1797 = vunpack.c.l.b16 %v382
  %v1798 = vunpack.c.h.b16 %v382
  %v1799 = vunpack.c.l.b16 %v383
  %v1800 = vunpack.c.h.b16 %v383
  %v1801 = vunpack.c.l.b16 %v384
  %v1802 = vunpack.c.h.b16 %v384
  %v1803 = vunpack.c.l.b16 %v385
  %v1804 = vunpack.c.h.b16 %v385
  %v1805 = vunpack.c.l.b16 %v386
  %v1806 = vunpack.c.h.b16 %v386
  %v1807 = vunpack.c.l.b16 %v387
  %v1808 = vunpack.c.h.b16 %v387
  %v1809 = vunpack.c.l.b16 %v388
  %v1810 = vunpack.c.h.b16 %v388
  %v1811 = vunpack.c.l.b16 %v389
  %v1812 = vunpack.c.h.b16 %v389
  %v1813 = vunpack.c.l.b16 %v390
  %v1814 = vunpack.c.h.b16 %v390
  %v1815 = vunpack.c.l.b16 %v391
  %v1816 = vunpack.c.h.b16 %v391
  %v1817 = vunpack.c.l.b16 %v392
  %v1818 = vunpack.c.h.b16 %v392
  %v1819 = vunpack.c.l.b16 %v393
  %v1820 = vunpack.c.h.b16 %v393
  %v1821 = vunpack.c.l.b16 %v394
  %v1822 = vunpack.c.h.b16 %v394
  %v1823 = vunpack.c.l.b16 %v395
  %v1824 = vunpack.c.h.b16 %v395
  %v1825 = vunpack.c.l.b16 %v396
  %v1826 = vunpack.c.h.b16 %v396
  %v1827 = vunpack.c.l.b16 %v397
  %v1828 = vunpack.c.h.b16 %v397
  %v1829 = vunpack.c.l.b16 %v398
  %v1830 = vunpack.c.h.b16 %v398
  %v1831 = vunpack.c.l.b16 %v399
  %v1832 = vunpack.c.h.b16 %v399
  %v1833 = vunpack.c.l.b16 %v400
  %v1834 = vunpack.c.h.b16 %v400
  %v1835 = vunpack.c.l.b16 %v401
  %v1836 = vunpack.c.h.b16 %v401
  %v1837 = vunpack.c.l.b16 %v402
  %v1838 = vunpack.c.h.b16 %v402
  %v1839 = vunpack.c.l.b16 %v403
  %v1840 = vunpack.c.h.b16 %v403
  %v1841 = vunpack.c.l.b16 %v404
  %v1842 = vunpack.c.h.b16 %v404
  %v1843 = vunpack.c.l.b16 %v405
  %v1844 = vunpack.c.h.b16 %v405
  %v1845 = vunpack.c.l.b16 %v406
  %v1846 = vunpack.c.h.b16 %v406
  %v1847 = vunpack.c.l.b16 %v407
  %v1848 = vunpack.c.h.b16 %v407
  %v1849 = vunpack.c.l.b16 %v408
  %v1850 = vunpack.c.h.b16 %v408
  %v1851 = vunpack.c.l.b16 %v409
  %v1852 = vunpack.c.h.b16 %v409
  %v1853 = vunpack.c.l.b16 %v410
  %v1854 = vunpack.c.h.b16 %v410
  %v1855 = vunpack.c.l.b16 %v411
  %v1856 = vunpack.c.h.b16 %v411
  %v1857 = vunpack.c.l.b16 %v412
  %v1858 = vunpack.c.h.b16 %v412
  %v1859 = vunpack.c.l.b16 %v413
  %v1860 = vunpack.c.h.b16 %v413
  %v1861 = vunpack.c.l.b16 %v414
  %v1862 = vunpack.c.h.b16 %v414
  %v1863 = vunpack.c.l.b16 %v415
  %v1864 = vunpack.c.h.b16 %v415
  %v1865 = vunpack.c.l.b16 %v416
  %v1866 = vunpack.c.h.b16 %v416
  %v1867 = vunpack.c.l.b16 %v417
  %v1868 = vunpack.c.h.b16 %v417
  %v1869 = vunpack.c.l.b16 %v418
  %v1870 = vunpack.c.h.b16 %v418
  %v1871 = vunpack.c.l.b16 %v419
  %v1872 = vunpack.c.h.b16 %v419
  %v1873 = vunpack.c.l.b16 %v420
  %v1874 = vunpack.c.h.b16 %v420
  %v1875 = vunpack.c.l.b16 %v421
  %v1876 = vunpack.c.h.b16 %v421
  %v1877 = vunpack.c.l.b16 %v422
  %v1878 = vunpack.c.h.b16 %v422
  %v1879 = vunpack.c.l.b16 %v423
  %v1880 = vunpack.c.h.b16 %v423
  %v1881 = vunpack.c.l.b16 %v424
  %v1882 = vunpack.c.h.b16 %v424
  %v1883 = vunpack.c.l.b16 %v425
  %v1884 = vunpack.c.h.b16 %v425
  %v1885 = vunpack.c.l.b16 %v426
  %v1886 = vunpack.c.h.b16 %v426
  %v1887 = vunpack.c.l.b16 %v427
  %v1888 = vunpack.c.h.b16 %v427
  %v1889 = vunpack.c.l.b16 %v428
  %v1890 = vunpack.c.h.b16 %v428
  %v1891 = vunpack.c.l.b16 %v429
  %v1892 = vunpack.c.h.b16 %v429
  %v1893 = vunpack.c.l.b16 %v430
  %v1894 = vunpack.c.h.b16 %v430
  %v1895 = vunpack.c.l.b16 %v431
  %v1896 = vunpack.c.h.b16 %v431
  %v1897 = vunpack.c.l.b16 %v432
  %v1898 = vunpack.c.h.b16 %v432
  %v1899 = vunpack.c.l.b16 %v433
  %v1900 = vunpack.c.h.b16 %v433
  %v1901 = vunpack.c.l.b16 %v434
  %v1902 = vunpack.c.h.b16 %v434
  %v1903 = vunpack.c.l.b16 %v435
  %v1904 = vunpack.c.h.b16 %v435
  %v1905 = vunpack.c.l.b16 %v436
  %v1906 = vunpack.c.h.b16 %v436
  %v1907 = vunpack.c.l.b16 %v437
  %v1908 = vunpack.c.h.b16 %v437
  %v1909 = vunpack.c.l.b16 %v438
  %v1910 = vunpack.c.h.b16 %v438
  %v1911 = vunpack.c.l.b16 %v439
  %v1912 = vunpack.c.h.b16 %v439
  %v1913 = vunpack.c.l.b16 %v440
  %v1914 = vunpack.c.h.b16 %v440
  %v1915 = vunpack.c.l.b16 %v441
  %v1916 = vunpack.c.h.b16 %v441
  %v1917 = vunpack.c.l.b16 %v442
  %v1918 = vunpack.c.h.b16 %v442
  %v1919 = vunpack.c.l.b16 %v443
  %v1920 = vunpack.c.h.b16 %v443
  %v1921 = vunpack.c.l.b16 %v444
  %v1922 = vunpack.c.h.b16 %v444
  %v1923 = vunpack.c.l.b16 %v445
  %v1924 = vunpack.c.h.b16 %v445
  %v1925 = vunpack.c.l.b16 %v446
  %v1926 = vunpack.c.h.b16 %v446
  %v1927 = vunpack.c.l.b16 %v447
  %v1928 = vunpack.c.h.b16 %v447
  %v1929 = vunpack.c.l.b16 %v448
  %v1930 = vunpack.c.h.b16 %v448
  %v1931 = vunpack.c.l.b16 %v449
  %v1932 = vunpack.c.h.b16 %v449
  %v1933 = vunpack.c.l.b16 %v450
  %v1934 = vunpack.c.h.b16 %v450
  %v1935 = vunpack.c.l.b16 %v451
  %v1936 = vunpack.c.h.b16 %v451
  %v1937 = vunpack.c.l.b16 %v452
  %v1938 = vunpack.c.h.b16 %v452
  %v1939 = vunpack.c.l.b16 %v453
  %v1940 = vunpack.c.h.b16 %v453
  %v1941 = vunpack.c.l.b16 %v454
  %v1942 = vunpack.c.h.b16 %v454
  %v1943 = vunpack.c.l.b16 %v455
  %v1944 = vunpack.c.h.b16 %v455
  %v1945 = vunpack.c.l.b16 %v456
  %v1946 = vunpack.c.h.b16 %v456
  %v1947 = vunpack.c.l.b16 %v457
  %v1948 = vunpack.c.h.b16 %v457
  %v1949 = vunpack.c.l.b16 %v458
  %v1950 = vunpack.c.h.b16 %v458
  %v1951 = vunpack.c.l.b16 %v459
  %v1952 = vunpack.c.h.b16 %v459
  %v1953 = vunpack.c.l.b16 %v460
  %v1954 = vunpack.c.h.b16 %v460
  %v1955 = vunpack.c.l.b16 %v461
  %v1956 = vunpack.c.h.b16 %v461
  %v1957 = vunpack.c.l.b16 %v462
  %v1958 = vunpack.c.h.b16 %v462
  %v1959 = vunpack.c.l.b16 %v463
  %v1960 = vunpack.c.h.b16 %v463
  %v1961 = vunpack.c.l.b16 %v464
  %v1962 = vunpack.c.h.b16 %v464
  %v1963 = vunpack.c.l.b16 %v465
  %v1964 = vunpack.c.h.b16 %v465
  %v1965 = vunpack.c.l.b16 %v466
  %v1966 = vunpack.c.h.b16 %v466
  %v1967 = vunpack.c.l.b16 %v467
  %v1968 = vunpack.c.h.b16 %v467
  %v1969 = vunpack.c.l.b16 %v468
  %v1970 = vunpack.c.h.b16 %v468
  %v1971 = vunpack.c.l.b16 %v469
  %v1972 = vunpack.c.h.b16 %v469
  %v1973 = vunpack.c.l.b16 %v470
  %v1974 = vunpack.c.h.b16 %v470
  %v1975 = vunpack.c.l.b16 %v471
  %v1976 = vunpack.c.h.b16 %v471
  %v1977 = vunpack.c.l.b16 %v472
  %v1978 = vunpack.c.h.b16 %v472
  %v1979 = vunpack.c.l.b16 %v473
  %v1980 = vunpack.c.h.b16 %v473
  %v1981 = vunpack.c.l.b16 %v474
  %v1982 = vunpack.c.h.b16 %v474
  %v1983 = vunpack.c.l.b16 %v475
  %v1984 = vunpack.c.h.b16 %v475
  %v1985 = vunpack.c.l.b16 %v476
  %v1986 = vunpack.c.h.b16 %v476
  %v1987 = vunpack.c.l.b16 %v477
  %v1988 = vunpack.c.h.b16 %v477
  %v1989 = vunpack.c.l.b16 %v478
  %v1990 = vunpack.c.h.b16 %v478
  %v1991 = vunpack.c.l.b16 %v479
  %v1992 = vunpack.c.h.b16 %v479
  %v1993 = vunpack.c.l.b16 %v480
  %v1994 = vunpack.c.h.b16 %v480
  %v1995 = vunpack.c.l.b16 %v481
  %v1996 = vunpack.c.h.b16 %v481
  %v1997 = vunpack.c.l.b16 %v482
  %v1998 = vunpack.c.h.b16 %v482
  %v1999 = vunpack.c.l.b16 %v483
  %v2000 = vunpack.c.h.b16 %v483
  %v2001 = vunpack.c.l.b16 %v484
  %v2002 = vunpack.c.h.b16 %v484
  %v2003 = vunpack.c.l.b16 %v485
  %v2004 = vunpack.c.h.b16 %v485
  %v2005 = vunpack.c.l.b16 %v486
  %v2006 = vunpack.c.h.b16 %v486
  %v2007 = vunpack.c.l.b16 %v487
  %v2008 = vunpack.c.h.b16 %v487
  %v2009 = vunpack.c.l.b16 %v488
  %v2010 = vunpack.c.h.b16 %v488
  %v2011 = vunpack.c.l.b16 %v489
  %v2012 = vunpack.c.h.b16 %v489
  %v2013 = vunpack.c.l.b16 %v490
  %v2014 = vunpack.c.h.b16 %v490
  %v2015 = vunpack.c.l.b16 %v491
  %v2016 = vunpack.c.h.b16 %v491
  %v2017 = vunpack.c.l.b16 %v492
  %v2018 = vunpack.c.h.b16 %v492
  %v2019 = vunpack.c.l.b16 %v493
  %v2020 = vunpack.c.h.b16 %v493
  %v2021 = vunpack.c.l.b16 %v494
  %v2022 = vunpack.c.h.b16 %v494
  %v2023 = vunpack.c.l.b16 %v495
  %v2024 = vunpack.c.h.b16 %v495
  %v2025 = vunpack.c.l.b16 %v496
  %v2026 = vunpack.c.h.b16 %v496
  %v2027 = vunpack.c.l.b16 %v497
  %v2028 = vunpack.c.h.b16 %v497
  %v2029 = vunpack.c.l.b16 %v498
  %v2030 = vunpack.c.h.b16 %v498
  %v2031 = vunpack.c.l.b16 %v499
  %v2032 = vunpack.c.h.b16 %v499
  %v2033 = vunpack.c.l.b16 %v500
  %v2034 = vunpack.c.h.b16 %v500
  %v2035 = vunpack.c.l.b16 %v501
  %v2036 = vunpack.c.h.b16 %v501
  %v2037 = vunpack.c.l.b16 %v502
  %v2038 = vunpack.c.h.b16 %v502
  %v2039 = vunpack.c.l.b16 %v503
  %v2040 = vunpack.c.h.b16 %v503
  %v2041 = vunpack.c.l.b16 %v504
  %v2042 = vunpack.c.h.b16 %v504
  %v2043 = vunpack.c.l.b16 %v505
  %v2044 = vunpack.c.h.b16 %v505
  %v2045 = vunpack.c.l.b16 %v506
  %v2046 = vunpack.c.h.b16 %v506
  %v2047 = vunpack.c.l.b16 %v507
  %v2048 = vunpack.c.h.b16 %v507
  %v2049 = vunpack.c.l.b16 %v508
  %v2050 = vunpack.c.h.b16 %v508
  %v2051 = vunpack.c.l.b16 %v509
  %v2052 = vunpack.c.h.b16 %v509
  %v2053 = vunpack.c.l.b16 %v510
  %v2054 = vunpack.c.h.b16 %v510
  %v2055 = vunpack.c.l.b16 %v511
  %v2056 = vunpack.c.h.b16 %v511
  %v2057 = vunpack.c.l.b16 %v512
  %v2058 = vunpack.c.h.b16 %v512
  %v2059 = vunpack.c.l.b16 %v513
  %v2060 = vunpack.c.h.b16 %v513
  %v2061 = vunpack.c.l.b16 %v514
  %v2062 = vunpack.c.h.b16 %v514
  %v2063 = vunpack.c.l.b16 %v515
  %v2064 = vunpack.c.h.b16 %v515
  %v2065 = vunpack.c.l.b16 %v516
  %v2066 = vunpack.c.h.b16 %v516
  %v2067 = vunpack.c.l.b16 %v517
  %v2068 = vunpack.c.h.b16 %v517
  %v2069 = vunpack.c.l.b16 %v518
  %v2070 = vunpack.c.h.b16 %v518
  %v2071 = vunpack.c.l.b16 %v519
  %v2072 = vunpack.c.h.b16 %v519
  %v2073 = vunpack.c.l.b16 %v520
  %v2074 = vunpack.c.h.b16 %v520
  %v2075 = vunpack.c.l.b16 %v521
  %v2076 = vunpack.c.h.b16 %v521
  %v2077 = vunpack.c.l.b16 %v522
  %v2078 = vunpack.c.h.b16 %v522
  %v2079 = vunpack.c.l.b16 %v523
  %v2080 = vunpack.c.h.b16 %v523
  %v2081 = vunpack.c.l.b16 %v524
  %v2082 = vunpack.c.h.b16 %v524
  %v2083 = vunpack.c.l.b16 %v525
  %v2084 = vunpack.c.h.b16 %v525
  %v2085 = vunpack.c.l.b16 %v526
  %v2086 = vunpack.c.h.b16 %v526
  %v2087 = vunpack.c.l.b16 %v527
  %v2088 = vunpack.c.h.b16 %v527
  %v2089 = vunpack.c.l.b16 %v528
  %v2090 = vunpack.c.h.b16 %v528
  %v2091 = vunpack.c.l.b16 %v529
  %v2092 = vunpack.c.h.b16 %v529
  %v2093 = vunpack.c.l.b16 %v530
  %v2094 = vunpack.c.h.b16 %v530
  %v2095 = vunpack.c.l.b16 %v531
  %v2096 = vunpack.c.h.b16 %v531
  %v2097 = vunpack.c.l.b16 %v532
  %v2098 = vunpack.c.h.b16 %v532
  %v2099 = vunpack.c.l.b16 %v533
  %v2100 = vunpack.c.h.b16 %v533
  %v2101 = vunpack.c.l.b16 %v534
  %v2102 = vunpack.c.h.b16 %v534
  %v2103 = vunpack.c.l.b16 %v535
  %v2104 = vunpack.c.h.b16 %v535
  %v2105 = vunpack.c.l.b16 %v536
  %v2106 = vunpack.c.h.b16 %v536
  %v2107 = vunpack.c.l.b16 %v537
  %v2108 = vunpack.c.h.b16 %v537
  %v2109 = vunpack.c.l.b16 %v538
  %v2110 = vunpack.c.h.b16 %v538
  %v2111 = vunpack.c.l.b16 %v539
  %v2112 = vunpack.c.h.b16 %v539
  %v2113 = vunpack.c.l.b16 %v540
  %v2114 = vunpack.c.h.b16 %v540
  %v2115 = vunpack.c.l.b16 %v541
  %v2116 = vunpack.c.h.b16 %v541
  %v2117 = vunpack.c.l.b16 %v542
  %v2118 = vunpack.c.h.b16 %v542
  %v2119 = vpack.c.b16 %v1103, %v1095
  %v2120 = vpack.c.b16 %v1104, %v1096
  %v2121 = vpack.c.b16 %v1105, %v1097
  %v2122 = vpack.c.b16 %v1106, %v1098
  %v2123 = vpack.c.b16 %v1107, %v1099
  %v2124 = vpack.c.b16 %v1108, %v1100
  %v2125 = vpack.c.b16 %v1109, %v1101
  %v2126 = vpack.c.b16 %v1110, %v1102
  %v2127 = vpack.c.b16 %v1119, %v1111
  %v2128 = vpack.c.b16 %v1120, %v1112
  %v2129 = vpack.c.b16 %v1121, %v1113
  %v2130 = vpack.c.b16 %v1122, %v1114
  %v2131 = vpack.c.b16 %v1123, %v1115
  %v2132 = vpack.c.b16 %v1124, %v1116
  %v2133 = vpack.c.b16 %v1125, %v1117
  %v2134 = vpack.c.b16 %v1126, %v1118
  %v2135 = vpack.c.b16 %v1135, %v1127
  %v2136 = vpack.c.b16 %v1136, %v1128
  %v2137 = vpack.c.b16 %v1137, %v1129
  %v2138 = vpack.c.b16 %v1138, %v1130
  %v2139 = vpack.c.b16 %v1139, %v1131
  %v2140 = vpack.c.b16 %v1140, %v1132
  %v2141 = vpack.c.b16 %v1141, %v1133
  %v2142 = vpack.c.b16 %v1142, %v1134
  %v2143 = vpack.c.b16 %v1151, %v1143
  %v2144 = vpack.c.b16 %v1152, %v1144
  %v2145 = vpack.c.b16 %v1153, %v1145
  %v2146 = vpack.c.b16 %v1154, %v1146
  %v2147 = vpack.c.b16 %v1155, %v1147
  %v2148 = vpack.c.b16 %v1156, %v1148
  %v2149 = vpack.c.b16 %v1157, %v1149
  %v2150 = vpack.c.b16 %v1158, %v1150
  %v2151 = vpack.c.b16 %v1167, %v1159
  %v2152 = vpack.c.b16 %v1168, %v1160
  %v2153 = vpack.c.b16 %v1169, %v1161
  %v2154 = vpack.c.b16 %v1170, %v1162
  %v2155 = vpack.c.b16 %v1171, %v1163
  %v2156 = vpack.c.b16 %v1172, %v1164
  %v2157 = vpack.c.b16 %v1173, %v1165
  %v2158 = vpack.c.b16 %v1174, %v1166
  %v2159 = vpack.c.b16 %v1183, %v1175
  %v2160 = vpack.c.b16 %v1184, %v1176
  %v2161 = vpack.c.b16 %v1185, %v1177
  %v2162 = vpack.c.b16 %v1186, %v1178
  %v2163 = vpack.c.b16 %v1187, %v1179
  %v2164 = vpack.c.b16 %v1188, %v1180
  %v2165 = vpack.c.b16 %v1189, %v1181
  %v2166 = vpack.c.b16 %v1190, %v1182
  %v2167 = vpack.c.b16 %v1199, %v1191
  %v2168 = vpack.c.b16 %v1200, %v1192
  %v2169 = vpack.c.b16 %v1201, %v1193
  %v2170 = vpack.c.b16 %v1202, %v1194
  %v2171 = vpack.c.b16 %v1203, %v1195
  %v2172 = vpack.c.b16 %v1204, %v1196
  %v2173 = vpack.c.b16 %v1205, %v1197
  %v2174 = vpack.c.b16 %v1206, %v1198
  %v2175 = vpack.c.b16 %v1215, %v1207
  %v2176 = vpack.c.b16 %v1216, %v1208
  %v2177 = vpack.c.b16 %v1217, %v1209
  %v2178 = vpack.c.b16 %v1218, %v1210
  %v2179 = vpack.c.b16 %v1219, %v1211
  %v2180 = vpack.c.b16 %v1220, %v1212
  %v2181 = vpack.c.b16 %v1221, %v1213
  %v2182 = vpack.c.b16 %v1222, %v1214
  %v2183 = vpack.c.b16 %v1231, %v1223
  %v2184 = vpack.c.b16 %v1232, %v1224
  %v2185 = vpack.c.b16 %v1233, %v1225
  %v2186 = vpack.c.b16 %v1234, %v1226
  %v2187 = vpack.c.b16 %v1235, %v1227
  %v2188 = vpack.c.b16 %v1236, %v1228
  %v2189 = vpack.c.b16 %v1237, %v1229
  %v2190 = vpack.c.b16 %v1238, %v1230
  %v2191 = vpack.c.b16 %v1247, %v1239
  %v2192 = vpack.c.b16 %v1248, %v1240
  %v2193 = vpack.c.b16 %v1249, %v1241
  %v2194 = vpack.c.b16 %v1250, %v1242
  %v2195 = vpack.c.b16 %v1251, %v1243
  %v2196 = vpack.c.b16 %v1252, %v1244
  %v2197 = vpack.c.b16 %v1253, %v1245
  %v2198 = vpack.c.b16 %v1254, %v1246
  %v2199 = vpack.c.b16 %v1263, %v1255
  %v2200 = vpack.c.b16 %v1264, %v1256
  %v2201 = vpack.c.b16 %v1265, %v1257
  %v2202 = vpack.c.b16 %v1266, %v1258
  %v2203 = vpack.c.b16 %v1267, %v1259
  %v2204 = vpack.c.b16 %v1268, %v1260
  %v2205 = vpack.c.b16 %v1269, %v1261
  %v2206 = vpack.c.b16 %v1270, %v1262
  %v2207 = vpack.c.b16 %v1279, %v1271
  %v2208 = vpack.c.b16 %v1280, %v1272
  %v2209 = vpack.c.b16 %v1281, %v1273
  %v2210 = vpack.c.b16 %v1282, %v1274
  %v2211 = vpack.c.b16 %v1283, %v1275
  %v2212 = vpack.c.b16 %v1284, %v1276
  %v2213 = vpack.c.b16 %v1285, %v1277
  %v2214 = vpack.c.b16 %v1286, %v1278
  %v2215 = vpack.c.b16 %v1295, %v1287
  %v2216 = vpack.c.b16 %v1296, %v1288
  %v2217 = vpack.c.b16 %v1297, %v1289
  %v2218 = vpack.c.b16 %v1298, %v1290
  %v2219 = vpack.c.b16 %v1299, %v1291
  %v2220 = vpack.c.b16 %v1300, %v1292
  %v2221 = vpack.c.b16 %v1301, %v1293
  %v2222 = vpack.c.b16 %v1302, %v1294
  %v2223 = vpack.c.b16 %v1311, %v1303
  %v2224 = vpack.c.b16 %v1312, %v1304
  %v2225 = vpack.c.b16 %v1313, %v1305
  %v2226 = vpack.c.b16 %v1314, %v1306
  %v2227 = vpack.c.b16 %v1315, %v1307
  %v2228 = vpack.c.b16 %v1316, %v1308
  %v2229 = vpack.c.b16 %v1317, %v1309
  %v2230 = vpack.c.b16 %v1318, %v1310
  %v2231 = vpack.c.b16 %v1327, %v1319
  %v2232 = vpack.c.b16 %v1328, %v1320
  %v2233 = vpack.c.b16 %v1329, %v1321
  %v2234 = vpack.c.b16 %v1330, %v1322
  %v2235 = vpack.c.b16 %v1331, %v1323
  %v2236 = vpack.c.b16 %v1332, %v1324
  %v2237 = vpack.c.b16 %v1333, %v1325
  %v2238 = vpack.c.b16 %v1334, %v1326
  %v2239 = vpack.c.b16 %v1343, %v1335
  %v2240 = vpack.c.b16 %v1344, %v1336
  %v2241 = vpack.c.b16 %v1345, %v1337
  %v2242 = vpack.c.b16 %v1346, %v1338
  %v2243 = vpack.c.b16 %v1347, %v1339
  %v2244 = vpack.c.b16 %v1348, %v1340
  %v2245 = vpack.c.b16 %v1349, %v1341
  %v2246 = vpack.c.b16 %v1350, %v1342
  %v2247 = vpack.c.b16 %v1359, %v1351
  %v2248 = vpack.c.b16 %v1360, %v1352
  %v2249 = vpack.c.b16 %v1361, %v1353
  %v2250 = vpack.c.b16 %v1362, %v1354
  %v2251 = vpack.c.b16 %v1363, %v1355
  %v2252 = vpack.c.b16 %v1364, %v1356
  %v2253 = vpack.c.b16 %v1365, %v1357
  %v2254 = vpack.c.b16 %v1366, %v1358
  %v2255 = vpack.c.b16 %v1375, %v1367
  %v2256 = vpack.c.b16 %v1376, %v1368
  %v2257 = vpack.c.b16 %v1377, %v1369
  %v2258 = vpack.c.b16 %v1378, %v1370
  %v2259 = vpack.c.b16 %v1379, %v1371
  %v2260 = vpack.c.b16 %v1380, %v1372
  %v2261 = vpack.c.b16 %v1381, %v1373
  %v2262 = vpack.c.b16 %v1382, %v1374
  %v2263 = vpack.c.b16 %v1391, %v1383
  %v2264 = vpack.c.b16 %v1392, %v1384
  %v2265 = vpack.c.b16 %v1393, %v1385
  %v2266 = vpack.c.b16 %v1394, %v1386
  %v2267 = vpack.c.b16 %v1395, %v1387
  %v2268 = vpack.c.b16 %v1396, %v1388
  %v2269 = vpack.c.b16 %v1397, %v1389
  %v2270 = vpack.c.b16 %v1398, %v1390
  %v2271 = vpack.c.b16 %v1407, %v1399
  %v2272 = vpack.c.b16 %v1408, %v1400
  %v2273 = vpack.c.b16 %v1409, %v1401
  %v2274 = vpack.c.b16 %v1410, %v1402
  %v2275 = vpack.c.b16 %v1411, %v1403
  %v2276 = vpack.c.b16 %v1412, %v1404
  %v2277 = vpack.c.b16 %v1413, %v1405
  %v2278 = vpack.c.b16 %v1414, %v1406
  %v2279 = vpack.c.b16 %v1423, %v1415
  %v2280 = vpack.c.b16 %v1424, %v1416
  %v2281 = vpack.c.b16 %v1425, %v1417
  %v2282 = vpack.c.b16 %v1426, %v1418
  %v2283 = vpack.c.b16 %v1427, %v1419
  %v2284 = vpack.c.b16 %v1428, %v1420
  %v2285 = vpack.c.b16 %v1429, %v1421
  %v2286 = vpack.c.b16 %v1430, %v1422
  %v2287 = vpack.c.b16 %v1439, %v1431
  %v2288 = vpack.c.b16 %v1440, %v1432
  %v2289 = vpack.c.b16 %v1441, %v1433
  %v2290 = vpack.c.b16 %v1442, %v1434
  %v2291 = vpack.c.b16 %v1443, %v1435
  %v2292 = vpack.c.b16 %v1444, %v1436
  %v2293 = vpack.c.b16 %v1445, %v1437
  %v2294 = vpack.c.b16 %v1446, %v1438
  %v2295 = vpack.c.b16 %v1455, %v1447
  %v2296 = vpack.c.b16 %v1456, %v1448
  %v2297 = vpack.c.b16 %v1457, %v1449
  %v2298 = vpack.c.b16 %v1458, %v1450
  %v2299 = vpack.c.b16 %v1459, %v1451
  %v2300 = vpack.c.b16 %v1460, %v1452
  %v2301 = vpack.c.b16 %v1461, %v1453
  %v2302 = vpack.c.b16 %v1462, %v1454
  %v2303 = vpack.c.b16 %v1471, %v1463
  %v2304 = vpack.c.b16 %v1472, %v1464
  %v2305 = vpack.c.b16 %v1473, %v1465
  %v2306 = vpack.c.b16 %v1474, %v1466
  %v2307 = vpack.c.b16 %v1475, %v1467
  %v2308 = vpack.c.b16 %v1476, %v1468
  %v2309 = vpack.c.b16 %v1477, %v1469
  %v2310 = vpack.c.b16 %v1478, %v1470
  %v2311 = vpack.c.b16 %v1487, %v1479
  %v2312 = vpack.c.b16 %v1488, %v1480
  %v2313 = vpack.c.b16 %v1489, %v1481
  %v2314 = vpack.c.b16 %v1490, %v1482
  %v2315 = vpack.c.b16 %v1491, %v1483
  %v2316 = vpack.c.b16 %v1492, %v1484
  %v2317 = vpack.c.b16 %v1493, %v1485
  %v2318 = vpack.c.b16 %v1494, %v1486
  %v2319 = vpack.c.b16 %v1503, %v1495
  %v2320 = vpack.c.b16 %v1504, %v1496
  %v2321 = vpack.c.b16 %v1505, %v1497
  %v2322 = vpack.c.b16 %v1506, %v1498
  %v2323 = vpack.c.b16 %v1507, %v1499
  %v2324 = vpack.c.b16 %v1508, %v1500
  %v2325 = vpack.c.b16 %v1509, %v1501
  %v2326 = vpack.c.b16 %v1510, %v1502
  %v2327 = vpack.c.b16 %v1519, %v1511
  %v2328 = vpack.c.b16 %v1520, %v1512
  %v2329 = vpack.c.b16 %v1521, %v1513
  %v2330 = vpack.c.b16 %v1522, %v1514
  %v2331 = vpack.c.b16 %v1523, %v1515
  %v2332 = vpack.c.b16 %v1524, %v1516
  %v2333 = vpack.c.b16 %v1525, %v1517
  %v2334 = vpack.c.b16 %v1526, %v1518
  %v2335 = vpack.c.b16 %v1535, %v1527
  %v2336 = vpack.c.b16 %v1536, %v1528
  %v2337 = vpack.c.b16 %v1537, %v1529
  %v2338 = vpack.c.b16 %v1538, %v1530
  %v2339 = vpack.c.b16 %v1539, %v1531
  %v2340 = vpack.c.b16 %v1540, %v1532
  %v2341 = vpack.c.b16 %v1541, %v1533
  %v2342 = vpack.c.b16 %v1542, %v1534
  %v2343 = vpack.c.b16 %v1551, %v1543
  %v2344 = vpack.c.b16 %v1552, %v1544
  %v2345 = vpack.c.b16 %v1553, %v1545
  %v2346 = vpack.c.b16 %v1554, %v1546
  %v2347 = vpack.c.b16 %v1555, %v1547
  %v2348 = vpack.c.b16 %v1556, %v1548
  %v2349 = vpack.c.b16 %v1557, %v1549
  %v2350 = vpack.c.b16 %v1558, %v1550
  %v2351 = vpack.c.b16 %v1567, %v1559
  %v2352 = vpack.c.b16 %v1568, %v1560
  %v2353 = vpack.c.b16 %v1569, %v1561
  %v2354 = vpack.c.b16 %v1570, %v1562
  %v2355 = vpack.c.b16 %v1571, %v1563
  %v2356 = vpack.c.b16 %v1572, %v1564
  %v2357 = vpack.c.b16 %v1573, %v1565
  %v2358 = vpack.c.b16 %v1574, %v1566
  %v2359 = vpack.c.b16 %v1583, %v1575
  %v2360 = vpack.c.b16 %v1584, %v1576
  %v2361 = vpack.c.b16 %v1585, %v1577
  %v2362 = vpack.c.b16 %v1586, %v1578
  %v2363 = vpack.c.b16 %v1587, %v1579
  %v2364 = vpack.c.b16 %v1588, %v1580
  %v2365 = vpack.c.b16 %v1589, %v1581
  %v2366 = vpack.c.b16 %v1590, %v1582
  %v2367 = vpack.c.b16 %v1599, %v1591
  %v2368 = vpack.c.b16 %v1600, %v1592
  %v2369 = vpack.c.b16 %v1601, %v1593
  %v2370 = vpack.c.b16 %v1602, %v1594
  %v2371 = vpack.c.b16 %v1603, %v1595
  %v2372 = vpack.c.b16 %v1604, %v1596
  %v2373 = vpack.c.b16 %v1605, %v1597
  %v2374 = vpack.c.b16 %v1606, %v1598
  %v2375 = vpack.c.b16 %v1615, %v1607
  %v2376 = vpack.c.b16 %v1616, %v1608
  %v2377 = vpack.c.b16 %v1617, %v1609
  %v2378 = vpack.c.b16 %v1618, %v1610
  %v2379 = vpack.c.b16 %v1619, %v1611
  %v2380 = vpack.c.b16 %v1620, %v1612
  %v2381 = vpack.c.b16 %v1621, %v1613
  %v2382 = vpack.c.b16 %v1622, %v1614
  %v2383 = vpack.c.b16 %v1631, %v1623
  %v2384 = vpack.c.b16 %v1632, %v1624
  %v2385 = vpack.c.b16 %v1633, %v1625
  %v2386 = vpack.c.b16 %v1634, %v1626
  %v2387 = vpack.c.b16 %v1635, %v1627
  %v2388 = vpack.c.b16 %v1636, %v1628
  %v2389 = vpack.c.b16 %v1637, %v1629
  %v2390 = vpack.c.b16 %v1638, %v1630
  %v2391 = vpack.c.b16 %v1647, %v1639
  %v2392 = vpack.c.b16 %v1648, %v1640
  %v2393 = vpack.c.b16 %v1649, %v1641
  %v2394 = vpack.c.b16 %v1650, %v1642
  %v2395 = vpack.c.b16 %v1651, %v1643
  %v2396 = vpack.c.b16 %v1652, %v1644
  %v2397 = vpack.c.b16 %v1653, %v1645
  %v2398 = vpack.c.b16 %v1654, %v1646
  %v2399 = vpack.c.b16 %v1663, %v1655
  %v2400 = vpack.c.b16 %v1664, %v1656
  %v2401 = vpack.c.b16 %v1665, %v1657
  %v2402 = vpack.c.b16 %v1666, %v1658
  %v2403 = vpack.c.b16 %v1667, %v1659
  %v2404 = vpack.c.b16 %v1668, %v1660
  %v2405 = vpack.c.b16 %v1669, %v1661
  %v2406 = vpack.c.b16 %v1670, %v1662
  %v2407 = vpack.c.b16 %v1679, %v1671
  %v2408 = vpack.c.b16 %v1680, %v1672
  %v2409 = vpack.c.b16 %v1681, %v1673
  %v2410 = vpack.c.b16 %v1682, %v1674
  %v2411 = vpack.c.b16 %v1683, %v1675
  %v2412 = vpack.c.b16 %v1684, %v1676
  %v2413 = vpack.c.b16 %v1685, %v1677
  %v2414 = vpack.c.b16 %v1686, %v1678
  %v2415 = vpack.c.b16 %v1695, %v1687
  %v2416 = vpack.c.b16 %v1696, %v1688
  %v2417 = vpack.c.b16 %v1697, %v1689
  %v2418 = vpack.c.b16 %v1698, %v1690
  %v2419 = vpack.c.b16 %v1699, %v1691
  %v2420 = vpack.c.b16 %v1700, %v1692
  %v2421 = vpack.c.b16 %v1701, %v1693
  %v2422 = vpack.c.b16 %v1702, %v1694
  %v2423 = vpack.c.b16 %v1711, %v1703
  %v2424 = vpack.c.b16 %v1712, %v1704
  %v2425 = vpack.c.b16 %v1713, %v1705
  %v2426 = vpack.c.b16 %v1714, %v1706
  %v2427 = vpack.c.b16 %v1715, %v1707
  %v2428 = vpack.c.b16 %v1716, %v1708
  %v2429 = vpack.c.b16 %v1717, %v1709
  %v2430 = vpack.c.b16 %v1718, %v1710
  %v2431 = vpack.c.b16 %v1727, %v1719
  %v2432 = vpack.c.b16 %v1728, %v1720
  %v2433 = vpack.c.b16 %v1729, %v1721
  %v2434 = vpack.c.b16 %v1730, %v1722
  %v2435 = vpack.c.b16 %v1731, %v1723
  %v2436 = vpack.c.b16 %v1732, %v1724
  %v2437 = vpack.c.b16 %v1733, %v1725
  %v2438 = vpack.c.b16 %v1734, %v1726
  %v2439 = vpack.c.b16 %v1743, %v1735
  %v2440 = vpack.c.b16 %v1744, %v1736
  %v2441 = vpack.c.b16 %v1745, %v1737
  %v2442 = vpack.c.b16 %v1746, %v1738
  %v2443 = vpack.c.b16 %v1747, %v1739
  %v2444 = vpack.c.b16 %v1748, %v1740
  %v2445 = vpack.c.b16 %v1749, %v1741
  %v2446 = vpack.c.b16 %v1750, %v1742
  %v2447 = vpack.c.b16 %v1759, %v1751
  %v2448 = vpack.c.b16 %v1760, %v1752
  %v2449 = vpack.c.b16 %v1761, %v1753
  %v2450 = vpack.c.b16 %v1762, %v1754
  %v2451 = vpack.c.b16 %v1763, %v1755
  %v2452 = vpack.c.b16 %v1764, %v1756
  %v2453 = vpack.c.b16 %v1765, %v1757
  %v2454 = vpack.c.b16 %v1766, %v1758
  %v2455 = vpack.c.b16 %v1775, %v1767
  %v2456 = vpack.c.b16 %v1776, %v1768
  %v2457 = vpack.c.b16 %v1777, %v1769
  %v2458 = vpack.c.b16 %v1778, %v1770
  %v2459 = vpack.c.b16 %v1779, %v1771
  %v2460 = vpack.c.b16 %v1780, %v1772
  %v2461 = vpack.c.b16 %v1781, %v1773
  %v2462 = vpack.c.b16 %v1782, %v1774
  %v2463 = vpack.c.b16 %v1791, %v1783
  %v2464 = vpack.c.b16 %v1792, %v1784
  %v2465 = vpack.c.b16 %v1793, %v1785
  %v2466 = vpack.c.b16 %v1794, %v1786
  %v2467 = vpack.c.b16 %v1795, %v1787
  %v2468 = vpack.c.b16 %v1796, %v1788
  %v2469 = vpack.c.b16 %v1797, %v1789
  %v2470 = vpack.c.b16 %v1798, %v1790
  %v2471 = vpack.c.b16 %v1807, %v1799
  %v2472 = vpack.c.b16 %v1808, %v1800
  %v2473 = vpack.c.b16 %v1809, %v1801
  %v2474 = vpack.c.b16 %v1810, %v1802
  %v2475 = vpack.c.b16 %v1811, %v1803
  %v2476 = vpack.c.b16 %v1812, %v1804
  %v2477 = vpack.c.b16 %v1813, %v1805
  %v2478 = vpack.c.b16 %v1814, %v1806
  %v2479 = vpack.c.b16 %v1823, %v1815
  %v2480 = vpack.c.b16 %v1824, %v1816
  %v2481 = vpack.c.b16 %v1825, %v1817
  %v2482 = vpack.c.b16 %v1826, %v1818
  %v2483 = vpack.c.b16 %v1827, %v1819
  %v2484 = vpack.c.b16 %v1828, %v1820
  %v2485 = vpack.c.b16 %v1829, %v1821
  %v2486 = vpack.c.b16 %v1830, %v1822
  %v2487 = vpack.c.b16 %v1839, %v1831
  %v2488 = vpack.c.b16 %v1840, %v1832
  %v2489 = vpack.c.b16 %v1841, %v1833
  %v2490 = vpack.c.b16 %v1842, %v1834
  %v2491 = vpack.c.b16 %v1843, %v1835
  %v2492 = vpack.c.b16 %v1844, %v1836
  %v2493 = vpack.c.b16 %v1845, %v1837
  %v2494 = vpack.c.b16 %v1846, %v1838
  %v2495 = vpack.c.b16 %v1855, %v1847
  %v2496 = vpack.c.b16 %v1856, %v1848
  %v2497 = vpack.c.b16 %v1857, %v1849
  %v2498 = vpack.c.b16 %v1858, %v1850
  %v2499 = vpack.c.b16 %v1859, %v1851
  %v2500 = vpack.c.b16 %v1860, %v1852
  %v2501 = vpack.c.b16 %v1861, %v1853
  %v2502 = vpack.c.b16 %v1862, %v1854
  %v2503 = vpack.c.b16 %v1871, %v1863
  %v2504 = vpack.c.b16 %v1872, %v1864
  %v2505 = vpack.c.b16 %v1873, %v1865
  %v2506 = vpack.c.b16 %v1874, %v1866
  %v2507 = vpack.c.b16 %v1875, %v1867
  %v2508 = vpack.c.b16 %v1876, %v1868
  %v2509 = vpack.c.b16 %v1877, %v1869
  %v2510 = vpack.c.b16 %v1878, %v1870
  %v2511 = vpack.c.b16 %v1887, %v1879
  %v2512 = vpack.c.b16 %v1888, %v1880
  %v2513 = vpack.c.b16 %v1889, %v1881
  %v2514 = vpack.c.b16 %v1890, %v1882
  %v2515 = vpack.c.b16 %v1891, %v1883
  %v2516 = vpack.c.b16 %v1892, %v1884
  %v2517 = vpack.c.b16 %v1893, %v1885
  %v2518 = vpack.c.b16 %v1894, %v1886
  %v2519 = vpack.c.b16 %v1903, %v1895
  %v2520 = vpack.c.b16 %v1904, %v1896
  %v2521 = vpack.c.b16 %v1905, %v1897
  %v2522 = vpack.c.b16 %v1906, %v1898
  %v2523 = vpack.c.b16 %v1907, %v1899
  %v2524 = vpack.c.b16 %v1908, %v1900
  %v2525 = vpack.c.b16 %v1909, %v1901
  %v2526 = vpack.c.b16 %v1910, %v1902
  %v2527 = vpack.c.b16 %v1919, %v1911
  %v2528 = vpack.c.b16 %v1920, %v1912
  %v2529 = vpack.c.b16 %v1921, %v1913
  %v2530 = vpack.c.b16 %v1922, %v1914
  %v2531 = vpack.c.b16 %v1923, %v1915
  %v2532 = vpack.c.b16 %v1924, %v1916
  %v2533 = vpack.c.b16 %v1925, %v1917
  %v2534 = vpack.c.b16 %v1926, %v1918
  %v2535 = vpack.c.b16 %v1935, %v1927
  %v2536 = vpack.c.b16 %v1936, %v1928
  %v2537 = vpack.c.b16 %v1937, %v1929
  %v2538 = vpack.c.b16 %v1938, %v1930
  %v2539 = vpack.c.b16 %v1939, %v1931
  %v2540 = vpack.c.b16 %v1940, %v1932
  %v2541 = vpack.c.b16 %v1941, %v1933
  %v2542 = vpack.c.b16 %v1942, %v1934
  %v2543 = vpack.c.b16 %v1951, %v1943
  %v2544 = vpack.c.b16 %v1952, %v1944
  %v2545 = vpack.c.b16 %v1953, %v1945
  %v2546 = vpack.c.b16 %v1954, %v1946
  %v2547 = vpack.c.b16 %v1955, %v1947
  %v2548 = vpack.c.b16 %v1956, %v1948
  %v2549 = vpack.c.b16 %v1957, %v1949
  %v2550 = vpack.c.b16 %v1958, %v1950
  %v2551 = vpack.c.b16 %v1967, %v1959
  %v2552 = vpack.c.b16 %v1968, %v1960
  %v2553 = vpack.c.b16 %v1969, %v1961
  %v2554 = vpack.c.b16 %v1970, %v1962
  %v2555 = vpack.c.b16 %v1971, %v1963
  %v2556 = vpack.c.b16 %v1972, %v1964
  %v2557 = vpack.c.b16 %v1973, %v1965
  %v2558 = vpack.c.b16 %v1974, %v1966
  %v2559 = vpack.c.b16 %v1983, %v1975
  %v2560 = vpack.c.b16 %v1984, %v1976
  %v2561 = vpack.c.b16 %v1985, %v1977
  %v2562 = vpack.c.b16 %v1986, %v1978
  %v2563 = vpack.c.b16 %v1987, %v1979
  %v2564 = vpack.c.b16 %v1988, %v1980
  %v2565 = vpack.c.b16 %v1989, %v1981
  %v2566 = vpack.c.b16 %v1990, %v1982
  %v2567 = vpack.c.b16 %v1999, %v1991
  %v2568 = vpack.c.b16 %v2000, %v1992
  %v2569 = vpack.c.b16 %v2001, %v1993
  %v2570 = vpack.c.b16 %v2002, %v1994
  %v2571 = vpack.c.b16 %v2003, %v1995
  %v2572 = vpack.c.b16 %v2004, %v1996
  %v2573 = vpack.c.b16 %v2005, %v1997
  %v2574 = vpack.c.b16 %v2006, %v1998
  %v2575 = vpack.c.b16 %v2015, %v2007
  %v2576 = vpack.c.b16 %v2016, %v2008
  %v2577 = vpack.c.b16 %v2017, %v2009
  %v2578 = vpack.c.b16 %v2018, %v2010
  %v2579 = vpack.c.b16 %v2019, %v2011
  %v2580 = vpack.c.b16 %v2020, %v2012
  %v2581 = vpack.c.b16 %v2021, %v2013
  %v2582 = vpack.c.b16 %v2022, %v2014
  %v2583 = vpack.c.b16 %v2031, %v2023
  %v2584 = vpack.c.b16 %v2032, %v2024
  %v2585 = vpack.c.b16 %v2033, %v2025
  %v2586 = vpack.c.b16 %v2034, %v2026
  %v2587 = vpack.c.b16 %v2035, %v2027
  %v2588 = vpack.c.b16 %v2036, %v2028
  %v2589 = vpack.c.b16 %v2037, %v2029
  %v2590 = vpack.c.b16 %v2038, %v2030
  %v2591 = vpack.c.b16 %v2047, %v2039
  %v2592 = vpack.c.b16 %v2048, %v2040
  %v2593 = vpack.c.b16 %v2049, %v2041
  %v2594 = vpack.c.b16 %v2050, %v2042
  %v2595 = vpack.c.b16 %v2051, %v2043
  %v2596 = vpack.c.b16 %v2052, %v2044
  %v2597 = vpack.c.b16 %v2053, %v2045
  %v2598 = vpack.c.b16 %v2054, %v2046
  %v2599 = vpack.c.b16 %v2063, %v2055
  %v2600 = vpack.c.b16 %v2064, %v2056
  %v2601 = vpack.c.b16 %v2065, %v2057
  %v2602 = vpack.c.b16 %v2066, %v2058
  %v2603 = vpack.c.b16 %v2067, %v2059
  %v2604 = vpack.c.b16 %v2068, %v2060
  %v2605 = vpack.c.b16 %v2069, %v2061
  %v2606 = vpack.c.b16 %v2070, %v2062
  %v2607 = vpack.c.b16 %v2079, %v2071
  %v2608 = vpack.c.b16 %v2080, %v2072
  %v2609 = vpack.c.b16 %v2081, %v2073
  %v2610 = vpack.c.b16 %v2082, %v2074
  %v2611 = vpack.c.b16 %v2083, %v2075
  %v2612 = vpack.c.b16 %v2084, %v2076
  %v2613 = vpack.c.b16 %v2085, %v2077
  %v2614 = vpack.c.b16 %v2086, %v2078
  %v2615 = vpack.c.b16 %v2095, %v2087
  %v2616 = vpack.c.b16 %v2096, %v2088
  %v2617 = vpack.c.b16 %v2097, %v2089
  %v2618 = vpack.c.b16 %v2098, %v2090
  %v2619 = vpack.c.b16 %v2099, %v2091
  %v2620 = vpack.c.b16 %v2100, %v2092
  %v2621 = vpack.c.b16 %v2101, %v2093
  %v2622 = vpack.c.b16 %v2102, %v2094
  %v2623 = vpack.c.b16 %v2111, %v2103
  %v2624 = vpack.c.b16 %v2112, %v2104
  %v2625 = vpack.c.b16 %v2113, %v2105
  %v2626 = vpack.c.b16 %v2114, %v2106
  %v2627 = vpack.c.b16 %v2115, %v2107
  %v2628 = vpack.c.b16 %v2116, %v2108
  %v2629 = vpack.c.b16 %v2117, %v2109
  %v2630 = vpack.c.b16 %v2118, %v2110
  %3143 = vmatpush.bf16.msra.mxu0 %v2175
  %3144 = vmatpush.bf16.msra.mxu0 %v2167
  %3145 = vmatpush.bf16.msra.mxu0 %v2159
  %3146 = vmatpush.bf16.msra.mxu0 %v2151
  %3147 = vmatpush.bf16.msra.mxu0 %v2143
  %3148 = vmatpush.bf16.msra.mxu0 %v2135
  %3149 = vmatpush.bf16.msra.mxu0 %v2127
  %3150 = vmatpush.bf16.msra.mxu0 %v2119
  %3151 = vmatmul.bf16.gmra.mxu0 %v567
  %v3152 = vpop.f32.mrf.mxu0
  %v3153 = vadd.f32 0.0, %v3152
  %v3154 = vpop.f32.mrf.mxu0
  %v3155 = vadd.f32 0.0, %v3154
  %3156 = vdwg.mxu0
  %3157 = vmatpush.bf16.msra.mxu0 %v2239
  %3158 = vmatpush.bf16.msra.mxu0 %v2231
  %3159 = vmatpush.bf16.msra.mxu0 %v2223
  %3160 = vmatpush.bf16.msra.mxu0 %v2215
  %3161 = vmatpush.bf16.msra.mxu0 %v2207
  %3162 = vmatpush.bf16.msra.mxu0 %v2199
  %3163 = vmatpush.bf16.msra.mxu0 %v2191
  %3164 = vmatpush.bf16.msra.mxu0 %v2183
  %3165 = vmatmul.bf16.gmra.mxu0 %v568
  %v3166 = vpop.f32.mrf.mxu0
  %v3167 = vadd.f32 %v3153, %v3166
  %v3168 = vpop.f32.mrf.mxu0
  %v3169 = vadd.f32 %v3155, %v3168
  %3170 = vdwg.mxu0
  %3171 = vmatpush.bf16.msra.mxu0 %v2303
  %3172 = vmatpush.bf16.msra.mxu0 %v2295
  %3173 = vmatpush.bf16.msra.mxu0 %v2287
  %3174 = vmatpush.bf16.msra.mxu0 %v2279
  %3175 = vmatpush.bf16.msra.mxu0 %v2271
  %3176 = vmatpush.bf16.msra.mxu0 %v2263
  %3177 = vmatpush.bf16.msra.mxu0 %v2255
  %3178 = vmatpush.bf16.msra.mxu0 %v2247
  %3179 = vmatmul.bf16.gmra.mxu0 %v569
  %v3180 = vpop.f32.mrf.mxu0
  %v3181 = vadd.f32 %v3167, %v3180
  %v3182 = vpop.f32.mrf.mxu0
  %v3183 = vadd.f32 %v3169, %v3182
  %3184 = vdwg.mxu0
  %3185 = vmatpush.bf16.msra.mxu0 %v2367
  %3186 = vmatpush.bf16.msra.mxu0 %v2359
  %3187 = vmatpush.bf16.msra.mxu0 %v2351
  %3188 = vmatpush.bf16.msra.mxu0 %v2343
  %3189 = vmatpush.bf16.msra.mxu0 %v2335
  %3190 = vmatpush.bf16.msra.mxu0 %v2327
  %3191 = vmatpush.bf16.msra.mxu0 %v2319
  %3192 = vmatpush.bf16.msra.mxu0 %v2311
  %3193 = vmatmul.bf16.gmra.mxu0 %v570
  %v3194 = vpop.f32.mrf.mxu0
  %v3195 = vadd.f32 %v3181, %v3194
  %v3196 = vpop.f32.mrf.mxu0
  %v3197 = vadd.f32 %v3183, %v3196
  %3198 = vdwg.mxu0
  %3199 = vmatpush.bf16.msra.mxu0 %v2431
  %3200 = vmatpush.bf16.msra.mxu0 %v2423
  %3201 = vmatpush.bf16.msra.mxu0 %v2415
  %3202 = vmatpush.bf16.msra.mxu0 %v2407
  %3203 = vmatpush.bf16.msra.mxu0 %v2399
  %3204 = vmatpush.bf16.msra.mxu0 %v2391
  %3205 = vmatpush.bf16.msra.mxu0 %v2383
  %3206 = vmatpush.bf16.msra.mxu0 %v2375
  %3207 = vmatmul.bf16.gmra.mxu0 %v571
  %v3208 = vpop.f32.mrf.mxu0
  %v3209 = vadd.f32 %v3195, %v3208
  %v3210 = vpop.f32.mrf.mxu0
  %v3211 = vadd.f32 %v3197, %v3210
  %3212 = vdwg.mxu0
  %3213 = vmatpush.bf16.msra.mxu0 %v2495
  %3214 = vmatpush.bf16.msra.mxu0 %v2487
  %3215 = vmatpush.bf16.msra.mxu0 %v2479
  %3216 = vmatpush.bf16.msra.mxu0 %v2471
  %3217 = vmatpush.bf16.msra.mxu0 %v2463
  %3218 = vmatpush.bf16.msra.mxu0 %v2455
  %3219 = vmatpush.bf16.msra.mxu0 %v2447
  %3220 = vmatpush.bf16.msra.mxu0 %v2439
  %3221 = vmatmul.bf16.gmra.mxu0 %v572
  %v3222 = vpop.f32.mrf.mxu0
  %v3223 = vadd.f32 %v3209, %v3222
  %v3224 = vpop.f32.mrf.mxu0
  %v3225 = vadd.f32 %v3211, %v3224
  %3226 = vdwg.mxu0
  %3227 = vmatpush.bf16.msra.mxu0 %v2559
  %3228 = vmatpush.bf16.msra.mxu0 %v2551
  %3229 = vmatpush.bf16.msra.mxu0 %v2543
  %3230 = vmatpush.bf16.msra.mxu0 %v2535
  %3231 = vmatpush.bf16.msra.mxu0 %v2527
  %3232 = vmatpush.bf16.msra.mxu0 %v2519
  %3233 = vmatpush.bf16.msra.mxu0 %v2511
  %3234 = vmatpush.bf16.msra.mxu0 %v2503
  %3235 = vmatmul.bf16.gmra.mxu0 %v573
  %v3236 = vpop.f32.mrf.mxu0
  %v3237 = vadd.f32 %v3223, %v3236
  %v3238 = vpop.f32.mrf.mxu0
  %v3239 = vadd.f32 %v3225, %v3238
  %3240 = vdwg.mxu0
  %3241 = vmatpush.bf16.msra.mxu0 %v2623
  %3242 = vmatpush.bf16.msra.mxu0 %v2615
  %3243 = vmatpush.bf16.msra.mxu0 %v2607
  %3244 = vmatpush.bf16.msra.mxu0 %v2599
  %3245 = vmatpush.bf16.msra.mxu0 %v2591
  %3246 = vmatpush.bf16.msra.mxu0 %v2583
  %3247 = vmatpush.bf16.msra.mxu0 %v2575
  %3248 = vmatpush.bf16.msra.mxu0 %v2567
  %3249 = vmatmul.bf16.gmra.mxu0 %v574
  %v3250 = vpop.f32.mrf.mxu0
  %v3251 = vadd.f32 %v3237, %v3250
  %v3252 = vpop.f32.mrf.mxu0
  %v3253 = vadd.f32 %v3239, %v3252
  %3254 = vdwg.mxu0
  %3255 = vmatpush.bf16.msra.mxu0 %v2176
  %3256 = vmatpush.bf16.msra.mxu0 %v2168
  %3257 = vmatpush.bf16.msra.mxu0 %v2160
  %3258 = vmatpush.bf16.msra.mxu0 %v2152
  %3259 = vmatpush.bf16.msra.mxu0 %v2144
  %3260 = vmatpush.bf16.msra.mxu0 %v2136
  %3261 = vmatpush.bf16.msra.mxu0 %v2128
  %3262 = vmatpush.bf16.msra.mxu0 %v2120
  %3263 = vmatmul.bf16.gmra.mxu0 %v567
  %v3264 = vpop.f32.mrf.mxu0
  %v3265 = vadd.f32 0.0, %v3264
  %v3266 = vpop.f32.mrf.mxu0
  %v3267 = vadd.f32 0.0, %v3266
  %3268 = vdwg.mxu0
  %3269 = vmatpush.bf16.msra.mxu0 %v2240
  %3270 = vmatpush.bf16.msra.mxu0 %v2232
  %3271 = vmatpush.bf16.msra.mxu0 %v2224
  %3272 = vmatpush.bf16.msra.mxu0 %v2216
  %3273 = vmatpush.bf16.msra.mxu0 %v2208
  %3274 = vmatpush.bf16.msra.mxu0 %v2200
  %3275 = vmatpush.bf16.msra.mxu0 %v2192
  %3276 = vmatpush.bf16.msra.mxu0 %v2184
  %3277 = vmatmul.bf16.gmra.mxu0 %v568
  %v3278 = vpop.f32.mrf.mxu0
  %v3279 = vadd.f32 %v3265, %v3278
  %v3280 = vpop.f32.mrf.mxu0
  %v3281 = vadd.f32 %v3267, %v3280
  %3282 = vdwg.mxu0
  %3283 = vmatpush.bf16.msra.mxu0 %v2304
  %3284 = vmatpush.bf16.msra.mxu0 %v2296
  %3285 = vmatpush.bf16.msra.mxu0 %v2288
  %3286 = vmatpush.bf16.msra.mxu0 %v2280
  %3287 = vmatpush.bf16.msra.mxu0 %v2272
  %3288 = vmatpush.bf16.msra.mxu0 %v2264
  %3289 = vmatpush.bf16.msra.mxu0 %v2256
  %3290 = vmatpush.bf16.msra.mxu0 %v2248
  %3291 = vmatmul.bf16.gmra.mxu0 %v569
  %v3292 = vpop.f32.mrf.mxu0
  %v3293 = vadd.f32 %v3279, %v3292
  %v3294 = vpop.f32.mrf.mxu0
  %v3295 = vadd.f32 %v3281, %v3294
  %3296 = vdwg.mxu0
  %3297 = vmatpush.bf16.msra.mxu0 %v2368
  %3298 = vmatpush.bf16.msra.mxu0 %v2360
  %3299 = vmatpush.bf16.msra.mxu0 %v2352
  %3300 = vmatpush.bf16.msra.mxu0 %v2344
  %3301 = vmatpush.bf16.msra.mxu0 %v2336
  %3302 = vmatpush.bf16.msra.mxu0 %v2328
  %3303 = vmatpush.bf16.msra.mxu0 %v2320
  %3304 = vmatpush.bf16.msra.mxu0 %v2312
  %3305 = vmatmul.bf16.gmra.mxu0 %v570
  %v3306 = vpop.f32.mrf.mxu0
  %v3307 = vadd.f32 %v3293, %v3306
  %v3308 = vpop.f32.mrf.mxu0
  %v3309 = vadd.f32 %v3295, %v3308
  %3310 = vdwg.mxu0
  %3311 = vmatpush.bf16.msra.mxu0 %v2432
  %3312 = vmatpush.bf16.msra.mxu0 %v2424
  %3313 = vmatpush.bf16.msra.mxu0 %v2416
  %3314 = vmatpush.bf16.msra.mxu0 %v2408
  %3315 = vmatpush.bf16.msra.mxu0 %v2400
  %3316 = vmatpush.bf16.msra.mxu0 %v2392
  %3317 = vmatpush.bf16.msra.mxu0 %v2384
  %3318 = vmatpush.bf16.msra.mxu0 %v2376
  %3319 = vmatmul.bf16.gmra.mxu0 %v571
  %v3320 = vpop.f32.mrf.mxu0
  %v3321 = vadd.f32 %v3307, %v3320
  %v3322 = vpop.f32.mrf.mxu0
  %v3323 = vadd.f32 %v3309, %v3322
  %3324 = vdwg.mxu0
  %3325 = vmatpush.bf16.msra.mxu0 %v2496
  %3326 = vmatpush.bf16.msra.mxu0 %v2488
  %3327 = vmatpush.bf16.msra.mxu0 %v2480
  %3328 = vmatpush.bf16.msra.mxu0 %v2472
  %3329 = vmatpush.bf16.msra.mxu0 %v2464
  %3330 = vmatpush.bf16.msra.mxu0 %v2456
  %3331 = vmatpush.bf16.msra.mxu0 %v2448
  %3332 = vmatpush.bf16.msra.mxu0 %v2440
  %3333 = vmatmul.bf16.gmra.mxu0 %v572
  %v3334 = vpop.f32.mrf.mxu0
  %v3335 = vadd.f32 %v3321, %v3334
  %v3336 = vpop.f32.mrf.mxu0
  %v3337 = vadd.f32 %v3323, %v3336
  %3338 = vdwg.mxu0
  %3339 = vmatpush.bf16.msra.mxu0 %v2560
  %3340 = vmatpush.bf16.msra.mxu0 %v2552
  %3341 = vmatpush.bf16.msra.mxu0 %v2544
  %3342 = vmatpush.bf16.msra.mxu0 %v2536
  %3343 = vmatpush.bf16.msra.mxu0 %v2528
  %3344 = vmatpush.bf16.msra.mxu0 %v2520
  %3345 = vmatpush.bf16.msra.mxu0 %v2512
  %3346 = vmatpush.bf16.msra.mxu0 %v2504
  %3347 = vmatmul.bf16.gmra.mxu0 %v573
  %v3348 = vpop.f32.mrf.mxu0
  %v3349 = vadd.f32 %v3335, %v3348
  %v3350 = vpop.f32.mrf.mxu0
  %v3351 = vadd.f32 %v3337, %v3350
  %3352 = vdwg.mxu0
  %3353 = vmatpush.bf16.msra.mxu0 %v2624
  %3354 = vmatpush.bf16.msra.mxu0 %v2616
  %3355 = vmatpush.bf16.msra.mxu0 %v2608
  %3356 = vmatpush.bf16.msra.mxu0 %v2600
  %3357 = vmatpush.bf16.msra.mxu0 %v2592
  %3358 = vmatpush.bf16.msra.mxu0 %v2584
  %3359 = vmatpush.bf16.msra.mxu0 %v2576
  %3360 = vmatpush.bf16.msra.mxu0 %v2568
  %3361 = vmatmul.bf16.gmra.mxu0 %v574
  %v3362 = vpop.f32.mrf.mxu0
  %v3363 = vadd.f32 %v3349, %v3362
  %v3364 = vpop.f32.mrf.mxu0
  %v3365 = vadd.f32 %v3351, %v3364
  %3366 = vdwg.mxu0
  %3367 = vmatpush.bf16.msra.mxu0 %v2177
  %3368 = vmatpush.bf16.msra.mxu0 %v2169
  %3369 = vmatpush.bf16.msra.mxu0 %v2161
  %3370 = vmatpush.bf16.msra.mxu0 %v2153
  %3371 = vmatpush.bf16.msra.mxu0 %v2145
  %3372 = vmatpush.bf16.msra.mxu0 %v2137
  %3373 = vmatpush.bf16.msra.mxu0 %v2129
  %3374 = vmatpush.bf16.msra.mxu0 %v2121
  %3375 = vmatmul.bf16.gmra.mxu0 %v567
  %v3376 = vpop.f32.mrf.mxu0
  %v3377 = vadd.f32 0.0, %v3376
  %v3378 = vpop.f32.mrf.mxu0
  %v3379 = vadd.f32 0.0, %v3378
  %3380 = vdwg.mxu0
  %3381 = vmatpush.bf16.msra.mxu0 %v2241
  %3382 = vmatpush.bf16.msra.mxu0 %v2233
  %3383 = vmatpush.bf16.msra.mxu0 %v2225
  %3384 = vmatpush.bf16.msra.mxu0 %v2217
  %3385 = vmatpush.bf16.msra.mxu0 %v2209
  %3386 = vmatpush.bf16.msra.mxu0 %v2201
  %3387 = vmatpush.bf16.msra.mxu0 %v2193
  %3388 = vmatpush.bf16.msra.mxu0 %v2185
  %3389 = vmatmul.bf16.gmra.mxu0 %v568
  %v3390 = vpop.f32.mrf.mxu0
  %v3391 = vadd.f32 %v3377, %v3390
  %v3392 = vpop.f32.mrf.mxu0
  %v3393 = vadd.f32 %v3379, %v3392
  %3394 = vdwg.mxu0
  %3395 = vmatpush.bf16.msra.mxu0 %v2305
  %3396 = vmatpush.bf16.msra.mxu0 %v2297
  %3397 = vmatpush.bf16.msra.mxu0 %v2289
  %3398 = vmatpush.bf16.msra.mxu0 %v2281
  %3399 = vmatpush.bf16.msra.mxu0 %v2273
  %3400 = vmatpush.bf16.msra.mxu0 %v2265
  %3401 = vmatpush.bf16.msra.mxu0 %v2257
  %3402 = vmatpush.bf16.msra.mxu0 %v2249
  %3403 = vmatmul.bf16.gmra.mxu0 %v569
  %v3404 = vpop.f32.mrf.mxu0
  %v3405 = vadd.f32 %v3391, %v3404
  %v3406 = vpop.f32.mrf.mxu0
  %v3407 = vadd.f32 %v3393, %v3406
  %3408 = vdwg.mxu0
  %3409 = vmatpush.bf16.msra.mxu0 %v2369
  %3410 = vmatpush.bf16.msra.mxu0 %v2361
  %3411 = vmatpush.bf16.msra.mxu0 %v2353
  %3412 = vmatpush.bf16.msra.mxu0 %v2345
  %3413 = vmatpush.bf16.msra.mxu0 %v2337
  %3414 = vmatpush.bf16.msra.mxu0 %v2329
  %3415 = vmatpush.bf16.msra.mxu0 %v2321
  %3416 = vmatpush.bf16.msra.mxu0 %v2313
  %3417 = vmatmul.bf16.gmra.mxu0 %v570
  %v3418 = vpop.f32.mrf.mxu0
  %v3419 = vadd.f32 %v3405, %v3418
  %v3420 = vpop.f32.mrf.mxu0
  %v3421 = vadd.f32 %v3407, %v3420
  %3422 = vdwg.mxu0
  %3423 = vmatpush.bf16.msra.mxu0 %v2433
  %3424 = vmatpush.bf16.msra.mxu0 %v2425
  %3425 = vmatpush.bf16.msra.mxu0 %v2417
  %3426 = vmatpush.bf16.msra.mxu0 %v2409
  %3427 = vmatpush.bf16.msra.mxu0 %v2401
  %3428 = vmatpush.bf16.msra.mxu0 %v2393
  %3429 = vmatpush.bf16.msra.mxu0 %v2385
  %3430 = vmatpush.bf16.msra.mxu0 %v2377
  %3431 = vmatmul.bf16.gmra.mxu0 %v571
  %v3432 = vpop.f32.mrf.mxu0
  %v3433 = vadd.f32 %v3419, %v3432
  %v3434 = vpop.f32.mrf.mxu0
  %v3435 = vadd.f32 %v3421, %v3434
  %3436 = vdwg.mxu0
  %3437 = vmatpush.bf16.msra.mxu0 %v2497
  %3438 = vmatpush.bf16.msra.mxu0 %v2489
  %3439 = vmatpush.bf16.msra.mxu0 %v2481
  %3440 = vmatpush.bf16.msra.mxu0 %v2473
  %3441 = vmatpush.bf16.msra.mxu0 %v2465
  %3442 = vmatpush.bf16.msra.mxu0 %v2457
  %3443 = vmatpush.bf16.msra.mxu0 %v2449
  %3444 = vmatpush.bf16.msra.mxu0 %v2441
  %3445 = vmatmul.bf16.gmra.mxu0 %v572
  %v3446 = vpop.f32.mrf.mxu0
  %v3447 = vadd.f32 %v3433, %v3446
  %v3448 = vpop.f32.mrf.mxu0
  %v3449 = vadd.f32 %v3435, %v3448
  %3450 = vdwg.mxu0
  %3451 = vmatpush.bf16.msra.mxu0 %v2561
  %3452 = vmatpush.bf16.msra.mxu0 %v2553
  %3453 = vmatpush.bf16.msra.mxu0 %v2545
  %3454 = vmatpush.bf16.msra.mxu0 %v2537
  %3455 = vmatpush.bf16.msra.mxu0 %v2529
  %3456 = vmatpush.bf16.msra.mxu0 %v2521
  %3457 = vmatpush.bf16.msra.mxu0 %v2513
  %3458 = vmatpush.bf16.msra.mxu0 %v2505
  %3459 = vmatmul.bf16.gmra.mxu0 %v573
  %v3460 = vpop.f32.mrf.mxu0
  %v3461 = vadd.f32 %v3447, %v3460
  %v3462 = vpop.f32.mrf.mxu0
  %v3463 = vadd.f32 %v3449, %v3462
  %3464 = vdwg.mxu0
  %3465 = vmatpush.bf16.msra.mxu0 %v2625
  %3466 = vmatpush.bf16.msra.mxu0 %v2617
  %3467 = vmatpush.bf16.msra.mxu0 %v2609
  %3468 = vmatpush.bf16.msra.mxu0 %v2601
  %3469 = vmatpush.bf16.msra.mxu0 %v2593
  %3470 = vmatpush.bf16.msra.mxu0 %v2585
  %3471 = vmatpush.bf16.msra.mxu0 %v2577
  %3472 = vmatpush.bf16.msra.mxu0 %v2569
  %3473 = vmatmul.bf16.gmra.mxu0 %v574
  %v3474 = vpop.f32.mrf.mxu0
  %v3475 = vadd.f32 %v3461, %v3474
  %v3476 = vpop.f32.mrf.mxu0
  %v3477 = vadd.f32 %v3463, %v3476
  %3478 = vdwg.mxu0
  %3479 = vmatpush.bf16.msra.mxu0 %v2178
  %3480 = vmatpush.bf16.msra.mxu0 %v2170
  %3481 = vmatpush.bf16.msra.mxu0 %v2162
  %3482 = vmatpush.bf16.msra.mxu0 %v2154
  %3483 = vmatpush.bf16.msra.mxu0 %v2146
  %3484 = vmatpush.bf16.msra.mxu0 %v2138
  %3485 = vmatpush.bf16.msra.mxu0 %v2130
  %3486 = vmatpush.bf16.msra.mxu0 %v2122
  %3487 = vmatmul.bf16.gmra.mxu0 %v567
  %v3488 = vpop.f32.mrf.mxu0
  %v3489 = vadd.f32 0.0, %v3488
  %v3490 = vpop.f32.mrf.mxu0
  %v3491 = vadd.f32 0.0, %v3490
  %3492 = vdwg.mxu0
  %3493 = vmatpush.bf16.msra.mxu0 %v2242
  %3494 = vmatpush.bf16.msra.mxu0 %v2234
  %3495 = vmatpush.bf16.msra.mxu0 %v2226
  %3496 = vmatpush.bf16.msra.mxu0 %v2218
  %3497 = vmatpush.bf16.msra.mxu0 %v2210
  %3498 = vmatpush.bf16.msra.mxu0 %v2202
  %3499 = vmatpush.bf16.msra.mxu0 %v2194
  %3500 = vmatpush.bf16.msra.mxu0 %v2186
  %3501 = vmatmul.bf16.gmra.mxu0 %v568
  %v3502 = vpop.f32.mrf.mxu0
  %v3503 = vadd.f32 %v3489, %v3502
  %v3504 = vpop.f32.mrf.mxu0
  %v3505 = vadd.f32 %v3491, %v3504
  %3506 = vdwg.mxu0
  %3507 = vmatpush.bf16.msra.mxu0 %v2306
  %3508 = vmatpush.bf16.msra.mxu0 %v2298
  %3509 = vmatpush.bf16.msra.mxu0 %v2290
  %3510 = vmatpush.bf16.msra.mxu0 %v2282
  %3511 = vmatpush.bf16.msra.mxu0 %v2274
  %3512 = vmatpush.bf16.msra.mxu0 %v2266
  %3513 = vmatpush.bf16.msra.mxu0 %v2258
  %3514 = vmatpush.bf16.msra.mxu0 %v2250
  %3515 = vmatmul.bf16.gmra.mxu0 %v569
  %v3516 = vpop.f32.mrf.mxu0
  %v3517 = vadd.f32 %v3503, %v3516
  %v3518 = vpop.f32.mrf.mxu0
  %v3519 = vadd.f32 %v3505, %v3518
  %3520 = vdwg.mxu0
  %3521 = vmatpush.bf16.msra.mxu0 %v2370
  %3522 = vmatpush.bf16.msra.mxu0 %v2362
  %3523 = vmatpush.bf16.msra.mxu0 %v2354
  %3524 = vmatpush.bf16.msra.mxu0 %v2346
  %3525 = vmatpush.bf16.msra.mxu0 %v2338
  %3526 = vmatpush.bf16.msra.mxu0 %v2330
  %3527 = vmatpush.bf16.msra.mxu0 %v2322
  %3528 = vmatpush.bf16.msra.mxu0 %v2314
  %3529 = vmatmul.bf16.gmra.mxu0 %v570
  %v3530 = vpop.f32.mrf.mxu0
  %v3531 = vadd.f32 %v3517, %v3530
  %v3532 = vpop.f32.mrf.mxu0
  %v3533 = vadd.f32 %v3519, %v3532
  %3534 = vdwg.mxu0
  %3535 = vmatpush.bf16.msra.mxu0 %v2434
  %3536 = vmatpush.bf16.msra.mxu0 %v2426
  %3537 = vmatpush.bf16.msra.mxu0 %v2418
  %3538 = vmatpush.bf16.msra.mxu0 %v2410
  %3539 = vmatpush.bf16.msra.mxu0 %v2402
  %3540 = vmatpush.bf16.msra.mxu0 %v2394
  %3541 = vmatpush.bf16.msra.mxu0 %v2386
  %3542 = vmatpush.bf16.msra.mxu0 %v2378
  %3543 = vmatmul.bf16.gmra.mxu0 %v571
  %v3544 = vpop.f32.mrf.mxu0
  %v3545 = vadd.f32 %v3531, %v3544
  %v3546 = vpop.f32.mrf.mxu0
  %v3547 = vadd.f32 %v3533, %v3546
  %3548 = vdwg.mxu0
  %3549 = vmatpush.bf16.msra.mxu0 %v2498
  %3550 = vmatpush.bf16.msra.mxu0 %v2490
  %3551 = vmatpush.bf16.msra.mxu0 %v2482
  %3552 = vmatpush.bf16.msra.mxu0 %v2474
  %3553 = vmatpush.bf16.msra.mxu0 %v2466
  %3554 = vmatpush.bf16.msra.mxu0 %v2458
  %3555 = vmatpush.bf16.msra.mxu0 %v2450
  %3556 = vmatpush.bf16.msra.mxu0 %v2442
  %3557 = vmatmul.bf16.gmra.mxu0 %v572
  %v3558 = vpop.f32.mrf.mxu0
  %v3559 = vadd.f32 %v3545, %v3558
  %v3560 = vpop.f32.mrf.mxu0
  %v3561 = vadd.f32 %v3547, %v3560
  %3562 = vdwg.mxu0
  %3563 = vmatpush.bf16.msra.mxu0 %v2562
  %3564 = vmatpush.bf16.msra.mxu0 %v2554
  %3565 = vmatpush.bf16.msra.mxu0 %v2546
  %3566 = vmatpush.bf16.msra.mxu0 %v2538
  %3567 = vmatpush.bf16.msra.mxu0 %v2530
  %3568 = vmatpush.bf16.msra.mxu0 %v2522
  %3569 = vmatpush.bf16.msra.mxu0 %v2514
  %3570 = vmatpush.bf16.msra.mxu0 %v2506
  %3571 = vmatmul.bf16.gmra.mxu0 %v573
  %v3572 = vpop.f32.mrf.mxu0
  %v3573 = vadd.f32 %v3559, %v3572
  %v3574 = vpop.f32.mrf.mxu0
  %v3575 = vadd.f32 %v3561, %v3574
  %3576 = vdwg.mxu0
  %3577 = vmatpush.bf16.msra.mxu0 %v2626
  %3578 = vmatpush.bf16.msra.mxu0 %v2618
  %3579 = vmatpush.bf16.msra.mxu0 %v2610
  %3580 = vmatpush.bf16.msra.mxu0 %v2602
  %3581 = vmatpush.bf16.msra.mxu0 %v2594
  %3582 = vmatpush.bf16.msra.mxu0 %v2586
  %3583 = vmatpush.bf16.msra.mxu0 %v2578
  %3584 = vmatpush.bf16.msra.mxu0 %v2570
  %3585 = vmatmul.bf16.gmra.mxu0 %v574
  %v3586 = vpop.f32.mrf.mxu0
  %v3587 = vadd.f32 %v3573, %v3586
  %v3588 = vpop.f32.mrf.mxu0
  %v3589 = vadd.f32 %v3575, %v3588
  %3590 = vdwg.mxu0
  %3591 = vmatpush.bf16.msra.mxu0 %v2179
  %3592 = vmatpush.bf16.msra.mxu0 %v2171
  %3593 = vmatpush.bf16.msra.mxu0 %v2163
  %3594 = vmatpush.bf16.msra.mxu0 %v2155
  %3595 = vmatpush.bf16.msra.mxu0 %v2147
  %3596 = vmatpush.bf16.msra.mxu0 %v2139
  %3597 = vmatpush.bf16.msra.mxu0 %v2131
  %3598 = vmatpush.bf16.msra.mxu0 %v2123
  %3599 = vmatmul.bf16.gmra.mxu0 %v567
  %v3600 = vpop.f32.mrf.mxu0
  %v3601 = vadd.f32 0.0, %v3600
  %v3602 = vpop.f32.mrf.mxu0
  %v3603 = vadd.f32 0.0, %v3602
  %3604 = vdwg.mxu0
  %3605 = vmatpush.bf16.msra.mxu0 %v2243
  %3606 = vmatpush.bf16.msra.mxu0 %v2235
  %3607 = vmatpush.bf16.msra.mxu0 %v2227
  %3608 = vmatpush.bf16.msra.mxu0 %v2219
  %3609 = vmatpush.bf16.msra.mxu0 %v2211
  %3610 = vmatpush.bf16.msra.mxu0 %v2203
  %3611 = vmatpush.bf16.msra.mxu0 %v2195
  %3612 = vmatpush.bf16.msra.mxu0 %v2187
  %3613 = vmatmul.bf16.gmra.mxu0 %v568
  %v3614 = vpop.f32.mrf.mxu0
  %v3615 = vadd.f32 %v3601, %v3614
  %v3616 = vpop.f32.mrf.mxu0
  %v3617 = vadd.f32 %v3603, %v3616
  %3618 = vdwg.mxu0
  %3619 = vmatpush.bf16.msra.mxu0 %v2307
  %3620 = vmatpush.bf16.msra.mxu0 %v2299
  %3621 = vmatpush.bf16.msra.mxu0 %v2291
  %3622 = vmatpush.bf16.msra.mxu0 %v2283
  %3623 = vmatpush.bf16.msra.mxu0 %v2275
  %3624 = vmatpush.bf16.msra.mxu0 %v2267
  %3625 = vmatpush.bf16.msra.mxu0 %v2259
  %3626 = vmatpush.bf16.msra.mxu0 %v2251
  %3627 = vmatmul.bf16.gmra.mxu0 %v569
  %v3628 = vpop.f32.mrf.mxu0
  %v3629 = vadd.f32 %v3615, %v3628
  %v3630 = vpop.f32.mrf.mxu0
  %v3631 = vadd.f32 %v3617, %v3630
  %3632 = vdwg.mxu0
  %3633 = vmatpush.bf16.msra.mxu0 %v2371
  %3634 = vmatpush.bf16.msra.mxu0 %v2363
  %3635 = vmatpush.bf16.msra.mxu0 %v2355
  %3636 = vmatpush.bf16.msra.mxu0 %v2347
  %3637 = vmatpush.bf16.msra.mxu0 %v2339
  %3638 = vmatpush.bf16.msra.mxu0 %v2331
  %3639 = vmatpush.bf16.msra.mxu0 %v2323
  %3640 = vmatpush.bf16.msra.mxu0 %v2315
  %3641 = vmatmul.bf16.gmra.mxu0 %v570
  %v3642 = vpop.f32.mrf.mxu0
  %v3643 = vadd.f32 %v3629, %v3642
  %v3644 = vpop.f32.mrf.mxu0
  %v3645 = vadd.f32 %v3631, %v3644
  %3646 = vdwg.mxu0
  %3647 = vmatpush.bf16.msra.mxu0 %v2435
  %3648 = vmatpush.bf16.msra.mxu0 %v2427
  %3649 = vmatpush.bf16.msra.mxu0 %v2419
  %3650 = vmatpush.bf16.msra.mxu0 %v2411
  %3651 = vmatpush.bf16.msra.mxu0 %v2403
  %3652 = vmatpush.bf16.msra.mxu0 %v2395
  %3653 = vmatpush.bf16.msra.mxu0 %v2387
  %3654 = vmatpush.bf16.msra.mxu0 %v2379
  %3655 = vmatmul.bf16.gmra.mxu0 %v571
  %v3656 = vpop.f32.mrf.mxu0
  %v3657 = vadd.f32 %v3643, %v3656
  %v3658 = vpop.f32.mrf.mxu0
  %v3659 = vadd.f32 %v3645, %v3658
  %3660 = vdwg.mxu0
  %3661 = vmatpush.bf16.msra.mxu0 %v2499
  %3662 = vmatpush.bf16.msra.mxu0 %v2491
  %3663 = vmatpush.bf16.msra.mxu0 %v2483
  %3664 = vmatpush.bf16.msra.mxu0 %v2475
  %3665 = vmatpush.bf16.msra.mxu0 %v2467
  %3666 = vmatpush.bf16.msra.mxu0 %v2459
  %3667 = vmatpush.bf16.msra.mxu0 %v2451
  %3668 = vmatpush.bf16.msra.mxu0 %v2443
  %3669 = vmatmul.bf16.gmra.mxu0 %v572
  %v3670 = vpop.f32.mrf.mxu0
  %v3671 = vadd.f32 %v3657, %v3670
  %v3672 = vpop.f32.mrf.mxu0
  %v3673 = vadd.f32 %v3659, %v3672
  %3674 = vdwg.mxu0
  %3675 = vmatpush.bf16.msra.mxu0 %v2563
  %3676 = vmatpush.bf16.msra.mxu0 %v2555
  %3677 = vmatpush.bf16.msra.mxu0 %v2547
  %3678 = vmatpush.bf16.msra.mxu0 %v2539
  %3679 = vmatpush.bf16.msra.mxu0 %v2531
  %3680 = vmatpush.bf16.msra.mxu0 %v2523
  %3681 = vmatpush.bf16.msra.mxu0 %v2515
  %3682 = vmatpush.bf16.msra.mxu0 %v2507
  %3683 = vmatmul.bf16.gmra.mxu0 %v573
  %v3684 = vpop.f32.mrf.mxu0
  %v3685 = vadd.f32 %v3671, %v3684
  %v3686 = vpop.f32.mrf.mxu0
  %v3687 = vadd.f32 %v3673, %v3686
  %3688 = vdwg.mxu0
  %3689 = vmatpush.bf16.msra.mxu0 %v2627
  %3690 = vmatpush.bf16.msra.mxu0 %v2619
  %3691 = vmatpush.bf16.msra.mxu0 %v2611
  %3692 = vmatpush.bf16.msra.mxu0 %v2603
  %3693 = vmatpush.bf16.msra.mxu0 %v2595
  %3694 = vmatpush.bf16.msra.mxu0 %v2587
  %3695 = vmatpush.bf16.msra.mxu0 %v2579
  %3696 = vmatpush.bf16.msra.mxu0 %v2571
  %3697 = vmatmul.bf16.gmra.mxu0 %v574
  %v3698 = vpop.f32.mrf.mxu0
  %v3699 = vadd.f32 %v3685, %v3698
  %v3700 = vpop.f32.mrf.mxu0
  %v3701 = vadd.f32 %v3687, %v3700
  %3702 = vdwg.mxu0
  %3703 = vmatpush.bf16.msra.mxu0 %v2180
  %3704 = vmatpush.bf16.msra.mxu0 %v2172
  %3705 = vmatpush.bf16.msra.mxu0 %v2164
  %3706 = vmatpush.bf16.msra.mxu0 %v2156
  %3707 = vmatpush.bf16.msra.mxu0 %v2148
  %3708 = vmatpush.bf16.msra.mxu0 %v2140
  %3709 = vmatpush.bf16.msra.mxu0 %v2132
  %3710 = vmatpush.bf16.msra.mxu0 %v2124
  %3711 = vmatmul.bf16.gmra.mxu0 %v567
  %v3712 = vpop.f32.mrf.mxu0
  %v3713 = vadd.f32 0.0, %v3712
  %v3714 = vpop.f32.mrf.mxu0
  %v3715 = vadd.f32 0.0, %v3714
  %3716 = vdwg.mxu0
  %3717 = vmatpush.bf16.msra.mxu0 %v2244
  %3718 = vmatpush.bf16.msra.mxu0 %v2236
  %3719 = vmatpush.bf16.msra.mxu0 %v2228
  %3720 = vmatpush.bf16.msra.mxu0 %v2220
  %3721 = vmatpush.bf16.msra.mxu0 %v2212
  %3722 = vmatpush.bf16.msra.mxu0 %v2204
  %3723 = vmatpush.bf16.msra.mxu0 %v2196
  %3724 = vmatpush.bf16.msra.mxu0 %v2188
  %3725 = vmatmul.bf16.gmra.mxu0 %v568
  %v3726 = vpop.f32.mrf.mxu0
  %v3727 = vadd.f32 %v3713, %v3726
  %v3728 = vpop.f32.mrf.mxu0
  %v3729 = vadd.f32 %v3715, %v3728
  %3730 = vdwg.mxu0
  %3731 = vmatpush.bf16.msra.mxu0 %v2308
  %3732 = vmatpush.bf16.msra.mxu0 %v2300
  %3733 = vmatpush.bf16.msra.mxu0 %v2292
  %3734 = vmatpush.bf16.msra.mxu0 %v2284
  %3735 = vmatpush.bf16.msra.mxu0 %v2276
  %3736 = vmatpush.bf16.msra.mxu0 %v2268
  %3737 = vmatpush.bf16.msra.mxu0 %v2260
  %3738 = vmatpush.bf16.msra.mxu0 %v2252
  %3739 = vmatmul.bf16.gmra.mxu0 %v569
  %v3740 = vpop.f32.mrf.mxu0
  %v3741 = vadd.f32 %v3727, %v3740
  %v3742 = vpop.f32.mrf.mxu0
  %v3743 = vadd.f32 %v3729, %v3742
  %3744 = vdwg.mxu0
  %3745 = vmatpush.bf16.msra.mxu0 %v2372
  %3746 = vmatpush.bf16.msra.mxu0 %v2364
  %3747 = vmatpush.bf16.msra.mxu0 %v2356
  %3748 = vmatpush.bf16.msra.mxu0 %v2348
  %3749 = vmatpush.bf16.msra.mxu0 %v2340
  %3750 = vmatpush.bf16.msra.mxu0 %v2332
  %3751 = vmatpush.bf16.msra.mxu0 %v2324
  %3752 = vmatpush.bf16.msra.mxu0 %v2316
  %3753 = vmatmul.bf16.gmra.mxu0 %v570
  %v3754 = vpop.f32.mrf.mxu0
  %v3755 = vadd.f32 %v3741, %v3754
  %v3756 = vpop.f32.mrf.mxu0
  %v3757 = vadd.f32 %v3743, %v3756
  %3758 = vdwg.mxu0
  %3759 = vmatpush.bf16.msra.mxu0 %v2436
  %3760 = vmatpush.bf16.msra.mxu0 %v2428
  %3761 = vmatpush.bf16.msra.mxu0 %v2420
  %3762 = vmatpush.bf16.msra.mxu0 %v2412
  %3763 = vmatpush.bf16.msra.mxu0 %v2404
  %3764 = vmatpush.bf16.msra.mxu0 %v2396
  %3765 = vmatpush.bf16.msra.mxu0 %v2388
  %3766 = vmatpush.bf16.msra.mxu0 %v2380
  %3767 = vmatmul.bf16.gmra.mxu0 %v571
  %v3768 = vpop.f32.mrf.mxu0
  %v3769 = vadd.f32 %v3755, %v3768
  %v3770 = vpop.f32.mrf.mxu0
  %v3771 = vadd.f32 %v3757, %v3770
  %3772 = vdwg.mxu0
  %3773 = vmatpush.bf16.msra.mxu0 %v2500
  %3774 = vmatpush.bf16.msra.mxu0 %v2492
  %3775 = vmatpush.bf16.msra.mxu0 %v2484
  %3776 = vmatpush.bf16.msra.mxu0 %v2476
  %3777 = vmatpush.bf16.msra.mxu0 %v2468
  %3778 = vmatpush.bf16.msra.mxu0 %v2460
  %3779 = vmatpush.bf16.msra.mxu0 %v2452
  %3780 = vmatpush.bf16.msra.mxu0 %v2444
  %3781 = vmatmul.bf16.gmra.mxu0 %v572
  %v3782 = vpop.f32.mrf.mxu0
  %v3783 = vadd.f32 %v3769, %v3782
  %v3784 = vpop.f32.mrf.mxu0
  %v3785 = vadd.f32 %v3771, %v3784
  %3786 = vdwg.mxu0
  %3787 = vmatpush.bf16.msra.mxu0 %v2564
  %3788 = vmatpush.bf16.msra.mxu0 %v2556
  %3789 = vmatpush.bf16.msra.mxu0 %v2548
  %3790 = vmatpush.bf16.msra.mxu0 %v2540
  %3791 = vmatpush.bf16.msra.mxu0 %v2532
  %3792 = vmatpush.bf16.msra.mxu0 %v2524
  %3793 = vmatpush.bf16.msra.mxu0 %v2516
  %3794 = vmatpush.bf16.msra.mxu0 %v2508
  %3795 = vmatmul.bf16.gmra.mxu0 %v573
  %v3796 = vpop.f32.mrf.mxu0
  %v3797 = vadd.f32 %v3783, %v3796
  %v3798 = vpop.f32.mrf.mxu0
  %v3799 = vadd.f32 %v3785, %v3798
  %3800 = vdwg.mxu0
  %3801 = vmatpush.bf16.msra.mxu0 %v2628
  %3802 = vmatpush.bf16.msra.mxu0 %v2620
  %3803 = vmatpush.bf16.msra.mxu0 %v2612
  %3804 = vmatpush.bf16.msra.mxu0 %v2604
  %3805 = vmatpush.bf16.msra.mxu0 %v2596
  %3806 = vmatpush.bf16.msra.mxu0 %v2588
  %3807 = vmatpush.bf16.msra.mxu0 %v2580
  %3808 = vmatpush.bf16.msra.mxu0 %v2572
  %3809 = vmatmul.bf16.gmra.mxu0 %v574
  %v3810 = vpop.f32.mrf.mxu0
  %v3811 = vadd.f32 %v3797, %v3810
  %v3812 = vpop.f32.mrf.mxu0
  %v3813 = vadd.f32 %v3799, %v3812
  %3814 = vdwg.mxu0
  %3815 = vmatpush.bf16.msra.mxu0 %v2181
  %3816 = vmatpush.bf16.msra.mxu0 %v2173
  %3817 = vmatpush.bf16.msra.mxu0 %v2165
  %3818 = vmatpush.bf16.msra.mxu0 %v2157
  %3819 = vmatpush.bf16.msra.mxu0 %v2149
  %3820 = vmatpush.bf16.msra.mxu0 %v2141
  %3821 = vmatpush.bf16.msra.mxu0 %v2133
  %3822 = vmatpush.bf16.msra.mxu0 %v2125
  %3823 = vmatmul.bf16.gmra.mxu0 %v567
  %v3824 = vpop.f32.mrf.mxu0
  %v3825 = vadd.f32 0.0, %v3824
  %v3826 = vpop.f32.mrf.mxu0
  %v3827 = vadd.f32 0.0, %v3826
  %3828 = vdwg.mxu0
  %3829 = vmatpush.bf16.msra.mxu0 %v2245
  %3830 = vmatpush.bf16.msra.mxu0 %v2237
  %3831 = vmatpush.bf16.msra.mxu0 %v2229
  %3832 = vmatpush.bf16.msra.mxu0 %v2221
  %3833 = vmatpush.bf16.msra.mxu0 %v2213
  %3834 = vmatpush.bf16.msra.mxu0 %v2205
  %3835 = vmatpush.bf16.msra.mxu0 %v2197
  %3836 = vmatpush.bf16.msra.mxu0 %v2189
  %3837 = vmatmul.bf16.gmra.mxu0 %v568
  %v3838 = vpop.f32.mrf.mxu0
  %v3839 = vadd.f32 %v3825, %v3838
  %v3840 = vpop.f32.mrf.mxu0
  %v3841 = vadd.f32 %v3827, %v3840
  %3842 = vdwg.mxu0
  %3843 = vmatpush.bf16.msra.mxu0 %v2309
  %3844 = vmatpush.bf16.msra.mxu0 %v2301
  %3845 = vmatpush.bf16.msra.mxu0 %v2293
  %3846 = vmatpush.bf16.msra.mxu0 %v2285
  %3847 = vmatpush.bf16.msra.mxu0 %v2277
  %3848 = vmatpush.bf16.msra.mxu0 %v2269
  %3849 = vmatpush.bf16.msra.mxu0 %v2261
  %3850 = vmatpush.bf16.msra.mxu0 %v2253
  %3851 = vmatmul.bf16.gmra.mxu0 %v569
  %v3852 = vpop.f32.mrf.mxu0
  %v3853 = vadd.f32 %v3839, %v3852
  %v3854 = vpop.f32.mrf.mxu0
  %v3855 = vadd.f32 %v3841, %v3854
  %3856 = vdwg.mxu0
  %3857 = vmatpush.bf16.msra.mxu0 %v2373
  %3858 = vmatpush.bf16.msra.mxu0 %v2365
  %3859 = vmatpush.bf16.msra.mxu0 %v2357
  %3860 = vmatpush.bf16.msra.mxu0 %v2349
  %3861 = vmatpush.bf16.msra.mxu0 %v2341
  %3862 = vmatpush.bf16.msra.mxu0 %v2333
  %3863 = vmatpush.bf16.msra.mxu0 %v2325
  %3864 = vmatpush.bf16.msra.mxu0 %v2317
  %3865 = vmatmul.bf16.gmra.mxu0 %v570
  %v3866 = vpop.f32.mrf.mxu0
  %v3867 = vadd.f32 %v3853, %v3866
  %v3868 = vpop.f32.mrf.mxu0
  %v3869 = vadd.f32 %v3855, %v3868
  %3870 = vdwg.mxu0
  %3871 = vmatpush.bf16.msra.mxu0 %v2437
  %3872 = vmatpush.bf16.msra.mxu0 %v2429
  %3873 = vmatpush.bf16.msra.mxu0 %v2421
  %3874 = vmatpush.bf16.msra.mxu0 %v2413
  %3875 = vmatpush.bf16.msra.mxu0 %v2405
  %3876 = vmatpush.bf16.msra.mxu0 %v2397
  %3877 = vmatpush.bf16.msra.mxu0 %v2389
  %3878 = vmatpush.bf16.msra.mxu0 %v2381
  %3879 = vmatmul.bf16.gmra.mxu0 %v571
  %v3880 = vpop.f32.mrf.mxu0
  %v3881 = vadd.f32 %v3867, %v3880
  %v3882 = vpop.f32.mrf.mxu0
  %v3883 = vadd.f32 %v3869, %v3882
  %3884 = vdwg.mxu0
  %3885 = vmatpush.bf16.msra.mxu0 %v2501
  %3886 = vmatpush.bf16.msra.mxu0 %v2493
  %3887 = vmatpush.bf16.msra.mxu0 %v2485
  %3888 = vmatpush.bf16.msra.mxu0 %v2477
  %3889 = vmatpush.bf16.msra.mxu0 %v2469
  %3890 = vmatpush.bf16.msra.mxu0 %v2461
  %3891 = vmatpush.bf16.msra.mxu0 %v2453
  %3892 = vmatpush.bf16.msra.mxu0 %v2445
  %3893 = vmatmul.bf16.gmra.mxu0 %v572
  %v3894 = vpop.f32.mrf.mxu0
  %v3895 = vadd.f32 %v3881, %v3894
  %v3896 = vpop.f32.mrf.mxu0
  %v3897 = vadd.f32 %v3883, %v3896
  %3898 = vdwg.mxu0
  %3899 = vmatpush.bf16.msra.mxu0 %v2565
  %3900 = vmatpush.bf16.msra.mxu0 %v2557
  %3901 = vmatpush.bf16.msra.mxu0 %v2549
  %3902 = vmatpush.bf16.msra.mxu0 %v2541
  %3903 = vmatpush.bf16.msra.mxu0 %v2533
  %3904 = vmatpush.bf16.msra.mxu0 %v2525
  %3905 = vmatpush.bf16.msra.mxu0 %v2517
  %3906 = vmatpush.bf16.msra.mxu0 %v2509
  %3907 = vmatmul.bf16.gmra.mxu0 %v573
  %v3908 = vpop.f32.mrf.mxu0
  %v3909 = vadd.f32 %v3895, %v3908
  %v3910 = vpop.f32.mrf.mxu0
  %v3911 = vadd.f32 %v3897, %v3910
  %3912 = vdwg.mxu0
  %3913 = vmatpush.bf16.msra.mxu0 %v2629
  %3914 = vmatpush.bf16.msra.mxu0 %v2621
  %3915 = vmatpush.bf16.msra.mxu0 %v2613
  %3916 = vmatpush.bf16.msra.mxu0 %v2605
  %3917 = vmatpush.bf16.msra.mxu0 %v2597
  %3918 = vmatpush.bf16.msra.mxu0 %v2589
  %3919 = vmatpush.bf16.msra.mxu0 %v2581
  %3920 = vmatpush.bf16.msra.mxu0 %v2573
  %3921 = vmatmul.bf16.gmra.mxu0 %v574
  %v3922 = vpop.f32.mrf.mxu0
  %v3923 = vadd.f32 %v3909, %v3922
  %v3924 = vpop.f32.mrf.mxu0
  %v3925 = vadd.f32 %v3911, %v3924
  %3926 = vdwg.mxu0
  %3927 = vmatpush.bf16.msra.mxu0 %v2182
  %3928 = vmatpush.bf16.msra.mxu0 %v2174
  %3929 = vmatpush.bf16.msra.mxu0 %v2166
  %3930 = vmatpush.bf16.msra.mxu0 %v2158
  %3931 = vmatpush.bf16.msra.mxu0 %v2150
  %3932 = vmatpush.bf16.msra.mxu0 %v2142
  %3933 = vmatpush.bf16.msra.mxu0 %v2134
  %3934 = vmatpush.bf16.msra.mxu0 %v2126
  %3935 = vmatmul.bf16.gmra.mxu0 %v567
  %v3936 = vpop.f32.mrf.mxu0
  %v3937 = vadd.f32 0.0, %v3936
  %v3938 = vpop.f32.mrf.mxu0
  %v3939 = vadd.f32 0.0, %v3938
  %3940 = vdwg.mxu0
  %3941 = vmatpush.bf16.msra.mxu0 %v2246
  %3942 = vmatpush.bf16.msra.mxu0 %v2238
  %3943 = vmatpush.bf16.msra.mxu0 %v2230
  %3944 = vmatpush.bf16.msra.mxu0 %v2222
  %3945 = vmatpush.bf16.msra.mxu0 %v2214
  %3946 = vmatpush.bf16.msra.mxu0 %v2206
  %3947 = vmatpush.bf16.msra.mxu0 %v2198
  %3948 = vmatpush.bf16.msra.mxu0 %v2190
  %3949 = vmatmul.bf16.gmra.mxu0 %v568
  %v3950 = vpop.f32.mrf.mxu0
  %v3951 = vadd.f32 %v3937, %v3950
  %v3952 = vpop.f32.mrf.mxu0
  %v3953 = vadd.f32 %v3939, %v3952
  %3954 = vdwg.mxu0
  %3955 = vmatpush.bf16.msra.mxu0 %v2310
  %3956 = vmatpush.bf16.msra.mxu0 %v2302
  %3957 = vmatpush.bf16.msra.mxu0 %v2294
  %3958 = vmatpush.bf16.msra.mxu0 %v2286
  %3959 = vmatpush.bf16.msra.mxu0 %v2278
  %3960 = vmatpush.bf16.msra.mxu0 %v2270
  %3961 = vmatpush.bf16.msra.mxu0 %v2262
  %3962 = vmatpush.bf16.msra.mxu0 %v2254
  %3963 = vmatmul.bf16.gmra.mxu0 %v569
  %v3964 = vpop.f32.mrf.mxu0
  %v3965 = vadd.f32 %v3951, %v3964
  %v3966 = vpop.f32.mrf.mxu0
  %v3967 = vadd.f32 %v3953, %v3966
  %3968 = vdwg.mxu0
  %3969 = vmatpush.bf16.msra.mxu0 %v2374
  %3970 = vmatpush.bf16.msra.mxu0 %v2366
  %3971 = vmatpush.bf16.msra.mxu0 %v2358
  %3972 = vmatpush.bf16.msra.mxu0 %v2350
  %3973 = vmatpush.bf16.msra.mxu0 %v2342
  %3974 = vmatpush.bf16.msra.mxu0 %v2334
  %3975 = vmatpush.bf16.msra.mxu0 %v2326
  %3976 = vmatpush.bf16.msra.mxu0 %v2318
  %3977 = vmatmul.bf16.gmra.mxu0 %v570
  %v3978 = vpop.f32.mrf.mxu0
  %v3979 = vadd.f32 %v3965, %v3978
  %v3980 = vpop.f32.mrf.mxu0
  %v3981 = vadd.f32 %v3967, %v3980
  %3982 = vdwg.mxu0
  %3983 = vmatpush.bf16.msra.mxu0 %v2438
  %3984 = vmatpush.bf16.msra.mxu0 %v2430
  %3985 = vmatpush.bf16.msra.mxu0 %v2422
  %3986 = vmatpush.bf16.msra.mxu0 %v2414
  %3987 = vmatpush.bf16.msra.mxu0 %v2406
  %3988 = vmatpush.bf16.msra.mxu0 %v2398
  %3989 = vmatpush.bf16.msra.mxu0 %v2390
  %3990 = vmatpush.bf16.msra.mxu0 %v2382
  %3991 = vmatmul.bf16.gmra.mxu0 %v571
  %v3992 = vpop.f32.mrf.mxu0
  %v3993 = vadd.f32 %v3979, %v3992
  %v3994 = vpop.f32.mrf.mxu0
  %v3995 = vadd.f32 %v3981, %v3994
  %3996 = vdwg.mxu0
  %3997 = vmatpush.bf16.msra.mxu0 %v2502
  %3998 = vmatpush.bf16.msra.mxu0 %v2494
  %3999 = vmatpush.bf16.msra.mxu0 %v2486
  %4000 = vmatpush.bf16.msra.mxu0 %v2478
  %4001 = vmatpush.bf16.msra.mxu0 %v2470
  %4002 = vmatpush.bf16.msra.mxu0 %v2462
  %4003 = vmatpush.bf16.msra.mxu0 %v2454
  %4004 = vmatpush.bf16.msra.mxu0 %v2446
  %4005 = vmatmul.bf16.gmra.mxu0 %v572
  %v4006 = vpop.f32.mrf.mxu0
  %v4007 = vadd.f32 %v3993, %v4006
  %v4008 = vpop.f32.mrf.mxu0
  %v4009 = vadd.f32 %v3995, %v4008
  %4010 = vdwg.mxu0
  %4011 = vmatpush.bf16.msra.mxu0 %v2566
  %4012 = vmatpush.bf16.msra.mxu0 %v2558
  %4013 = vmatpush.bf16.msra.mxu0 %v2550
  %4014 = vmatpush.bf16.msra.mxu0 %v2542
  %4015 = vmatpush.bf16.msra.mxu0 %v2534
  %4016 = vmatpush.bf16.msra.mxu0 %v2526
  %4017 = vmatpush.bf16.msra.mxu0 %v2518
  %4018 = vmatpush.bf16.msra.mxu0 %v2510
  %4019 = vmatmul.bf16.gmra.mxu0 %v573
  %v4020 = vpop.f32.mrf.mxu0
  %v4021 = vadd.f32 %v4007, %v4020
  %v4022 = vpop.f32.mrf.mxu0
  %v4023 = vadd.f32 %v4009, %v4022
  %4024 = vdwg.mxu0
  %4025 = vmatpush.bf16.msra.mxu0 %v2630
  %4026 = vmatpush.bf16.msra.mxu0 %v2622
  %4027 = vmatpush.bf16.msra.mxu0 %v2614
  %4028 = vmatpush.bf16.msra.mxu0 %v2606
  %4029 = vmatpush.bf16.msra.mxu0 %v2598
  %4030 = vmatpush.bf16.msra.mxu0 %v2590
  %4031 = vmatpush.bf16.msra.mxu0 %v2582
  %4032 = vmatpush.bf16.msra.mxu0 %v2574
  %4033 = vmatmul.bf16.gmra.mxu0 %v574
  %v4034 = vpop.f32.mrf.mxu0
  %v4035 = vadd.f32 %v4021, %v4034
  %v4036 = vpop.f32.mrf.mxu0
  %v4037 = vadd.f32 %v4023, %v4036
  %4038 = vdwg.mxu0
  %v4039 = vld [vmem:[%s2] sm:$0xff]
  %v4040 = vld [vmem:[%s3] sm:$0xff]
  %v4041 = vadd.f32 %v3251, %v3253
  %v4042 = vrot.slane %v4041, 4
  %v4043 = vadd.f32 %v4041, %v4042
  %v4044 = vrot.slane %v4043, 2
  %v4045 = vadd.f32 %v4043, %v4044
  %v4046 = vrot.slane %v4045, 1
  %v4047 = vadd.f32 %v4045, %v4046
  %v4048 = vadd.f32 %v3363, %v3365
  %v4049 = vrot.slane %v4048, 4
  %v4050 = vadd.f32 %v4048, %v4049
  %v4051 = vrot.slane %v4050, 2
  %v4052 = vadd.f32 %v4050, %v4051
  %v4053 = vrot.slane %v4052, 1
  %v4054 = vadd.f32 %v4052, %v4053
  %v4055 = vadd.f32 %v3475, %v3477
  %v4056 = vrot.slane %v4055, 4
  %v4057 = vadd.f32 %v4055, %v4056
  %v4058 = vrot.slane %v4057, 2
  %v4059 = vadd.f32 %v4057, %v4058
  %v4060 = vrot.slane %v4059, 1
  %v4061 = vadd.f32 %v4059, %v4060
  %v4062 = vadd.f32 %v3587, %v3589
  %v4063 = vrot.slane %v4062, 4
  %v4064 = vadd.f32 %v4062, %v4063
  %v4065 = vrot.slane %v4064, 2
  %v4066 = vadd.f32 %v4064, %v4065
  %v4067 = vrot.slane %v4066, 1
  %v4068 = vadd.f32 %v4066, %v4067
  %v4069 = vadd.f32 %v3699, %v3701
  %v4070 = vrot.slane %v4069, 4
  %v4071 = vadd.f32 %v4069, %v4070
  %v4072 = vrot.slane %v4071, 2
  %v4073 = vadd.f32 %v4071, %v4072
  %v4074 = vrot.slane %v4073, 1
  %v4075 = vadd.f32 %v4073, %v4074
  %v4076 = vadd.f32 %v3811, %v3813
  %v4077 = vrot.slane %v4076, 4
  %v4078 = vadd.f32 %v4076, %v4077
  %v4079 = vrot.slane %v4078, 2
  %v4080 = vadd.f32 %v4078, %v4079
  %v4081 = vrot.slane %v4080, 1
  %v4082 = vadd.f32 %v4080, %v4081
  %v4083 = vadd.f32 %v3923, %v3925
  %v4084 = vrot.slane %v4083, 4
  %v4085 = vadd.f32 %v4083, %v4084
  %v4086 = vrot.slane %v4085, 2
  %v4087 = vadd.f32 %v4085, %v4086
  %v4088 = vrot.slane %v4087, 1
  %v4089 = vadd.f32 %v4087, %v4088
  %v4090 = vadd.f32 %v4035, %v4037
  %v4091 = vrot.slane %v4090, 4
  %v4092 = vadd.f32 %v4090, %v4091
  %v4093 = vrot.slane %v4092, 2
  %v4094 = vadd.f32 %v4092, %v4093
  %v4095 = vrot.slane %v4094, 1
  %v4096 = vadd.f32 %v4094, %v4095
  %v4097 = vmul.f32 %v3251, %v3251
  %v4098 = vmul.f32 %v3363, %v3363
  %v4099 = vmul.f32 %v3475, %v3475
  %v4100 = vmul.f32 %v3587, %v3587
  %v4101 = vmul.f32 %v3699, %v3699
  %v4102 = vmul.f32 %v3811, %v3811
  %v4103 = vmul.f32 %v3923, %v3923
  %v4104 = vmul.f32 %v4035, %v4035
  %v4105 = vmul.f32 %v3253, %v3253
  %v4106 = vmul.f32 %v3365, %v3365
  %v4107 = vmul.f32 %v3477, %v3477
  %v4108 = vmul.f32 %v3589, %v3589
  %v4109 = vmul.f32 %v3701, %v3701
  %v4110 = vmul.f32 %v3813, %v3813
  %v4111 = vmul.f32 %v3925, %v3925
  %v4112 = vmul.f32 %v4037, %v4037
  %v4113 = vadd.f32 %v4097, %v4105
  %v4114 = vrot.slane %v4113, 4
  %v4115 = vadd.f32 %v4113, %v4114
  %v4116 = vrot.slane %v4115, 2
  %v4117 = vadd.f32 %v4115, %v4116
  %v4118 = vrot.slane %v4117, 1
  %v4119 = vadd.f32 %v4117, %v4118
  %v4120 = vadd.f32 %v4098, %v4106
  %v4121 = vrot.slane %v4120, 4
  %v4122 = vadd.f32 %v4120, %v4121
  %v4123 = vrot.slane %v4122, 2
  %v4124 = vadd.f32 %v4122, %v4123
  %v4125 = vrot.slane %v4124, 1
  %v4126 = vadd.f32 %v4124, %v4125
  %v4127 = vadd.f32 %v4099, %v4107
  %v4128 = vrot.slane %v4127, 4
  %v4129 = vadd.f32 %v4127, %v4128
  %v4130 = vrot.slane %v4129, 2
  %v4131 = vadd.f32 %v4129, %v4130
  %v4132 = vrot.slane %v4131, 1
  %v4133 = vadd.f32 %v4131, %v4132
  %v4134 = vadd.f32 %v4100, %v4108
  %v4135 = vrot.slane %v4134, 4
  %v4136 = vadd.f32 %v4134, %v4135
  %v4137 = vrot.slane %v4136, 2
  %v4138 = vadd.f32 %v4136, %v4137
  %v4139 = vrot.slane %v4138, 1
  %v4140 = vadd.f32 %v4138, %v4139
  %v4141 = vadd.f32 %v4101, %v4109
  %v4142 = vrot.slane %v4141, 4
  %v4143 = vadd.f32 %v4141, %v4142
  %v4144 = vrot.slane %v4143, 2
  %v4145 = vadd.f32 %v4143, %v4144
  %v4146 = vrot.slane %v4145, 1
  %v4147 = vadd.f32 %v4145, %v4146
  %v4148 = vadd.f32 %v4102, %v4110
  %v4149 = vrot.slane %v4148, 4
  %v4150 = vadd.f32 %v4148, %v4149
  %v4151 = vrot.slane %v4150, 2
  %v4152 = vadd.f32 %v4150, %v4151
  %v4153 = vrot.slane %v4152, 1
  %v4154 = vadd.f32 %v4152, %v4153
  %v4155 = vadd.f32 %v4103, %v4111
  %v4156 = vrot.slane %v4155, 4
  %v4157 = vadd.f32 %v4155, %v4156
  %v4158 = vrot.slane %v4157, 2
  %v4159 = vadd.f32 %v4157, %v4158
  %v4160 = vrot.slane %v4159, 1
  %v4161 = vadd.f32 %v4159, %v4160
  %v4162 = vadd.f32 %v4104, %v4112
  %v4163 = vrot.slane %v4162, 4
  %v4164 = vadd.f32 %v4162, %v4163
  %v4165 = vrot.slane %v4164, 2
  %v4166 = vadd.f32 %v4164, %v4165
  %v4167 = vrot.slane %v4166, 1
  %v4168 = vadd.f32 %v4166, %v4167
  %v4169 = vmul.f32 %v4047, 0.5
  %v4170 = vmul.f32 %v4054, 0.5
  %v4171 = vmul.f32 %v4061, 0.5
  %v4172 = vmul.f32 %v4068, 0.5
  %v4173 = vmul.f32 %v4075, 0.5
  %v4174 = vmul.f32 %v4082, 0.5
  %v4175 = vmul.f32 %v4089, 0.5
  %v4176 = vmul.f32 %v4096, 0.5
  %v4177 = vmul.f32 %v4119, 0.5
  %v4178 = vmul.f32 %v4126, 0.5
  %v4179 = vmul.f32 %v4133, 0.5
  %v4180 = vmul.f32 %v4140, 0.5
  %v4181 = vmul.f32 %v4147, 0.5
  %v4182 = vmul.f32 %v4154, 0.5
  %v4183 = vmul.f32 %v4161, 0.5
  %v4184 = vmul.f32 %v4168, 0.5
  %v4185 = vmul.f32 %v4169, %v4169
  %v4186 = vmul.f32 %v4170, %v4170
  %v4187 = vmul.f32 %v4171, %v4171
  %v4188 = vmul.f32 %v4172, %v4172
  %v4189 = vmul.f32 %v4173, %v4173
  %v4190 = vmul.f32 %v4174, %v4174
  %v4191 = vmul.f32 %v4175, %v4175
  %v4192 = vmul.f32 %v4176, %v4176
  %v4193 = vsub.f32 %v4177, %v4185
  %v4194 = vsub.f32 %v4178, %v4186
  %v4195 = vsub.f32 %v4179, %v4187
  %v4196 = vsub.f32 %v4180, %v4188
  %v4197 = vsub.f32 %v4181, %v4189
  %v4198 = vsub.f32 %v4182, %v4190
  %v4199 = vsub.f32 %v4183, %v4191
  %v4200 = vsub.f32 %v4184, %v4192
  %v4201 = vmax.f32 %v4193, 0.0
  %v4202 = vmax.f32 %v4194, 0.0
  %v4203 = vmax.f32 %v4195, 0.0
  %v4204 = vmax.f32 %v4196, 0.0
  %v4205 = vmax.f32 %v4197, 0.0
  %v4206 = vmax.f32 %v4198, 0.0
  %v4207 = vmax.f32 %v4199, 0.0
  %v4208 = vmax.f32 %v4200, 0.0
  %v4209 = vsub.f32 %v3251, %v4169
  %v4210 = vsub.f32 %v3363, %v4170
  %v4211 = vsub.f32 %v3475, %v4171
  %v4212 = vsub.f32 %v3587, %v4172
  %v4213 = vsub.f32 %v3699, %v4173
  %v4214 = vsub.f32 %v3811, %v4174
  %v4215 = vsub.f32 %v3923, %v4175
  %v4216 = vsub.f32 %v4035, %v4176
  %v4217 = vsub.f32 %v3253, %v4169
  %v4218 = vsub.f32 %v3365, %v4170
  %v4219 = vsub.f32 %v3477, %v4171
  %v4220 = vsub.f32 %v3589, %v4172
  %v4221 = vsub.f32 %v3701, %v4173
  %v4222 = vsub.f32 %v3813, %v4174
  %v4223 = vsub.f32 %v3925, %v4175
  %v4224 = vsub.f32 %v4037, %v4176
  %v4225 = vadd.f32 %v4201, 1e-05
  %v4226 = vadd.f32 %v4202, 1e-05
  %v4227 = vadd.f32 %v4203, 1e-05
  %v4228 = vadd.f32 %v4204, 1e-05
  %v4229 = vadd.f32 %v4205, 1e-05
  %v4230 = vadd.f32 %v4206, 1e-05
  %v4231 = vadd.f32 %v4207, 1e-05
  %v4232 = vadd.f32 %v4208, 1e-05
  %v4233 = vrsqrt.pop %v4225
  %v4234 = vmul.f32 %v4233, %v4225
  %v4235 = vmul.f32 %v4234, %v4233
  %v4236 = vmul.f32 0.5, %v4235
  %v4237 = vsub.f32 1.5, %v4236
  %v4238 = vmul.f32 %v4233, %v4237
  %vm4239 = vweird.f32 %v4225
  %vm4240 = vweird.f32 %v4233
  %vm4241 = vmor %vm4239, %vm4240
  %v4242 = vsel %vm4241, %v4233, %v4238
  %v4243 = vrsqrt.pop %v4226
  %v4244 = vmul.f32 %v4243, %v4226
  %v4245 = vmul.f32 %v4244, %v4243
  %v4246 = vmul.f32 0.5, %v4245
  %v4247 = vsub.f32 1.5, %v4246
  %v4248 = vmul.f32 %v4243, %v4247
  %vm4249 = vweird.f32 %v4226
  %vm4250 = vweird.f32 %v4243
  %vm4251 = vmor %vm4249, %vm4250
  %v4252 = vsel %vm4251, %v4243, %v4248
  %v4253 = vrsqrt.pop %v4227
  %v4254 = vmul.f32 %v4253, %v4227
  %v4255 = vmul.f32 %v4254, %v4253
  %v4256 = vmul.f32 0.5, %v4255
  %v4257 = vsub.f32 1.5, %v4256
  %v4258 = vmul.f32 %v4253, %v4257
  %vm4259 = vweird.f32 %v4227
  %vm4260 = vweird.f32 %v4253
  %vm4261 = vmor %vm4259, %vm4260
  %v4262 = vsel %vm4261, %v4253, %v4258
  %v4263 = vrsqrt.pop %v4228
  %v4264 = vmul.f32 %v4263, %v4228
  %v4265 = vmul.f32 %v4264, %v4263
  %v4266 = vmul.f32 0.5, %v4265
  %v4267 = vsub.f32 1.5, %v4266
  %v4268 = vmul.f32 %v4263, %v4267
  %vm4269 = vweird.f32 %v4228
  %vm4270 = vweird.f32 %v4263
  %vm4271 = vmor %vm4269, %vm4270
  %v4272 = vsel %vm4271, %v4263, %v4268
  %v4273 = vrsqrt.pop %v4229
  %v4274 = vmul.f32 %v4273, %v4229
  %v4275 = vmul.f32 %v4274, %v4273
  %v4276 = vmul.f32 0.5, %v4275
  %v4277 = vsub.f32 1.5, %v4276
  %v4278 = vmul.f32 %v4273, %v4277
  %vm4279 = vweird.f32 %v4229
  %vm4280 = vweird.f32 %v4273
  %vm4281 = vmor %vm4279, %vm4280
  %v4282 = vsel %vm4281, %v4273, %v4278
  %v4283 = vrsqrt.pop %v4230
  %v4284 = vmul.f32 %v4283, %v4230
  %v4285 = vmul.f32 %v4284, %v4283
  %v4286 = vmul.f32 0.5, %v4285
  %v4287 = vsub.f32 1.5, %v4286
  %v4288 = vmul.f32 %v4283, %v4287
  %vm4289 = vweird.f32 %v4230
  %vm4290 = vweird.f32 %v4283
  %vm4291 = vmor %vm4289, %vm4290
  %v4292 = vsel %vm4291, %v4283, %v4288
  %v4293 = vrsqrt.pop %v4231
  %v4294 = vmul.f32 %v4293, %v4231
  %v4295 = vmul.f32 %v4294, %v4293
  %v4296 = vmul.f32 0.5, %v4295
  %v4297 = vsub.f32 1.5, %v4296
  %v4298 = vmul.f32 %v4293, %v4297
  %vm4299 = vweird.f32 %v4231
  %vm4300 = vweird.f32 %v4293
  %vm4301 = vmor %vm4299, %vm4300
  %v4302 = vsel %vm4301, %v4293, %v4298
  %v4303 = vrsqrt.pop %v4232
  %v4304 = vmul.f32 %v4303, %v4232
  %v4305 = vmul.f32 %v4304, %v4303
  %v4306 = vmul.f32 0.5, %v4305
  %v4307 = vsub.f32 1.5, %v4306
  %v4308 = vmul.f32 %v4303, %v4307
  %vm4309 = vweird.f32 %v4232
  %vm4310 = vweird.f32 %v4303
  %vm4311 = vmor %vm4309, %vm4310
  %v4312 = vsel %vm4311, %v4303, %v4308
  %v4313 = vmul.f32 %v4209, %v4242
  %v4314 = vmul.f32 %v4210, %v4252
  %v4315 = vmul.f32 %v4211, %v4262
  %v4316 = vmul.f32 %v4212, %v4272
  %v4317 = vmul.f32 %v4213, %v4282
  %v4318 = vmul.f32 %v4214, %v4292
  %v4319 = vmul.f32 %v4215, %v4302
  %v4320 = vmul.f32 %v4216, %v4312
  %v4321 = vmul.f32 %v4217, %v4242
  %v4322 = vmul.f32 %v4218, %v4252
  %v4323 = vmul.f32 %v4219, %v4262
  %v4324 = vmul.f32 %v4220, %v4272
  %v4325 = vmul.f32 %v4221, %v4282
  %v4326 = vmul.f32 %v4222, %v4292
  %v4327 = vmul.f32 %v4223, %v4302
  %v4328 = vmul.f32 %v4224, %v4312
  %v4330 = vperm.slane %v4039, 0
  %v4331 = vperm.slane %v4039, 1
  %v4332 = vperm.slane %v4039, 2
  %v4333 = vperm.slane %v4039, 3
  %v4334 = vperm.slane %v4039, 4
  %v4335 = vperm.slane %v4039, 5
  %v4336 = vperm.slane %v4039, 6
  %v4337 = vperm.slane %v4039, 7
  %v4346 = vmul.f32 %v4330, %v4313
  %v4347 = vmul.f32 %v4331, %v4314
  %v4348 = vmul.f32 %v4332, %v4315
  %v4349 = vmul.f32 %v4333, %v4316
  %v4350 = vmul.f32 %v4334, %v4317
  %v4351 = vmul.f32 %v4335, %v4318
  %v4352 = vmul.f32 %v4336, %v4319
  %v4353 = vmul.f32 %v4337, %v4320
  %v4354 = vmul.f32 %v4330, %v4321
  %v4355 = vmul.f32 %v4331, %v4322
  %v4356 = vmul.f32 %v4332, %v4323
  %v4357 = vmul.f32 %v4333, %v4324
  %v4358 = vmul.f32 %v4334, %v4325
  %v4359 = vmul.f32 %v4335, %v4326
  %v4360 = vmul.f32 %v4336, %v4327
  %v4361 = vmul.f32 %v4337, %v4328
  %v4363 = vperm.slane %v4040, 0
  %v4364 = vperm.slane %v4040, 1
  %v4365 = vperm.slane %v4040, 2
  %v4366 = vperm.slane %v4040, 3
  %v4367 = vperm.slane %v4040, 4
  %v4368 = vperm.slane %v4040, 5
  %v4369 = vperm.slane %v4040, 6
  %v4370 = vperm.slane %v4040, 7
  %v4379 = vadd.f32 %v4346, %v4363
  %v4380 = vadd.f32 %v4347, %v4364
  %v4381 = vadd.f32 %v4348, %v4365
  %v4382 = vadd.f32 %v4349, %v4366
  %v4383 = vadd.f32 %v4350, %v4367
  %v4384 = vadd.f32 %v4351, %v4368
  %v4385 = vadd.f32 %v4352, %v4369
  %v4386 = vadd.f32 %v4353, %v4370
  %v4387 = vadd.f32 %v4354, %v4363
  %v4388 = vadd.f32 %v4355, %v4364
  %v4389 = vadd.f32 %v4356, %v4365
  %v4390 = vadd.f32 %v4357, %v4366
  %v4391 = vadd.f32 %v4358, %v4367
  %v4392 = vadd.f32 %v4359, %v4368
  %v4393 = vadd.f32 %v4360, %v4369
  %v4394 = vadd.f32 %v4361, %v4370
  %vm4395 = vcmp.gt.f32.partialorder %v4379, 0.0
  %vm4396 = vcmp.gt.f32.partialorder %v4380, 0.0
  %vm4397 = vcmp.gt.f32.partialorder %v4381, 0.0
  %vm4398 = vcmp.gt.f32.partialorder %v4382, 0.0
  %vm4399 = vcmp.gt.f32.partialorder %v4383, 0.0
  %vm4400 = vcmp.gt.f32.partialorder %v4384, 0.0
  %vm4401 = vcmp.gt.f32.partialorder %v4385, 0.0
  %vm4402 = vcmp.gt.f32.partialorder %v4386, 0.0
  %vm4403 = vcmp.gt.f32.partialorder %v4387, 0.0
  %vm4404 = vcmp.gt.f32.partialorder %v4388, 0.0
  %vm4405 = vcmp.gt.f32.partialorder %v4389, 0.0
  %vm4406 = vcmp.gt.f32.partialorder %v4390, 0.0
  %vm4407 = vcmp.gt.f32.partialorder %v4391, 0.0
  %vm4408 = vcmp.gt.f32.partialorder %v4392, 0.0
  %vm4409 = vcmp.gt.f32.partialorder %v4393, 0.0
  %vm4410 = vcmp.gt.f32.partialorder %v4394, 0.0
  %v4411 = vmul.f32 %v4379, 0.2
  %v4412 = vmul.f32 %v4380, 0.2
  %v4413 = vmul.f32 %v4381, 0.2
  %v4414 = vmul.f32 %v4382, 0.2
  %v4415 = vmul.f32 %v4383, 0.2
  %v4416 = vmul.f32 %v4384, 0.2
  %v4417 = vmul.f32 %v4385, 0.2
  %v4418 = vmul.f32 %v4386, 0.2
  %v4419 = vmul.f32 %v4387, 0.2
  %v4420 = vmul.f32 %v4388, 0.2
  %v4421 = vmul.f32 %v4389, 0.2
  %v4422 = vmul.f32 %v4390, 0.2
  %v4423 = vmul.f32 %v4391, 0.2
  %v4424 = vmul.f32 %v4392, 0.2
  %v4425 = vmul.f32 %v4393, 0.2
  %v4426 = vmul.f32 %v4394, 0.2
  %v4427 = vsel %vm4395, %v4379, %v4411
  %v4428 = vsel %vm4396, %v4380, %v4412
  %v4429 = vsel %vm4397, %v4381, %v4413
  %v4430 = vsel %vm4398, %v4382, %v4414
  %v4431 = vsel %vm4399, %v4383, %v4415
  %v4432 = vsel %vm4400, %v4384, %v4416
  %v4433 = vsel %vm4401, %v4385, %v4417
  %v4434 = vsel %vm4402, %v4386, %v4418
  %v4435 = vsel %vm4403, %v4387, %v4419
  %v4436 = vsel %vm4404, %v4388, %v4420
  %v4437 = vsel %vm4405, %v4389, %v4421
  %v4438 = vsel %vm4406, %v4390, %v4422
  %v4439 = vsel %vm4407, %v4391, %v4423
  %v4440 = vsel %vm4408, %v4392, %v4424
  %v4441 = vsel %vm4409, %v4393, %v4425
  %v4442 = vsel %vm4410, %v4394, %v4426
  %v4443 = vpack.c.bf16 %v4435, %v4427
  %v4444 = vpack.c.bf16 %v4436, %v4428
  %v4445 = vpack.c.bf16 %v4437, %v4429
  %v4446 = vpack.c.bf16 %v4438, %v4430
  %v4447 = vpack.c.bf16 %v4439, %v4431
  %v4448 = vpack.c.bf16 %v4440, %v4432
  %v4449 = vpack.c.bf16 %v4441, %v4433
  %v4450 = vpack.c.bf16 %v4442, %v4434
  %v4451 = vld [vmem:[%s4] sm:$0xf]
  %v4452 = vld [vmem:[%s4 + $0x4] sm:$0xf]
  %v4453 = vld [vmem:[%s4 + $0x8] sm:$0xf]
  %v4454 = vld [vmem:[%s4 + $0xc] sm:$0xf]
  %v4455 = vld [vmem:[%s4 + $0x10] sm:$0xf]
  %v4456 = vld [vmem:[%s4 + $0x14] sm:$0xf]
  %v4457 = vld [vmem:[%s4 + $0x18] sm:$0xf]
  %v4458 = vld [vmem:[%s4 + $0x1c] sm:$0xf]
  %v4459 = vld [vmem:[%s4 + $0x20] sm:$0xf]
  %v4460 = vld [vmem:[%s4 + $0x24] sm:$0xf]
  %v4461 = vld [vmem:[%s4 + $0x28] sm:$0xf]
  %v4462 = vld [vmem:[%s4 + $0x2c] sm:$0xf]
  %v4463 = vld [vmem:[%s4 + $0x30] sm:$0xf]
  %v4464 = vld [vmem:[%s4 + $0x34] sm:$0xf]
  %v4465 = vld [vmem:[%s4 + $0x38] sm:$0xf]
  %v4466 = vld [vmem:[%s4 + $0x3c] sm:$0xf]
  %v4467 = vld [vmem:[%s4 + $0x40] sm:$0xf]
  %v4468 = vld [vmem:[%s4 + $0x44] sm:$0xf]
  %v4469 = vld [vmem:[%s4 + $0x48] sm:$0xf]
  %v4470 = vld [vmem:[%s4 + $0x4c] sm:$0xf]
  %v4471 = vld [vmem:[%s4 + $0x50] sm:$0xf]
  %v4472 = vld [vmem:[%s4 + $0x54] sm:$0xf]
  %v4473 = vld [vmem:[%s4 + $0x58] sm:$0xf]
  %v4474 = vld [vmem:[%s4 + $0x5c] sm:$0xf]
  %v4475 = vld [vmem:[%s4 + $0x60] sm:$0xf]
  %v4476 = vld [vmem:[%s4 + $0x64] sm:$0xf]
  %v4477 = vld [vmem:[%s4 + $0x68] sm:$0xf]
  %v4478 = vld [vmem:[%s4 + $0x6c] sm:$0xf]
  %v4479 = vld [vmem:[%s4 + $0x70] sm:$0xf]
  %v4480 = vld [vmem:[%s4 + $0x74] sm:$0xf]
  %v4481 = vld [vmem:[%s4 + $0x78] sm:$0xf]
  %v4482 = vld [vmem:[%s4 + $0x7c] sm:$0xf]
  %v4483 = vld [vmem:[%s4 + $0x80] sm:$0xf]
  %v4484 = vld [vmem:[%s4 + $0x84] sm:$0xf]
  %v4485 = vld [vmem:[%s4 + $0x88] sm:$0xf]
  %v4486 = vld [vmem:[%s4 + $0x8c] sm:$0xf]
  %v4487 = vld [vmem:[%s4 + $0x90] sm:$0xf]
  %v4488 = vld [vmem:[%s4 + $0x94] sm:$0xf]
  %v4489 = vld [vmem:[%s4 + $0x98] sm:$0xf]
  %v4490 = vld [vmem:[%s4 + $0x9c] sm:$0xf]
  %v4491 = vld [vmem:[%s4 + $0xa0] sm:$0xf]
  %v4492 = vld [vmem:[%s4 + $0xa4] sm:$0xf]
  %v4493 = vld [vmem:[%s4 + $0xa8] sm:$0xf]
  %v4494 = vld [vmem:[%s4 + $0xac] sm:$0xf]
  %v4495 = vld [vmem:[%s4 + $0xb0] sm:$0xf]
  %v4496 = vld [vmem:[%s4 + $0xb4] sm:$0xf]
  %v4497 = vld [vmem:[%s4 + $0xb8] sm:$0xf]
  %v4498 = vld [vmem:[%s4 + $0xbc] sm:$0xf]
  %v4499 = vld [vmem:[%s4 + $0xc0] sm:$0xf]
  %v4500 = vld [vmem:[%s4 + $0xc4] sm:$0xf]
  %v4501 = vld [vmem:[%s4 + $0xc8] sm:$0xf]
  %v4502 = vld [vmem:[%s4 + $0xcc] sm:$0xf]
  %v4503 = vld [vmem:[%s4 + $0xd0] sm:$0xf]
  %v4504 = vld [vmem:[%s4 + $0xd4] sm:$0xf]
  %v4505 = vld [vmem:[%s4 + $0xd8] sm:$0xf]
  %v4506 = vld [vmem:[%s4 + $0xdc] sm:$0xf]
  %v4507 = vld [vmem:[%s4 + $0xe0] sm:$0xf]
  %v4508 = vld [vmem:[%s4 + $0xe4] sm:$0xf]
  %v4509 = vld [vmem:[%s4 + $0xe8] sm:$0xf]
  %v4510 = vld [vmem:[%s4 + $0xec] sm:$0xf]
  %v4511 = vld [vmem:[%s4 + $0xf0] sm:$0xf]
  %v4512 = vld [vmem:[%s4 + $0xf4] sm:$0xf]
  %v4513 = vld [vmem:[%s4 + $0xf8] sm:$0xf]
  %v4514 = vld [vmem:[%s4 + $0xfc] sm:$0xf]
  %v4515 = vld [vmem:[%s4 + $0x100] sm:$0xf]
  %v4516 = vld [vmem:[%s4 + $0x104] sm:$0xf]
  %v4517 = vld [vmem:[%s4 + $0x108] sm:$0xf]
  %v4518 = vld [vmem:[%s4 + $0x10c] sm:$0xf]
  %v4519 = vld [vmem:[%s4 + $0x110] sm:$0xf]
  %v4520 = vld [vmem:[%s4 + $0x114] sm:$0xf]
  %v4521 = vld [vmem:[%s4 + $0x118] sm:$0xf]
  %v4522 = vld [vmem:[%s4 + $0x11c] sm:$0xf]
  %v4523 = vld [vmem:[%s4 + $0x120] sm:$0xf]
  %v4524 = vld [vmem:[%s4 + $0x124] sm:$0xf]
  %v4525 = vld [vmem:[%s4 + $0x128] sm:$0xf]
  %v4526 = vld [vmem:[%s4 + $0x12c] sm:$0xf]
  %v4527 = vld [vmem:[%s4 + $0x130] sm:$0xf]
  %v4528 = vld [vmem:[%s4 + $0x134] sm:$0xf]
  %v4529 = vld [vmem:[%s4 + $0x138] sm:$0xf]
  %v4530 = vld [vmem:[%s4 + $0x13c] sm:$0xf]
  %v4531 = vld [vmem:[%s4 + $0x140] sm:$0xf]
  %v4532 = vld [vmem:[%s4 + $0x144] sm:$0xf]
  %v4533 = vld [vmem:[%s4 + $0x148] sm:$0xf]
  %v4534 = vld [vmem:[%s4 + $0x14c] sm:$0xf]
  %v4535 = vld [vmem:[%s4 + $0x150] sm:$0xf]
  %v4536 = vld [vmem:[%s4 + $0x154] sm:$0xf]
  %v4537 = vld [vmem:[%s4 + $0x158] sm:$0xf]
  %v4538 = vld [vmem:[%s4 + $0x15c] sm:$0xf]
  %v4539 = vld [vmem:[%s4 + $0x160] sm:$0xf]
  %v4540 = vld [vmem:[%s4 + $0x164] sm:$0xf]
  %v4541 = vld [vmem:[%s4 + $0x168] sm:$0xf]
  %v4542 = vld [vmem:[%s4 + $0x16c] sm:$0xf]
  %v4543 = vld [vmem:[%s4 + $0x170] sm:$0xf]
  %v4544 = vld [vmem:[%s4 + $0x174] sm:$0xf]
  %v4545 = vld [vmem:[%s4 + $0x178] sm:$0xf]
  %v4546 = vld [vmem:[%s4 + $0x17c] sm:$0xf]
  %v4547 = vld [vmem:[%s4 + $0x180] sm:$0xf]
  %v4548 = vld [vmem:[%s4 + $0x184] sm:$0xf]
  %v4549 = vld [vmem:[%s4 + $0x188] sm:$0xf]
  %v4550 = vld [vmem:[%s4 + $0x18c] sm:$0xf]
  %v4551 = vld [vmem:[%s4 + $0x190] sm:$0xf]
  %v4552 = vld [vmem:[%s4 + $0x194] sm:$0xf]
  %v4553 = vld [vmem:[%s4 + $0x198] sm:$0xf]
  %v4554 = vld [vmem:[%s4 + $0x19c] sm:$0xf]
  %v4555 = vld [vmem:[%s4 + $0x1a0] sm:$0xf]
  %v4556 = vld [vmem:[%s4 + $0x1a4] sm:$0xf]
  %v4557 = vld [vmem:[%s4 + $0x1a8] sm:$0xf]
  %v4558 = vld [vmem:[%s4 + $0x1ac] sm:$0xf]
  %v4559 = vld [vmem:[%s4 + $0x1b0] sm:$0xf]
  %v4560 = vld [vmem:[%s4 + $0x1b4] sm:$0xf]
  %v4561 = vld [vmem:[%s4 + $0x1b8] sm:$0xf]
  %v4562 = vld [vmem:[%s4 + $0x1bc] sm:$0xf]
  %v4563 = vld [vmem:[%s4 + $0x1c0] sm:$0xf]
  %v4564 = vld [vmem:[%s4 + $0x1c4] sm:$0xf]
  %v4565 = vld [vmem:[%s4 + $0x1c8] sm:$0xf]
  %v4566 = vld [vmem:[%s4 + $0x1cc] sm:$0xf]
  %v4567 = vld [vmem:[%s4 + $0x1d0] sm:$0xf]
  %v4568 = vld [vmem:[%s4 + $0x1d4] sm:$0xf]
  %v4569 = vld [vmem:[%s4 + $0x1d8] sm:$0xf]
  %v4570 = vld [vmem:[%s4 + $0x1dc] sm:$0xf]
  %v4571 = vld [vmem:[%s4 + $0x1e0] sm:$0xf]
  %v4572 = vld [vmem:[%s4 + $0x1e4] sm:$0xf]
  %v4573 = vld [vmem:[%s4 + $0x1e8] sm:$0xf]
  %v4574 = vld [vmem:[%s4 + $0x1ec] sm:$0xf]
  %v4575 = vld [vmem:[%s4 + $0x1f0] sm:$0xf]
  %v4576 = vld [vmem:[%s4 + $0x1f4] sm:$0xf]
  %v4577 = vld [vmem:[%s4 + $0x1f8] sm:$0xf]
  %v4578 = vld [vmem:[%s4 + $0x1fc] sm:$0xf]
  %v4579 = vld [vmem:[%s5] sm:$0x1]
  %v4581 = vperm.slane %v4579, 0
  %v4711 = vunpack.c.l.b16 %v4451
  %v4712 = vunpack.c.l.b16 %v4452
  %v4713 = vunpack.c.l.b16 %v4453
  %v4714 = vunpack.c.l.b16 %v4454
  %v4715 = vunpack.c.l.b16 %v4455
  %v4716 = vunpack.c.l.b16 %v4456
  %v4717 = vunpack.c.l.b16 %v4457
  %v4718 = vunpack.c.l.b16 %v4458
  %v4719 = vunpack.c.l.b16 %v4459
  %v4720 = vunpack.c.l.b16 %v4460
  %v4721 = vunpack.c.l.b16 %v4461
  %v4722 = vunpack.c.l.b16 %v4462
  %v4723 = vunpack.c.l.b16 %v4463
  %v4724 = vunpack.c.l.b16 %v4464
  %v4725 = vunpack.c.l.b16 %v4465
  %v4726 = vunpack.c.l.b16 %v4466
  %v4727 = vunpack.c.l.b16 %v4467
  %v4728 = vunpack.c.l.b16 %v4468
  %v4729 = vunpack.c.l.b16 %v4469
  %v4730 = vunpack.c.l.b16 %v4470
  %v4731 = vunpack.c.l.b16 %v4471
  %v4732 = vunpack.c.l.b16 %v4472
  %v4733 = vunpack.c.l.b16 %v4473
  %v4734 = vunpack.c.l.b16 %v4474
  %v4735 = vunpack.c.l.b16 %v4475
  %v4736 = vunpack.c.l.b16 %v4476
  %v4737 = vunpack.c.l.b16 %v4477
  %v4738 = vunpack.c.l.b16 %v4478
  %v4739 = vunpack.c.l.b16 %v4479
  %v4740 = vunpack.c.l.b16 %v4480
  %v4741 = vunpack.c.l.b16 %v4481
  %v4742 = vunpack.c.l.b16 %v4482
  %v4743 = vunpack.c.l.b16 %v4483
  %v4744 = vunpack.c.l.b16 %v4484
  %v4745 = vunpack.c.l.b16 %v4485
  %v4746 = vunpack.c.l.b16 %v4486
  %v4747 = vunpack.c.l.b16 %v4487
  %v4748 = vunpack.c.l.b16 %v4488
  %v4749 = vunpack.c.l.b16 %v4489
  %v4750 = vunpack.c.l.b16 %v4490
  %v4751 = vunpack.c.l.b16 %v4491
  %v4752 = vunpack.c.l.b16 %v4492
  %v4753 = vunpack.c.l.b16 %v4493
  %v4754 = vunpack.c.l.b16 %v4494
  %v4755 = vunpack.c.l.b16 %v4495
  %v4756 = vunpack.c.l.b16 %v4496
  %v4757 = vunpack.c.l.b16 %v4497
  %v4758 = vunpack.c.l.b16 %v4498
  %v4759 = vunpack.c.l.b16 %v4499
  %v4760 = vunpack.c.l.b16 %v4500
  %v4761 = vunpack.c.l.b16 %v4501
  %v4762 = vunpack.c.l.b16 %v4502
  %v4763 = vunpack.c.l.b16 %v4503
  %v4764 = vunpack.c.l.b16 %v4504
  %v4765 = vunpack.c.l.b16 %v4505
  %v4766 = vunpack.c.l.b16 %v4506
  %v4767 = vunpack.c.l.b16 %v4507
  %v4768 = vunpack.c.l.b16 %v4508
  %v4769 = vunpack.c.l.b16 %v4509
  %v4770 = vunpack.c.l.b16 %v4510
  %v4771 = vunpack.c.l.b16 %v4511
  %v4772 = vunpack.c.l.b16 %v4512
  %v4773 = vunpack.c.l.b16 %v4513
  %v4774 = vunpack.c.l.b16 %v4514
  %v4775 = vunpack.c.l.b16 %v4515
  %v4776 = vunpack.c.l.b16 %v4516
  %v4777 = vunpack.c.l.b16 %v4517
  %v4778 = vunpack.c.l.b16 %v4518
  %v4779 = vunpack.c.l.b16 %v4519
  %v4780 = vunpack.c.l.b16 %v4520
  %v4781 = vunpack.c.l.b16 %v4521
  %v4782 = vunpack.c.l.b16 %v4522
  %v4783 = vunpack.c.l.b16 %v4523
  %v4784 = vunpack.c.l.b16 %v4524
  %v4785 = vunpack.c.l.b16 %v4525
  %v4786 = vunpack.c.l.b16 %v4526
  %v4787 = vunpack.c.l.b16 %v4527
  %v4788 = vunpack.c.l.b16 %v4528
  %v4789 = vunpack.c.l.b16 %v4529
  %v4790 = vunpack.c.l.b16 %v4530
  %v4791 = vunpack.c.l.b16 %v4531
  %v4792 = vunpack.c.l.b16 %v4532
  %v4793 = vunpack.c.l.b16 %v4533
  %v4794 = vunpack.c.l.b16 %v4534
  %v4795 = vunpack.c.l.b16 %v4535
  %v4796 = vunpack.c.l.b16 %v4536
  %v4797 = vunpack.c.l.b16 %v4537
  %v4798 = vunpack.c.l.b16 %v4538
  %v4799 = vunpack.c.l.b16 %v4539
  %v4800 = vunpack.c.l.b16 %v4540
  %v4801 = vunpack.c.l.b16 %v4541
  %v4802 = vunpack.c.l.b16 %v4542
  %v4803 = vunpack.c.l.b16 %v4543
  %v4804 = vunpack.c.l.b16 %v4544
  %v4805 = vunpack.c.l.b16 %v4545
  %v4806 = vunpack.c.l.b16 %v4546
  %v4807 = vunpack.c.l.b16 %v4547
  %v4808 = vunpack.c.l.b16 %v4548
  %v4809 = vunpack.c.l.b16 %v4549
  %v4810 = vunpack.c.l.b16 %v4550
  %v4811 = vunpack.c.l.b16 %v4551
  %v4812 = vunpack.c.l.b16 %v4552
  %v4813 = vunpack.c.l.b16 %v4553
  %v4814 = vunpack.c.l.b16 %v4554
  %v4815 = vunpack.c.l.b16 %v4555
  %v4816 = vunpack.c.l.b16 %v4556
  %v4817 = vunpack.c.l.b16 %v4557
  %v4818 = vunpack.c.l.b16 %v4558
  %v4819 = vunpack.c.l.b16 %v4559
  %v4820 = vunpack.c.l.b16 %v4560
  %v4821 = vunpack.c.l.b16 %v4561
  %v4822 = vunpack.c.l.b16 %v4562
  %v4823 = vunpack.c.l.b16 %v4563
  %v4824 = vunpack.c.l.b16 %v4564
  %v4825 = vunpack.c.l.b16 %v4565
  %v4826 = vunpack.c.l.b16 %v4566
  %v4827 = vunpack.c.l.b16 %v4567
  %v4828 = vunpack.c.l.b16 %v4568
  %v4829 = vunpack.c.l.b16 %v4569
  %v4830 = vunpack.c.l.b16 %v4570
  %v4831 = vunpack.c.l.b16 %v4571
  %v4832 = vunpack.c.l.b16 %v4572
  %v4833 = vunpack.c.l.b16 %v4573
  %v4834 = vunpack.c.l.b16 %v4574
  %v4835 = vunpack.c.l.b16 %v4575
  %v4836 = vunpack.c.l.b16 %v4576
  %v4837 = vunpack.c.l.b16 %v4577
  %v4838 = vunpack.c.l.b16 %v4578
  %v4839 = vpack.c.b16 %v4712, %v4711
  %v4840 = vpack.c.b16 %v4714, %v4713
  %v4841 = vpack.c.b16 %v4716, %v4715
  %v4842 = vpack.c.b16 %v4718, %v4717
  %v4843 = vpack.c.b16 %v4720, %v4719
  %v4844 = vpack.c.b16 %v4722, %v4721
  %v4845 = vpack.c.b16 %v4724, %v4723
  %v4846 = vpack.c.b16 %v4726, %v4725
  %v4847 = vpack.c.b16 %v4728, %v4727
  %v4848 = vpack.c.b16 %v4730, %v4729
  %v4849 = vpack.c.b16 %v4732, %v4731
  %v4850 = vpack.c.b16 %v4734, %v4733
  %v4851 = vpack.c.b16 %v4736, %v4735
  %v4852 = vpack.c.b16 %v4738, %v4737
  %v4853 = vpack.c.b16 %v4740, %v4739
  %v4854 = vpack.c.b16 %v4742, %v4741
  %v4855 = vpack.c.b16 %v4744, %v4743
  %v4856 = vpack.c.b16 %v4746, %v4745
  %v4857 = vpack.c.b16 %v4748, %v4747
  %v4858 = vpack.c.b16 %v4750, %v4749
  %v4859 = vpack.c.b16 %v4752, %v4751
  %v4860 = vpack.c.b16 %v4754, %v4753
  %v4861 = vpack.c.b16 %v4756, %v4755
  %v4862 = vpack.c.b16 %v4758, %v4757
  %v4863 = vpack.c.b16 %v4760, %v4759
  %v4864 = vpack.c.b16 %v4762, %v4761
  %v4865 = vpack.c.b16 %v4764, %v4763
  %v4866 = vpack.c.b16 %v4766, %v4765
  %v4867 = vpack.c.b16 %v4768, %v4767
  %v4868 = vpack.c.b16 %v4770, %v4769
  %v4869 = vpack.c.b16 %v4772, %v4771
  %v4870 = vpack.c.b16 %v4774, %v4773
  %v4871 = vpack.c.b16 %v4776, %v4775
  %v4872 = vpack.c.b16 %v4778, %v4777
  %v4873 = vpack.c.b16 %v4780, %v4779
  %v4874 = vpack.c.b16 %v4782, %v4781
  %v4875 = vpack.c.b16 %v4784, %v4783
  %v4876 = vpack.c.b16 %v4786, %v4785
  %v4877 = vpack.c.b16 %v4788, %v4787
  %v4878 = vpack.c.b16 %v4790, %v4789
  %v4879 = vpack.c.b16 %v4792, %v4791
  %v4880 = vpack.c.b16 %v4794, %v4793
  %v4881 = vpack.c.b16 %v4796, %v4795
  %v4882 = vpack.c.b16 %v4798, %v4797
  %v4883 = vpack.c.b16 %v4800, %v4799
  %v4884 = vpack.c.b16 %v4802, %v4801
  %v4885 = vpack.c.b16 %v4804, %v4803
  %v4886 = vpack.c.b16 %v4806, %v4805
  %v4887 = vpack.c.b16 %v4808, %v4807
  %v4888 = vpack.c.b16 %v4810, %v4809
  %v4889 = vpack.c.b16 %v4812, %v4811
  %v4890 = vpack.c.b16 %v4814, %v4813
  %v4891 = vpack.c.b16 %v4816, %v4815
  %v4892 = vpack.c.b16 %v4818, %v4817
  %v4893 = vpack.c.b16 %v4820, %v4819
  %v4894 = vpack.c.b16 %v4822, %v4821
  %v4895 = vpack.c.b16 %v4824, %v4823
  %v4896 = vpack.c.b16 %v4826, %v4825
  %v4897 = vpack.c.b16 %v4828, %v4827
  %v4898 = vpack.c.b16 %v4830, %v4829
  %v4899 = vpack.c.b16 %v4832, %v4831
  %v4900 = vpack.c.b16 %v4834, %v4833
  %v4901 = vpack.c.b16 %v4836, %v4835
  %v4902 = vpack.c.b16 %v4838, %v4837
  %4967 = vmatpush.bf16.msra.mxu0 %v4846
  %4968 = vmatpush.bf16.msra.mxu0 %v4845
  %4969 = vmatpush.bf16.msra.mxu0 %v4844
  %4970 = vmatpush.bf16.msra.mxu0 %v4843
  %4971 = vmatpush.bf16.msra.mxu0 %v4842
  %4972 = vmatpush.bf16.msra.mxu0 %v4841
  %4973 = vmatpush.bf16.msra.mxu0 %v4840
  %4974 = vmatpush.bf16.msra.mxu0 %v4839
  %4975 = vmatmul.bf16.gmra.mxu0 %v4443
  %v4976 = vpop.f32.mrf.mxu0
  %v4977 = vadd.f32 %v4581, %v4976
  %v4978 = vpop.f32.mrf.mxu0
  %v4979 = vadd.f32 %v4581, %v4978
  %4980 = vdwg.mxu0
  %4981 = vmatpush.bf16.msra.mxu0 %v4854
  %4982 = vmatpush.bf16.msra.mxu0 %v4853
  %4983 = vmatpush.bf16.msra.mxu0 %v4852
  %4984 = vmatpush.bf16.msra.mxu0 %v4851
  %4985 = vmatpush.bf16.msra.mxu0 %v4850
  %4986 = vmatpush.bf16.msra.mxu0 %v4849
  %4987 = vmatpush.bf16.msra.mxu0 %v4848
  %4988 = vmatpush.bf16.msra.mxu0 %v4847
  %4989 = vmatmul.bf16.gmra.mxu0 %v4444
  %v4990 = vpop.f32.mrf.mxu0
  %v4991 = vadd.f32 %v4977, %v4990
  %v4992 = vpop.f32.mrf.mxu0
  %v4993 = vadd.f32 %v4979, %v4992
  %4994 = vdwg.mxu0
  %4995 = vmatpush.bf16.msra.mxu0 %v4862
  %4996 = vmatpush.bf16.msra.mxu0 %v4861
  %4997 = vmatpush.bf16.msra.mxu0 %v4860
  %4998 = vmatpush.bf16.msra.mxu0 %v4859
  %4999 = vmatpush.bf16.msra.mxu0 %v4858
  %5000 = vmatpush.bf16.msra.mxu0 %v4857
  %5001 = vmatpush.bf16.msra.mxu0 %v4856
  %5002 = vmatpush.bf16.msra.mxu0 %v4855
  %5003 = vmatmul.bf16.gmra.mxu0 %v4445
  %v5004 = vpop.f32.mrf.mxu0
  %v5005 = vadd.f32 %v4991, %v5004
  %v5006 = vpop.f32.mrf.mxu0
  %v5007 = vadd.f32 %v4993, %v5006
  %5008 = vdwg.mxu0
  %5009 = vmatpush.bf16.msra.mxu0 %v4870
  %5010 = vmatpush.bf16.msra.mxu0 %v4869
  %5011 = vmatpush.bf16.msra.mxu0 %v4868
  %5012 = vmatpush.bf16.msra.mxu0 %v4867
  %5013 = vmatpush.bf16.msra.mxu0 %v4866
  %5014 = vmatpush.bf16.msra.mxu0 %v4865
  %5015 = vmatpush.bf16.msra.mxu0 %v4864
  %5016 = vmatpush.bf16.msra.mxu0 %v4863
  %5017 = vmatmul.bf16.gmra.mxu0 %v4446
  %v5018 = vpop.f32.mrf.mxu0
  %v5019 = vadd.f32 %v5005, %v5018
  %v5020 = vpop.f32.mrf.mxu0
  %v5021 = vadd.f32 %v5007, %v5020
  %5022 = vdwg.mxu0
  %5023 = vmatpush.bf16.msra.mxu0 %v4878
  %5024 = vmatpush.bf16.msra.mxu0 %v4877
  %5025 = vmatpush.bf16.msra.mxu0 %v4876
  %5026 = vmatpush.bf16.msra.mxu0 %v4875
  %5027 = vmatpush.bf16.msra.mxu0 %v4874
  %5028 = vmatpush.bf16.msra.mxu0 %v4873
  %5029 = vmatpush.bf16.msra.mxu0 %v4872
  %5030 = vmatpush.bf16.msra.mxu0 %v4871
  %5031 = vmatmul.bf16.gmra.mxu0 %v4447
  %v5032 = vpop.f32.mrf.mxu0
  %v5033 = vadd.f32 %v5019, %v5032
  %v5034 = vpop.f32.mrf.mxu0
  %v5035 = vadd.f32 %v5021, %v5034
  %5036 = vdwg.mxu0
  %5037 = vmatpush.bf16.msra.mxu0 %v4886
  %5038 = vmatpush.bf16.msra.mxu0 %v4885
  %5039 = vmatpush.bf16.msra.mxu0 %v4884
  %5040 = vmatpush.bf16.msra.mxu0 %v4883
  %5041 = vmatpush.bf16.msra.mxu0 %v4882
  %5042 = vmatpush.bf16.msra.mxu0 %v4881
  %5043 = vmatpush.bf16.msra.mxu0 %v4880
  %5044 = vmatpush.bf16.msra.mxu0 %v4879
  %5045 = vmatmul.bf16.gmra.mxu0 %v4448
  %v5046 = vpop.f32.mrf.mxu0
  %v5047 = vadd.f32 %v5033, %v5046
  %v5048 = vpop.f32.mrf.mxu0
  %v5049 = vadd.f32 %v5035, %v5048
  %5050 = vdwg.mxu0
  %5051 = vmatpush.bf16.msra.mxu0 %v4894
  %5052 = vmatpush.bf16.msra.mxu0 %v4893
  %5053 = vmatpush.bf16.msra.mxu0 %v4892
  %5054 = vmatpush.bf16.msra.mxu0 %v4891
  %5055 = vmatpush.bf16.msra.mxu0 %v4890
  %5056 = vmatpush.bf16.msra.mxu0 %v4889
  %5057 = vmatpush.bf16.msra.mxu0 %v4888
  %5058 = vmatpush.bf16.msra.mxu0 %v4887
  %5059 = vmatmul.bf16.gmra.mxu0 %v4449
  %v5060 = vpop.f32.mrf.mxu0
  %v5061 = vadd.f32 %v5047, %v5060
  %v5062 = vpop.f32.mrf.mxu0
  %v5063 = vadd.f32 %v5049, %v5062
  %5064 = vdwg.mxu0
  %5065 = vmatpush.bf16.msra.mxu0 %v4902
  %5066 = vmatpush.bf16.msra.mxu0 %v4901
  %5067 = vmatpush.bf16.msra.mxu0 %v4900
  %5068 = vmatpush.bf16.msra.mxu0 %v4899
  %5069 = vmatpush.bf16.msra.mxu0 %v4898
  %5070 = vmatpush.bf16.msra.mxu0 %v4897
  %5071 = vmatpush.bf16.msra.mxu0 %v4896
  %5072 = vmatpush.bf16.msra.mxu0 %v4895
  %5073 = vmatmul.bf16.gmra.mxu0 %v4450
  %v5074 = vpop.f32.mrf.mxu0
  %v5075 = vadd.f32 %v5061, %v5074
  %v5076 = vpop.f32.mrf.mxu0
  %v5077 = vadd.f32 %v5063, %v5076
  %5078 = vdwg.mxu0
  %v5079 = vtanh.pop %v5075
  %v5080 = vtanh.pop %v5077
  %5081 = vst [vmem:[%s6] sm:$0xff] %v5079
  %5082 = vst [vmem:[%s6 + $0x8] sm:$0xff] %v5080
  // Predicated region
  $region26: #{cnn_encoder_forward.11} parent=0 // pred_check
    _
  $region27: #{cnn_encoder_forward.11} parent=0 // pred_check_branch
    %5084 = sbr.rel (0) target = $region29
  $region28: #{cnn_encoder_forward.11} parent=0 // pred_region
    _
  $region29: #{cnn_encoder_forward.11} parent=0 // pred_fallthru
    _
  // Predicated region
  $region30: #{cnn_encoder_forward.11} parent=0 // pred_check
    _
  $region31: #{cnn_encoder_forward.11} parent=0 // pred_check_branch
    %5086 = sbr.rel (0) target = $region33
  $region32: #{cnn_encoder_forward.11} parent=0 // pred_region
    _
  $region33: #{cnn_encoder_forward.11} parent=0 // pred_fallthru
    _

</llo_original>
